<compile_context>
chip_gen: v5e
topology: v5e:2x2
jax: 0.10.0
libtpu: 0.0.40
codegen_flags: <defaults>
</compile_context>

<pallas_src>
import jax
import jax.numpy as jnp
from jax.experimental import pallas as pl
from jax.experimental.pallas import tpu as pltpu

F32 = jnp.float32
NEG = -1e30  # plain Python float -> jaxpr literal, NOT a captured constant array


def _masked_softmax_lastdim(scores, pad_mask):
    """Softmax along the last axis with padded positions (mask > 0) suppressed."""
    scores = jnp.where(pad_mask > 0.0, NEG, scores)
    scores = scores - jnp.max(scores, axis=-1, keepdims=True)
    e = jnp.exp(scores)
    return e / jnp.sum(e, axis=-1, keepdims=True)


# --------------------------------------------------------------------------
# Kernel 1: SeqAttnMatch -- whole batch, single invocation (no grid).
# --------------------------------------------------------------------------
def _seqattn_kernel(x1_ref, x2_ref, mask_ref, w_ref, b_ref, o_ref):
    x1 = x1_ref[...]                                   # (B, Ld, E)
    x2 = x2_ref[...]                                   # (B, Lq, E)
    mask = mask_ref[...]                               # (B, 1, Lq), 1.0 == pad
    w = w_ref[...]
    b = b_ref[...]
    B, Ld, E = x1.shape
    Lq = x2.shape[1]
    # Shared projection + ReLU; batch*seq flattened into the matmul M dim.
    p1 = jnp.maximum(jnp.dot(x1.reshape(B * Ld, E), w,
                             preferred_element_type=F32) + b, 0.0).reshape(B, Ld, E)
    p2 = jnp.maximum(jnp.dot(x2.reshape(B * Lq, E), w,
                             preferred_element_type=F32) + b, 0.0).reshape(B, Lq, E)
    scores = jnp.einsum('bqe,bke->bqk', p1, p2, preferred_element_type=F32)
    alpha = _masked_softmax_lastdim(scores, mask)      # (B, Ld, Lq)
    o_ref[...] = jnp.einsum('bqk,bke->bqe', alpha, x2, preferred_element_type=F32)


def seq_attn_match(x1_emb, x2_emb, x2_mask, w, b):
    B, Ld, E = x1_emb.shape
    Lq = x2_emb.shape[1]
    mask = x2_mask.astype(F32).reshape(B, 1, Lq)
    return pl.pallas_call(
        _seqattn_kernel,
        out_shape=jax.ShapeDtypeStruct((B, Ld, E), F32),
    )(x1_emb.astype(F32), x2_emb.astype(F32), mask, w, b)


# --------------------------------------------------------------------------
# Shared body: fused bidirectional GRU + ReLU reduction branch.
#   * gate weights fused to (Din, 3H) / (H, 3H): 2 matmuls per step instead of 6
#   * input-to-hidden projections for ALL timesteps hoisted out of the recurrence
#     as two big MXU matmuls (plus one for the reduction branch)
#   * forward and backward directions run in the same in-kernel time loop
#     (no JAX-side transposes, flips or concatenates)
#   * results written lane-packed into out_ref[:, :, 0:H | H:2H | 2H:]
# --------------------------------------------------------------------------
def _bigru_reduce_into(out_ref, x,
                       wih_f, whh_f, bih_f, bhh_f,
                       wih_b, whh_b, bih_b, bhh_b,
                       red_w, red_b):
    B, L, Din = x.shape
    H = whh_f.shape[0]
    H3 = 3 * H

    x2d = x.reshape(B * L, Din)
    gi_f = (jnp.dot(x2d, wih_f, preferred_element_type=F32) + bih_f).reshape(B, L, H3)
    gi_b = (jnp.dot(x2d, wih_b, preferred_element_type=F32) + bih_b).reshape(B, L, H3)
    red = jnp.maximum(jnp.dot(x2d, red_w, preferred_element_type=F32) + red_b, 0.0)
    out_ref[:, :, 2 * H:] = red.reshape(B, L, red.shape[-1])

    # Hidden-to-hidden weights broadcast once (hoisted out of the loop).
    whh_f_b = jnp.broadcast_to(whh_f, (B, H, H3))
    whh_b_b = jnp.broadcast_to(whh_b, (B, H, H3))

    def cell(gi, gh, h):
        r = jax.nn.sigmoid(gi[:, :, 0:H] + gh[:, :, 0:H])
        z = jax.nn.sigmoid(gi[:, :, H:2 * H] + gh[:, :, H:2 * H])
        n = jnp.tanh(gi[:, :, 2 * H:] + r * gh[:, :, 2 * H:])
        return (1.0 - z) * n + z * h

    # Traced zero init (avoids closing over constant arrays in the kernel jaxpr).
    h_f = gi_f[:, 0:1, 0:H] * 0.0                      # (B, 1, H)
    h_b = gi_b[:, 0:1, 0:H] * 0.0

    # TODO(synk): static unroll is fine for these lengths (L <= 16); switch to
    # lax.fori_loop + pl.ds indexing for realistic DrQA sequence lengths.
    for t in range(L):
        tb = L - 1 - t
        gh_f = jnp.einsum('boh,bhk->bok', h_f, whh_f_b,
                          preferred_element_type=F32) + bhh_f
        gh_b = jnp.einsum('boh,bhk->bok', h_b, whh_b_b,
                          preferred_element_type=F32) + bhh_b
        h_f = cell(gi_f[:, t:t + 1, :], gh_f, h_f)
        h_b = cell(gi_b[:, tb:tb + 1, :], gh_b, h_b)
        out_ref[:, t:t + 1, 0:H] = h_f
        out_ref[:, tb:tb + 1, H:2 * H] = h_b


def _bigru_reduce_kernel(x_ref,
                         wih_f_ref, whh_f_ref, bih_f_ref, bhh_f_ref,
                         wih_b_ref, whh_b_ref, bih_b_ref, bhh_b_ref,
                         red_w_ref, red_b_ref,
                         o_ref):
    _bigru_reduce_into(
        o_ref, x_ref[...],
        wih_f_ref[...], whh_f_ref[...], bih_f_ref[...], bhh_f_ref[...],
        wih_b_ref[...], whh_b_ref[...], bih_b_ref[...], bhh_b_ref[...],
        red_w_ref[...], red_b_ref[...])


def bigru_reduce(x, gru_params):
    (wih_f, whh_f, bih_f, bhh_f,
     wih_b, whh_b, bih_b, bhh_b, red_w, red_b) = gru_params
    B, L, _ = x.shape
    H = whh_f.shape[0]
    R = red_w.shape[1]
    return pl.pallas_call(
        _bigru_reduce_kernel,
        out_shape=jax.ShapeDtypeStruct((B, L, 2 * H + R), F32),
    )(x.astype(F32), wih_f, whh_f, bih_f, bhh_f,
      wih_b, whh_b, bih_b, bhh_b, red_w, red_b)


# --------------------------------------------------------------------------
# Kernel 3: question bi-GRU + LinearSeqAttn merge + fused start/end bilinear attn.
# --------------------------------------------------------------------------
def _q_merge_score_kernel(x2_ref, doc_ref, qmask_ref, dmask_ref,
                          wih_f_ref, whh_f_ref, bih_f_ref, bhh_f_ref,
                          wih_b_ref, whh_b_ref, bih_b_ref, bhh_b_ref,
                          red_w_ref, red_b_ref,
                          saw_ref, sab_ref, ws_ref, bs_ref, we_ref, be_ref,
                          start_ref, end_ref,
                          qh_ref):
    # 1) Question bi-GRU + reduction -> question_hiddens kept in VMEM scratch.
    _bigru_reduce_into(
        qh_ref, x2_ref[...],
        wih_f_ref[...], whh_f_ref[...], bih_f_ref[...], bhh_f_ref[...],
        wih_b_ref[...], whh_b_ref[...], bih_b_ref[...], bhh_b_ref[...],
        red_w_ref[...], red_b_ref[...])
    q = qh_ref[...]                                    # (B, Lq, Qh)
    qmask = qmask_ref[...]                             # (B, Lq), 1.0 == pad
    doc = doc_ref[...]                                 # (B, Ld, Dh)
    dmask = dmask_ref[...]                             # (B, Ld), 1.0 == pad

    # 2) LinearSeqAttn question merge (lane-oriented (B, Lq) scores) + weighted avg.
    s = jnp.sum(q * saw_ref[...], axis=-1) + sab_ref[...]      # (B, Lq)
    alpha = _masked_softmax_lastdim(s, qmask)                  # (B, Lq)
    q_hidden = jnp.sum(alpha[:, :, None] * q, axis=1)          # (B, Qh)

    # 3) start / end BilinearSeqAttn fused: doc hiddens read once.
    wy_s = jnp.dot(q_hidden, ws_ref[...], preferred_element_type=F32) + bs_ref[...]
    wy_e = jnp.dot(q_hidden, we_ref[...], preferred_element_type=F32) + be_ref[...]
    start_ref[...] = _masked_softmax_lastdim(
        jnp.sum(doc * wy_s[:, None, :], axis=-1), dmask)
    end_ref[...] = _masked_softmax_lastdim(
        jnp.sum(doc * wy_e[:, None, :], axis=-1), dmask)


def question_merge_and_score(x2_emb, x2_mask, doc_hiddens, x1_mask, q_gru_params, params):
    B, Lq, _ = x2_emb.shape
    Ld = doc_hiddens.shape[1]
    (wih_f, whh_f, bih_f, bhh_f,
     wih_b, whh_b, bih_b, bhh_b, red_w, red_b) = q_gru_params
    H = whh_f.shape[0]
    R = red_w.shape[1]
    Qh = 2 * H + R
    return pl.pallas_call(
        _q_merge_score_kernel,
        out_shape=(jax.ShapeDtypeStruct((B, Ld), F32),
                   jax.ShapeDtypeStruct((B, Ld), F32)),
        scratch_shapes=[pltpu.VMEM((B, Lq, Qh), F32)],
    )(x2_emb.astype(F32), doc_hiddens, x2_mask.astype(F32), x1_mask.astype(F32),
      wih_f, whh_f, bih_f, bhh_f, wih_b, whh_b, bih_b, bhh_b, red_w, red_b,
      params["self_attn_W"], params["self_attn_b"],
      params["start_W"], params["start_b"], params["end_W"], params["end_b"])


# --------------------------------------------------------------------------
# Model: parameter init + forward (eval mode: dropout is a no-op).
# --------------------------------------------------------------------------
OPT = dict(
    vocab_size=100, embedding_dim=32, num_features=4,
    pos=True, pos_size=12, pos_dim=8,
    ner=True, ner_size=10, ner_dim=8,
    use_qemb=True, hidden_size=32, reduction_ratio=4,
    question_merge="self_attn", dropout_emb=0.0,
)


def init_params(key):
    E = OPT["embedding_dim"]
    H = OPT["hidden_size"]
    R = H // OPT["reduction_ratio"]
    nf = OPT["num_features"]
    din_doc = E + nf + E + OPT["pos_dim"] + OPT["ner_dim"]
    dh = 2 * H + R  # doc_hidden_size == question_hidden_size

    keys = iter(jax.random.split(key, 64))

    def rnd(shape, scale=0.1):
        return (scale * jax.random.normal(next(keys), shape, dtype=F32)).astype(F32)

    def bigru_red_params(din):
        # fused gate weights: (Din, 3H), (H, 3H); biases (1, 3H); reduction (Din, R)
        return (rnd((din, 3 * H)), rnd((H, 3 * H)), rnd((1, 3 * H)), rnd((1, 3 * H)),
                rnd((din, 3 * H)), rnd((H, 3 * H)), rnd((1, 3 * H)), rnd((1, 3 * H)),
                rnd((din, R)), rnd((1, R)))

    emb = rnd((OPT["vocab_size"], E), 1.0)
    emb = emb.at[0].set(0.0)  # padding_idx = 0

    return dict(
        embedding=emb,
        pos_embedding=rnd((OPT["pos_size"], OPT["pos_dim"]), 1.0),
        ner_embedding=rnd((OPT["ner_size"], OPT["ner_dim"]), 1.0),
        qemb_W=rnd((E, E)), qemb_b=rnd((1, E)),
        doc_rnn=bigru_red_params(din_doc),
        q_rnn=bigru_red_params(E),
        self_attn_W=rnd((1, dh)), self_attn_b=rnd((1, 1)),
        start_W=rnd((dh, dh)), start_b=rnd((1, dh)),
        end_W=rnd((dh, dh)), end_b=rnd((1, dh)),
    )


def rnn_doc_reader_forward(params, x1, x1_f, x1_pos, x1_ner, x1_mask, x2, x2_mask):
    # Embedding lookups (glue; gathers stay in JAX).
    x1_emb = jnp.take(params["embedding"], x1, axis=0)
    x2_emb = jnp.take(params["embedding"], x2, axis=0)
    # dropout_emb: eval mode -> identity.

    # use_qemb: question-aware doc representation (Pallas kernel 1).
    x2_weighted = seq_attn_match(x1_emb, x2_emb, x2_mask,
                                 params["qemb_W"], params["qemb_b"])

    x1_pos_emb = jnp.take(params["pos_embedding"], x1_pos, axis=0)
    x1_ner_emb = jnp.take(params["ner_embedding"], x1_ner, axis=0)

    drnn_input = jnp.concatenate(
        [x1_emb, x1_f.astype(F32), x2_weighted, x1_pos_emb, x1_ner_emb], axis=2)

    # AttentionRNN stand-in (see TODO at top): doc path = bi-GRU + reduction (kernel 2).
    doc_hiddens = bigru_reduce(drnn_input, params["doc_rnn"])        # [B, Ld, 2H+R]

    # Question path + self-attn merge + fused start/end bilinear scoring (kernel 3).
    start_scores, end_scores = question_merge_and_score(
        x2_emb, x2_mask, doc_hiddens, x1_mask, params["q_rnn"], params)
    return start_scores, end_scores


# --------------------------------------------------------------------------
if __name__ == "__main__":
    B, Ld, Lq = 2, 16, 8
    nf = OPT["num_features"]
    key = jax.random.PRNGKey(0)
    kp, k1, k2, k3, k4, k5 = jax.random.split(key, 6)

    params = init_params(kp)

    x1 = jax.random.randint(k1, (B, Ld), 1, OPT["vocab_size"], dtype=jnp.int32)
    x2 = jax.random.randint(k2, (B, Lq), 1, OPT["vocab_size"], dtype=jnp.int32)
    x1_pos = jax.random.randint(k3, (B, Ld), 0, OPT["pos_size"], dtype=jnp.int32)
    x1_ner = jax.random.randint(k4, (B, Ld), 0, OPT["ner_size"], dtype=jnp.int32)
    x1_f = jax.random.normal(k5, (B, Ld, nf), dtype=F32)

    # Padding masks (1 = pad). Pad last positions of the second example.
    x1_mask = jnp.zeros((B, Ld), dtype=jnp.int32).at[1, Ld - 4:].set(1)
    x2_mask = jnp.zeros((B, Lq), dtype=jnp.int32).at[1, Lq - 2:].set(1)
    x1 = jnp.where(x1_mask > 0, 0, x1)
    x2 = jnp.where(x2_mask > 0, 0, x2)

    fwd = jax.jit(rnn_doc_reader_forward)
    start_scores, end_scores = fwd(params, x1, x1_f, x1_pos, x1_ner, x1_mask, x2, x2_mask)
    jax.block_until_ready((start_scores, end_scores))

    assert start_scores.shape == (B, Ld) and end_scores.shape == (B, Ld)
    assert bool(jnp.all(jnp.isfinite(start_scores))) and bool(jnp.all(jnp.isfinite(end_scores)))
    # softmax rows sum to ~1
    assert bool(jnp.allclose(start_scores.sum(-1), 1.0, atol=1e-4))
    assert bool(jnp.allclose(end_scores.sum(-1), 1.0, atol=1e-4))
    # padded doc positions carry ~0 probability
    assert bool(jnp.all(start_scores[1, Ld - 4:] < 1e-6))
    print("KERNEL_OK")
</pallas_src>

<mosaic_0001>
module attributes {stable_mosaic.version = 11 : i64} {
  func.func @_seqattn_kernel(%arg0: memref<2x16x32xf32, #tpu.memory_space<vmem>>, %arg1: memref<2x8x32xf32, #tpu.memory_space<vmem>>, %arg2: memref<2x1x8xf32, #tpu.memory_space<vmem>>, %arg3: memref<32x32xf32, #tpu.memory_space<vmem>>, %arg4: memref<1x32xf32, #tpu.memory_space<vmem>>, %arg5: memref<2x16x32xf32, #tpu.memory_space<vmem>>) attributes {dimension_semantics = [], scalar_prefetch = 0 : i64, scratch_operands = 0 : i64, tpu.core_type = #tpu.core_type<tc>} {
    %c0 = arith.constant 0 : index
    %c0_0 = arith.constant 0 : index
    %c0_1 = arith.constant 0 : index
    %0 = vector.load %arg0[%c0, %c0_0, %c0_1] : memref<2x16x32xf32, #tpu.memory_space<vmem>>, vector<2x16x32xf32>
    %c0_2 = arith.constant 0 : index
    %c0_3 = arith.constant 0 : index
    %c0_4 = arith.constant 0 : index
    %1 = vector.load %arg1[%c0_2, %c0_3, %c0_4] : memref<2x8x32xf32, #tpu.memory_space<vmem>>, vector<2x8x32xf32>
    %c0_5 = arith.constant 0 : index
    %c0_6 = arith.constant 0 : index
    %c0_7 = arith.constant 0 : index
    %2 = vector.load %arg2[%c0_5, %c0_6, %c0_7] : memref<2x1x8xf32, #tpu.memory_space<vmem>>, vector<2x1x8xf32>
    %c0_8 = arith.constant 0 : index
    %c0_9 = arith.constant 0 : index
    %3 = vector.load %arg3[%c0_8, %c0_9] : memref<32x32xf32, #tpu.memory_space<vmem>>, vector<32x32xf32>
    %c0_10 = arith.constant 0 : index
    %c0_11 = arith.constant 0 : index
    %4 = vector.load %arg4[%c0_10, %c0_11] : memref<1x32xf32, #tpu.memory_space<vmem>>, vector<1x32xf32>
    %5 = vector.shape_cast %0 : vector<2x16x32xf32> to vector<32x32xf32>
    %cst = arith.constant dense<0.000000e+00> : vector<32x32xf32>
    %6 = tpu.matmul %5, %3, %cst {dimension_numbers = #tpu.dot_dimension_numbers<[1], [0], [0], [1], [0, 0, 1, 1], [], []>} : vector<32x32xf32>, vector<32x32xf32>, vector<32x32xf32> -> vector<32x32xf32>
    %7 = vector.broadcast %4 : vector<1x32xf32> to vector<32x32xf32>
    %8 = arith.addf %6, %7 : vector<32x32xf32>
    %cst_12 = arith.constant 0.000000e+00 : f32
    %9 = vector.broadcast %cst_12 : f32 to vector<32x32xf32>
    %10 = arith.maximumf %8, %9 : vector<32x32xf32>
    %11 = vector.shape_cast %10 : vector<32x32xf32> to vector<2x16x32xf32>
    %12 = vector.shape_cast %1 : vector<2x8x32xf32> to vector<16x32xf32>
    %cst_13 = arith.constant dense<0.000000e+00> : vector<16x32xf32>
    %13 = tpu.matmul %12, %3, %cst_13 {dimension_numbers = #tpu.dot_dimension_numbers<[1], [0], [0], [1], [0, 0, 1, 1], [], []>} : vector<16x32xf32>, vector<32x32xf32>, vector<16x32xf32> -> vector<16x32xf32>
    %14 = vector.broadcast %4 : vector<1x32xf32> to vector<16x32xf32>
    %15 = arith.addf %13, %14 : vector<16x32xf32>
    %cst_14 = arith.constant 0.000000e+00 : f32
    %16 = vector.broadcast %cst_14 : f32 to vector<16x32xf32>
    %17 = arith.maximumf %15, %16 : vector<16x32xf32>
    %18 = vector.shape_cast %17 : vector<16x32xf32> to vector<2x8x32xf32>
    "tpu.trace_start"() <{level = 10 : i32, message = "bqe,bke->bqk"}> : () -> ()
    %cst_15 = arith.constant dense<0.000000e+00> : vector<2x16x8xf32>
    %19 = tpu.matmul %11, %18, %cst_15 {dimension_numbers = #tpu.dot_dimension_numbers<[2], [2], [1], [1], [0, 0, 0, 1, 1, 1], [0], [0]>} : vector<2x16x32xf32>, vector<2x8x32xf32>, vector<2x16x8xf32> -> vector<2x16x8xf32>
    %cst_16 = arith.constant 0.000000e+00 : f32
    "tpu.trace_stop"() : () -> ()
    %20 = vector.broadcast %cst_16 : f32 to vector<2x1x8xf32>
    %21 = arith.cmpf ogt, %2, %20 : vector<2x1x8xf32>
    %cst_17 = arith.constant -1.000000e+30 : f32
    %22 = vector.shape_cast %21 : vector<2x1x8xi1> to vector<2x1x8xi1>
    %23 = vector.broadcast %22 : vector<2x1x8xi1> to vector<2x16x8xi1>
    %24 = vector.broadcast %cst_17 : f32 to vector<2x16x8xf32>
    %25 = arith.select %23, %24, %19 : vector<2x16x8xi1>, vector<2x16x8xf32>
    %cst_18 = arith.constant dense<0xFF800000> : vector<2x16xf32>
    %26 = vector.multi_reduction <maximumf>, %25, %cst_18 [2] : vector<2x16x8xf32> to vector<2x16xf32>
    %27 = vector.shape_cast %26 : vector<2x16xf32> to vector<2x16x1xf32>
    %28 = vector.broadcast %27 : vector<2x16x1xf32> to vector<2x16x8xf32>
    %29 = arith.subf %25, %28 : vector<2x16x8xf32>
    %30 = math.exp %29 : vector<2x16x8xf32>
    %cst_19 = arith.constant dense<0.000000e+00> : vector<2x16xf32>
    %31 = vector.multi_reduction <add>, %30, %cst_19 [2] : vector<2x16x8xf32> to vector<2x16xf32>
    %32 = vector.shape_cast %31 : vector<2x16xf32> to vector<2x16x1xf32>
    %33 = vector.broadcast %32 : vector<2x16x1xf32> to vector<2x16x8xf32>
    %34 = arith.divf %30, %33 : vector<2x16x8xf32>
    "tpu.trace_start"() <{level = 10 : i32, message = "bqk,bke->bqe"}> : () -> ()
    %cst_20 = arith.constant dense<0.000000e+00> : vector<2x16x32xf32>
    %35 = tpu.matmul %34, %1, %cst_20 {dimension_numbers = #tpu.dot_dimension_numbers<[2], [1], [1], [2], [0, 0, 0, 1, 1, 2], [0], [0]>} : vector<2x16x8xf32>, vector<2x8x32xf32>, vector<2x16x32xf32> -> vector<2x16x32xf32>
    "tpu.trace_stop"() : () -> ()
    %c0_21 = arith.constant 0 : index
    %c0_22 = arith.constant 0 : index
    %c0_23 = arith.constant 0 : index
    %36 = vector.load %arg5[%c0_21, %c0_22, %c0_23] : memref<2x16x32xf32, #tpu.memory_space<vmem>>, vector<2x16x32xf32>
    tpu.vector_store %arg5[%c0_21, %c0_22, %c0_23], %35 {strides = array<i32>} : memref<2x16x32xf32, #tpu.memory_space<vmem>>, vector<2x16x32xf32>,
    return
  }
}

module attributes {stable_mosaic.version = 11 : i64} {
  func.func @_q_merge_score_kernel(%arg0: memref<2x8x32xf32, #tpu.memory_space<vmem>>, %arg1: memref<2x16x72xf32, #tpu.memory_space<vmem>>, %arg2: memref<2x8xf32, #tpu.memory_space<vmem>>, %arg3: memref<2x16xf32, #tpu.memory_space<vmem>>, %arg4: memref<32x96xf32, #tpu.memory_space<vmem>>, %arg5: memref<32x96xf32, #tpu.memory_space<vmem>>, %arg6: memref<1x96xf32, #tpu.memory_space<vmem>>, %arg7: memref<1x96xf32, #tpu.memory_space<vmem>>, %arg8: memref<32x96xf32, #tpu.memory_space<vmem>>, %arg9: memref<32x96xf32, #tpu.memory_space<vmem>>, %arg10: memref<1x96xf32, #tpu.memory_space<vmem>>, %arg11: memref<1x96xf32, #tpu.memory_space<vmem>>, %arg12: memref<32x8xf32, #tpu.memory_space<vmem>>, %arg13: memref<1x8xf32, #tpu.memory_space<vmem>>, %arg14: memref<1x72xf32, #tpu.memory_space<vmem>>, %arg15: memref<1x1xf32, #tpu.memory_space<vmem>>, %arg16: memref<72x72xf32, #tpu.memory_space<vmem>>, %arg17: memref<1x72xf32, #tpu.memory_space<vmem>>, %arg18: memref<72x72xf32, #tpu.memory_space<vmem>>, %arg19: memref<1x72xf32, #tpu.memory_space<vmem>>, %arg20: memref<2x16xf32, #tpu.memory_space<vmem>>, %arg21: memref<2x16xf32, #tpu.memory_space<vmem>>, %arg22: memref<2x8x72xf32, #tpu.memory_space<vmem>>) attributes {dimension_semantics = [], scalar_prefetch = 0 : i64, scratch_operands = 1 : i64, tpu.core_type = #tpu.core_type<tc>} {
    %c0 = arith.constant 0 : index
    %c0_0 = arith.constant 0 : index
    %c0_1 = arith.constant 0 : index
    %0 = vector.load %arg0[%c0, %c0_0, %c0_1] : memref<2x8x32xf32, #tpu.memory_space<vmem>>, vector<2x8x32xf32>
    %c0_2 = arith.constant 0 : index
    %c0_3 = arith.constant 0 : index
    %1 = vector.load %arg4[%c0_2, %c0_3] : memref<32x96xf32, #tpu.memory_space<vmem>>, vector<32x96xf32>
    %c0_4 = arith.constant 0 : index
    %c0_5 = arith.constant 0 : index
    %2 = vector.load %arg5[%c0_4, %c0_5] : memref<32x96xf32, #tpu.memory_space<vmem>>, vector<32x96xf32>
    %c0_6 = arith.constant 0 : index
    %c0_7 = arith.constant 0 : index
    %3 = vector.load %arg6[%c0_6, %c0_7] : memref<1x96xf32, #tpu.memory_space<vmem>>, vector<1x96xf32>
    %c0_8 = arith.constant 0 : index
    %c0_9 = arith.constant 0 : index
    %4 = vector.load %arg7[%c0_8, %c0_9] : memref<1x96xf32, #tpu.memory_space<vmem>>, vector<1x96xf32>
    %c0_10 = arith.constant 0 : index
    %c0_11 = arith.constant 0 : index
    %5 = vector.load %arg8[%c0_10, %c0_11] : memref<32x96xf32, #tpu.memory_space<vmem>>, vector<32x96xf32>
    %c0_12 = arith.constant 0 : index
    %c0_13 = arith.constant 0 : index
    %6 = vector.load %arg9[%c0_12, %c0_13] : memref<32x96xf32, #tpu.memory_space<vmem>>, vector<32x96xf32>
    %c0_14 = arith.constant 0 : index
    %c0_15 = arith.constant 0 : index
    %7 = vector.load %arg10[%c0_14, %c0_15] : memref<1x96xf32, #tpu.memory_space<vmem>>, vector<1x96xf32>
    %c0_16 = arith.constant 0 : index
    %c0_17 = arith.constant 0 : index
    %8 = vector.load %arg11[%c0_16, %c0_17] : memref<1x96xf32, #tpu.memory_space<vmem>>, vector<1x96xf32>
    %c0_18 = arith.constant 0 : index
    %c0_19 = arith.constant 0 : index
    %9 = vector.load %arg12[%c0_18, %c0_19] : memref<32x8xf32, #tpu.memory_space<vmem>>, vector<32x8xf32>
    %c0_20 = arith.constant 0 : index
    %c0_21 = arith.constant 0 : index
    %10 = vector.load %arg13[%c0_20, %c0_21] : memref<1x8xf32, #tpu.memory_space<vmem>>, vector<1x8xf32>
    %11 = vector.shape_cast %0 : vector<2x8x32xf32> to vector<16x32xf32>
    %cst = arith.constant dense<0.000000e+00> : vector<16x96xf32>
    %12 = tpu.matmul %11, %1, %cst {dimension_numbers = #tpu.dot_dimension_numbers<[1], [0], [0], [1], [0, 0, 1, 1], [], []>} : vector<16x32xf32>, vector<32x96xf32>, vector<16x96xf32> -> vector<16x96xf32>
    %13 = vector.broadcast %3 : vector<1x96xf32> to vector<16x96xf32>
    %14 = arith.addf %12, %13 : vector<16x96xf32>
    %15 = vector.shape_cast %14 : vector<16x96xf32> to vector<2x8x96xf32>
    %cst_22 = arith.constant dense<0.000000e+00> : vector<16x96xf32>
    %16 = tpu.matmul %11, %5, %cst_22 {dimension_numbers = #tpu.dot_dimension_numbers<[1], [0], [0], [1], [0, 0, 1, 1], [], []>} : vector<16x32xf32>, vector<32x96xf32>, vector<16x96xf32> -> vector<16x96xf32>
    %17 = vector.broadcast %7 : vector<1x96xf32> to vector<16x96xf32>
    %18 = arith.addf %16, %17 : vector<16x96xf32>
    %19 = vector.shape_cast %18 : vector<16x96xf32> to vector<2x8x96xf32>
    %cst_23 = arith.constant dense<0.000000e+00> : vector<16x8xf32>
    %20 = tpu.matmul %11, %9, %cst_23 {dimension_numbers = #tpu.dot_dimension_numbers<[1], [0], [0], [1], [0, 0, 1, 1], [], []>} : vector<16x32xf32>, vector<32x8xf32>, vector<16x8xf32> -> vector<16x8xf32>
    %21 = vector.broadcast %10 : vector<1x8xf32> to vector<16x8xf32>
    %22 = arith.addf %20, %21 : vector<16x8xf32>
    %cst_24 = arith.constant 0.000000e+00 : f32
    %23 = vector.broadcast %cst_24 : f32 to vector<16x8xf32>
    %24 = arith.maximumf %22, %23 : vector<16x8xf32>
    %25 = vector.shape_cast %24 : vector<16x8xf32> to vector<2x8x8xf32>
    %c0_25 = arith.constant 0 : index
    %c0_26 = arith.constant 0 : index
    %c64 = arith.constant 64 : index
    %26 = vector.load %arg22[%c0_25, %c0_26, %c64] : memref<2x8x72xf32, #tpu.memory_space<vmem>>, vector<2x8x8xf32>
    tpu.vector_store %arg22[%c0_25, %c0_26, %c64], %25 {strides = array<i32>} : memref<2x8x72xf32, #tpu.memory_space<vmem>>, vector<2x8x8xf32>,
    %27 = vector.shape_cast %2 : vector<32x96xf32> to vector<1x32x96xf32>
    %28 = vector.broadcast %27 : vector<1x32x96xf32> to vector<2x32x96xf32>
    %29 = vector.shape_cast %6 : vector<32x96xf32> to vector<1x32x96xf32>
    %30 = vector.broadcast %29 : vector<1x32x96xf32> to vector<2x32x96xf32>
    %31 = vector.extract_strided_slice %15 {offsets = [0, 0, 0], sizes = [2, 1, 32], strides = [1, 1, 1]} : vector<2x8x96xf32> to vector<2x1x32xf32>
    %cst_27 = arith.constant 0.000000e+00 : f32
    %32 = vector.broadcast %cst_27 : f32 to vector<2x1x32xf32>
    %33 = arith.mulf %31, %32 : vector<2x1x32xf32>
    %34 = vector.extract_strided_slice %19 {offsets = [0, 0, 0], sizes = [2, 1, 32], strides = [1, 1, 1]} : vector<2x8x96xf32> to vector<2x1x32xf32>
    %cst_28 = arith.constant 0.000000e+00 : f32
    %35 = vector.broadcast %cst_28 : f32 to vector<2x1x32xf32>
    %36 = arith.mulf %34, %35 : vector<2x1x32xf32>
    "tpu.trace_start"() <{level = 10 : i32, message = "boh,bhk->bok"}> : () -> ()
    %cst_29 = arith.constant dense<0.000000e+00> : vector<2x1x96xf32>
    %37 = tpu.matmul %33, %28, %cst_29 {dimension_numbers = #tpu.dot_dimension_numbers<[2], [1], [1], [2], [0, 0, 0, 1, 1, 2], [0], [0]>} : vector<2x1x32xf32>, vector<2x32x96xf32>, vector<2x1x96xf32> -> vector<2x1x96xf32>
    "tpu.trace_stop"() : () -> ()
    %38 = vector.shape_cast %4 : vector<1x96xf32> to vector<1x1x96xf32>
    %39 = vector.broadcast %38 : vector<1x1x96xf32> to vector<2x1x96xf32>
    %40 = arith.addf %37, %39 : vector<2x1x96xf32>
    "tpu.trace_start"() <{level = 10 : i32, message = "boh,bhk->bok"}> : () -> ()
    %cst_30 = arith.constant dense<0.000000e+00> : vector<2x1x96xf32>
    %41 = tpu.matmul %36, %30, %cst_30 {dimension_numbers = #tpu.dot_dimension_numbers<[2], [1], [1], [2], [0, 0, 0, 1, 1, 2], [0], [0]>} : vector<2x1x32xf32>, vector<2x32x96xf32>, vector<2x1x96xf32> -> vector<2x1x96xf32>
    "tpu.trace_stop"() : () -> ()
    %42 = vector.shape_cast %8 : vector<1x96xf32> to vector<1x1x96xf32>
    %43 = vector.broadcast %42 : vector<1x1x96xf32> to vector<2x1x96xf32>
    %44 = arith.addf %41, %43 : vector<2x1x96xf32>
    %45 = vector.extract_strided_slice %15 {offsets = [0, 0, 0], sizes = [2, 1, 96], strides = [1, 1, 1]} : vector<2x8x96xf32> to vector<2x1x96xf32>
    %46 = vector.extract_strided_slice %45 {offsets = [0, 0, 0], sizes = [2, 1, 32], strides = [1, 1, 1]} : vector<2x1x96xf32> to vector<2x1x32xf32>
    %47 = vector.extract_strided_slice %40 {offsets = [0, 0, 0], sizes = [2, 1, 32], strides = [1, 1, 1]} : vector<2x1x96xf32> to vector<2x1x32xf32>
    %48 = arith.addf %46, %47 : vector<2x1x32xf32>
    %49 = arith.negf %48 : vector<2x1x32xf32>
    %50 = math.exp %49 : vector<2x1x32xf32>
    %cst_31 = arith.constant 1.000000e+00 : f32
    %51 = vector.broadcast %cst_31 : f32 to vector<2x1x32xf32>
    %52 = arith.addf %51, %50 : vector<2x1x32xf32>
    %53 = arith.divf %51, %52 : vector<2x1x32xf32>
    %54 = vector.extract_strided_slice %45 {offsets = [0, 0, 32], sizes = [2, 1, 32], strides = [1, 1, 1]} : vector<2x1x96xf32> to vector<2x1x32xf32>
    %55 = vector.extract_strided_slice %40 {offsets = [0, 0, 32], sizes = [2, 1, 32], strides = [1, 1, 1]} : vector<2x1x96xf32> to vector<2x1x32xf32>
    %56 = arith.addf %54, %55 : vector<2x1x32xf32>
    %57 = arith.negf %56 : vector<2x1x32xf32>
    %58 = math.exp %57 : vector<2x1x32xf32>
    %cst_32 = arith.constant 1.000000e+00 : f32
    %59 = vector.broadcast %cst_32 : f32 to vector<2x1x32xf32>
    %60 = arith.addf %59, %58 : vector<2x1x32xf32>
    %61 = arith.divf %59, %60 : vector<2x1x32xf32>
    %62 = vector.extract_strided_slice %45 {offsets = [0, 0, 64], sizes = [2, 1, 32], strides = [1, 1, 1]} : vector<2x1x96xf32> to vector<2x1x32xf32>
    %63 = vector.extract_strided_slice %40 {offsets = [0, 0, 64], sizes = [2, 1, 32], strides = [1, 1, 1]} : vector<2x1x96xf32> to vector<2x1x32xf32>
    %64 = arith.mulf %53, %63 : vector<2x1x32xf32>
    %65 = arith.addf %62, %64 : vector<2x1x32xf32>
    %66 = math.tanh %65 : vector<2x1x32xf32>
    %cst_33 = arith.constant 1.000000e+00 : f32
    %67 = vector.broadcast %cst_33 : f32 to vector<2x1x32xf32>
    %68 = arith.subf %67, %61 : vector<2x1x32xf32>
    %69 = arith.mulf %68, %66 : vector<2x1x32xf32>
    %70 = arith.mulf %61, %33 : vector<2x1x32xf32>
    %71 = arith.addf %69, %70 : vector<2x1x32xf32>
    %72 = vector.extract_strided_slice %19 {offsets = [0, 7, 0], sizes = [2, 1, 96], strides = [1, 1, 1]} : vector<2x8x96xf32> to vector<2x1x96xf32>
    %73 = vector.extract_strided_slice %72 {offsets = [0, 0, 0], sizes = [2, 1, 32], strides = [1, 1, 1]} : vector<2x1x96xf32> to vector<2x1x32xf32>
    %74 = vector.extract_strided_slice %44 {offsets = [0, 0, 0], sizes = [2, 1, 32], strides = [1, 1, 1]} : vector<2x1x96xf32> to vector<2x1x32xf32>
    %75 = arith.addf %73, %74 : vector<2x1x32xf32>
    %76 = arith.negf %75 : vector<2x1x32xf32>
    %77 = math.exp %76 : vector<2x1x32xf32>
    %cst_34 = arith.constant 1.000000e+00 : f32
    %78 = vector.broadcast %cst_34 : f32 to vector<2x1x32xf32>
    %79 = arith.addf %78, %77 : vector<2x1x32xf32>
    %80 = arith.divf %78, %79 : vector<2x1x32xf32>
    %81 = vector.extract_strided_slice %72 {offsets = [0, 0, 32], sizes = [2, 1, 32], strides = [1, 1, 1]} : vector<2x1x96xf32> to vector<2x1x32xf32>
    %82 = vector.extract_strided_slice %44 {offsets = [0, 0, 32], sizes = [2, 1, 32], strides = [1, 1, 1]} : vector<2x1x96xf32> to vector<2x1x32xf32>
    %83 = arith.addf %81, %82 : vector<2x1x32xf32>
    %84 = arith.negf %83 : vector<2x1x32xf32>
    %85 = math.exp %84 : vector<2x1x32xf32>
    %cst_35 = arith.constant 1.000000e+00 : f32
    %86 = vector.broadcast %cst_35 : f32 to vector<2x1x32xf32>
    %87 = arith.addf %86, %85 : vector<2x1x32xf32>
    %88 = arith.divf %86, %87 : vector<2x1x32xf32>
    %89 = vector.extract_strided_slice %72 {offsets = [0, 0, 64], sizes = [2, 1, 32], strides = [1, 1, 1]} : vector<2x1x96xf32> to vector<2x1x32xf32>
    %90 = vector.extract_strided_slice %44 {offsets = [0, 0, 64], sizes = [2, 1, 32], strides = [1, 1, 1]} : vector<2x1x96xf32> to vector<2x1x32xf32>
    %91 = arith.mulf %80, %90 : vector<2x1x32xf32>
    %92 = arith.addf %89, %91 : vector<2x1x32xf32>
    %93 = math.tanh %92 : vector<2x1x32xf32>
    %cst_36 = arith.constant 1.000000e+00 : f32
    %94 = vector.broadcast %cst_36 : f32 to vector<2x1x32xf32>
    %95 = arith.subf %94, %88 : vector<2x1x32xf32>
    %96 = arith.mulf %95, %93 : vector<2x1x32xf32>
    %97 = arith.mulf %88, %36 : vector<2x1x32xf32>
    %98 = arith.addf %96, %97 : vector<2x1x32xf32>
    %c0_37 = arith.constant 0 : index
    %c0_38 = arith.constant 0 : index
    %c0_39 = arith.constant 0 : index
    %99 = vector.load %arg22[%c0_37, %c0_38, %c0_39] : memref<2x8x72xf32, #tpu.memory_space<vmem>>, vector<2x1x32xf32>
    tpu.vector_store %arg22[%c0_37, %c0_38, %c0_39], %71 {strides = array<i32>} : memref<2x8x72xf32, #tpu.memory_space<vmem>>, vector<2x1x32xf32>,
    %c0_40 = arith.constant 0 : index
    %c7 = arith.constant 7 : index
    %c32 = arith.constant 32 : index
    %100 = vector.load %arg22[%c0_40, %c7, %c32] : memref<2x8x72xf32, #tpu.memory_space<vmem>>, vector<2x1x32xf32>
    tpu.vector_store %arg22[%c0_40, %c7, %c32], %98 {strides = array<i32>} : memref<2x8x72xf32, #tpu.memory_space<vmem>>, vector<2x1x32xf32>,
    "tpu.trace_start"() <{level = 10 : i32, message = "boh,bhk->bok"}> : () -> ()
    %cst_41 = arith.constant dense<0.000000e+00> : vector<2x1x96xf32>
    %101 = tpu.matmul %71, %28, %cst_41 {dimension_numbers = #tpu.dot_dimension_numbers<[2], [1], [1], [2], [0, 0, 0, 1, 1, 2], [0], [0]>} : vector<2x1x32xf32>, vector<2x32x96xf32>, vector<2x1x96xf32> -> vector<2x1x96xf32>
    "tpu.trace_stop"() : () -> ()
    %102 = vector.shape_cast %4 : vector<1x96xf32> to vector<1x1x96xf32>
    %103 = vector.broadcast %102 : vector<1x1x96xf32> to vector<2x1x96xf32>
    %104 = arith.addf %101, %103 : vector<2x1x96xf32>
    "tpu.trace_start"() <{level = 10 : i32, message = "boh,bhk->bok"}> : () -> ()
    %cst_42 = arith.constant dense<0.000000e+00> : vector<2x1x96xf32>
    %105 = tpu.matmul %98, %30, %cst_42 {dimension_numbers = #tpu.dot_dimension_numbers<[2], [1], [1], [2], [0, 0, 0, 1, 1, 2], [0], [0]>} : vector<2x1x32xf32>, vector<2x32x96xf32>, vector<2x1x96xf32> -> vector<2x1x96xf32>
    "tpu.trace_stop"() : () -> ()
    %106 = vector.shape_cast %8 : vector<1x96xf32> to vector<1x1x96xf32>
    %107 = vector.broadcast %106 : vector<1x1x96xf32> to vector<2x1x96xf32>
    %108 = arith.addf %105, %107 : vector<2x1x96xf32>
    %109 = vector.extract_strided_slice %15 {offsets = [0, 1, 0], sizes = [2, 1, 96], strides = [1, 1, 1]} : vector<2x8x96xf32> to vector<2x1x96xf32>
    %110 = vector.extract_strided_slice %109 {offsets = [0, 0, 0], sizes = [2, 1, 32], strides = [1, 1, 1]} : vector<2x1x96xf32> to vector<2x1x32xf32>
    %111 = vector.extract_strided_slice %104 {offsets = [0, 0, 0], sizes = [2, 1, 32], strides = [1, 1, 1]} : vector<2x1x96xf32> to vector<2x1x32xf32>
    %112 = arith.addf %110, %111 : vector<2x1x32xf32>
    %113 = arith.negf %112 : vector<2x1x32xf32>
    %114 = math.exp %113 : vector<2x1x32xf32>
    %cst_43 = arith.constant 1.000000e+00 : f32
    %115 = vector.broadcast %cst_43 : f32 to vector<2x1x32xf32>
    %116 = arith.addf %115, %114 : vector<2x1x32xf32>
    %117 = arith.divf %115, %116 : vector<2x1x32xf32>
    %118 = vector.extract_strided_slice %109 {offsets = [0, 0, 32], sizes = [2, 1, 32], strides = [1, 1, 1]} : vector<2x1x96xf32> to vector<2x1x32xf32>
    %119 = vector.extract_strided_slice %104 {offsets = [0, 0, 32], sizes = [2, 1, 32], strides = [1, 1, 1]} : vector<2x1x96xf32> to vector<2x1x32xf32>
    %120 = arith.addf %118, %119 : vector<2x1x32xf32>
    %121 = arith.negf %120 : vector<2x1x32xf32>
    %122 = math.exp %121 : vector<2x1x32xf32>
    %cst_44 = arith.constant 1.000000e+00 : f32
    %123 = vector.broadcast %cst_44 : f32 to vector<2x1x32xf32>
    %124 = arith.addf %123, %122 : vector<2x1x32xf32>
    %125 = arith.divf %123, %124 : vector<2x1x32xf32>
    %126 = vector.extract_strided_slice %109 {offsets = [0, 0, 64], sizes = [2, 1, 32], strides = [1, 1, 1]} : vector<2x1x96xf32> to vector<2x1x32xf32>
    %127 = vector.extract_strided_slice %104 {offsets = [0, 0, 64], sizes = [2, 1, 32], strides = [1, 1, 1]} : vector<2x1x96xf32> to vector<2x1x32xf32>
    %128 = arith.mulf %117, %127 : vector<2x1x32xf32>
    %129 = arith.addf %126, %128 : vector<2x1x32xf32>
    %130 = math.tanh %129 : vector<2x1x32xf32>
    %cst_45 = arith.constant 1.000000e+00 : f32
    %131 = vector.broadcast %cst_45 : f32 to vector<2x1x32xf32>
    %132 = arith.subf %131, %125 : vector<2x1x32xf32>
    %133 = arith.mulf %132, %130 : vector<2x1x32xf32>
    %134 = arith.mulf %125, %71 : vector<2x1x32xf32>
    %135 = arith.addf %133, %134 : vector<2x1x32xf32>
    %136 = vector.extract_strided_slice %19 {offsets = [0, 6, 0], sizes = [2, 1, 96], strides = [1, 1, 1]} : vector<2x8x96xf32> to vector<2x1x96xf32>
    %137 = vector.extract_strided_slice %136 {offsets = [0, 0, 0], sizes = [2, 1, 32], strides = [1, 1, 1]} : vector<2x1x96xf32> to vector<2x1x32xf32>
    %138 = vector.extract_strided_slice %108 {offsets = [0, 0, 0], sizes = [2, 1, 32], strides = [1, 1, 1]} : vector<2x1x96xf32> to vector<2x1x32xf32>
    %139 = arith.addf %137, %138 : vector<2x1x32xf32>
    %140 = arith.negf %139 : vector<2x1x32xf32>
    %141 = math.exp %140 : vector<2x1x32xf32>
    %cst_46 = arith.constant 1.000000e+00 : f32
    %142 = vector.broadcast %cst_46 : f32 to vector<2x1x32xf32>
    %143 = arith.addf %142, %141 : vector<2x1x32xf32>
    %144 = arith.divf %142, %143 : vector<2x1x32xf32>
    %145 = vector.extract_strided_slice %136 {offsets = [0, 0, 32], sizes = [2, 1, 32], strides = [1, 1, 1]} : vector<2x1x96xf32> to vector<2x1x32xf32>
    %146 = vector.extract_strided_slice %108 {offsets = [0, 0, 32], sizes = [2, 1, 32], strides = [1, 1, 1]} : vector<2x1x96xf32> to vector<2x1x32xf32>
    %147 = arith.addf %145, %146 : vector<2x1x32xf32>
    %148 = arith.negf %147 : vector<2x1x32xf32>
    %149 = math.exp %148 : vector<2x1x32xf32>
    %cst_47 = arith.constant 1.000000e+00 : f32
    %150 = vector.broadcast %cst_47 : f32 to vector<2x1x32xf32>
    %151 = arith.addf %150, %149 : vector<2x1x32xf32>
    %152 = arith.divf %150, %151 : vector<2x1x32xf32>
    %153 = vector.extract_strided_slice %136 {offsets = [0, 0, 64], sizes = [2, 1, 32], strides = [1, 1, 1]} : vector<2x1x96xf32> to vector<2x1x32xf32>
    %154 = vector.extract_strided_slice %108 {offsets = [0, 0, 64], sizes = [2, 1, 32], strides = [1, 1, 1]} : vector<2x1x96xf32> to vector<2x1x32xf32>
    %155 = arith.mulf %144, %154 : vector<2x1x32xf32>
    %156 = arith.addf %153, %155 : vector<2x1x32xf32>
    %157 = math.tanh %156 : vector<2x1x32xf32>
    %cst_48 = arith.constant 1.000000e+00 : f32
    %158 = vector.broadcast %cst_48 : f32 to vector<2x1x32xf32>
    %159 = arith.subf %158, %152 : vector<2x1x32xf32>
    %160 = arith.mulf %159, %157 : vector<2x1x32xf32>
    %161 = arith.mulf %152, %98 : vector<2x1x32xf32>
    %162 = arith.addf %160, %161 : vector<2x1x32xf32>
    %c0_49 = arith.constant 0 : index
    %c1 = arith.constant 1 : index
    %c0_50 = arith.constant 0 : index
    %163 = vector.load %arg22[%c0_49, %c1, %c0_50] : memref<2x8x72xf32, #tpu.memory_space<vmem>>, vector<2x1x32xf32>
    tpu.vector_store %arg22[%c0_49, %c1, %c0_50], %135 {strides = array<i32>} : memref<2x8x72xf32, #tpu.memory_space<vmem>>, vector<2x1x32xf32>,
    %c0_51 = arith.constant 0 : index
    %c6 = arith.constant 6 : index
    %c32_52 = arith.constant 32 : index
    %164 = vector.load %arg22[%c0_51, %c6, %c32_52] : memref<2x8x72xf32, #tpu.memory_space<vmem>>, vector<2x1x32xf32>
    tpu.vector_store %arg22[%c0_51, %c6, %c32_52], %162 {strides = array<i32>} : memref<2x8x72xf32, #tpu.memory_space<vmem>>, vector<2x1x32xf32>,
    "tpu.trace_start"() <{level = 10 : i32, message = "boh,bhk->bok"}> : () -> ()
    %cst_53 = arith.constant dense<0.000000e+00> : vector<2x1x96xf32>
    %165 = tpu.matmul %135, %28, %cst_53 {dimension_numbers = #tpu.dot_dimension_numbers<[2], [1], [1], [2], [0, 0, 0, 1, 1, 2], [0], [0]>} : vector<2x1x32xf32>, vector<2x32x96xf32>, vector<2x1x96xf32> -> vector<2x1x96xf32>
    "tpu.trace_stop"() : () -> ()
    %166 = vector.shape_cast %4 : vector<1x96xf32> to vector<1x1x96xf32>
    %167 = vector.broadcast %166 : vector<1x1x96xf32> to vector<2x1x96xf32>
    %168 = arith.addf %165, %167 : vector<2x1x96xf32>
    "tpu.trace_start"() <{level = 10 : i32, message = "boh,bhk->bok"}> : () -> ()
    %cst_54 = arith.constant dense<0.000000e+00> : vector<2x1x96xf32>
    %169 = tpu.matmul %162, %30, %cst_54 {dimension_numbers = #tpu.dot_dimension_numbers<[2], [1], [1], [2], [0, 0, 0, 1, 1, 2], [0], [0]>} : vector<2x1x32xf32>, vector<2x32x96xf32>, vector<2x1x96xf32> -> vector<2x1x96xf32>
    "tpu.trace_stop"() : () -> ()
    %170 = vector.shape_cast %8 : vector<1x96xf32> to vector<1x1x96xf32>
    %171 = vector.broadcast %170 : vector<1x1x96xf32> to vector<2x1x96xf32>
    %172 = arith.addf %169, %171 : vector<2x1x96xf32>
    %173 = vector.extract_strided_slice %15 {offsets = [0, 2, 0], sizes = [2, 1, 96], strides = [1, 1, 1]} : vector<2x8x96xf32> to vector<2x1x96xf32>
    %174 = vector.extract_strided_slice %173 {offsets = [0, 0, 0], sizes = [2, 1, 32], strides = [1, 1, 1]} : vector<2x1x96xf32> to vector<2x1x32xf32>
    %175 = vector.extract_strided_slice %168 {offsets = [0, 0, 0], sizes = [2, 1, 32], strides = [1, 1, 1]} : vector<2x1x96xf32> to vector<2x1x32xf32>
    %176 = arith.addf %174, %175 : vector<2x1x32xf32>
    %177 = arith.negf %176 : vector<2x1x32xf32>
    %178 = math.exp %177 : vector<2x1x32xf32>
    %cst_55 = arith.constant 1.000000e+00 : f32
    %179 = vector.broadcast %cst_55 : f32 to vector<2x1x32xf32>
    %180 = arith.addf %179, %178 : vector<2x1x32xf32>
    %181 = arith.divf %179, %180 : vector<2x1x32xf32>
    %182 = vector.extract_strided_slice %173 {offsets = [0, 0, 32], sizes = [2, 1, 32], strides = [1, 1, 1]} : vector<2x1x96xf32> to vector<2x1x32xf32>
    %183 = vector.extract_strided_slice %168 {offsets = [0, 0, 32], sizes = [2, 1, 32], strides = [1, 1, 1]} : vector<2x1x96xf32> to vector<2x1x32xf32>
    %184 = arith.addf %182, %183 : vector<2x1x32xf32>
    %185 = arith.negf %184 : vector<2x1x32xf32>
    %186 = math.exp %185 : vector<2x1x32xf32>
    %cst_56 = arith.constant 1.000000e+00 : f32
    %187 = vector.broadcast %cst_56 : f32 to vector<2x1x32xf32>
    %188 = arith.addf %187, %186 : vector<2x1x32xf32>
    %189 = arith.divf %187, %188 : vector<2x1x32xf32>
    %190 = vector.extract_strided_slice %173 {offsets = [0, 0, 64], sizes = [2, 1, 32], strides = [1, 1, 1]} : vector<2x1x96xf32> to vector<2x1x32xf32>
    %191 = vector.extract_strided_slice %168 {offsets = [0, 0, 64], sizes = [2, 1, 32], strides = [1, 1, 1]} : vector<2x1x96xf32> to vector<2x1x32xf32>
    %192 = arith.mulf %181, %191 : vector<2x1x32xf32>
    %193 = arith.addf %190, %192 : vector<2x1x32xf32>
    %194 = math.tanh %193 : vector<2x1x32xf32>
    %cst_57 = arith.constant 1.000000e+00 : f32
    %195 = vector.broadcast %cst_57 : f32 to vector<2x1x32xf32>
    %196 = arith.subf %195, %189 : vector<2x1x32xf32>
    %197 = arith.mulf %196, %194 : vector<2x1x32xf32>
    %198 = arith.mulf %189, %135 : vector<2x1x32xf32>
    %199 = arith.addf %197, %198 : vector<2x1x32xf32>
    %200 = vector.extract_strided_slice %19 {offsets = [0, 5, 0], sizes = [2, 1, 96], strides = [1, 1, 1]} : vector<2x8x96xf32> to vector<2x1x96xf32>
    %201 = vector.extract_strided_slice %200 {offsets = [0, 0, 0], sizes = [2, 1, 32], strides = [1, 1, 1]} : vector<2x1x96xf32> to vector<2x1x32xf32>
    %202 = vector.extract_strided_slice %172 {offsets = [0, 0, 0], sizes = [2, 1, 32], strides = [1, 1, 1]} : vector<2x1x96xf32> to vector<2x1x32xf32>
    %203 = arith.addf %201, %202 : vector<2x1x32xf32>
    %204 = arith.negf %203 : vector<2x1x32xf32>
    %205 = math.exp %204 : vector<2x1x32xf32>
    %cst_58 = arith.constant 1.000000e+00 : f32
    %206 = vector.broadcast %cst_58 : f32 to vector<2x1x32xf32>
    %207 = arith.addf %206, %205 : vector<2x1x32xf32>
    %208 = arith.divf %206, %207 : vector<2x1x32xf32>
    %209 = vector.extract_strided_slice %200 {offsets = [0, 0, 32], sizes = [2, 1, 32], strides = [1, 1, 1]} : vector<2x1x96xf32> to vector<2x1x32xf32>
    %210 = vector.extract_strided_slice %172 {offsets = [0, 0, 32], sizes = [2, 1, 32], strides = [1, 1, 1]} : vector<2x1x96xf32> to vector<2x1x32xf32>
    %211 = arith.addf %209, %210 : vector<2x1x32xf32>
    %212 = arith.negf %211 : vector<2x1x32xf32>
    %213 = math.exp %212 : vector<2x1x32xf32>
    %cst_59 = arith.constant 1.000000e+00 : f32
    %214 = vector.broadcast %cst_59 : f32 to vector<2x1x32xf32>
    %215 = arith.addf %214, %213 : vector<2x1x32xf32>
    %216 = arith.divf %214, %215 : vector<2x1x32xf32>
    %217 = vector.extract_strided_slice %200 {offsets = [0, 0, 64], sizes = [2, 1, 32], strides = [1, 1, 1]} : vector<2x1x96xf32> to vector<2x1x32xf32>
    %218 = vector.extract_strided_slice %172 {offsets = [0, 0, 64], sizes = [2, 1, 32], strides = [1, 1, 1]} : vector<2x1x96xf32> to vector<2x1x32xf32>
    %219 = arith.mulf %208, %218 : vector<2x1x32xf32>
    %220 = arith.addf %217, %219 : vector<2x1x32xf32>
    %221 = math.tanh %220 : vector<2x1x32xf32>
    %cst_60 = arith.constant 1.000000e+00 : f32
    %222 = vector.broadcast %cst_60 : f32 to vector<2x1x32xf32>
    %223 = arith.subf %222, %216 : vector<2x1x32xf32>
    %224 = arith.mulf %223, %221 : vector<2x1x32xf32>
    %225 = arith.mulf %216, %162 : vector<2x1x32xf32>
    %226 = arith.addf %224, %225 : vector<2x1x32xf32>
    %c0_61 = arith.constant 0 : index
    %c2 = arith.constant 2 : index
    %c0_62 = arith.constant 0 : index
    %227 = vector.load %arg22[%c0_61, %c2, %c0_62] : memref<2x8x72xf32, #tpu.memory_space<vmem>>, vector<2x1x32xf32>
    tpu.vector_store %arg22[%c0_61, %c2, %c0_62], %199 {strides = array<i32>} : memref<2x8x72xf32, #tpu.memory_space<vmem>>, vector<2x1x32xf32>,
    %c0_63 = arith.constant 0 : index
    %c5 = arith.constant 5 : index
    %c32_64 = arith.constant 32 : index
    %228 = vector.load %arg22[%c0_63, %c5, %c32_64] : memref<2x8x72xf32, #tpu.memory_space<vmem>>, vector<2x1x32xf32>
    tpu.vector_store %arg22[%c0_63, %c5, %c32_64], %226 {strides = array<i32>} : memref<2x8x72xf32, #tpu.memory_space<vmem>>, vector<2x1x32xf32>,
    "tpu.trace_start"() <{level = 10 : i32, message = "boh,bhk->bok"}> : () -> ()
    %cst_65 = arith.constant dense<0.000000e+00> : vector<2x1x96xf32>
    %229 = tpu.matmul %199, %28, %cst_65 {dimension_numbers = #tpu.dot_dimension_numbers<[2], [1], [1], [2], [0, 0, 0, 1, 1, 2], [0], [0]>} : vector<2x1x32xf32>, vector<2x32x96xf32>, vector<2x1x96xf32> -> vector<2x1x96xf32>
    "tpu.trace_stop"() : () -> ()
    %230 = vector.shape_cast %4 : vector<1x96xf32> to vector<1x1x96xf32>
    %231 = vector.broadcast %230 : vector<1x1x96xf32> to vector<2x1x96xf32>
    %232 = arith.addf %229, %231 : vector<2x1x96xf32>
    "tpu.trace_start"() <{level = 10 : i32, message = "boh,bhk->bok"}> : () -> ()
    %cst_66 = arith.constant dense<0.000000e+00> : vector<2x1x96xf32>
    %233 = tpu.matmul %226, %30, %cst_66 {dimension_numbers = #tpu.dot_dimension_numbers<[2], [1], [1], [2], [0, 0, 0, 1, 1, 2], [0], [0]>} : vector<2x1x32xf32>, vector<2x32x96xf32>, vector<2x1x96xf32> -> vector<2x1x96xf32>
    "tpu.trace_stop"() : () -> ()
    %234 = vector.shape_cast %8 : vector<1x96xf32> to vector<1x1x96xf32>
    %235 = vector.broadcast %234 : vector<1x1x96xf32> to vector<2x1x96xf32>
    %236 = arith.addf %233, %235 : vector<2x1x96xf32>
    %237 = vector.extract_strided_slice %15 {offsets = [0, 3, 0], sizes = [2, 1, 96], strides = [1, 1, 1]} : vector<2x8x96xf32> to vector<2x1x96xf32>
    %238 = vector.extract_strided_slice %237 {offsets = [0, 0, 0], sizes = [2, 1, 32], strides = [1, 1, 1]} : vector<2x1x96xf32> to vector<2x1x32xf32>
    %239 = vector.extract_strided_slice %232 {offsets = [0, 0, 0], sizes = [2, 1, 32], strides = [1, 1, 1]} : vector<2x1x96xf32> to vector<2x1x32xf32>
    %240 = arith.addf %238, %239 : vector<2x1x32xf32>
    %241 = arith.negf %240 : vector<2x1x32xf32>
    %242 = math.exp %241 : vector<2x1x32xf32>
    %cst_67 = arith.constant 1.000000e+00 : f32
    %243 = vector.broadcast %cst_67 : f32 to vector<2x1x32xf32>
    %244 = arith.addf %243, %242 : vector<2x1x32xf32>
    %245 = arith.divf %243, %244 : vector<2x1x32xf32>
    %246 = vector.extract_strided_slice %237 {offsets = [0, 0, 32], sizes = [2, 1, 32], strides = [1, 1, 1]} : vector<2x1x96xf32> to vector<2x1x32xf32>
    %247 = vector.extract_strided_slice %232 {offsets = [0, 0, 32], sizes = [2, 1, 32], strides = [1, 1, 1]} : vector<2x1x96xf32> to vector<2x1x32xf32>
    %248 = arith.addf %246, %247 : vector<2x1x32xf32>
    %249 = arith.negf %248 : vector<2x1x32xf32>
    %250 = math.exp %249 : vector<2x1x32xf32>
    %cst_68 = arith.constant 1.000000e+00 : f32
    %251 = vector.broadcast %cst_68 : f32 to vector<2x1x32xf32>
    %252 = arith.addf %251, %250 : vector<2x1x32xf32>
    %253 = arith.divf %251, %252 : vector<2x1x32xf32>
    %254 = vector.extract_strided_slice %237 {offsets = [0, 0, 64], sizes = [2, 1, 32], strides = [1, 1, 1]} : vector<2x1x96xf32> to vector<2x1x32xf32>
    %255 = vector.extract_strided_slice %232 {offsets = [0, 0, 64], sizes = [2, 1, 32], strides = [1, 1, 1]} : vector<2x1x96xf32> to vector<2x1x32xf32>
    %256 = arith.mulf %245, %255 : vector<2x1x32xf32>
    %257 = arith.addf %254, %256 : vector<2x1x32xf32>
    %258 = math.tanh %257 : vector<2x1x32xf32>
    %cst_69 = arith.constant 1.000000e+00 : f32
    %259 = vector.broadcast %cst_69 : f32 to vector<2x1x32xf32>
    %260 = arith.subf %259, %253 : vector<2x1x32xf32>
    %261 = arith.mulf %260, %258 : vector<2x1x32xf32>
    %262 = arith.mulf %253, %199 : vector<2x1x32xf32>
    %263 = arith.addf %261, %262 : vector<2x1x32xf32>
    %264 = vector.extract_strided_slice %19 {offsets = [0, 4, 0], sizes = [2, 1, 96], strides = [1, 1, 1]} : vector<2x8x96xf32> to vector<2x1x96xf32>
    %265 = vector.extract_strided_slice %264 {offsets = [0, 0, 0], sizes = [2, 1, 32], strides = [1, 1, 1]} : vector<2x1x96xf32> to vector<2x1x32xf32>
    %266 = vector.extract_strided_slice %236 {offsets = [0, 0, 0], sizes = [2, 1, 32], strides = [1, 1, 1]} : vector<2x1x96xf32> to vector<2x1x32xf32>
    %267 = arith.addf %265, %266 : vector<2x1x32xf32>
    %268 = arith.negf %267 : vector<2x1x32xf32>
    %269 = math.exp %268 : vector<2x1x32xf32>
    %cst_70 = arith.constant 1.000000e+00 : f32
    %270 = vector.broadcast %cst_70 : f32 to vector<2x1x32xf32>
    %271 = arith.addf %270, %269 : vector<2x1x32xf32>
    %272 = arith.divf %270, %271 : vector<2x1x32xf32>
    %273 = vector.extract_strided_slice %264 {offsets = [0, 0, 32], sizes = [2, 1, 32], strides = [1, 1, 1]} : vector<2x1x96xf32> to vector<2x1x32xf32>
    %274 = vector.extract_strided_slice %236 {offsets = [0, 0, 32], sizes = [2, 1, 32], strides = [1, 1, 1]} : vector<2x1x96xf32> to vector<2x1x32xf32>
    %275 = arith.addf %273, %274 : vector<2x1x32xf32>
    %276 = arith.negf %275 : vector<2x1x32xf32>
    %277 = math.exp %276 : vector<2x1x32xf32>
    %cst_71 = arith.constant 1.000000e+00 : f32
    %278 = vector.broadcast %cst_71 : f32 to vector<2x1x32xf32>
    %279 = arith.addf %278, %277 : vector<2x1x32xf32>
    %280 = arith.divf %278, %279 : vector<2x1x32xf32>
    %281 = vector.extract_strided_slice %264 {offsets = [0, 0, 64], sizes = [2, 1, 32], strides = [1, 1, 1]} : vector<2x1x96xf32> to vector<2x1x32xf32>
    %282 = vector.extract_strided_slice %236 {offsets = [0, 0, 64], sizes = [2, 1, 32], strides = [1, 1, 1]} : vector<2x1x96xf32> to vector<2x1x32xf32>
    %283 = arith.mulf %272, %282 : vector<2x1x32xf32>
    %284 = arith.addf %281, %283 : vector<2x1x32xf32>
    %285 = math.tanh %284 : vector<2x1x32xf32>
    %cst_72 = arith.constant 1.000000e+00 : f32
    %286 = vector.broadcast %cst_72 : f32 to vector<2x1x32xf32>
    %287 = arith.subf %286, %280 : vector<2x1x32xf32>
    %288 = arith.mulf %287, %285 : vector<2x1x32xf32>
    %289 = arith.mulf %280, %226 : vector<2x1x32xf32>
    %290 = arith.addf %288, %289 : vector<2x1x32xf32>
    %c0_73 = arith.constant 0 : index
    %c3 = arith.constant 3 : index
    %c0_74 = arith.constant 0 : index
    %291 = vector.load %arg22[%c0_73, %c3, %c0_74] : memref<2x8x72xf32, #tpu.memory_space<vmem>>, vector<2x1x32xf32>
    tpu.vector_store %arg22[%c0_73, %c3, %c0_74], %263 {strides = array<i32>} : memref<2x8x72xf32, #tpu.memory_space<vmem>>, vector<2x1x32xf32>,
    %c0_75 = arith.constant 0 : index
    %c4 = arith.constant 4 : index
    %c32_76 = arith.constant 32 : index
    %292 = vector.load %arg22[%c0_75, %c4, %c32_76] : memref<2x8x72xf32, #tpu.memory_space<vmem>>, vector<2x1x32xf32>
    tpu.vector_store %arg22[%c0_75, %c4, %c32_76], %290 {strides = array<i32>} : memref<2x8x72xf32, #tpu.memory_space<vmem>>, vector<2x1x32xf32>,
    "tpu.trace_start"() <{level = 10 : i32, message = "boh,bhk->bok"}> : () -> ()
    %cst_77 = arith.constant dense<0.000000e+00> : vector<2x1x96xf32>
    %293 = tpu.matmul %263, %28, %cst_77 {dimension_numbers = #tpu.dot_dimension_numbers<[2], [1], [1], [2], [0, 0, 0, 1, 1, 2], [0], [0]>} : vector<2x1x32xf32>, vector<2x32x96xf32>, vector<2x1x96xf32> -> vector<2x1x96xf32>
    "tpu.trace_stop"() : () -> ()
    %294 = vector.shape_cast %4 : vector<1x96xf32> to vector<1x1x96xf32>
    %295 = vector.broadcast %294 : vector<1x1x96xf32> to vector<2x1x96xf32>
    %296 = arith.addf %293, %295 : vector<2x1x96xf32>
    "tpu.trace_start"() <{level = 10 : i32, message = "boh,bhk->bok"}> : () -> ()
    %cst_78 = arith.constant dense<0.000000e+00> : vector<2x1x96xf32>
    %297 = tpu.matmul %290, %30, %cst_78 {dimension_numbers = #tpu.dot_dimension_numbers<[2], [1], [1], [2], [0, 0, 0, 1, 1, 2], [0], [0]>} : vector<2x1x32xf32>, vector<2x32x96xf32>, vector<2x1x96xf32> -> vector<2x1x96xf32>
    "tpu.trace_stop"() : () -> ()
    %298 = vector.shape_cast %8 : vector<1x96xf32> to vector<1x1x96xf32>
    %299 = vector.broadcast %298 : vector<1x1x96xf32> to vector<2x1x96xf32>
    %300 = arith.addf %297, %299 : vector<2x1x96xf32>
    %301 = vector.extract_strided_slice %15 {offsets = [0, 4, 0], sizes = [2, 1, 96], strides = [1, 1, 1]} : vector<2x8x96xf32> to vector<2x1x96xf32>
    %302 = vector.extract_strided_slice %301 {offsets = [0, 0, 0], sizes = [2, 1, 32], strides = [1, 1, 1]} : vector<2x1x96xf32> to vector<2x1x32xf32>
    %303 = vector.extract_strided_slice %296 {offsets = [0, 0, 0], sizes = [2, 1, 32], strides = [1, 1, 1]} : vector<2x1x96xf32> to vector<2x1x32xf32>
    %304 = arith.addf %302, %303 : vector<2x1x32xf32>
    %305 = arith.negf %304 : vector<2x1x32xf32>
    %306 = math.exp %305 : vector<2x1x32xf32>
    %cst_79 = arith.constant 1.000000e+00 : f32
    %307 = vector.broadcast %cst_79 : f32 to vector<2x1x32xf32>
    %308 = arith.addf %307, %306 : vector<2x1x32xf32>
    %309 = arith.divf %307, %308 : vector<2x1x32xf32>
    %310 = vector.extract_strided_slice %301 {offsets = [0, 0, 32], sizes = [2, 1, 32], strides = [1, 1, 1]} : vector<2x1x96xf32> to vector<2x1x32xf32>
    %311 = vector.extract_strided_slice %296 {offsets = [0, 0, 32], sizes = [2, 1, 32], strides = [1, 1, 1]} : vector<2x1x96xf32> to vector<2x1x32xf32>
    %312 = arith.addf %310, %311 : vector<2x1x32xf32>
    %313 = arith.negf %312 : vector<2x1x32xf32>
    %314 = math.exp %313 : vector<2x1x32xf32>
    %cst_80 = arith.constant 1.000000e+00 : f32
    %315 = vector.broadcast %cst_80 : f32 to vector<2x1x32xf32>
    %316 = arith.addf %315, %314 : vector<2x1x32xf32>
    %317 = arith.divf %315, %316 : vector<2x1x32xf32>
    %318 = vector.extract_strided_slice %301 {offsets = [0, 0, 64], sizes = [2, 1, 32], strides = [1, 1, 1]} : vector<2x1x96xf32> to vector<2x1x32xf32>
    %319 = vector.extract_strided_slice %296 {offsets = [0, 0, 64], sizes = [2, 1, 32], strides = [1, 1, 1]} : vector<2x1x96xf32> to vector<2x1x32xf32>
    %320 = arith.mulf %309, %319 : vector<2x1x32xf32>
    %321 = arith.addf %318, %320 : vector<2x1x32xf32>
    %322 = math.tanh %321 : vector<2x1x32xf32>
    %cst_81 = arith.constant 1.000000e+00 : f32
    %323 = vector.broadcast %cst_81 : f32 to vector<2x1x32xf32>
    %324 = arith.subf %323, %317 : vector<2x1x32xf32>
    %325 = arith.mulf %324, %322 : vector<2x1x32xf32>
    %326 = arith.mulf %317, %263 : vector<2x1x32xf32>
    %327 = arith.addf %325, %326 : vector<2x1x32xf32>
    %328 = vector.extract_strided_slice %19 {offsets = [0, 3, 0], sizes = [2, 1, 96], strides = [1, 1, 1]} : vector<2x8x96xf32> to vector<2x1x96xf32>
    %329 = vector.extract_strided_slice %328 {offsets = [0, 0, 0], sizes = [2, 1, 32], strides = [1, 1, 1]} : vector<2x1x96xf32> to vector<2x1x32xf32>
    %330 = vector.extract_strided_slice %300 {offsets = [0, 0, 0], sizes = [2, 1, 32], strides = [1, 1, 1]} : vector<2x1x96xf32> to vector<2x1x32xf32>
    %331 = arith.addf %329, %330 : vector<2x1x32xf32>
    %332 = arith.negf %331 : vector<2x1x32xf32>
    %333 = math.exp %332 : vector<2x1x32xf32>
    %cst_82 = arith.constant 1.000000e+00 : f32
    %334 = vector.broadcast %cst_82 : f32 to vector<2x1x32xf32>
    %335 = arith.addf %334, %333 : vector<2x1x32xf32>
    %336 = arith.divf %334, %335 : vector<2x1x32xf32>
    %337 = vector.extract_strided_slice %328 {offsets = [0, 0, 32], sizes = [2, 1, 32], strides = [1, 1, 1]} : vector<2x1x96xf32> to vector<2x1x32xf32>
    %338 = vector.extract_strided_slice %300 {offsets = [0, 0, 32], sizes = [2, 1, 32], strides = [1, 1, 1]} : vector<2x1x96xf32> to vector<2x1x32xf32>
    %339 = arith.addf %337, %338 : vector<2x1x32xf32>
    %340 = arith.negf %339 : vector<2x1x32xf32>
    %341 = math.exp %340 : vector<2x1x32xf32>
    %cst_83 = arith.constant 1.000000e+00 : f32
    %342 = vector.broadcast %cst_83 : f32 to vector<2x1x32xf32>
    %343 = arith.addf %342, %341 : vector<2x1x32xf32>
    %344 = arith.divf %342, %343 : vector<2x1x32xf32>
    %345 = vector.extract_strided_slice %328 {offsets = [0, 0, 64], sizes = [2, 1, 32], strides = [1, 1, 1]} : vector<2x1x96xf32> to vector<2x1x32xf32>
    %346 = vector.extract_strided_slice %300 {offsets = [0, 0, 64], sizes = [2, 1, 32], strides = [1, 1, 1]} : vector<2x1x96xf32> to vector<2x1x32xf32>
    %347 = arith.mulf %336, %346 : vector<2x1x32xf32>
    %348 = arith.addf %345, %347 : vector<2x1x32xf32>
    %349 = math.tanh %348 : vector<2x1x32xf32>
    %cst_84 = arith.constant 1.000000e+00 : f32
    %350 = vector.broadcast %cst_84 : f32 to vector<2x1x32xf32>
    %351 = arith.subf %350, %344 : vector<2x1x32xf32>
    %352 = arith.mulf %351, %349 : vector<2x1x32xf32>
    %353 = arith.mulf %344, %290 : vector<2x1x32xf32>
    %354 = arith.addf %352, %353 : vector<2x1x32xf32>
    %c0_85 = arith.constant 0 : index
    %c4_86 = arith.constant 4 : index
    %c0_87 = arith.constant 0 : index
    %355 = vector.load %arg22[%c0_85, %c4_86, %c0_87] : memref<2x8x72xf32, #tpu.memory_space<vmem>>, vector<2x1x32xf32>
    tpu.vector_store %arg22[%c0_85, %c4_86, %c0_87], %327 {strides = array<i32>} : memref<2x8x72xf32, #tpu.memory_space<vmem>>, vector<2x1x32xf32>,
    %c0_88 = arith.constant 0 : index
    %c3_89 = arith.constant 3 : index
    %c32_90 = arith.constant 32 : index
    %356 = vector.load %arg22[%c0_88, %c3_89, %c32_90] : memref<2x8x72xf32, #tpu.memory_space<vmem>>, vector<2x1x32xf32>
    tpu.vector_store %arg22[%c0_88, %c3_89, %c32_90], %354 {strides = array<i32>} : memref<2x8x72xf32, #tpu.memory_space<vmem>>, vector<2x1x32xf32>,
    "tpu.trace_start"() <{level = 10 : i32, message = "boh,bhk->bok"}> : () -> ()
    %cst_91 = arith.constant dense<0.000000e+00> : vector<2x1x96xf32>
    %357 = tpu.matmul %327, %28, %cst_91 {dimension_numbers = #tpu.dot_dimension_numbers<[2], [1], [1], [2], [0, 0, 0, 1, 1, 2], [0], [0]>} : vector<2x1x32xf32>, vector<2x32x96xf32>, vector<2x1x96xf32> -> vector<2x1x96xf32>
    "tpu.trace_stop"() : () -> ()
    %358 = vector.shape_cast %4 : vector<1x96xf32> to vector<1x1x96xf32>
    %359 = vector.broadcast %358 : vector<1x1x96xf32> to vector<2x1x96xf32>
    %360 = arith.addf %357, %359 : vector<2x1x96xf32>
    "tpu.trace_start"() <{level = 10 : i32, message = "boh,bhk->bok"}> : () -> ()
    %cst_92 = arith.constant dense<0.000000e+00> : vector<2x1x96xf32>
    %361 = tpu.matmul %354, %30, %cst_92 {dimension_numbers = #tpu.dot_dimension_numbers<[2], [1], [1], [2], [0, 0, 0, 1, 1, 2], [0], [0]>} : vector<2x1x32xf32>, vector<2x32x96xf32>, vector<2x1x96xf32> -> vector<2x1x96xf32>
    "tpu.trace_stop"() : () -> ()
    %362 = vector.shape_cast %8 : vector<1x96xf32> to vector<1x1x96xf32>
    %363 = vector.broadcast %362 : vector<1x1x96xf32> to vector<2x1x96xf32>
    %364 = arith.addf %361, %363 : vector<2x1x96xf32>
    %365 = vector.extract_strided_slice %15 {offsets = [0, 5, 0], sizes = [2, 1, 96], strides = [1, 1, 1]} : vector<2x8x96xf32> to vector<2x1x96xf32>
    %366 = vector.extract_strided_slice %365 {offsets = [0, 0, 0], sizes = [2, 1, 32], strides = [1, 1, 1]} : vector<2x1x96xf32> to vector<2x1x32xf32>
    %367 = vector.extract_strided_slice %360 {offsets = [0, 0, 0], sizes = [2, 1, 32], strides = [1, 1, 1]} : vector<2x1x96xf32> to vector<2x1x32xf32>
    %368 = arith.addf %366, %367 : vector<2x1x32xf32>
    %369 = arith.negf %368 : vector<2x1x32xf32>
    %370 = math.exp %369 : vector<2x1x32xf32>
    %cst_93 = arith.constant 1.000000e+00 : f32
    %371 = vector.broadcast %cst_93 : f32 to vector<2x1x32xf32>
    %372 = arith.addf %371, %370 : vector<2x1x32xf32>
    %373 = arith.divf %371, %372 : vector<2x1x32xf32>
    %374 = vector.extract_strided_slice %365 {offsets = [0, 0, 32], sizes = [2, 1, 32], strides = [1, 1, 1]} : vector<2x1x96xf32> to vector<2x1x32xf32>
    %375 = vector.extract_strided_slice %360 {offsets = [0, 0, 32], sizes = [2, 1, 32], strides = [1, 1, 1]} : vector<2x1x96xf32> to vector<2x1x32xf32>
    %376 = arith.addf %374, %375 : vector<2x1x32xf32>
    %377 = arith.negf %376 : vector<2x1x32xf32>
    %378 = math.exp %377 : vector<2x1x32xf32>
    %cst_94 = arith.constant 1.000000e+00 : f32
    %379 = vector.broadcast %cst_94 : f32 to vector<2x1x32xf32>
    %380 = arith.addf %379, %378 : vector<2x1x32xf32>
    %381 = arith.divf %379, %380 : vector<2x1x32xf32>
    %382 = vector.extract_strided_slice %365 {offsets = [0, 0, 64], sizes = [2, 1, 32], strides = [1, 1, 1]} : vector<2x1x96xf32> to vector<2x1x32xf32>
    %383 = vector.extract_strided_slice %360 {offsets = [0, 0, 64], sizes = [2, 1, 32], strides = [1, 1, 1]} : vector<2x1x96xf32> to vector<2x1x32xf32>
    %384 = arith.mulf %373, %383 : vector<2x1x32xf32>
    %385 = arith.addf %382, %384 : vector<2x1x32xf32>
    %386 = math.tanh %385 : vector<2x1x32xf32>
    %cst_95 = arith.constant 1.000000e+00 : f32
    %387 = vector.broadcast %cst_95 : f32 to vector<2x1x32xf32>
    %388 = arith.subf %387, %381 : vector<2x1x32xf32>
    %389 = arith.mulf %388, %386 : vector<2x1x32xf32>
    %390 = arith.mulf %381, %327 : vector<2x1x32xf32>
    %391 = arith.addf %389, %390 : vector<2x1x32xf32>
    %392 = vector.extract_strided_slice %19 {offsets = [0, 2, 0], sizes = [2, 1, 96], strides = [1, 1, 1]} : vector<2x8x96xf32> to vector<2x1x96xf32>
    %393 = vector.extract_strided_slice %392 {offsets = [0, 0, 0], sizes = [2, 1, 32], strides = [1, 1, 1]} : vector<2x1x96xf32> to vector<2x1x32xf32>
    %394 = vector.extract_strided_slice %364 {offsets = [0, 0, 0], sizes = [2, 1, 32], strides = [1, 1, 1]} : vector<2x1x96xf32> to vector<2x1x32xf32>
    %395 = arith.addf %393, %394 : vector<2x1x32xf32>
    %396 = arith.negf %395 : vector<2x1x32xf32>
    %397 = math.exp %396 : vector<2x1x32xf32>
    %cst_96 = arith.constant 1.000000e+00 : f32
    %398 = vector.broadcast %cst_96 : f32 to vector<2x1x32xf32>
    %399 = arith.addf %398, %397 : vector<2x1x32xf32>
    %400 = arith.divf %398, %399 : vector<2x1x32xf32>
    %401 = vector.extract_strided_slice %392 {offsets = [0, 0, 32], sizes = [2, 1, 32], strides = [1, 1, 1]} : vector<2x1x96xf32> to vector<2x1x32xf32>
    %402 = vector.extract_strided_slice %364 {offsets = [0, 0, 32], sizes = [2, 1, 32], strides = [1, 1, 1]} : vector<2x1x96xf32> to vector<2x1x32xf32>
    %403 = arith.addf %401, %402 : vector<2x1x32xf32>
    %404 = arith.negf %403 : vector<2x1x32xf32>
    %405 = math.exp %404 : vector<2x1x32xf32>
    %cst_97 = arith.constant 1.000000e+00 : f32
    %406 = vector.broadcast %cst_97 : f32 to vector<2x1x32xf32>
    %407 = arith.addf %406, %405 : vector<2x1x32xf32>
    %408 = arith.divf %406, %407 : vector<2x1x32xf32>
    %409 = vector.extract_strided_slice %392 {offsets = [0, 0, 64], sizes = [2, 1, 32], strides = [1, 1, 1]} : vector<2x1x96xf32> to vector<2x1x32xf32>
    %410 = vector.extract_strided_slice %364 {offsets = [0, 0, 64], sizes = [2, 1, 32], strides = [1, 1, 1]} : vector<2x1x96xf32> to vector<2x1x32xf32>
    %411 = arith.mulf %400, %410 : vector<2x1x32xf32>
    %412 = arith.addf %409, %411 : vector<2x1x32xf32>
    %413 = math.tanh %412 : vector<2x1x32xf32>
    %cst_98 = arith.constant 1.000000e+00 : f32
    %414 = vector.broadcast %cst_98 : f32 to vector<2x1x32xf32>
    %415 = arith.subf %414, %408 : vector<2x1x32xf32>
    %416 = arith.mulf %415, %413 : vector<2x1x32xf32>
    %417 = arith.mulf %408, %354 : vector<2x1x32xf32>
    %418 = arith.addf %416, %417 : vector<2x1x32xf32>
    %c0_99 = arith.constant 0 : index
    %c5_100 = arith.constant 5 : index
    %c0_101 = arith.constant 0 : index
    %419 = vector.load %arg22[%c0_99, %c5_100, %c0_101] : memref<2x8x72xf32, #tpu.memory_space<vmem>>, vector<2x1x32xf32>
    tpu.vector_store %arg22[%c0_99, %c5_100, %c0_101], %391 {strides = array<i32>} : memref<2x8x72xf32, #tpu.memory_space<vmem>>, vector<2x1x32xf32>,
    %c0_102 = arith.constant 0 : index
    %c2_103 = arith.constant 2 : index
    %c32_104 = arith.constant 32 : index
    %420 = vector.load %arg22[%c0_102, %c2_103, %c32_104] : memref<2x8x72xf32, #tpu.memory_space<vmem>>, vector<2x1x32xf32>
    tpu.vector_store %arg22[%c0_102, %c2_103, %c32_104], %418 {strides = array<i32>} : memref<2x8x72xf32, #tpu.memory_space<vmem>>, vector<2x1x32xf32>,
    "tpu.trace_start"() <{level = 10 : i32, message = "boh,bhk->bok"}> : () -> ()
    %cst_105 = arith.constant dense<0.000000e+00> : vector<2x1x96xf32>
    %421 = tpu.matmul %391, %28, %cst_105 {dimension_numbers = #tpu.dot_dimension_numbers<[2], [1], [1], [2], [0, 0, 0, 1, 1, 2], [0], [0]>} : vector<2x1x32xf32>, vector<2x32x96xf32>, vector<2x1x96xf32> -> vector<2x1x96xf32>
    "tpu.trace_stop"() : () -> ()
    %422 = vector.shape_cast %4 : vector<1x96xf32> to vector<1x1x96xf32>
    %423 = vector.broadcast %422 : vector<1x1x96xf32> to vector<2x1x96xf32>
    %424 = arith.addf %421, %423 : vector<2x1x96xf32>
    "tpu.trace_start"() <{level = 10 : i32, message = "boh,bhk->bok"}> : () -> ()
    %cst_106 = arith.constant dense<0.000000e+00> : vector<2x1x96xf32>
    %425 = tpu.matmul %418, %30, %cst_106 {dimension_numbers = #tpu.dot_dimension_numbers<[2], [1], [1], [2], [0, 0, 0, 1, 1, 2], [0], [0]>} : vector<2x1x32xf32>, vector<2x32x96xf32>, vector<2x1x96xf32> -> vector<2x1x96xf32>
    "tpu.trace_stop"() : () -> ()
    %426 = vector.shape_cast %8 : vector<1x96xf32> to vector<1x1x96xf32>
    %427 = vector.broadcast %426 : vector<1x1x96xf32> to vector<2x1x96xf32>
    %428 = arith.addf %425, %427 : vector<2x1x96xf32>
    %429 = vector.extract_strided_slice %15 {offsets = [0, 6, 0], sizes = [2, 1, 96], strides = [1, 1, 1]} : vector<2x8x96xf32> to vector<2x1x96xf32>
    %430 = vector.extract_strided_slice %429 {offsets = [0, 0, 0], sizes = [2, 1, 32], strides = [1, 1, 1]} : vector<2x1x96xf32> to vector<2x1x32xf32>
    %431 = vector.extract_strided_slice %424 {offsets = [0, 0, 0], sizes = [2, 1, 32], strides = [1, 1, 1]} : vector<2x1x96xf32> to vector<2x1x32xf32>
    %432 = arith.addf %430, %431 : vector<2x1x32xf32>
    %433 = arith.negf %432 : vector<2x1x32xf32>
    %434 = math.exp %433 : vector<2x1x32xf32>
    %cst_107 = arith.constant 1.000000e+00 : f32
    %435 = vector.broadcast %cst_107 : f32 to vector<2x1x32xf32>
    %436 = arith.addf %435, %434 : vector<2x1x32xf32>
    %437 = arith.divf %435, %436 : vector<2x1x32xf32>
    %438 = vector.extract_strided_slice %429 {offsets = [0, 0, 32], sizes = [2, 1, 32], strides = [1, 1, 1]} : vector<2x1x96xf32> to vector<2x1x32xf32>
    %439 = vector.extract_strided_slice %424 {offsets = [0, 0, 32], sizes = [2, 1, 32], strides = [1, 1, 1]} : vector<2x1x96xf32> to vector<2x1x32xf32>
    %440 = arith.addf %438, %439 : vector<2x1x32xf32>
    %441 = arith.negf %440 : vector<2x1x32xf32>
    %442 = math.exp %441 : vector<2x1x32xf32>
    %cst_108 = arith.constant 1.000000e+00 : f32
    %443 = vector.broadcast %cst_108 : f32 to vector<2x1x32xf32>
    %444 = arith.addf %443, %442 : vector<2x1x32xf32>
    %445 = arith.divf %443, %444 : vector<2x1x32xf32>
    %446 = vector.extract_strided_slice %429 {offsets = [0, 0, 64], sizes = [2, 1, 32], strides = [1, 1, 1]} : vector<2x1x96xf32> to vector<2x1x32xf32>
    %447 = vector.extract_strided_slice %424 {offsets = [0, 0, 64], sizes = [2, 1, 32], strides = [1, 1, 1]} : vector<2x1x96xf32> to vector<2x1x32xf32>
    %448 = arith.mulf %437, %447 : vector<2x1x32xf32>
    %449 = arith.addf %446, %448 : vector<2x1x32xf32>
    %450 = math.tanh %449 : vector<2x1x32xf32>
    %cst_109 = arith.constant 1.000000e+00 : f32
    %451 = vector.broadcast %cst_109 : f32 to vector<2x1x32xf32>
    %452 = arith.subf %451, %445 : vector<2x1x32xf32>
    %453 = arith.mulf %452, %450 : vector<2x1x32xf32>
    %454 = arith.mulf %445, %391 : vector<2x1x32xf32>
    %455 = arith.addf %453, %454 : vector<2x1x32xf32>
    %456 = vector.extract_strided_slice %19 {offsets = [0, 1, 0], sizes = [2, 1, 96], strides = [1, 1, 1]} : vector<2x8x96xf32> to vector<2x1x96xf32>
    %457 = vector.extract_strided_slice %456 {offsets = [0, 0, 0], sizes = [2, 1, 32], strides = [1, 1, 1]} : vector<2x1x96xf32> to vector<2x1x32xf32>
    %458 = vector.extract_strided_slice %428 {offsets = [0, 0, 0], sizes = [2, 1, 32], strides = [1, 1, 1]} : vector<2x1x96xf32> to vector<2x1x32xf32>
    %459 = arith.addf %457, %458 : vector<2x1x32xf32>
    %460 = arith.negf %459 : vector<2x1x32xf32>
    %461 = math.exp %460 : vector<2x1x32xf32>
    %cst_110 = arith.constant 1.000000e+00 : f32
    %462 = vector.broadcast %cst_110 : f32 to vector<2x1x32xf32>
    %463 = arith.addf %462, %461 : vector<2x1x32xf32>
    %464 = arith.divf %462, %463 : vector<2x1x32xf32>
    %465 = vector.extract_strided_slice %456 {offsets = [0, 0, 32], sizes = [2, 1, 32], strides = [1, 1, 1]} : vector<2x1x96xf32> to vector<2x1x32xf32>
    %466 = vector.extract_strided_slice %428 {offsets = [0, 0, 32], sizes = [2, 1, 32], strides = [1, 1, 1]} : vector<2x1x96xf32> to vector<2x1x32xf32>
    %467 = arith.addf %465, %466 : vector<2x1x32xf32>
    %468 = arith.negf %467 : vector<2x1x32xf32>
    %469 = math.exp %468 : vector<2x1x32xf32>
    %cst_111 = arith.constant 1.000000e+00 : f32
    %470 = vector.broadcast %cst_111 : f32 to vector<2x1x32xf32>
    %471 = arith.addf %470, %469 : vector<2x1x32xf32>
    %472 = arith.divf %470, %471 : vector<2x1x32xf32>
    %473 = vector.extract_strided_slice %456 {offsets = [0, 0, 64], sizes = [2, 1, 32], strides = [1, 1, 1]} : vector<2x1x96xf32> to vector<2x1x32xf32>
    %474 = vector.extract_strided_slice %428 {offsets = [0, 0, 64], sizes = [2, 1, 32], strides = [1, 1, 1]} : vector<2x1x96xf32> to vector<2x1x32xf32>
    %475 = arith.mulf %464, %474 : vector<2x1x32xf32>
    %476 = arith.addf %473, %475 : vector<2x1x32xf32>
    %477 = math.tanh %476 : vector<2x1x32xf32>
    %cst_112 = arith.constant 1.000000e+00 : f32
    %478 = vector.broadcast %cst_112 : f32 to vector<2x1x32xf32>
    %479 = arith.subf %478, %472 : vector<2x1x32xf32>
    %480 = arith.mulf %479, %477 : vector<2x1x32xf32>
    %481 = arith.mulf %472, %418 : vector<2x1x32xf32>
    %482 = arith.addf %480, %481 : vector<2x1x32xf32>
    %c0_113 = arith.constant 0 : index
    %c6_114 = arith.constant 6 : index
    %c0_115 = arith.constant 0 : index
    %483 = vector.load %arg22[%c0_113, %c6_114, %c0_115] : memref<2x8x72xf32, #tpu.memory_space<vmem>>, vector<2x1x32xf32>
    tpu.vector_store %arg22[%c0_113, %c6_114, %c0_115], %455 {strides = array<i32>} : memref<2x8x72xf32, #tpu.memory_space<vmem>>, vector<2x1x32xf32>,
    %c0_116 = arith.constant 0 : index
    %c1_117 = arith.constant 1 : index
    %c32_118 = arith.constant 32 : index
    %484 = vector.load %arg22[%c0_116, %c1_117, %c32_118] : memref<2x8x72xf32, #tpu.memory_space<vmem>>, vector<2x1x32xf32>
    tpu.vector_store %arg22[%c0_116, %c1_117, %c32_118], %482 {strides = array<i32>} : memref<2x8x72xf32, #tpu.memory_space<vmem>>, vector<2x1x32xf32>,
    "tpu.trace_start"() <{level = 10 : i32, message = "boh,bhk->bok"}> : () -> ()
    %cst_119 = arith.constant dense<0.000000e+00> : vector<2x1x96xf32>
    %485 = tpu.matmul %455, %28, %cst_119 {dimension_numbers = #tpu.dot_dimension_numbers<[2], [1], [1], [2], [0, 0, 0, 1, 1, 2], [0], [0]>} : vector<2x1x32xf32>, vector<2x32x96xf32>, vector<2x1x96xf32> -> vector<2x1x96xf32>
    "tpu.trace_stop"() : () -> ()
    %486 = vector.shape_cast %4 : vector<1x96xf32> to vector<1x1x96xf32>
    %487 = vector.broadcast %486 : vector<1x1x96xf32> to vector<2x1x96xf32>
    %488 = arith.addf %485, %487 : vector<2x1x96xf32>
    "tpu.trace_start"() <{level = 10 : i32, message = "boh,bhk->bok"}> : () -> ()
    %cst_120 = arith.constant dense<0.000000e+00> : vector<2x1x96xf32>
    %489 = tpu.matmul %482, %30, %cst_120 {dimension_numbers = #tpu.dot_dimension_numbers<[2], [1], [1], [2], [0, 0, 0, 1, 1, 2], [0], [0]>} : vector<2x1x32xf32>, vector<2x32x96xf32>, vector<2x1x96xf32> -> vector<2x1x96xf32>
    "tpu.trace_stop"() : () -> ()
    %490 = vector.shape_cast %8 : vector<1x96xf32> to vector<1x1x96xf32>
    %491 = vector.broadcast %490 : vector<1x1x96xf32> to vector<2x1x96xf32>
    %492 = arith.addf %489, %491 : vector<2x1x96xf32>
    %493 = vector.extract_strided_slice %15 {offsets = [0, 7, 0], sizes = [2, 1, 96], strides = [1, 1, 1]} : vector<2x8x96xf32> to vector<2x1x96xf32>
    %494 = vector.extract_strided_slice %493 {offsets = [0, 0, 0], sizes = [2, 1, 32], strides = [1, 1, 1]} : vector<2x1x96xf32> to vector<2x1x32xf32>
    %495 = vector.extract_strided_slice %488 {offsets = [0, 0, 0], sizes = [2, 1, 32], strides = [1, 1, 1]} : vector<2x1x96xf32> to vector<2x1x32xf32>
    %496 = arith.addf %494, %495 : vector<2x1x32xf32>
    %497 = arith.negf %496 : vector<2x1x32xf32>
    %498 = math.exp %497 : vector<2x1x32xf32>
    %cst_121 = arith.constant 1.000000e+00 : f32
    %499 = vector.broadcast %cst_121 : f32 to vector<2x1x32xf32>
    %500 = arith.addf %499, %498 : vector<2x1x32xf32>
    %501 = arith.divf %499, %500 : vector<2x1x32xf32>
    %502 = vector.extract_strided_slice %493 {offsets = [0, 0, 32], sizes = [2, 1, 32], strides = [1, 1, 1]} : vector<2x1x96xf32> to vector<2x1x32xf32>
    %503 = vector.extract_strided_slice %488 {offsets = [0, 0, 32], sizes = [2, 1, 32], strides = [1, 1, 1]} : vector<2x1x96xf32> to vector<2x1x32xf32>
    %504 = arith.addf %502, %503 : vector<2x1x32xf32>
    %505 = arith.negf %504 : vector<2x1x32xf32>
    %506 = math.exp %505 : vector<2x1x32xf32>
    %cst_122 = arith.constant 1.000000e+00 : f32
    %507 = vector.broadcast %cst_122 : f32 to vector<2x1x32xf32>
    %508 = arith.addf %507, %506 : vector<2x1x32xf32>
    %509 = arith.divf %507, %508 : vector<2x1x32xf32>
    %510 = vector.extract_strided_slice %493 {offsets = [0, 0, 64], sizes = [2, 1, 32], strides = [1, 1, 1]} : vector<2x1x96xf32> to vector<2x1x32xf32>
    %511 = vector.extract_strided_slice %488 {offsets = [0, 0, 64], sizes = [2, 1, 32], strides = [1, 1, 1]} : vector<2x1x96xf32> to vector<2x1x32xf32>
    %512 = arith.mulf %501, %511 : vector<2x1x32xf32>
    %513 = arith.addf %510, %512 : vector<2x1x32xf32>
    %514 = math.tanh %513 : vector<2x1x32xf32>
    %cst_123 = arith.constant 1.000000e+00 : f32
    %515 = vector.broadcast %cst_123 : f32 to vector<2x1x32xf32>
    %516 = arith.subf %515, %509 : vector<2x1x32xf32>
    %517 = arith.mulf %516, %514 : vector<2x1x32xf32>
    %518 = arith.mulf %509, %455 : vector<2x1x32xf32>
    %519 = arith.addf %517, %518 : vector<2x1x32xf32>
    %520 = vector.extract_strided_slice %19 {offsets = [0, 0, 0], sizes = [2, 1, 96], strides = [1, 1, 1]} : vector<2x8x96xf32> to vector<2x1x96xf32>
    %521 = vector.extract_strided_slice %520 {offsets = [0, 0, 0], sizes = [2, 1, 32], strides = [1, 1, 1]} : vector<2x1x96xf32> to vector<2x1x32xf32>
    %522 = vector.extract_strided_slice %492 {offsets = [0, 0, 0], sizes = [2, 1, 32], strides = [1, 1, 1]} : vector<2x1x96xf32> to vector<2x1x32xf32>
    %523 = arith.addf %521, %522 : vector<2x1x32xf32>
    %524 = arith.negf %523 : vector<2x1x32xf32>
    %525 = math.exp %524 : vector<2x1x32xf32>
    %cst_124 = arith.constant 1.000000e+00 : f32
    %526 = vector.broadcast %cst_124 : f32 to vector<2x1x32xf32>
    %527 = arith.addf %526, %525 : vector<2x1x32xf32>
    %528 = arith.divf %526, %527 : vector<2x1x32xf32>
    %529 = vector.extract_strided_slice %520 {offsets = [0, 0, 32], sizes = [2, 1, 32], strides = [1, 1, 1]} : vector<2x1x96xf32> to vector<2x1x32xf32>
    %530 = vector.extract_strided_slice %492 {offsets = [0, 0, 32], sizes = [2, 1, 32], strides = [1, 1, 1]} : vector<2x1x96xf32> to vector<2x1x32xf32>
    %531 = arith.addf %529, %530 : vector<2x1x32xf32>
    %532 = arith.negf %531 : vector<2x1x32xf32>
    %533 = math.exp %532 : vector<2x1x32xf32>
    %cst_125 = arith.constant 1.000000e+00 : f32
    %534 = vector.broadcast %cst_125 : f32 to vector<2x1x32xf32>
    %535 = arith.addf %534, %533 : vector<2x1x32xf32>
    %536 = arith.divf %534, %535 : vector<2x1x32xf32>
    %537 = vector.extract_strided_slice %520 {offsets = [0, 0, 64], sizes = [2, 1, 32], strides = [1, 1, 1]} : vector<2x1x96xf32> to vector<2x1x32xf32>
    %538 = vector.extract_strided_slice %492 {offsets = [0, 0, 64], sizes = [2, 1, 32], strides = [1, 1, 1]} : vector<2x1x96xf32> to vector<2x1x32xf32>
    %539 = arith.mulf %528, %538 : vector<2x1x32xf32>
    %540 = arith.addf %537, %539 : vector<2x1x32xf32>
    %541 = math.tanh %540 : vector<2x1x32xf32>
    %cst_126 = arith.constant 1.000000e+00 : f32
    %542 = vector.broadcast %cst_126 : f32 to vector<2x1x32xf32>
    %543 = arith.subf %542, %536 : vector<2x1x32xf32>
    %544 = arith.mulf %543, %541 : vector<2x1x32xf32>
    %545 = arith.mulf %536, %482 : vector<2x1x32xf32>
    %546 = arith.addf %544, %545 : vector<2x1x32xf32>
    %c0_127 = arith.constant 0 : index
    %c7_128 = arith.constant 7 : index
    %c0_129 = arith.constant 0 : index
    %547 = vector.load %arg22[%c0_127, %c7_128, %c0_129] : memref<2x8x72xf32, #tpu.memory_space<vmem>>, vector<2x1x32xf32>
    tpu.vector_store %arg22[%c0_127, %c7_128, %c0_129], %519 {strides = array<i32>} : memref<2x8x72xf32, #tpu.memory_space<vmem>>, vector<2x1x32xf32>,
    %c0_130 = arith.constant 0 : index
    %c0_131 = arith.constant 0 : index
    %c32_132 = arith.constant 32 : index
    %548 = vector.load %arg22[%c0_130, %c0_131, %c32_132] : memref<2x8x72xf32, #tpu.memory_space<vmem>>, vector<2x1x32xf32>
    tpu.vector_store %arg22[%c0_130, %c0_131, %c32_132], %546 {strides = array<i32>} : memref<2x8x72xf32, #tpu.memory_space<vmem>>, vector<2x1x32xf32>,
    %c0_133 = arith.constant 0 : index
    %c0_134 = arith.constant 0 : index
    %c0_135 = arith.constant 0 : index
    %549 = vector.load %arg22[%c0_133, %c0_134, %c0_135] : memref<2x8x72xf32, #tpu.memory_space<vmem>>, vector<2x8x72xf32>
    %c0_136 = arith.constant 0 : index
    %c0_137 = arith.constant 0 : index
    %550 = vector.load %arg2[%c0_136, %c0_137] : memref<2x8xf32, #tpu.memory_space<vmem>>, vector<2x8xf32>
    %c0_138 = arith.constant 0 : index
    %c0_139 = arith.constant 0 : index
    %c0_140 = arith.constant 0 : index
    %551 = vector.load %arg1[%c0_138, %c0_139, %c0_140] : memref<2x16x72xf32, #tpu.memory_space<vmem>>, vector<2x16x72xf32>
    %c0_141 = arith.constant 0 : index
    %c0_142 = arith.constant 0 : index
    %552 = vector.load %arg3[%c0_141, %c0_142] : memref<2x16xf32, #tpu.memory_space<vmem>>, vector<2x16xf32>
    %c0_143 = arith.constant 0 : index
    %c0_144 = arith.constant 0 : index
    %553 = vector.load %arg14[%c0_143, %c0_144] : memref<1x72xf32, #tpu.memory_space<vmem>>, vector<1x72xf32>
    %554 = vector.shape_cast %553 : vector<1x72xf32> to vector<1x1x72xf32>
    %555 = vector.broadcast %554 : vector<1x1x72xf32> to vector<2x8x72xf32>
    %556 = arith.mulf %549, %555 : vector<2x8x72xf32>
    %cst_145 = arith.constant dense<0.000000e+00> : vector<2x8xf32>
    %557 = vector.multi_reduction <add>, %556, %cst_145 [2] : vector<2x8x72xf32> to vector<2x8xf32>
    %c0_146 = arith.constant 0 : index
    %c0_147 = arith.constant 0 : index
    %558 = vector.load %arg15[%c0_146, %c0_147] : memref<1x1xf32, #tpu.memory_space<vmem>>, vector<1x1xf32>
    %559 = vector.broadcast %558 : vector<1x1xf32> to vector<2x8xf32>
    %560 = arith.addf %557, %559 : vector<2x8xf32>
    %cst_148 = arith.constant 0.000000e+00 : f32
    %561 = vector.broadcast %cst_148 : f32 to vector<2x8xf32>
    %562 = arith.cmpf ogt, %550, %561 : vector<2x8xf32>
    %cst_149 = arith.constant -1.000000e+30 : f32
    %563 = vector.broadcast %cst_149 : f32 to vector<2x8xf32>
    %564 = arith.select %562, %563, %560 : vector<2x8xi1>, vector<2x8xf32>
    %cst_150 = arith.constant dense<0xFF800000> : vector<2xf32>
    %565 = vector.multi_reduction <maximumf>, %564, %cst_150 [1] : vector<2x8xf32> to vector<2xf32>
    %566 = vector.shape_cast %565 : vector<2xf32> to vector<2x1xf32>
    %567 = vector.broadcast %566 : vector<2x1xf32> to vector<2x8xf32>
    %568 = arith.subf %564, %567 : vector<2x8xf32>
    %569 = math.exp %568 : vector<2x8xf32>
    %cst_151 = arith.constant dense<0.000000e+00> : vector<2xf32>
    %570 = vector.multi_reduction <add>, %569, %cst_151 [1] : vector<2x8xf32> to vector<2xf32>
    %571 = vector.shape_cast %570 : vector<2xf32> to vector<2x1xf32>
    %572 = vector.broadcast %571 : vector<2x1xf32> to vector<2x8xf32>
    %573 = arith.divf %569, %572 : vector<2x8xf32>
    %574 = vector.shape_cast %573 : vector<2x8xf32> to vector<2x8x1xf32>
    %575 = vector.broadcast %574 : vector<2x8x1xf32> to vector<2x8x72xf32>
    %576 = arith.mulf %575, %549 : vector<2x8x72xf32>
    %cst_152 = arith.constant dense<0.000000e+00> : vector<2x72xf32>
    %577 = vector.multi_reduction <add>, %576, %cst_152 [1] : vector<2x8x72xf32> to vector<2x72xf32>
    %c0_153 = arith.constant 0 : index
    %c0_154 = arith.constant 0 : index
    %578 = vector.load %arg16[%c0_153, %c0_154] : memref<72x72xf32, #tpu.memory_space<vmem>>, vector<72x72xf32>
    %cst_155 = arith.constant dense<0.000000e+00> : vector<2x72xf32>
    %579 = tpu.matmul %577, %578, %cst_155 {dimension_numbers = #tpu.dot_dimension_numbers<[1], [0], [0], [1], [0, 0, 1, 1], [], []>} : vector<2x72xf32>, vector<72x72xf32>, vector<2x72xf32> -> vector<2x72xf32>
    %c0_156 = arith.constant 0 : index
    %c0_157 = arith.constant 0 : index
    %580 = vector.load %arg17[%c0_156, %c0_157] : memref<1x72xf32, #tpu.memory_space<vmem>>, vector<1x72xf32>
    %581 = vector.broadcast %580 : vector<1x72xf32> to vector<2x72xf32>
    %582 = arith.addf %579, %581 : vector<2x72xf32>
    %c0_158 = arith.constant 0 : index
    %c0_159 = arith.constant 0 : index
    %583 = vector.load %arg18[%c0_158, %c0_159] : memref<72x72xf32, #tpu.memory_space<vmem>>, vector<72x72xf32>
    %cst_160 = arith.constant dense<0.000000e+00> : vector<2x72xf32>
    %584 = tpu.matmul %577, %583, %cst_160 {dimension_numbers = #tpu.dot_dimension_numbers<[1], [0], [0], [1], [0, 0, 1, 1], [], []>} : vector<2x72xf32>, vector<72x72xf32>, vector<2x72xf32> -> vector<2x72xf32>
    %c0_161 = arith.constant 0 : index
    %c0_162 = arith.constant 0 : index
    %585 = vector.load %arg19[%c0_161, %c0_162] : memref<1x72xf32, #tpu.memory_space<vmem>>, vector<1x72xf32>
    %586 = vector.broadcast %585 : vector<1x72xf32> to vector<2x72xf32>
    %587 = arith.addf %584, %586 : vector<2x72xf32>
    %588 = vector.shape_cast %582 : vector<2x72xf32> to vector<2x1x72xf32>
    %589 = vector.broadcast %588 : vector<2x1x72xf32> to vector<2x16x72xf32>
    %590 = arith.mulf %551, %589 : vector<2x16x72xf32>
    %cst_163 = arith.constant dense<0.000000e+00> : vector<2x16xf32>
    %591 = vector.multi_reduction <add>, %590, %cst_163 [2] : vector<2x16x72xf32> to vector<2x16xf32>
    %cst_164 = arith.constant 0.000000e+00 : f32
    %592 = vector.broadcast %cst_164 : f32 to vector<2x16xf32>
    %593 = arith.cmpf ogt, %552, %592 : vector<2x16xf32>
    %cst_165 = arith.constant -1.000000e+30 : f32
    %594 = vector.broadcast %cst_165 : f32 to vector<2x16xf32>
    %595 = arith.select %593, %594, %591 : vector<2x16xi1>, vector<2x16xf32>
    %cst_166 = arith.constant dense<0xFF800000> : vector<2xf32>
    %596 = vector.multi_reduction <maximumf>, %595, %cst_166 [1] : vector<2x16xf32> to vector<2xf32>
    %597 = vector.shape_cast %596 : vector<2xf32> to vector<2x1xf32>
    %598 = vector.broadcast %597 : vector<2x1xf32> to vector<2x16xf32>
    %599 = arith.subf %595, %598 : vector<2x16xf32>
    %600 = math.exp %599 : vector<2x16xf32>
    %cst_167 = arith.constant dense<0.000000e+00> : vector<2xf32>
    %601 = vector.multi_reduction <add>, %600, %cst_167 [1] : vector<2x16xf32> to vector<2xf32>
    %602 = vector.shape_cast %601 : vector<2xf32> to vector<2x1xf32>
    %603 = vector.broadcast %602 : vector<2x1xf32> to vector<2x16xf32>
    %604 = arith.divf %600, %603 : vector<2x16xf32>
    %c0_168 = arith.constant 0 : index
    %c0_169 = arith.constant 0 : index
    %605 = vector.load %arg20[%c0_168, %c0_169] : memref<2x16xf32, #tpu.memory_space<vmem>>, vector<2x16xf32>
    tpu.vector_store %arg20[%c0_168, %c0_169], %604 {strides = array<i32>} : memref<2x16xf32, #tpu.memory_space<vmem>>, vector<2x16xf32>,
    %606 = vector.shape_cast %587 : vector<2x72xf32> to vector<2x1x72xf32>
    %607 = vector.broadcast %606 : vector<2x1x72xf32> to vector<2x16x72xf32>
    %608 = arith.mulf %551, %607 : vector<2x16x72xf32>
    %cst_170 = arith.constant dense<0.000000e+00> : vector<2x16xf32>
    %609 = vector.multi_reduction <add>, %608, %cst_170 [2] : vector<2x16x72xf32> to vector<2x16xf32>
    %cst_171 = arith.constant 0.000000e+00 : f32
    %610 = vector.broadcast %cst_171 : f32 to vector<2x16xf32>
    %611 = arith.cmpf ogt, %552, %610 : vector<2x16xf32>
    %cst_172 = arith.constant -1.000000e+30 : f32
    %612 = vector.broadcast %cst_172 : f32 to vector<2x16xf32>
    %613 = arith.select %611, %612, %609 : vector<2x16xi1>, vector<2x16xf32>
    %cst_173 = arith.constant dense<0xFF800000> : vector<2xf32>
    %614 = vector.multi_reduction <maximumf>, %613, %cst_173 [1] : vector<2x16xf32> to vector<2xf32>
    %615 = vector.shape_cast %614 : vector<2xf32> to vector<2x1xf32>
    %616 = vector.broadcast %615 : vector<2x1xf32> to vector<2x16xf32>
    %617 = arith.subf %613, %616 : vector<2x16xf32>
    %618 = math.exp %617 : vector<2x16xf32>
    %cst_174 = arith.constant dense<0.000000e+00> : vector<2xf32>
    %619 = vector.multi_reduction <add>, %618, %cst_174 [1] : vector<2x16xf32> to vector<2xf32>
    %620 = vector.shape_cast %619 : vector<2xf32> to vector<2x1xf32>
    %621 = vector.broadcast %620 : vector<2x1xf32> to vector<2x16xf32>
    %622 = arith.divf %618, %621 : vector<2x16xf32>
    %c0_175 = arith.constant 0 : index
    %c0_176 = arith.constant 0 : index
    %623 = vector.load %arg21[%c0_175, %c0_176] : memref<2x16xf32, #tpu.memory_space<vmem>>, vector<2x16xf32>
    tpu.vector_store %arg21[%c0_175, %c0_176], %622 {strides = array<i32>} : memref<2x16xf32, #tpu.memory_space<vmem>>, vector<2x16xf32>,
    return
  }
}

module attributes {stable_mosaic.version = 11 : i64} {
  func.func @_bigru_reduce_kernel(%arg0: memref<2x16x84xf32, #tpu.memory_space<vmem>>, %arg1: memref<84x96xf32, #tpu.memory_space<vmem>>, %arg2: memref<32x96xf32, #tpu.memory_space<vmem>>, %arg3: memref<1x96xf32, #tpu.memory_space<vmem>>, %arg4: memref<1x96xf32, #tpu.memory_space<vmem>>, %arg5: memref<84x96xf32, #tpu.memory_space<vmem>>, %arg6: memref<32x96xf32, #tpu.memory_space<vmem>>, %arg7: memref<1x96xf32, #tpu.memory_space<vmem>>, %arg8: memref<1x96xf32, #tpu.memory_space<vmem>>, %arg9: memref<84x8xf32, #tpu.memory_space<vmem>>, %arg10: memref<1x8xf32, #tpu.memory_space<vmem>>, %arg11: memref<2x16x72xf32, #tpu.memory_space<vmem>>) attributes {dimension_semantics = [], scalar_prefetch = 0 : i64, scratch_operands = 0 : i64, tpu.core_type = #tpu.core_type<tc>} {
    %c0 = arith.constant 0 : index
    %c0_0 = arith.constant 0 : index
    %c0_1 = arith.constant 0 : index
    %0 = vector.load %arg0[%c0, %c0_0, %c0_1] : memref<2x16x84xf32, #tpu.memory_space<vmem>>, vector<2x16x84xf32>
    %c0_2 = arith.constant 0 : index
    %c0_3 = arith.constant 0 : index
    %1 = vector.load %arg1[%c0_2, %c0_3] : memref<84x96xf32, #tpu.memory_space<vmem>>, vector<84x96xf32>
    %c0_4 = arith.constant 0 : index
    %c0_5 = arith.constant 0 : index
    %2 = vector.load %arg2[%c0_4, %c0_5] : memref<32x96xf32, #tpu.memory_space<vmem>>, vector<32x96xf32>
    %c0_6 = arith.constant 0 : index
    %c0_7 = arith.constant 0 : index
    %3 = vector.load %arg3[%c0_6, %c0_7] : memref<1x96xf32, #tpu.memory_space<vmem>>, vector<1x96xf32>
    %c0_8 = arith.constant 0 : index
    %c0_9 = arith.constant 0 : index
    %4 = vector.load %arg4[%c0_8, %c0_9] : memref<1x96xf32, #tpu.memory_space<vmem>>, vector<1x96xf32>
    %c0_10 = arith.constant 0 : index
    %c0_11 = arith.constant 0 : index
    %5 = vector.load %arg5[%c0_10, %c0_11] : memref<84x96xf32, #tpu.memory_space<vmem>>, vector<84x96xf32>
    %c0_12 = arith.constant 0 : index
    %c0_13 = arith.constant 0 : index
    %6 = vector.load %arg6[%c0_12, %c0_13] : memref<32x96xf32, #tpu.memory_space<vmem>>, vector<32x96xf32>
    %c0_14 = arith.constant 0 : index
    %c0_15 = arith.constant 0 : index
    %7 = vector.load %arg7[%c0_14, %c0_15] : memref<1x96xf32, #tpu.memory_space<vmem>>, vector<1x96xf32>
    %c0_16 = arith.constant 0 : index
    %c0_17 = arith.constant 0 : index
    %8 = vector.load %arg8[%c0_16, %c0_17] : memref<1x96xf32, #tpu.memory_space<vmem>>, vector<1x96xf32>
    %c0_18 = arith.constant 0 : index
    %c0_19 = arith.constant 0 : index
    %9 = vector.load %arg9[%c0_18, %c0_19] : memref<84x8xf32, #tpu.memory_space<vmem>>, vector<84x8xf32>
    %c0_20 = arith.constant 0 : index
    %c0_21 = arith.constant 0 : index
    %10 = vector.load %arg10[%c0_20, %c0_21] : memref<1x8xf32, #tpu.memory_space<vmem>>, vector<1x8xf32>
    %11 = vector.shape_cast %0 : vector<2x16x84xf32> to vector<32x84xf32>
    %cst = arith.constant dense<0.000000e+00> : vector<32x96xf32>
    %12 = tpu.matmul %11, %1, %cst {dimension_numbers = #tpu.dot_dimension_numbers<[1], [0], [0], [1], [0, 0, 1, 1], [], []>} : vector<32x84xf32>, vector<84x96xf32>, vector<32x96xf32> -> vector<32x96xf32>
    %13 = vector.broadcast %3 : vector<1x96xf32> to vector<32x96xf32>
    %14 = arith.addf %12, %13 : vector<32x96xf32>
    %15 = vector.shape_cast %14 : vector<32x96xf32> to vector<2x16x96xf32>
    %cst_22 = arith.constant dense<0.000000e+00> : vector<32x96xf32>
    %16 = tpu.matmul %11, %5, %cst_22 {dimension_numbers = #tpu.dot_dimension_numbers<[1], [0], [0], [1], [0, 0, 1, 1], [], []>} : vector<32x84xf32>, vector<84x96xf32>, vector<32x96xf32> -> vector<32x96xf32>
    %17 = vector.broadcast %7 : vector<1x96xf32> to vector<32x96xf32>
    %18 = arith.addf %16, %17 : vector<32x96xf32>
    %19 = vector.shape_cast %18 : vector<32x96xf32> to vector<2x16x96xf32>
    %cst_23 = arith.constant dense<0.000000e+00> : vector<32x8xf32>
    %20 = tpu.matmul %11, %9, %cst_23 {dimension_numbers = #tpu.dot_dimension_numbers<[1], [0], [0], [1], [0, 0, 1, 1], [], []>} : vector<32x84xf32>, vector<84x8xf32>, vector<32x8xf32> -> vector<32x8xf32>
    %21 = vector.broadcast %10 : vector<1x8xf32> to vector<32x8xf32>
    %22 = arith.addf %20, %21 : vector<32x8xf32>
    %cst_24 = arith.constant 0.000000e+00 : f32
    %23 = vector.broadcast %cst_24 : f32 to vector<32x8xf32>
    %24 = arith.maximumf %22, %23 : vector<32x8xf32>
    %25 = vector.shape_cast %24 : vector<32x8xf32> to vector<2x16x8xf32>
    %c0_25 = arith.constant 0 : index
    %c0_26 = arith.constant 0 : index
    %c64 = arith.constant 64 : index
    %26 = vector.load %arg11[%c0_25, %c0_26, %c64] : memref<2x16x72xf32, #tpu.memory_space<vmem>>, vector<2x16x8xf32>
    tpu.vector_store %arg11[%c0_25, %c0_26, %c64], %25 {strides = array<i32>} : memref<2x16x72xf32, #tpu.memory_space<vmem>>, vector<2x16x8xf32>,
    %27 = vector.shape_cast %2 : vector<32x96xf32> to vector<1x32x96xf32>
    %28 = vector.broadcast %27 : vector<1x32x96xf32> to vector<2x32x96xf32>
    %29 = vector.shape_cast %6 : vector<32x96xf32> to vector<1x32x96xf32>
    %30 = vector.broadcast %29 : vector<1x32x96xf32> to vector<2x32x96xf32>
    %31 = vector.extract_strided_slice %15 {offsets = [0, 0, 0], sizes = [2, 1, 32], strides = [1, 1, 1]} : vector<2x16x96xf32> to vector<2x1x32xf32>
    %cst_27 = arith.constant 0.000000e+00 : f32
    %32 = vector.broadcast %cst_27 : f32 to vector<2x1x32xf32>
    %33 = arith.mulf %31, %32 : vector<2x1x32xf32>
    %34 = vector.extract_strided_slice %19 {offsets = [0, 0, 0], sizes = [2, 1, 32], strides = [1, 1, 1]} : vector<2x16x96xf32> to vector<2x1x32xf32>
    %cst_28 = arith.constant 0.000000e+00 : f32
    %35 = vector.broadcast %cst_28 : f32 to vector<2x1x32xf32>
    %36 = arith.mulf %34, %35 : vector<2x1x32xf32>
    "tpu.trace_start"() <{level = 10 : i32, message = "boh,bhk->bok"}> : () -> ()
    %cst_29 = arith.constant dense<0.000000e+00> : vector<2x1x96xf32>
    %37 = tpu.matmul %33, %28, %cst_29 {dimension_numbers = #tpu.dot_dimension_numbers<[2], [1], [1], [2], [0, 0, 0, 1, 1, 2], [0], [0]>} : vector<2x1x32xf32>, vector<2x32x96xf32>, vector<2x1x96xf32> -> vector<2x1x96xf32>
    "tpu.trace_stop"() : () -> ()
    %38 = vector.shape_cast %4 : vector<1x96xf32> to vector<1x1x96xf32>
    %39 = vector.broadcast %38 : vector<1x1x96xf32> to vector<2x1x96xf32>
    %40 = arith.addf %37, %39 : vector<2x1x96xf32>
    "tpu.trace_start"() <{level = 10 : i32, message = "boh,bhk->bok"}> : () -> ()
    %cst_30 = arith.constant dense<0.000000e+00> : vector<2x1x96xf32>
    %41 = tpu.matmul %36, %30, %cst_30 {dimension_numbers = #tpu.dot_dimension_numbers<[2], [1], [1], [2], [0, 0, 0, 1, 1, 2], [0], [0]>} : vector<2x1x32xf32>, vector<2x32x96xf32>, vector<2x1x96xf32> -> vector<2x1x96xf32>
    "tpu.trace_stop"() : () -> ()
    %42 = vector.shape_cast %8 : vector<1x96xf32> to vector<1x1x96xf32>
    %43 = vector.broadcast %42 : vector<1x1x96xf32> to vector<2x1x96xf32>
    %44 = arith.addf %41, %43 : vector<2x1x96xf32>
    %45 = vector.extract_strided_slice %15 {offsets = [0, 0, 0], sizes = [2, 1, 96], strides = [1, 1, 1]} : vector<2x16x96xf32> to vector<2x1x96xf32>
    %46 = vector.extract_strided_slice %45 {offsets = [0, 0, 0], sizes = [2, 1, 32], strides = [1, 1, 1]} : vector<2x1x96xf32> to vector<2x1x32xf32>
    %47 = vector.extract_strided_slice %40 {offsets = [0, 0, 0], sizes = [2, 1, 32], strides = [1, 1, 1]} : vector<2x1x96xf32> to vector<2x1x32xf32>
    %48 = arith.addf %46, %47 : vector<2x1x32xf32>
    %49 = arith.negf %48 : vector<2x1x32xf32>
    %50 = math.exp %49 : vector<2x1x32xf32>
    %cst_31 = arith.constant 1.000000e+00 : f32
    %51 = vector.broadcast %cst_31 : f32 to vector<2x1x32xf32>
    %52 = arith.addf %51, %50 : vector<2x1x32xf32>
    %53 = arith.divf %51, %52 : vector<2x1x32xf32>
    %54 = vector.extract_strided_slice %45 {offsets = [0, 0, 32], sizes = [2, 1, 32], strides = [1, 1, 1]} : vector<2x1x96xf32> to vector<2x1x32xf32>
    %55 = vector.extract_strided_slice %40 {offsets = [0, 0, 32], sizes = [2, 1, 32], strides = [1, 1, 1]} : vector<2x1x96xf32> to vector<2x1x32xf32>
    %56 = arith.addf %54, %55 : vector<2x1x32xf32>
    %57 = arith.negf %56 : vector<2x1x32xf32>
    %58 = math.exp %57 : vector<2x1x32xf32>
    %cst_32 = arith.constant 1.000000e+00 : f32
    %59 = vector.broadcast %cst_32 : f32 to vector<2x1x32xf32>
    %60 = arith.addf %59, %58 : vector<2x1x32xf32>
    %61 = arith.divf %59, %60 : vector<2x1x32xf32>
    %62 = vector.extract_strided_slice %45 {offsets = [0, 0, 64], sizes = [2, 1, 32], strides = [1, 1, 1]} : vector<2x1x96xf32> to vector<2x1x32xf32>
    %63 = vector.extract_strided_slice %40 {offsets = [0, 0, 64], sizes = [2, 1, 32], strides = [1, 1, 1]} : vector<2x1x96xf32> to vector<2x1x32xf32>
    %64 = arith.mulf %53, %63 : vector<2x1x32xf32>
    %65 = arith.addf %62, %64 : vector<2x1x32xf32>
    %66 = math.tanh %65 : vector<2x1x32xf32>
    %cst_33 = arith.constant 1.000000e+00 : f32
    %67 = vector.broadcast %cst_33 : f32 to vector<2x1x32xf32>
    %68 = arith.subf %67, %61 : vector<2x1x32xf32>
    %69 = arith.mulf %68, %66 : vector<2x1x32xf32>
    %70 = arith.mulf %61, %33 : vector<2x1x32xf32>
    %71 = arith.addf %69, %70 : vector<2x1x32xf32>
    %72 = vector.extract_strided_slice %19 {offsets = [0, 15, 0], sizes = [2, 1, 96], strides = [1, 1, 1]} : vector<2x16x96xf32> to vector<2x1x96xf32>
    %73 = vector.extract_strided_slice %72 {offsets = [0, 0, 0], sizes = [2, 1, 32], strides = [1, 1, 1]} : vector<2x1x96xf32> to vector<2x1x32xf32>
    %74 = vector.extract_strided_slice %44 {offsets = [0, 0, 0], sizes = [2, 1, 32], strides = [1, 1, 1]} : vector<2x1x96xf32> to vector<2x1x32xf32>
    %75 = arith.addf %73, %74 : vector<2x1x32xf32>
    %76 = arith.negf %75 : vector<2x1x32xf32>
    %77 = math.exp %76 : vector<2x1x32xf32>
    %cst_34 = arith.constant 1.000000e+00 : f32
    %78 = vector.broadcast %cst_34 : f32 to vector<2x1x32xf32>
    %79 = arith.addf %78, %77 : vector<2x1x32xf32>
    %80 = arith.divf %78, %79 : vector<2x1x32xf32>
    %81 = vector.extract_strided_slice %72 {offsets = [0, 0, 32], sizes = [2, 1, 32], strides = [1, 1, 1]} : vector<2x1x96xf32> to vector<2x1x32xf32>
    %82 = vector.extract_strided_slice %44 {offsets = [0, 0, 32], sizes = [2, 1, 32], strides = [1, 1, 1]} : vector<2x1x96xf32> to vector<2x1x32xf32>
    %83 = arith.addf %81, %82 : vector<2x1x32xf32>
    %84 = arith.negf %83 : vector<2x1x32xf32>
    %85 = math.exp %84 : vector<2x1x32xf32>
    %cst_35 = arith.constant 1.000000e+00 : f32
    %86 = vector.broadcast %cst_35 : f32 to vector<2x1x32xf32>
    %87 = arith.addf %86, %85 : vector<2x1x32xf32>
    %88 = arith.divf %86, %87 : vector<2x1x32xf32>
    %89 = vector.extract_strided_slice %72 {offsets = [0, 0, 64], sizes = [2, 1, 32], strides = [1, 1, 1]} : vector<2x1x96xf32> to vector<2x1x32xf32>
    %90 = vector.extract_strided_slice %44 {offsets = [0, 0, 64], sizes = [2, 1, 32], strides = [1, 1, 1]} : vector<2x1x96xf32> to vector<2x1x32xf32>
    %91 = arith.mulf %80, %90 : vector<2x1x32xf32>
    %92 = arith.addf %89, %91 : vector<2x1x32xf32>
    %93 = math.tanh %92 : vector<2x1x32xf32>
    %cst_36 = arith.constant 1.000000e+00 : f32
    %94 = vector.broadcast %cst_36 : f32 to vector<2x1x32xf32>
    %95 = arith.subf %94, %88 : vector<2x1x32xf32>
    %96 = arith.mulf %95, %93 : vector<2x1x32xf32>
    %97 = arith.mulf %88, %36 : vector<2x1x32xf32>
    %98 = arith.addf %96, %97 : vector<2x1x32xf32>
    %c0_37 = arith.constant 0 : index
    %c0_38 = arith.constant 0 : index
    %c0_39 = arith.constant 0 : index
    %99 = vector.load %arg11[%c0_37, %c0_38, %c0_39] : memref<2x16x72xf32, #tpu.memory_space<vmem>>, vector<2x1x32xf32>
    tpu.vector_store %arg11[%c0_37, %c0_38, %c0_39], %71 {strides = array<i32>} : memref<2x16x72xf32, #tpu.memory_space<vmem>>, vector<2x1x32xf32>,
    %c0_40 = arith.constant 0 : index
    %c15 = arith.constant 15 : index
    %c32 = arith.constant 32 : index
    %100 = vector.load %arg11[%c0_40, %c15, %c32] : memref<2x16x72xf32, #tpu.memory_space<vmem>>, vector<2x1x32xf32>
    tpu.vector_store %arg11[%c0_40, %c15, %c32], %98 {strides = array<i32>} : memref<2x16x72xf32, #tpu.memory_space<vmem>>, vector<2x1x32xf32>,
    "tpu.trace_start"() <{level = 10 : i32, message = "boh,bhk->bok"}> : () -> ()
    %cst_41 = arith.constant dense<0.000000e+00> : vector<2x1x96xf32>
    %101 = tpu.matmul %71, %28, %cst_41 {dimension_numbers = #tpu.dot_dimension_numbers<[2], [1], [1], [2], [0, 0, 0, 1, 1, 2], [0], [0]>} : vector<2x1x32xf32>, vector<2x32x96xf32>, vector<2x1x96xf32> -> vector<2x1x96xf32>
    "tpu.trace_stop"() : () -> ()
    %102 = vector.shape_cast %4 : vector<1x96xf32> to vector<1x1x96xf32>
    %103 = vector.broadcast %102 : vector<1x1x96xf32> to vector<2x1x96xf32>
    %104 = arith.addf %101, %103 : vector<2x1x96xf32>
    "tpu.trace_start"() <{level = 10 : i32, message = "boh,bhk->bok"}> : () -> ()
    %cst_42 = arith.constant dense<0.000000e+00> : vector<2x1x96xf32>
    %105 = tpu.matmul %98, %30, %cst_42 {dimension_numbers = #tpu.dot_dimension_numbers<[2], [1], [1], [2], [0, 0, 0, 1, 1, 2], [0], [0]>} : vector<2x1x32xf32>, vector<2x32x96xf32>, vector<2x1x96xf32> -> vector<2x1x96xf32>
    "tpu.trace_stop"() : () -> ()
    %106 = vector.shape_cast %8 : vector<1x96xf32> to vector<1x1x96xf32>
    %107 = vector.broadcast %106 : vector<1x1x96xf32> to vector<2x1x96xf32>
    %108 = arith.addf %105, %107 : vector<2x1x96xf32>
    %109 = vector.extract_strided_slice %15 {offsets = [0, 1, 0], sizes = [2, 1, 96], strides = [1, 1, 1]} : vector<2x16x96xf32> to vector<2x1x96xf32>
    %110 = vector.extract_strided_slice %109 {offsets = [0, 0, 0], sizes = [2, 1, 32], strides = [1, 1, 1]} : vector<2x1x96xf32> to vector<2x1x32xf32>
    %111 = vector.extract_strided_slice %104 {offsets = [0, 0, 0], sizes = [2, 1, 32], strides = [1, 1, 1]} : vector<2x1x96xf32> to vector<2x1x32xf32>
    %112 = arith.addf %110, %111 : vector<2x1x32xf32>
    %113 = arith.negf %112 : vector<2x1x32xf32>
    %114 = math.exp %113 : vector<2x1x32xf32>
    %cst_43 = arith.constant 1.000000e+00 : f32
    %115 = vector.broadcast %cst_43 : f32 to vector<2x1x32xf32>
    %116 = arith.addf %115, %114 : vector<2x1x32xf32>
    %117 = arith.divf %115, %116 : vector<2x1x32xf32>
    %118 = vector.extract_strided_slice %109 {offsets = [0, 0, 32], sizes = [2, 1, 32], strides = [1, 1, 1]} : vector<2x1x96xf32> to vector<2x1x32xf32>
    %119 = vector.extract_strided_slice %104 {offsets = [0, 0, 32], sizes = [2, 1, 32], strides = [1, 1, 1]} : vector<2x1x96xf32> to vector<2x1x32xf32>
    %120 = arith.addf %118, %119 : vector<2x1x32xf32>
    %121 = arith.negf %120 : vector<2x1x32xf32>
    %122 = math.exp %121 : vector<2x1x32xf32>
    %cst_44 = arith.constant 1.000000e+00 : f32
    %123 = vector.broadcast %cst_44 : f32 to vector<2x1x32xf32>
    %124 = arith.addf %123, %122 : vector<2x1x32xf32>
    %125 = arith.divf %123, %124 : vector<2x1x32xf32>
    %126 = vector.extract_strided_slice %109 {offsets = [0, 0, 64], sizes = [2, 1, 32], strides = [1, 1, 1]} : vector<2x1x96xf32> to vector<2x1x32xf32>
    %127 = vector.extract_strided_slice %104 {offsets = [0, 0, 64], sizes = [2, 1, 32], strides = [1, 1, 1]} : vector<2x1x96xf32> to vector<2x1x32xf32>
    %128 = arith.mulf %117, %127 : vector<2x1x32xf32>
    %129 = arith.addf %126, %128 : vector<2x1x32xf32>
    %130 = math.tanh %129 : vector<2x1x32xf32>
    %cst_45 = arith.constant 1.000000e+00 : f32
    %131 = vector.broadcast %cst_45 : f32 to vector<2x1x32xf32>
    %132 = arith.subf %131, %125 : vector<2x1x32xf32>
    %133 = arith.mulf %132, %130 : vector<2x1x32xf32>
    %134 = arith.mulf %125, %71 : vector<2x1x32xf32>
    %135 = arith.addf %133, %134 : vector<2x1x32xf32>
    %136 = vector.extract_strided_slice %19 {offsets = [0, 14, 0], sizes = [2, 1, 96], strides = [1, 1, 1]} : vector<2x16x96xf32> to vector<2x1x96xf32>
    %137 = vector.extract_strided_slice %136 {offsets = [0, 0, 0], sizes = [2, 1, 32], strides = [1, 1, 1]} : vector<2x1x96xf32> to vector<2x1x32xf32>
    %138 = vector.extract_strided_slice %108 {offsets = [0, 0, 0], sizes = [2, 1, 32], strides = [1, 1, 1]} : vector<2x1x96xf32> to vector<2x1x32xf32>
    %139 = arith.addf %137, %138 : vector<2x1x32xf32>
    %140 = arith.negf %139 : vector<2x1x32xf32>
    %141 = math.exp %140 : vector<2x1x32xf32>
    %cst_46 = arith.constant 1.000000e+00 : f32
    %142 = vector.broadcast %cst_46 : f32 to vector<2x1x32xf32>
    %143 = arith.addf %142, %141 : vector<2x1x32xf32>
    %144 = arith.divf %142, %143 : vector<2x1x32xf32>
    %145 = vector.extract_strided_slice %136 {offsets = [0, 0, 32], sizes = [2, 1, 32], strides = [1, 1, 1]} : vector<2x1x96xf32> to vector<2x1x32xf32>
    %146 = vector.extract_strided_slice %108 {offsets = [0, 0, 32], sizes = [2, 1, 32], strides = [1, 1, 1]} : vector<2x1x96xf32> to vector<2x1x32xf32>
    %147 = arith.addf %145, %146 : vector<2x1x32xf32>
    %148 = arith.negf %147 : vector<2x1x32xf32>
    %149 = math.exp %148 : vector<2x1x32xf32>
    %cst_47 = arith.constant 1.000000e+00 : f32
    %150 = vector.broadcast %cst_47 : f32 to vector<2x1x32xf32>
    %151 = arith.addf %150, %149 : vector<2x1x32xf32>
    %152 = arith.divf %150, %151 : vector<2x1x32xf32>
    %153 = vector.extract_strided_slice %136 {offsets = [0, 0, 64], sizes = [2, 1, 32], strides = [1, 1, 1]} : vector<2x1x96xf32> to vector<2x1x32xf32>
    %154 = vector.extract_strided_slice %108 {offsets = [0, 0, 64], sizes = [2, 1, 32], strides = [1, 1, 1]} : vector<2x1x96xf32> to vector<2x1x32xf32>
    %155 = arith.mulf %144, %154 : vector<2x1x32xf32>
    %156 = arith.addf %153, %155 : vector<2x1x32xf32>
    %157 = math.tanh %156 : vector<2x1x32xf32>
    %cst_48 = arith.constant 1.000000e+00 : f32
    %158 = vector.broadcast %cst_48 : f32 to vector<2x1x32xf32>
    %159 = arith.subf %158, %152 : vector<2x1x32xf32>
    %160 = arith.mulf %159, %157 : vector<2x1x32xf32>
    %161 = arith.mulf %152, %98 : vector<2x1x32xf32>
    %162 = arith.addf %160, %161 : vector<2x1x32xf32>
    %c0_49 = arith.constant 0 : index
    %c1 = arith.constant 1 : index
    %c0_50 = arith.constant 0 : index
    %163 = vector.load %arg11[%c0_49, %c1, %c0_50] : memref<2x16x72xf32, #tpu.memory_space<vmem>>, vector<2x1x32xf32>
    tpu.vector_store %arg11[%c0_49, %c1, %c0_50], %135 {strides = array<i32>} : memref<2x16x72xf32, #tpu.memory_space<vmem>>, vector<2x1x32xf32>,
    %c0_51 = arith.constant 0 : index
    %c14 = arith.constant 14 : index
    %c32_52 = arith.constant 32 : index
    %164 = vector.load %arg11[%c0_51, %c14, %c32_52] : memref<2x16x72xf32, #tpu.memory_space<vmem>>, vector<2x1x32xf32>
    tpu.vector_store %arg11[%c0_51, %c14, %c32_52], %162 {strides = array<i32>} : memref<2x16x72xf32, #tpu.memory_space<vmem>>, vector<2x1x32xf32>,
    "tpu.trace_start"() <{level = 10 : i32, message = "boh,bhk->bok"}> : () -> ()
    %cst_53 = arith.constant dense<0.000000e+00> : vector<2x1x96xf32>
    %165 = tpu.matmul %135, %28, %cst_53 {dimension_numbers = #tpu.dot_dimension_numbers<[2], [1], [1], [2], [0, 0, 0, 1, 1, 2], [0], [0]>} : vector<2x1x32xf32>, vector<2x32x96xf32>, vector<2x1x96xf32> -> vector<2x1x96xf32>
    "tpu.trace_stop"() : () -> ()
    %166 = vector.shape_cast %4 : vector<1x96xf32> to vector<1x1x96xf32>
    %167 = vector.broadcast %166 : vector<1x1x96xf32> to vector<2x1x96xf32>
    %168 = arith.addf %165, %167 : vector<2x1x96xf32>
    "tpu.trace_start"() <{level = 10 : i32, message = "boh,bhk->bok"}> : () -> ()
    %cst_54 = arith.constant dense<0.000000e+00> : vector<2x1x96xf32>
    %169 = tpu.matmul %162, %30, %cst_54 {dimension_numbers = #tpu.dot_dimension_numbers<[2], [1], [1], [2], [0, 0, 0, 1, 1, 2], [0], [0]>} : vector<2x1x32xf32>, vector<2x32x96xf32>, vector<2x1x96xf32> -> vector<2x1x96xf32>
    "tpu.trace_stop"() : () -> ()
    %170 = vector.shape_cast %8 : vector<1x96xf32> to vector<1x1x96xf32>
    %171 = vector.broadcast %170 : vector<1x1x96xf32> to vector<2x1x96xf32>
    %172 = arith.addf %169, %171 : vector<2x1x96xf32>
    %173 = vector.extract_strided_slice %15 {offsets = [0, 2, 0], sizes = [2, 1, 96], strides = [1, 1, 1]} : vector<2x16x96xf32> to vector<2x1x96xf32>
    %174 = vector.extract_strided_slice %173 {offsets = [0, 0, 0], sizes = [2, 1, 32], strides = [1, 1, 1]} : vector<2x1x96xf32> to vector<2x1x32xf32>
    %175 = vector.extract_strided_slice %168 {offsets = [0, 0, 0], sizes = [2, 1, 32], strides = [1, 1, 1]} : vector<2x1x96xf32> to vector<2x1x32xf32>
    %176 = arith.addf %174, %175 : vector<2x1x32xf32>
    %177 = arith.negf %176 : vector<2x1x32xf32>
    %178 = math.exp %177 : vector<2x1x32xf32>
    %cst_55 = arith.constant 1.000000e+00 : f32
    %179 = vector.broadcast %cst_55 : f32 to vector<2x1x32xf32>
    %180 = arith.addf %179, %178 : vector<2x1x32xf32>
    %181 = arith.divf %179, %180 : vector<2x1x32xf32>
    %182 = vector.extract_strided_slice %173 {offsets = [0, 0, 32], sizes = [2, 1, 32], strides = [1, 1, 1]} : vector<2x1x96xf32> to vector<2x1x32xf32>
    %183 = vector.extract_strided_slice %168 {offsets = [0, 0, 32], sizes = [2, 1, 32], strides = [1, 1, 1]} : vector<2x1x96xf32> to vector<2x1x32xf32>
    %184 = arith.addf %182, %183 : vector<2x1x32xf32>
    %185 = arith.negf %184 : vector<2x1x32xf32>
    %186 = math.exp %185 : vector<2x1x32xf32>
    %cst_56 = arith.constant 1.000000e+00 : f32
    %187 = vector.broadcast %cst_56 : f32 to vector<2x1x32xf32>
    %188 = arith.addf %187, %186 : vector<2x1x32xf32>
    %189 = arith.divf %187, %188 : vector<2x1x32xf32>
    %190 = vector.extract_strided_slice %173 {offsets = [0, 0, 64], sizes = [2, 1, 32], strides = [1, 1, 1]} : vector<2x1x96xf32> to vector<2x1x32xf32>
    %191 = vector.extract_strided_slice %168 {offsets = [0, 0, 64], sizes = [2, 1, 32], strides = [1, 1, 1]} : vector<2x1x96xf32> to vector<2x1x32xf32>
    %192 = arith.mulf %181, %191 : vector<2x1x32xf32>
    %193 = arith.addf %190, %192 : vector<2x1x32xf32>
    %194 = math.tanh %193 : vector<2x1x32xf32>
    %cst_57 = arith.constant 1.000000e+00 : f32
    %195 = vector.broadcast %cst_57 : f32 to vector<2x1x32xf32>
    %196 = arith.subf %195, %189 : vector<2x1x32xf32>
    %197 = arith.mulf %196, %194 : vector<2x1x32xf32>
    %198 = arith.mulf %189, %135 : vector<2x1x32xf32>
    %199 = arith.addf %197, %198 : vector<2x1x32xf32>
    %200 = vector.extract_strided_slice %19 {offsets = [0, 13, 0], sizes = [2, 1, 96], strides = [1, 1, 1]} : vector<2x16x96xf32> to vector<2x1x96xf32>
    %201 = vector.extract_strided_slice %200 {offsets = [0, 0, 0], sizes = [2, 1, 32], strides = [1, 1, 1]} : vector<2x1x96xf32> to vector<2x1x32xf32>
    %202 = vector.extract_strided_slice %172 {offsets = [0, 0, 0], sizes = [2, 1, 32], strides = [1, 1, 1]} : vector<2x1x96xf32> to vector<2x1x32xf32>
    %203 = arith.addf %201, %202 : vector<2x1x32xf32>
    %204 = arith.negf %203 : vector<2x1x32xf32>
    %205 = math.exp %204 : vector<2x1x32xf32>
    %cst_58 = arith.constant 1.000000e+00 : f32
    %206 = vector.broadcast %cst_58 : f32 to vector<2x1x32xf32>
    %207 = arith.addf %206, %205 : vector<2x1x32xf32>
    %208 = arith.divf %206, %207 : vector<2x1x32xf32>
    %209 = vector.extract_strided_slice %200 {offsets = [0, 0, 32], sizes = [2, 1, 32], strides = [1, 1, 1]} : vector<2x1x96xf32> to vector<2x1x32xf32>
    %210 = vector.extract_strided_slice %172 {offsets = [0, 0, 32], sizes = [2, 1, 32], strides = [1, 1, 1]} : vector<2x1x96xf32> to vector<2x1x32xf32>
    %211 = arith.addf %209, %210 : vector<2x1x32xf32>
    %212 = arith.negf %211 : vector<2x1x32xf32>
    %213 = math.exp %212 : vector<2x1x32xf32>
    %cst_59 = arith.constant 1.000000e+00 : f32
    %214 = vector.broadcast %cst_59 : f32 to vector<2x1x32xf32>
    %215 = arith.addf %214, %213 : vector<2x1x32xf32>
    %216 = arith.divf %214, %215 : vector<2x1x32xf32>
    %217 = vector.extract_strided_slice %200 {offsets = [0, 0, 64], sizes = [2, 1, 32], strides = [1, 1, 1]} : vector<2x1x96xf32> to vector<2x1x32xf32>
    %218 = vector.extract_strided_slice %172 {offsets = [0, 0, 64], sizes = [2, 1, 32], strides = [1, 1, 1]} : vector<2x1x96xf32> to vector<2x1x32xf32>
    %219 = arith.mulf %208, %218 : vector<2x1x32xf32>
    %220 = arith.addf %217, %219 : vector<2x1x32xf32>
    %221 = math.tanh %220 : vector<2x1x32xf32>
    %cst_60 = arith.constant 1.000000e+00 : f32
    %222 = vector.broadcast %cst_60 : f32 to vector<2x1x32xf32>
    %223 = arith.subf %222, %216 : vector<2x1x32xf32>
    %224 = arith.mulf %223, %221 : vector<2x1x32xf32>
    %225 = arith.mulf %216, %162 : vector<2x1x32xf32>
    %226 = arith.addf %224, %225 : vector<2x1x32xf32>
    %c0_61 = arith.constant 0 : index
    %c2 = arith.constant 2 : index
    %c0_62 = arith.constant 0 : index
    %227 = vector.load %arg11[%c0_61, %c2, %c0_62] : memref<2x16x72xf32, #tpu.memory_space<vmem>>, vector<2x1x32xf32>
    tpu.vector_store %arg11[%c0_61, %c2, %c0_62], %199 {strides = array<i32>} : memref<2x16x72xf32, #tpu.memory_space<vmem>>, vector<2x1x32xf32>,
    %c0_63 = arith.constant 0 : index
    %c13 = arith.constant 13 : index
    %c32_64 = arith.constant 32 : index
    %228 = vector.load %arg11[%c0_63, %c13, %c32_64] : memref<2x16x72xf32, #tpu.memory_space<vmem>>, vector<2x1x32xf32>
    tpu.vector_store %arg11[%c0_63, %c13, %c32_64], %226 {strides = array<i32>} : memref<2x16x72xf32, #tpu.memory_space<vmem>>, vector<2x1x32xf32>,
    "tpu.trace_start"() <{level = 10 : i32, message = "boh,bhk->bok"}> : () -> ()
    %cst_65 = arith.constant dense<0.000000e+00> : vector<2x1x96xf32>
    %229 = tpu.matmul %199, %28, %cst_65 {dimension_numbers = #tpu.dot_dimension_numbers<[2], [1], [1], [2], [0, 0, 0, 1, 1, 2], [0], [0]>} : vector<2x1x32xf32>, vector<2x32x96xf32>, vector<2x1x96xf32> -> vector<2x1x96xf32>
    "tpu.trace_stop"() : () -> ()
    %230 = vector.shape_cast %4 : vector<1x96xf32> to vector<1x1x96xf32>
    %231 = vector.broadcast %230 : vector<1x1x96xf32> to vector<2x1x96xf32>
    %232 = arith.addf %229, %231 : vector<2x1x96xf32>
    "tpu.trace_start"() <{level = 10 : i32, message = "boh,bhk->bok"}> : () -> ()
    %cst_66 = arith.constant dense<0.000000e+00> : vector<2x1x96xf32>
    %233 = tpu.matmul %226, %30, %cst_66 {dimension_numbers = #tpu.dot_dimension_numbers<[2], [1], [1], [2], [0, 0, 0, 1, 1, 2], [0], [0]>} : vector<2x1x32xf32>, vector<2x32x96xf32>, vector<2x1x96xf32> -> vector<2x1x96xf32>
    "tpu.trace_stop"() : () -> ()
    %234 = vector.shape_cast %8 : vector<1x96xf32> to vector<1x1x96xf32>
    %235 = vector.broadcast %234 : vector<1x1x96xf32> to vector<2x1x96xf32>
    %236 = arith.addf %233, %235 : vector<2x1x96xf32>
    %237 = vector.extract_strided_slice %15 {offsets = [0, 3, 0], sizes = [2, 1, 96], strides = [1, 1, 1]} : vector<2x16x96xf32> to vector<2x1x96xf32>
    %238 = vector.extract_strided_slice %237 {offsets = [0, 0, 0], sizes = [2, 1, 32], strides = [1, 1, 1]} : vector<2x1x96xf32> to vector<2x1x32xf32>
    %239 = vector.extract_strided_slice %232 {offsets = [0, 0, 0], sizes = [2, 1, 32], strides = [1, 1, 1]} : vector<2x1x96xf32> to vector<2x1x32xf32>
    %240 = arith.addf %238, %239 : vector<2x1x32xf32>
    %241 = arith.negf %240 : vector<2x1x32xf32>
    %242 = math.exp %241 : vector<2x1x32xf32>
    %cst_67 = arith.constant 1.000000e+00 : f32
    %243 = vector.broadcast %cst_67 : f32 to vector<2x1x32xf32>
    %244 = arith.addf %243, %242 : vector<2x1x32xf32>
    %245 = arith.divf %243, %244 : vector<2x1x32xf32>
    %246 = vector.extract_strided_slice %237 {offsets = [0, 0, 32], sizes = [2, 1, 32], strides = [1, 1, 1]} : vector<2x1x96xf32> to vector<2x1x32xf32>
    %247 = vector.extract_strided_slice %232 {offsets = [0, 0, 32], sizes = [2, 1, 32], strides = [1, 1, 1]} : vector<2x1x96xf32> to vector<2x1x32xf32>
    %248 = arith.addf %246, %247 : vector<2x1x32xf32>
    %249 = arith.negf %248 : vector<2x1x32xf32>
    %250 = math.exp %249 : vector<2x1x32xf32>
    %cst_68 = arith.constant 1.000000e+00 : f32
    %251 = vector.broadcast %cst_68 : f32 to vector<2x1x32xf32>
    %252 = arith.addf %251, %250 : vector<2x1x32xf32>
    %253 = arith.divf %251, %252 : vector<2x1x32xf32>
    %254 = vector.extract_strided_slice %237 {offsets = [0, 0, 64], sizes = [2, 1, 32], strides = [1, 1, 1]} : vector<2x1x96xf32> to vector<2x1x32xf32>
    %255 = vector.extract_strided_slice %232 {offsets = [0, 0, 64], sizes = [2, 1, 32], strides = [1, 1, 1]} : vector<2x1x96xf32> to vector<2x1x32xf32>
    %256 = arith.mulf %245, %255 : vector<2x1x32xf32>
    %257 = arith.addf %254, %256 : vector<2x1x32xf32>
    %258 = math.tanh %257 : vector<2x1x32xf32>
    %cst_69 = arith.constant 1.000000e+00 : f32
    %259 = vector.broadcast %cst_69 : f32 to vector<2x1x32xf32>
    %260 = arith.subf %259, %253 : vector<2x1x32xf32>
    %261 = arith.mulf %260, %258 : vector<2x1x32xf32>
    %262 = arith.mulf %253, %199 : vector<2x1x32xf32>
    %263 = arith.addf %261, %262 : vector<2x1x32xf32>
    %264 = vector.extract_strided_slice %19 {offsets = [0, 12, 0], sizes = [2, 1, 96], strides = [1, 1, 1]} : vector<2x16x96xf32> to vector<2x1x96xf32>
    %265 = vector.extract_strided_slice %264 {offsets = [0, 0, 0], sizes = [2, 1, 32], strides = [1, 1, 1]} : vector<2x1x96xf32> to vector<2x1x32xf32>
    %266 = vector.extract_strided_slice %236 {offsets = [0, 0, 0], sizes = [2, 1, 32], strides = [1, 1, 1]} : vector<2x1x96xf32> to vector<2x1x32xf32>
    %267 = arith.addf %265, %266 : vector<2x1x32xf32>
    %268 = arith.negf %267 : vector<2x1x32xf32>
    %269 = math.exp %268 : vector<2x1x32xf32>
    %cst_70 = arith.constant 1.000000e+00 : f32
    %270 = vector.broadcast %cst_70 : f32 to vector<2x1x32xf32>
    %271 = arith.addf %270, %269 : vector<2x1x32xf32>
    %272 = arith.divf %270, %271 : vector<2x1x32xf32>
    %273 = vector.extract_strided_slice %264 {offsets = [0, 0, 32], sizes = [2, 1, 32], strides = [1, 1, 1]} : vector<2x1x96xf32> to vector<2x1x32xf32>
    %274 = vector.extract_strided_slice %236 {offsets = [0, 0, 32], sizes = [2, 1, 32], strides = [1, 1, 1]} : vector<2x1x96xf32> to vector<2x1x32xf32>
    %275 = arith.addf %273, %274 : vector<2x1x32xf32>
    %276 = arith.negf %275 : vector<2x1x32xf32>
    %277 = math.exp %276 : vector<2x1x32xf32>
    %cst_71 = arith.constant 1.000000e+00 : f32
    %278 = vector.broadcast %cst_71 : f32 to vector<2x1x32xf32>
    %279 = arith.addf %278, %277 : vector<2x1x32xf32>
    %280 = arith.divf %278, %279 : vector<2x1x32xf32>
    %281 = vector.extract_strided_slice %264 {offsets = [0, 0, 64], sizes = [2, 1, 32], strides = [1, 1, 1]} : vector<2x1x96xf32> to vector<2x1x32xf32>
    %282 = vector.extract_strided_slice %236 {offsets = [0, 0, 64], sizes = [2, 1, 32], strides = [1, 1, 1]} : vector<2x1x96xf32> to vector<2x1x32xf32>
    %283 = arith.mulf %272, %282 : vector<2x1x32xf32>
    %284 = arith.addf %281, %283 : vector<2x1x32xf32>
    %285 = math.tanh %284 : vector<2x1x32xf32>
    %cst_72 = arith.constant 1.000000e+00 : f32
    %286 = vector.broadcast %cst_72 : f32 to vector<2x1x32xf32>
    %287 = arith.subf %286, %280 : vector<2x1x32xf32>
    %288 = arith.mulf %287, %285 : vector<2x1x32xf32>
    %289 = arith.mulf %280, %226 : vector<2x1x32xf32>
    %290 = arith.addf %288, %289 : vector<2x1x32xf32>
    %c0_73 = arith.constant 0 : index
    %c3 = arith.constant 3 : index
    %c0_74 = arith.constant 0 : index
    %291 = vector.load %arg11[%c0_73, %c3, %c0_74] : memref<2x16x72xf32, #tpu.memory_space<vmem>>, vector<2x1x32xf32>
    tpu.vector_store %arg11[%c0_73, %c3, %c0_74], %263 {strides = array<i32>} : memref<2x16x72xf32, #tpu.memory_space<vmem>>, vector<2x1x32xf32>,
    %c0_75 = arith.constant 0 : index
    %c12 = arith.constant 12 : index
    %c32_76 = arith.constant 32 : index
    %292 = vector.load %arg11[%c0_75, %c12, %c32_76] : memref<2x16x72xf32, #tpu.memory_space<vmem>>, vector<2x1x32xf32>
    tpu.vector_store %arg11[%c0_75, %c12, %c32_76], %290 {strides = array<i32>} : memref<2x16x72xf32, #tpu.memory_space<vmem>>, vector<2x1x32xf32>,
    "tpu.trace_start"() <{level = 10 : i32, message = "boh,bhk->bok"}> : () -> ()
    %cst_77 = arith.constant dense<0.000000e+00> : vector<2x1x96xf32>
    %293 = tpu.matmul %263, %28, %cst_77 {dimension_numbers = #tpu.dot_dimension_numbers<[2], [1], [1], [2], [0, 0, 0, 1, 1, 2], [0], [0]>} : vector<2x1x32xf32>, vector<2x32x96xf32>, vector<2x1x96xf32> -> vector<2x1x96xf32>
    "tpu.trace_stop"() : () -> ()
    %294 = vector.shape_cast %4 : vector<1x96xf32> to vector<1x1x96xf32>
    %295 = vector.broadcast %294 : vector<1x1x96xf32> to vector<2x1x96xf32>
    %296 = arith.addf %293, %295 : vector<2x1x96xf32>
    "tpu.trace_start"() <{level = 10 : i32, message = "boh,bhk->bok"}> : () -> ()
    %cst_78 = arith.constant dense<0.000000e+00> : vector<2x1x96xf32>
    %297 = tpu.matmul %290, %30, %cst_78 {dimension_numbers = #tpu.dot_dimension_numbers<[2], [1], [1], [2], [0, 0, 0, 1, 1, 2], [0], [0]>} : vector<2x1x32xf32>, vector<2x32x96xf32>, vector<2x1x96xf32> -> vector<2x1x96xf32>
    "tpu.trace_stop"() : () -> ()
    %298 = vector.shape_cast %8 : vector<1x96xf32> to vector<1x1x96xf32>
    %299 = vector.broadcast %298 : vector<1x1x96xf32> to vector<2x1x96xf32>
    %300 = arith.addf %297, %299 : vector<2x1x96xf32>
    %301 = vector.extract_strided_slice %15 {offsets = [0, 4, 0], sizes = [2, 1, 96], strides = [1, 1, 1]} : vector<2x16x96xf32> to vector<2x1x96xf32>
    %302 = vector.extract_strided_slice %301 {offsets = [0, 0, 0], sizes = [2, 1, 32], strides = [1, 1, 1]} : vector<2x1x96xf32> to vector<2x1x32xf32>
    %303 = vector.extract_strided_slice %296 {offsets = [0, 0, 0], sizes = [2, 1, 32], strides = [1, 1, 1]} : vector<2x1x96xf32> to vector<2x1x32xf32>
    %304 = arith.addf %302, %303 : vector<2x1x32xf32>
    %305 = arith.negf %304 : vector<2x1x32xf32>
    %306 = math.exp %305 : vector<2x1x32xf32>
    %cst_79 = arith.constant 1.000000e+00 : f32
    %307 = vector.broadcast %cst_79 : f32 to vector<2x1x32xf32>
    %308 = arith.addf %307, %306 : vector<2x1x32xf32>
    %309 = arith.divf %307, %308 : vector<2x1x32xf32>
    %310 = vector.extract_strided_slice %301 {offsets = [0, 0, 32], sizes = [2, 1, 32], strides = [1, 1, 1]} : vector<2x1x96xf32> to vector<2x1x32xf32>
    %311 = vector.extract_strided_slice %296 {offsets = [0, 0, 32], sizes = [2, 1, 32], strides = [1, 1, 1]} : vector<2x1x96xf32> to vector<2x1x32xf32>
    %312 = arith.addf %310, %311 : vector<2x1x32xf32>
    %313 = arith.negf %312 : vector<2x1x32xf32>
    %314 = math.exp %313 : vector<2x1x32xf32>
    %cst_80 = arith.constant 1.000000e+00 : f32
    %315 = vector.broadcast %cst_80 : f32 to vector<2x1x32xf32>
    %316 = arith.addf %315, %314 : vector<2x1x32xf32>
    %317 = arith.divf %315, %316 : vector<2x1x32xf32>
    %318 = vector.extract_strided_slice %301 {offsets = [0, 0, 64], sizes = [2, 1, 32], strides = [1, 1, 1]} : vector<2x1x96xf32> to vector<2x1x32xf32>
    %319 = vector.extract_strided_slice %296 {offsets = [0, 0, 64], sizes = [2, 1, 32], strides = [1, 1, 1]} : vector<2x1x96xf32> to vector<2x1x32xf32>
    %320 = arith.mulf %309, %319 : vector<2x1x32xf32>
    %321 = arith.addf %318, %320 : vector<2x1x32xf32>
    %322 = math.tanh %321 : vector<2x1x32xf32>
    %cst_81 = arith.constant 1.000000e+00 : f32
    %323 = vector.broadcast %cst_81 : f32 to vector<2x1x32xf32>
    %324 = arith.subf %323, %317 : vector<2x1x32xf32>
    %325 = arith.mulf %324, %322 : vector<2x1x32xf32>
    %326 = arith.mulf %317, %263 : vector<2x1x32xf32>
    %327 = arith.addf %325, %326 : vector<2x1x32xf32>
    %328 = vector.extract_strided_slice %19 {offsets = [0, 11, 0], sizes = [2, 1, 96], strides = [1, 1, 1]} : vector<2x16x96xf32> to vector<2x1x96xf32>
    %329 = vector.extract_strided_slice %328 {offsets = [0, 0, 0], sizes = [2, 1, 32], strides = [1, 1, 1]} : vector<2x1x96xf32> to vector<2x1x32xf32>
    %330 = vector.extract_strided_slice %300 {offsets = [0, 0, 0], sizes = [2, 1, 32], strides = [1, 1, 1]} : vector<2x1x96xf32> to vector<2x1x32xf32>
    %331 = arith.addf %329, %330 : vector<2x1x32xf32>
    %332 = arith.negf %331 : vector<2x1x32xf32>
    %333 = math.exp %332 : vector<2x1x32xf32>
    %cst_82 = arith.constant 1.000000e+00 : f32
    %334 = vector.broadcast %cst_82 : f32 to vector<2x1x32xf32>
    %335 = arith.addf %334, %333 : vector<2x1x32xf32>
    %336 = arith.divf %334, %335 : vector<2x1x32xf32>
    %337 = vector.extract_strided_slice %328 {offsets = [0, 0, 32], sizes = [2, 1, 32], strides = [1, 1, 1]} : vector<2x1x96xf32> to vector<2x1x32xf32>
    %338 = vector.extract_strided_slice %300 {offsets = [0, 0, 32], sizes = [2, 1, 32], strides = [1, 1, 1]} : vector<2x1x96xf32> to vector<2x1x32xf32>
    %339 = arith.addf %337, %338 : vector<2x1x32xf32>
    %340 = arith.negf %339 : vector<2x1x32xf32>
    %341 = math.exp %340 : vector<2x1x32xf32>
    %cst_83 = arith.constant 1.000000e+00 : f32
    %342 = vector.broadcast %cst_83 : f32 to vector<2x1x32xf32>
    %343 = arith.addf %342, %341 : vector<2x1x32xf32>
    %344 = arith.divf %342, %343 : vector<2x1x32xf32>
    %345 = vector.extract_strided_slice %328 {offsets = [0, 0, 64], sizes = [2, 1, 32], strides = [1, 1, 1]} : vector<2x1x96xf32> to vector<2x1x32xf32>
    %346 = vector.extract_strided_slice %300 {offsets = [0, 0, 64], sizes = [2, 1, 32], strides = [1, 1, 1]} : vector<2x1x96xf32> to vector<2x1x32xf32>
    %347 = arith.mulf %336, %346 : vector<2x1x32xf32>
    %348 = arith.addf %345, %347 : vector<2x1x32xf32>
    %349 = math.tanh %348 : vector<2x1x32xf32>
    %cst_84 = arith.constant 1.000000e+00 : f32
    %350 = vector.broadcast %cst_84 : f32 to vector<2x1x32xf32>
    %351 = arith.subf %350, %344 : vector<2x1x32xf32>
    %352 = arith.mulf %351, %349 : vector<2x1x32xf32>
    %353 = arith.mulf %344, %290 : vector<2x1x32xf32>
    %354 = arith.addf %352, %353 : vector<2x1x32xf32>
    %c0_85 = arith.constant 0 : index
    %c4 = arith.constant 4 : index
    %c0_86 = arith.constant 0 : index
    %355 = vector.load %arg11[%c0_85, %c4, %c0_86] : memref<2x16x72xf32, #tpu.memory_space<vmem>>, vector<2x1x32xf32>
    tpu.vector_store %arg11[%c0_85, %c4, %c0_86], %327 {strides = array<i32>} : memref<2x16x72xf32, #tpu.memory_space<vmem>>, vector<2x1x32xf32>,
    %c0_87 = arith.constant 0 : index
    %c11 = arith.constant 11 : index
    %c32_88 = arith.constant 32 : index
    %356 = vector.load %arg11[%c0_87, %c11, %c32_88] : memref<2x16x72xf32, #tpu.memory_space<vmem>>, vector<2x1x32xf32>
    tpu.vector_store %arg11[%c0_87, %c11, %c32_88], %354 {strides = array<i32>} : memref<2x16x72xf32, #tpu.memory_space<vmem>>, vector<2x1x32xf32>,
    "tpu.trace_start"() <{level = 10 : i32, message = "boh,bhk->bok"}> : () -> ()
    %cst_89 = arith.constant dense<0.000000e+00> : vector<2x1x96xf32>
    %357 = tpu.matmul %327, %28, %cst_89 {dimension_numbers = #tpu.dot_dimension_numbers<[2], [1], [1], [2], [0, 0, 0, 1, 1, 2], [0], [0]>} : vector<2x1x32xf32>, vector<2x32x96xf32>, vector<2x1x96xf32> -> vector<2x1x96xf32>
    "tpu.trace_stop"() : () -> ()
    %358 = vector.shape_cast %4 : vector<1x96xf32> to vector<1x1x96xf32>
    %359 = vector.broadcast %358 : vector<1x1x96xf32> to vector<2x1x96xf32>
    %360 = arith.addf %357, %359 : vector<2x1x96xf32>
    "tpu.trace_start"() <{level = 10 : i32, message = "boh,bhk->bok"}> : () -> ()
    %cst_90 = arith.constant dense<0.000000e+00> : vector<2x1x96xf32>
    %361 = tpu.matmul %354, %30, %cst_90 {dimension_numbers = #tpu.dot_dimension_numbers<[2], [1], [1], [2], [0, 0, 0, 1, 1, 2], [0], [0]>} : vector<2x1x32xf32>, vector<2x32x96xf32>, vector<2x1x96xf32> -> vector<2x1x96xf32>
    "tpu.trace_stop"() : () -> ()
    %362 = vector.shape_cast %8 : vector<1x96xf32> to vector<1x1x96xf32>
    %363 = vector.broadcast %362 : vector<1x1x96xf32> to vector<2x1x96xf32>
    %364 = arith.addf %361, %363 : vector<2x1x96xf32>
    %365 = vector.extract_strided_slice %15 {offsets = [0, 5, 0], sizes = [2, 1, 96], strides = [1, 1, 1]} : vector<2x16x96xf32> to vector<2x1x96xf32>
    %366 = vector.extract_strided_slice %365 {offsets = [0, 0, 0], sizes = [2, 1, 32], strides = [1, 1, 1]} : vector<2x1x96xf32> to vector<2x1x32xf32>
    %367 = vector.extract_strided_slice %360 {offsets = [0, 0, 0], sizes = [2, 1, 32], strides = [1, 1, 1]} : vector<2x1x96xf32> to vector<2x1x32xf32>
    %368 = arith.addf %366, %367 : vector<2x1x32xf32>
    %369 = arith.negf %368 : vector<2x1x32xf32>
    %370 = math.exp %369 : vector<2x1x32xf32>
    %cst_91 = arith.constant 1.000000e+00 : f32
    %371 = vector.broadcast %cst_91 : f32 to vector<2x1x32xf32>
    %372 = arith.addf %371, %370 : vector<2x1x32xf32>
    %373 = arith.divf %371, %372 : vector<2x1x32xf32>
    %374 = vector.extract_strided_slice %365 {offsets = [0, 0, 32], sizes = [2, 1, 32], strides = [1, 1, 1]} : vector<2x1x96xf32> to vector<2x1x32xf32>
    %375 = vector.extract_strided_slice %360 {offsets = [0, 0, 32], sizes = [2, 1, 32], strides = [1, 1, 1]} : vector<2x1x96xf32> to vector<2x1x32xf32>
    %376 = arith.addf %374, %375 : vector<2x1x32xf32>
    %377 = arith.negf %376 : vector<2x1x32xf32>
    %378 = math.exp %377 : vector<2x1x32xf32>
    %cst_92 = arith.constant 1.000000e+00 : f32
    %379 = vector.broadcast %cst_92 : f32 to vector<2x1x32xf32>
    %380 = arith.addf %379, %378 : vector<2x1x32xf32>
    %381 = arith.divf %379, %380 : vector<2x1x32xf32>
    %382 = vector.extract_strided_slice %365 {offsets = [0, 0, 64], sizes = [2, 1, 32], strides = [1, 1, 1]} : vector<2x1x96xf32> to vector<2x1x32xf32>
    %383 = vector.extract_strided_slice %360 {offsets = [0, 0, 64], sizes = [2, 1, 32], strides = [1, 1, 1]} : vector<2x1x96xf32> to vector<2x1x32xf32>
    %384 = arith.mulf %373, %383 : vector<2x1x32xf32>
    %385 = arith.addf %382, %384 : vector<2x1x32xf32>
    %386 = math.tanh %385 : vector<2x1x32xf32>
    %cst_93 = arith.constant 1.000000e+00 : f32
    %387 = vector.broadcast %cst_93 : f32 to vector<2x1x32xf32>
    %388 = arith.subf %387, %381 : vector<2x1x32xf32>
    %389 = arith.mulf %388, %386 : vector<2x1x32xf32>
    %390 = arith.mulf %381, %327 : vector<2x1x32xf32>
    %391 = arith.addf %389, %390 : vector<2x1x32xf32>
    %392 = vector.extract_strided_slice %19 {offsets = [0, 10, 0], sizes = [2, 1, 96], strides = [1, 1, 1]} : vector<2x16x96xf32> to vector<2x1x96xf32>
    %393 = vector.extract_strided_slice %392 {offsets = [0, 0, 0], sizes = [2, 1, 32], strides = [1, 1, 1]} : vector<2x1x96xf32> to vector<2x1x32xf32>
    %394 = vector.extract_strided_slice %364 {offsets = [0, 0, 0], sizes = [2, 1, 32], strides = [1, 1, 1]} : vector<2x1x96xf32> to vector<2x1x32xf32>
    %395 = arith.addf %393, %394 : vector<2x1x32xf32>
    %396 = arith.negf %395 : vector<2x1x32xf32>
    %397 = math.exp %396 : vector<2x1x32xf32>
    %cst_94 = arith.constant 1.000000e+00 : f32
    %398 = vector.broadcast %cst_94 : f32 to vector<2x1x32xf32>
    %399 = arith.addf %398, %397 : vector<2x1x32xf32>
    %400 = arith.divf %398, %399 : vector<2x1x32xf32>
    %401 = vector.extract_strided_slice %392 {offsets = [0, 0, 32], sizes = [2, 1, 32], strides = [1, 1, 1]} : vector<2x1x96xf32> to vector<2x1x32xf32>
    %402 = vector.extract_strided_slice %364 {offsets = [0, 0, 32], sizes = [2, 1, 32], strides = [1, 1, 1]} : vector<2x1x96xf32> to vector<2x1x32xf32>
    %403 = arith.addf %401, %402 : vector<2x1x32xf32>
    %404 = arith.negf %403 : vector<2x1x32xf32>
    %405 = math.exp %404 : vector<2x1x32xf32>
    %cst_95 = arith.constant 1.000000e+00 : f32
    %406 = vector.broadcast %cst_95 : f32 to vector<2x1x32xf32>
    %407 = arith.addf %406, %405 : vector<2x1x32xf32>
    %408 = arith.divf %406, %407 : vector<2x1x32xf32>
    %409 = vector.extract_strided_slice %392 {offsets = [0, 0, 64], sizes = [2, 1, 32], strides = [1, 1, 1]} : vector<2x1x96xf32> to vector<2x1x32xf32>
    %410 = vector.extract_strided_slice %364 {offsets = [0, 0, 64], sizes = [2, 1, 32], strides = [1, 1, 1]} : vector<2x1x96xf32> to vector<2x1x32xf32>
    %411 = arith.mulf %400, %410 : vector<2x1x32xf32>
    %412 = arith.addf %409, %411 : vector<2x1x32xf32>
    %413 = math.tanh %412 : vector<2x1x32xf32>
    %cst_96 = arith.constant 1.000000e+00 : f32
    %414 = vector.broadcast %cst_96 : f32 to vector<2x1x32xf32>
    %415 = arith.subf %414, %408 : vector<2x1x32xf32>
    %416 = arith.mulf %415, %413 : vector<2x1x32xf32>
    %417 = arith.mulf %408, %354 : vector<2x1x32xf32>
    %418 = arith.addf %416, %417 : vector<2x1x32xf32>
    %c0_97 = arith.constant 0 : index
    %c5 = arith.constant 5 : index
    %c0_98 = arith.constant 0 : index
    %419 = vector.load %arg11[%c0_97, %c5, %c0_98] : memref<2x16x72xf32, #tpu.memory_space<vmem>>, vector<2x1x32xf32>
    tpu.vector_store %arg11[%c0_97, %c5, %c0_98], %391 {strides = array<i32>} : memref<2x16x72xf32, #tpu.memory_space<vmem>>, vector<2x1x32xf32>,
    %c0_99 = arith.constant 0 : index
    %c10 = arith.constant 10 : index
    %c32_100 = arith.constant 32 : index
    %420 = vector.load %arg11[%c0_99, %c10, %c32_100] : memref<2x16x72xf32, #tpu.memory_space<vmem>>, vector<2x1x32xf32>
    tpu.vector_store %arg11[%c0_99, %c10, %c32_100], %418 {strides = array<i32>} : memref<2x16x72xf32, #tpu.memory_space<vmem>>, vector<2x1x32xf32>,
    "tpu.trace_start"() <{level = 10 : i32, message = "boh,bhk->bok"}> : () -> ()
    %cst_101 = arith.constant dense<0.000000e+00> : vector<2x1x96xf32>
    %421 = tpu.matmul %391, %28, %cst_101 {dimension_numbers = #tpu.dot_dimension_numbers<[2], [1], [1], [2], [0, 0, 0, 1, 1, 2], [0], [0]>} : vector<2x1x32xf32>, vector<2x32x96xf32>, vector<2x1x96xf32> -> vector<2x1x96xf32>
    "tpu.trace_stop"() : () -> ()
    %422 = vector.shape_cast %4 : vector<1x96xf32> to vector<1x1x96xf32>
    %423 = vector.broadcast %422 : vector<1x1x96xf32> to vector<2x1x96xf32>
    %424 = arith.addf %421, %423 : vector<2x1x96xf32>
    "tpu.trace_start"() <{level = 10 : i32, message = "boh,bhk->bok"}> : () -> ()
    %cst_102 = arith.constant dense<0.000000e+00> : vector<2x1x96xf32>
    %425 = tpu.matmul %418, %30, %cst_102 {dimension_numbers = #tpu.dot_dimension_numbers<[2], [1], [1], [2], [0, 0, 0, 1, 1, 2], [0], [0]>} : vector<2x1x32xf32>, vector<2x32x96xf32>, vector<2x1x96xf32> -> vector<2x1x96xf32>
    "tpu.trace_stop"() : () -> ()
    %426 = vector.shape_cast %8 : vector<1x96xf32> to vector<1x1x96xf32>
    %427 = vector.broadcast %426 : vector<1x1x96xf32> to vector<2x1x96xf32>
    %428 = arith.addf %425, %427 : vector<2x1x96xf32>
    %429 = vector.extract_strided_slice %15 {offsets = [0, 6, 0], sizes = [2, 1, 96], strides = [1, 1, 1]} : vector<2x16x96xf32> to vector<2x1x96xf32>
    %430 = vector.extract_strided_slice %429 {offsets = [0, 0, 0], sizes = [2, 1, 32], strides = [1, 1, 1]} : vector<2x1x96xf32> to vector<2x1x32xf32>
    %431 = vector.extract_strided_slice %424 {offsets = [0, 0, 0], sizes = [2, 1, 32], strides = [1, 1, 1]} : vector<2x1x96xf32> to vector<2x1x32xf32>
    %432 = arith.addf %430, %431 : vector<2x1x32xf32>
    %433 = arith.negf %432 : vector<2x1x32xf32>
    %434 = math.exp %433 : vector<2x1x32xf32>
    %cst_103 = arith.constant 1.000000e+00 : f32
    %435 = vector.broadcast %cst_103 : f32 to vector<2x1x32xf32>
    %436 = arith.addf %435, %434 : vector<2x1x32xf32>
    %437 = arith.divf %435, %436 : vector<2x1x32xf32>
    %438 = vector.extract_strided_slice %429 {offsets = [0, 0, 32], sizes = [2, 1, 32], strides = [1, 1, 1]} : vector<2x1x96xf32> to vector<2x1x32xf32>
    %439 = vector.extract_strided_slice %424 {offsets = [0, 0, 32], sizes = [2, 1, 32], strides = [1, 1, 1]} : vector<2x1x96xf32> to vector<2x1x32xf32>
    %440 = arith.addf %438, %439 : vector<2x1x32xf32>
    %441 = arith.negf %440 : vector<2x1x32xf32>
    %442 = math.exp %441 : vector<2x1x32xf32>
    %cst_104 = arith.constant 1.000000e+00 : f32
    %443 = vector.broadcast %cst_104 : f32 to vector<2x1x32xf32>
    %444 = arith.addf %443, %442 : vector<2x1x32xf32>
    %445 = arith.divf %443, %444 : vector<2x1x32xf32>
    %446 = vector.extract_strided_slice %429 {offsets = [0, 0, 64], sizes = [2, 1, 32], strides = [1, 1, 1]} : vector<2x1x96xf32> to vector<2x1x32xf32>
    %447 = vector.extract_strided_slice %424 {offsets = [0, 0, 64], sizes = [2, 1, 32], strides = [1, 1, 1]} : vector<2x1x96xf32> to vector<2x1x32xf32>
    %448 = arith.mulf %437, %447 : vector<2x1x32xf32>
    %449 = arith.addf %446, %448 : vector<2x1x32xf32>
    %450 = math.tanh %449 : vector<2x1x32xf32>
    %cst_105 = arith.constant 1.000000e+00 : f32
    %451 = vector.broadcast %cst_105 : f32 to vector<2x1x32xf32>
    %452 = arith.subf %451, %445 : vector<2x1x32xf32>
    %453 = arith.mulf %452, %450 : vector<2x1x32xf32>
    %454 = arith.mulf %445, %391 : vector<2x1x32xf32>
    %455 = arith.addf %453, %454 : vector<2x1x32xf32>
    %456 = vector.extract_strided_slice %19 {offsets = [0, 9, 0], sizes = [2, 1, 96], strides = [1, 1, 1]} : vector<2x16x96xf32> to vector<2x1x96xf32>
    %457 = vector.extract_strided_slice %456 {offsets = [0, 0, 0], sizes = [2, 1, 32], strides = [1, 1, 1]} : vector<2x1x96xf32> to vector<2x1x32xf32>
    %458 = vector.extract_strided_slice %428 {offsets = [0, 0, 0], sizes = [2, 1, 32], strides = [1, 1, 1]} : vector<2x1x96xf32> to vector<2x1x32xf32>
    %459 = arith.addf %457, %458 : vector<2x1x32xf32>
    %460 = arith.negf %459 : vector<2x1x32xf32>
    %461 = math.exp %460 : vector<2x1x32xf32>
    %cst_106 = arith.constant 1.000000e+00 : f32
    %462 = vector.broadcast %cst_106 : f32 to vector<2x1x32xf32>
    %463 = arith.addf %462, %461 : vector<2x1x32xf32>
    %464 = arith.divf %462, %463 : vector<2x1x32xf32>
    %465 = vector.extract_strided_slice %456 {offsets = [0, 0, 32], sizes = [2, 1, 32], strides = [1, 1, 1]} : vector<2x1x96xf32> to vector<2x1x32xf32>
    %466 = vector.extract_strided_slice %428 {offsets = [0, 0, 32], sizes = [2, 1, 32], strides = [1, 1, 1]} : vector<2x1x96xf32> to vector<2x1x32xf32>
    %467 = arith.addf %465, %466 : vector<2x1x32xf32>
    %468 = arith.negf %467 : vector<2x1x32xf32>
    %469 = math.exp %468 : vector<2x1x32xf32>
    %cst_107 = arith.constant 1.000000e+00 : f32
    %470 = vector.broadcast %cst_107 : f32 to vector<2x1x32xf32>
    %471 = arith.addf %470, %469 : vector<2x1x32xf32>
    %472 = arith.divf %470, %471 : vector<2x1x32xf32>
    %473 = vector.extract_strided_slice %456 {offsets = [0, 0, 64], sizes = [2, 1, 32], strides = [1, 1, 1]} : vector<2x1x96xf32> to vector<2x1x32xf32>
    %474 = vector.extract_strided_slice %428 {offsets = [0, 0, 64], sizes = [2, 1, 32], strides = [1, 1, 1]} : vector<2x1x96xf32> to vector<2x1x32xf32>
    %475 = arith.mulf %464, %474 : vector<2x1x32xf32>
    %476 = arith.addf %473, %475 : vector<2x1x32xf32>
    %477 = math.tanh %476 : vector<2x1x32xf32>
    %cst_108 = arith.constant 1.000000e+00 : f32
    %478 = vector.broadcast %cst_108 : f32 to vector<2x1x32xf32>
    %479 = arith.subf %478, %472 : vector<2x1x32xf32>
    %480 = arith.mulf %479, %477 : vector<2x1x32xf32>
    %481 = arith.mulf %472, %418 : vector<2x1x32xf32>
    %482 = arith.addf %480, %481 : vector<2x1x32xf32>
    %c0_109 = arith.constant 0 : index
    %c6 = arith.constant 6 : index
    %c0_110 = arith.constant 0 : index
    %483 = vector.load %arg11[%c0_109, %c6, %c0_110] : memref<2x16x72xf32, #tpu.memory_space<vmem>>, vector<2x1x32xf32>
    tpu.vector_store %arg11[%c0_109, %c6, %c0_110], %455 {strides = array<i32>} : memref<2x16x72xf32, #tpu.memory_space<vmem>>, vector<2x1x32xf32>,
    %c0_111 = arith.constant 0 : index
    %c9 = arith.constant 9 : index
    %c32_112 = arith.constant 32 : index
    %484 = vector.load %arg11[%c0_111, %c9, %c32_112] : memref<2x16x72xf32, #tpu.memory_space<vmem>>, vector<2x1x32xf32>
    tpu.vector_store %arg11[%c0_111, %c9, %c32_112], %482 {strides = array<i32>} : memref<2x16x72xf32, #tpu.memory_space<vmem>>, vector<2x1x32xf32>,
    "tpu.trace_start"() <{level = 10 : i32, message = "boh,bhk->bok"}> : () -> ()
    %cst_113 = arith.constant dense<0.000000e+00> : vector<2x1x96xf32>
    %485 = tpu.matmul %455, %28, %cst_113 {dimension_numbers = #tpu.dot_dimension_numbers<[2], [1], [1], [2], [0, 0, 0, 1, 1, 2], [0], [0]>} : vector<2x1x32xf32>, vector<2x32x96xf32>, vector<2x1x96xf32> -> vector<2x1x96xf32>
    "tpu.trace_stop"() : () -> ()
    %486 = vector.shape_cast %4 : vector<1x96xf32> to vector<1x1x96xf32>
    %487 = vector.broadcast %486 : vector<1x1x96xf32> to vector<2x1x96xf32>
    %488 = arith.addf %485, %487 : vector<2x1x96xf32>
    "tpu.trace_start"() <{level = 10 : i32, message = "boh,bhk->bok"}> : () -> ()
    %cst_114 = arith.constant dense<0.000000e+00> : vector<2x1x96xf32>
    %489 = tpu.matmul %482, %30, %cst_114 {dimension_numbers = #tpu.dot_dimension_numbers<[2], [1], [1], [2], [0, 0, 0, 1, 1, 2], [0], [0]>} : vector<2x1x32xf32>, vector<2x32x96xf32>, vector<2x1x96xf32> -> vector<2x1x96xf32>
    "tpu.trace_stop"() : () -> ()
    %490 = vector.shape_cast %8 : vector<1x96xf32> to vector<1x1x96xf32>
    %491 = vector.broadcast %490 : vector<1x1x96xf32> to vector<2x1x96xf32>
    %492 = arith.addf %489, %491 : vector<2x1x96xf32>
    %493 = vector.extract_strided_slice %15 {offsets = [0, 7, 0], sizes = [2, 1, 96], strides = [1, 1, 1]} : vector<2x16x96xf32> to vector<2x1x96xf32>
    %494 = vector.extract_strided_slice %493 {offsets = [0, 0, 0], sizes = [2, 1, 32], strides = [1, 1, 1]} : vector<2x1x96xf32> to vector<2x1x32xf32>
    %495 = vector.extract_strided_slice %488 {offsets = [0, 0, 0], sizes = [2, 1, 32], strides = [1, 1, 1]} : vector<2x1x96xf32> to vector<2x1x32xf32>
    %496 = arith.addf %494, %495 : vector<2x1x32xf32>
    %497 = arith.negf %496 : vector<2x1x32xf32>
    %498 = math.exp %497 : vector<2x1x32xf32>
    %cst_115 = arith.constant 1.000000e+00 : f32
    %499 = vector.broadcast %cst_115 : f32 to vector<2x1x32xf32>
    %500 = arith.addf %499, %498 : vector<2x1x32xf32>
    %501 = arith.divf %499, %500 : vector<2x1x32xf32>
    %502 = vector.extract_strided_slice %493 {offsets = [0, 0, 32], sizes = [2, 1, 32], strides = [1, 1, 1]} : vector<2x1x96xf32> to vector<2x1x32xf32>
    %503 = vector.extract_strided_slice %488 {offsets = [0, 0, 32], sizes = [2, 1, 32], strides = [1, 1, 1]} : vector<2x1x96xf32> to vector<2x1x32xf32>
    %504 = arith.addf %502, %503 : vector<2x1x32xf32>
    %505 = arith.negf %504 : vector<2x1x32xf32>
    %506 = math.exp %505 : vector<2x1x32xf32>
    %cst_116 = arith.constant 1.000000e+00 : f32
    %507 = vector.broadcast %cst_116 : f32 to vector<2x1x32xf32>
    %508 = arith.addf %507, %506 : vector<2x1x32xf32>
    %509 = arith.divf %507, %508 : vector<2x1x32xf32>
    %510 = vector.extract_strided_slice %493 {offsets = [0, 0, 64], sizes = [2, 1, 32], strides = [1, 1, 1]} : vector<2x1x96xf32> to vector<2x1x32xf32>
    %511 = vector.extract_strided_slice %488 {offsets = [0, 0, 64], sizes = [2, 1, 32], strides = [1, 1, 1]} : vector<2x1x96xf32> to vector<2x1x32xf32>
    %512 = arith.mulf %501, %511 : vector<2x1x32xf32>
    %513 = arith.addf %510, %512 : vector<2x1x32xf32>
    %514 = math.tanh %513 : vector<2x1x32xf32>
    %cst_117 = arith.constant 1.000000e+00 : f32
    %515 = vector.broadcast %cst_117 : f32 to vector<2x1x32xf32>
    %516 = arith.subf %515, %509 : vector<2x1x32xf32>
    %517 = arith.mulf %516, %514 : vector<2x1x32xf32>
    %518 = arith.mulf %509, %455 : vector<2x1x32xf32>
    %519 = arith.addf %517, %518 : vector<2x1x32xf32>
    %520 = vector.extract_strided_slice %19 {offsets = [0, 8, 0], sizes = [2, 1, 96], strides = [1, 1, 1]} : vector<2x16x96xf32> to vector<2x1x96xf32>
    %521 = vector.extract_strided_slice %520 {offsets = [0, 0, 0], sizes = [2, 1, 32], strides = [1, 1, 1]} : vector<2x1x96xf32> to vector<2x1x32xf32>
    %522 = vector.extract_strided_slice %492 {offsets = [0, 0, 0], sizes = [2, 1, 32], strides = [1, 1, 1]} : vector<2x1x96xf32> to vector<2x1x32xf32>
    %523 = arith.addf %521, %522 : vector<2x1x32xf32>
    %524 = arith.negf %523 : vector<2x1x32xf32>
    %525 = math.exp %524 : vector<2x1x32xf32>
    %cst_118 = arith.constant 1.000000e+00 : f32
    %526 = vector.broadcast %cst_118 : f32 to vector<2x1x32xf32>
    %527 = arith.addf %526, %525 : vector<2x1x32xf32>
    %528 = arith.divf %526, %527 : vector<2x1x32xf32>
    %529 = vector.extract_strided_slice %520 {offsets = [0, 0, 32], sizes = [2, 1, 32], strides = [1, 1, 1]} : vector<2x1x96xf32> to vector<2x1x32xf32>
    %530 = vector.extract_strided_slice %492 {offsets = [0, 0, 32], sizes = [2, 1, 32], strides = [1, 1, 1]} : vector<2x1x96xf32> to vector<2x1x32xf32>
    %531 = arith.addf %529, %530 : vector<2x1x32xf32>
    %532 = arith.negf %531 : vector<2x1x32xf32>
    %533 = math.exp %532 : vector<2x1x32xf32>
    %cst_119 = arith.constant 1.000000e+00 : f32
    %534 = vector.broadcast %cst_119 : f32 to vector<2x1x32xf32>
    %535 = arith.addf %534, %533 : vector<2x1x32xf32>
    %536 = arith.divf %534, %535 : vector<2x1x32xf32>
    %537 = vector.extract_strided_slice %520 {offsets = [0, 0, 64], sizes = [2, 1, 32], strides = [1, 1, 1]} : vector<2x1x96xf32> to vector<2x1x32xf32>
    %538 = vector.extract_strided_slice %492 {offsets = [0, 0, 64], sizes = [2, 1, 32], strides = [1, 1, 1]} : vector<2x1x96xf32> to vector<2x1x32xf32>
    %539 = arith.mulf %528, %538 : vector<2x1x32xf32>
    %540 = arith.addf %537, %539 : vector<2x1x32xf32>
    %541 = math.tanh %540 : vector<2x1x32xf32>
    %cst_120 = arith.constant 1.000000e+00 : f32
    %542 = vector.broadcast %cst_120 : f32 to vector<2x1x32xf32>
    %543 = arith.subf %542, %536 : vector<2x1x32xf32>
    %544 = arith.mulf %543, %541 : vector<2x1x32xf32>
    %545 = arith.mulf %536, %482 : vector<2x1x32xf32>
    %546 = arith.addf %544, %545 : vector<2x1x32xf32>
    %c0_121 = arith.constant 0 : index
    %c7 = arith.constant 7 : index
    %c0_122 = arith.constant 0 : index
    %547 = vector.load %arg11[%c0_121, %c7, %c0_122] : memref<2x16x72xf32, #tpu.memory_space<vmem>>, vector<2x1x32xf32>
    tpu.vector_store %arg11[%c0_121, %c7, %c0_122], %519 {strides = array<i32>} : memref<2x16x72xf32, #tpu.memory_space<vmem>>, vector<2x1x32xf32>,
    %c0_123 = arith.constant 0 : index
    %c8 = arith.constant 8 : index
    %c32_124 = arith.constant 32 : index
    %548 = vector.load %arg11[%c0_123, %c8, %c32_124] : memref<2x16x72xf32, #tpu.memory_space<vmem>>, vector<2x1x32xf32>
    tpu.vector_store %arg11[%c0_123, %c8, %c32_124], %546 {strides = array<i32>} : memref<2x16x72xf32, #tpu.memory_space<vmem>>, vector<2x1x32xf32>,
    "tpu.trace_start"() <{level = 10 : i32, message = "boh,bhk->bok"}> : () -> ()
    %cst_125 = arith.constant dense<0.000000e+00> : vector<2x1x96xf32>
    %549 = tpu.matmul %519, %28, %cst_125 {dimension_numbers = #tpu.dot_dimension_numbers<[2], [1], [1], [2], [0, 0, 0, 1, 1, 2], [0], [0]>} : vector<2x1x32xf32>, vector<2x32x96xf32>, vector<2x1x96xf32> -> vector<2x1x96xf32>
    "tpu.trace_stop"() : () -> ()
    %550 = vector.shape_cast %4 : vector<1x96xf32> to vector<1x1x96xf32>
    %551 = vector.broadcast %550 : vector<1x1x96xf32> to vector<2x1x96xf32>
    %552 = arith.addf %549, %551 : vector<2x1x96xf32>
    "tpu.trace_start"() <{level = 10 : i32, message = "boh,bhk->bok"}> : () -> ()
    %cst_126 = arith.constant dense<0.000000e+00> : vector<2x1x96xf32>
    %553 = tpu.matmul %546, %30, %cst_126 {dimension_numbers = #tpu.dot_dimension_numbers<[2], [1], [1], [2], [0, 0, 0, 1, 1, 2], [0], [0]>} : vector<2x1x32xf32>, vector<2x32x96xf32>, vector<2x1x96xf32> -> vector<2x1x96xf32>
    "tpu.trace_stop"() : () -> ()
    %554 = vector.shape_cast %8 : vector<1x96xf32> to vector<1x1x96xf32>
    %555 = vector.broadcast %554 : vector<1x1x96xf32> to vector<2x1x96xf32>
    %556 = arith.addf %553, %555 : vector<2x1x96xf32>
    %557 = vector.extract_strided_slice %15 {offsets = [0, 8, 0], sizes = [2, 1, 96], strides = [1, 1, 1]} : vector<2x16x96xf32> to vector<2x1x96xf32>
    %558 = vector.extract_strided_slice %557 {offsets = [0, 0, 0], sizes = [2, 1, 32], strides = [1, 1, 1]} : vector<2x1x96xf32> to vector<2x1x32xf32>
    %559 = vector.extract_strided_slice %552 {offsets = [0, 0, 0], sizes = [2, 1, 32], strides = [1, 1, 1]} : vector<2x1x96xf32> to vector<2x1x32xf32>
    %560 = arith.addf %558, %559 : vector<2x1x32xf32>
    %561 = arith.negf %560 : vector<2x1x32xf32>
    %562 = math.exp %561 : vector<2x1x32xf32>
    %cst_127 = arith.constant 1.000000e+00 : f32
    %563 = vector.broadcast %cst_127 : f32 to vector<2x1x32xf32>
    %564 = arith.addf %563, %562 : vector<2x1x32xf32>
    %565 = arith.divf %563, %564 : vector<2x1x32xf32>
    %566 = vector.extract_strided_slice %557 {offsets = [0, 0, 32], sizes = [2, 1, 32], strides = [1, 1, 1]} : vector<2x1x96xf32> to vector<2x1x32xf32>
    %567 = vector.extract_strided_slice %552 {offsets = [0, 0, 32], sizes = [2, 1, 32], strides = [1, 1, 1]} : vector<2x1x96xf32> to vector<2x1x32xf32>
    %568 = arith.addf %566, %567 : vector<2x1x32xf32>
    %569 = arith.negf %568 : vector<2x1x32xf32>
    %570 = math.exp %569 : vector<2x1x32xf32>
    %cst_128 = arith.constant 1.000000e+00 : f32
    %571 = vector.broadcast %cst_128 : f32 to vector<2x1x32xf32>
    %572 = arith.addf %571, %570 : vector<2x1x32xf32>
    %573 = arith.divf %571, %572 : vector<2x1x32xf32>
    %574 = vector.extract_strided_slice %557 {offsets = [0, 0, 64], sizes = [2, 1, 32], strides = [1, 1, 1]} : vector<2x1x96xf32> to vector<2x1x32xf32>
    %575 = vector.extract_strided_slice %552 {offsets = [0, 0, 64], sizes = [2, 1, 32], strides = [1, 1, 1]} : vector<2x1x96xf32> to vector<2x1x32xf32>
    %576 = arith.mulf %565, %575 : vector<2x1x32xf32>
    %577 = arith.addf %574, %576 : vector<2x1x32xf32>
    %578 = math.tanh %577 : vector<2x1x32xf32>
    %cst_129 = arith.constant 1.000000e+00 : f32
    %579 = vector.broadcast %cst_129 : f32 to vector<2x1x32xf32>
    %580 = arith.subf %579, %573 : vector<2x1x32xf32>
    %581 = arith.mulf %580, %578 : vector<2x1x32xf32>
    %582 = arith.mulf %573, %519 : vector<2x1x32xf32>
    %583 = arith.addf %581, %582 : vector<2x1x32xf32>
    %584 = vector.extract_strided_slice %19 {offsets = [0, 7, 0], sizes = [2, 1, 96], strides = [1, 1, 1]} : vector<2x16x96xf32> to vector<2x1x96xf32>
    %585 = vector.extract_strided_slice %584 {offsets = [0, 0, 0], sizes = [2, 1, 32], strides = [1, 1, 1]} : vector<2x1x96xf32> to vector<2x1x32xf32>
    %586 = vector.extract_strided_slice %556 {offsets = [0, 0, 0], sizes = [2, 1, 32], strides = [1, 1, 1]} : vector<2x1x96xf32> to vector<2x1x32xf32>
    %587 = arith.addf %585, %586 : vector<2x1x32xf32>
    %588 = arith.negf %587 : vector<2x1x32xf32>
    %589 = math.exp %588 : vector<2x1x32xf32>
    %cst_130 = arith.constant 1.000000e+00 : f32
    %590 = vector.broadcast %cst_130 : f32 to vector<2x1x32xf32>
    %591 = arith.addf %590, %589 : vector<2x1x32xf32>
    %592 = arith.divf %590, %591 : vector<2x1x32xf32>
    %593 = vector.extract_strided_slice %584 {offsets = [0, 0, 32], sizes = [2, 1, 32], strides = [1, 1, 1]} : vector<2x1x96xf32> to vector<2x1x32xf32>
    %594 = vector.extract_strided_slice %556 {offsets = [0, 0, 32], sizes = [2, 1, 32], strides = [1, 1, 1]} : vector<2x1x96xf32> to vector<2x1x32xf32>
    %595 = arith.addf %593, %594 : vector<2x1x32xf32>
    %596 = arith.negf %595 : vector<2x1x32xf32>
    %597 = math.exp %596 : vector<2x1x32xf32>
    %cst_131 = arith.constant 1.000000e+00 : f32
    %598 = vector.broadcast %cst_131 : f32 to vector<2x1x32xf32>
    %599 = arith.addf %598, %597 : vector<2x1x32xf32>
    %600 = arith.divf %598, %599 : vector<2x1x32xf32>
    %601 = vector.extract_strided_slice %584 {offsets = [0, 0, 64], sizes = [2, 1, 32], strides = [1, 1, 1]} : vector<2x1x96xf32> to vector<2x1x32xf32>
    %602 = vector.extract_strided_slice %556 {offsets = [0, 0, 64], sizes = [2, 1, 32], strides = [1, 1, 1]} : vector<2x1x96xf32> to vector<2x1x32xf32>
    %603 = arith.mulf %592, %602 : vector<2x1x32xf32>
    %604 = arith.addf %601, %603 : vector<2x1x32xf32>
    %605 = math.tanh %604 : vector<2x1x32xf32>
    %cst_132 = arith.constant 1.000000e+00 : f32
    %606 = vector.broadcast %cst_132 : f32 to vector<2x1x32xf32>
    %607 = arith.subf %606, %600 : vector<2x1x32xf32>
    %608 = arith.mulf %607, %605 : vector<2x1x32xf32>
    %609 = arith.mulf %600, %546 : vector<2x1x32xf32>
    %610 = arith.addf %608, %609 : vector<2x1x32xf32>
    %c0_133 = arith.constant 0 : index
    %c8_134 = arith.constant 8 : index
    %c0_135 = arith.constant 0 : index
    %611 = vector.load %arg11[%c0_133, %c8_134, %c0_135] : memref<2x16x72xf32, #tpu.memory_space<vmem>>, vector<2x1x32xf32>
    tpu.vector_store %arg11[%c0_133, %c8_134, %c0_135], %583 {strides = array<i32>} : memref<2x16x72xf32, #tpu.memory_space<vmem>>, vector<2x1x32xf32>,
    %c0_136 = arith.constant 0 : index
    %c7_137 = arith.constant 7 : index
    %c32_138 = arith.constant 32 : index
    %612 = vector.load %arg11[%c0_136, %c7_137, %c32_138] : memref<2x16x72xf32, #tpu.memory_space<vmem>>, vector<2x1x32xf32>
    tpu.vector_store %arg11[%c0_136, %c7_137, %c32_138], %610 {strides = array<i32>} : memref<2x16x72xf32, #tpu.memory_space<vmem>>, vector<2x1x32xf32>,
    "tpu.trace_start"() <{level = 10 : i32, message = "boh,bhk->bok"}> : () -> ()
    %cst_139 = arith.constant dense<0.000000e+00> : vector<2x1x96xf32>
    %613 = tpu.matmul %583, %28, %cst_139 {dimension_numbers = #tpu.dot_dimension_numbers<[2], [1], [1], [2], [0, 0, 0, 1, 1, 2], [0], [0]>} : vector<2x1x32xf32>, vector<2x32x96xf32>, vector<2x1x96xf32> -> vector<2x1x96xf32>
    "tpu.trace_stop"() : () -> ()
    %614 = vector.shape_cast %4 : vector<1x96xf32> to vector<1x1x96xf32>
    %615 = vector.broadcast %614 : vector<1x1x96xf32> to vector<2x1x96xf32>
    %616 = arith.addf %613, %615 : vector<2x1x96xf32>
    "tpu.trace_start"() <{level = 10 : i32, message = "boh,bhk->bok"}> : () -> ()
    %cst_140 = arith.constant dense<0.000000e+00> : vector<2x1x96xf32>
    %617 = tpu.matmul %610, %30, %cst_140 {dimension_numbers = #tpu.dot_dimension_numbers<[2], [1], [1], [2], [0, 0, 0, 1, 1, 2], [0], [0]>} : vector<2x1x32xf32>, vector<2x32x96xf32>, vector<2x1x96xf32> -> vector<2x1x96xf32>
    "tpu.trace_stop"() : () -> ()
    %618 = vector.shape_cast %8 : vector<1x96xf32> to vector<1x1x96xf32>
    %619 = vector.broadcast %618 : vector<1x1x96xf32> to vector<2x1x96xf32>
    %620 = arith.addf %617, %619 : vector<2x1x96xf32>
    %621 = vector.extract_strided_slice %15 {offsets = [0, 9, 0], sizes = [2, 1, 96], strides = [1, 1, 1]} : vector<2x16x96xf32> to vector<2x1x96xf32>
    %622 = vector.extract_strided_slice %621 {offsets = [0, 0, 0], sizes = [2, 1, 32], strides = [1, 1, 1]} : vector<2x1x96xf32> to vector<2x1x32xf32>
    %623 = vector.extract_strided_slice %616 {offsets = [0, 0, 0], sizes = [2, 1, 32], strides = [1, 1, 1]} : vector<2x1x96xf32> to vector<2x1x32xf32>
    %624 = arith.addf %622, %623 : vector<2x1x32xf32>
    %625 = arith.negf %624 : vector<2x1x32xf32>
    %626 = math.exp %625 : vector<2x1x32xf32>
    %cst_141 = arith.constant 1.000000e+00 : f32
    %627 = vector.broadcast %cst_141 : f32 to vector<2x1x32xf32>
    %628 = arith.addf %627, %626 : vector<2x1x32xf32>
    %629 = arith.divf %627, %628 : vector<2x1x32xf32>
    %630 = vector.extract_strided_slice %621 {offsets = [0, 0, 32], sizes = [2, 1, 32], strides = [1, 1, 1]} : vector<2x1x96xf32> to vector<2x1x32xf32>
    %631 = vector.extract_strided_slice %616 {offsets = [0, 0, 32], sizes = [2, 1, 32], strides = [1, 1, 1]} : vector<2x1x96xf32> to vector<2x1x32xf32>
    %632 = arith.addf %630, %631 : vector<2x1x32xf32>
    %633 = arith.negf %632 : vector<2x1x32xf32>
    %634 = math.exp %633 : vector<2x1x32xf32>
    %cst_142 = arith.constant 1.000000e+00 : f32
    %635 = vector.broadcast %cst_142 : f32 to vector<2x1x32xf32>
    %636 = arith.addf %635, %634 : vector<2x1x32xf32>
    %637 = arith.divf %635, %636 : vector<2x1x32xf32>
    %638 = vector.extract_strided_slice %621 {offsets = [0, 0, 64], sizes = [2, 1, 32], strides = [1, 1, 1]} : vector<2x1x96xf32> to vector<2x1x32xf32>
    %639 = vector.extract_strided_slice %616 {offsets = [0, 0, 64], sizes = [2, 1, 32], strides = [1, 1, 1]} : vector<2x1x96xf32> to vector<2x1x32xf32>
    %640 = arith.mulf %629, %639 : vector<2x1x32xf32>
    %641 = arith.addf %638, %640 : vector<2x1x32xf32>
    %642 = math.tanh %641 : vector<2x1x32xf32>
    %cst_143 = arith.constant 1.000000e+00 : f32
    %643 = vector.broadcast %cst_143 : f32 to vector<2x1x32xf32>
    %644 = arith.subf %643, %637 : vector<2x1x32xf32>
    %645 = arith.mulf %644, %642 : vector<2x1x32xf32>
    %646 = arith.mulf %637, %583 : vector<2x1x32xf32>
    %647 = arith.addf %645, %646 : vector<2x1x32xf32>
    %648 = vector.extract_strided_slice %19 {offsets = [0, 6, 0], sizes = [2, 1, 96], strides = [1, 1, 1]} : vector<2x16x96xf32> to vector<2x1x96xf32>
    %649 = vector.extract_strided_slice %648 {offsets = [0, 0, 0], sizes = [2, 1, 32], strides = [1, 1, 1]} : vector<2x1x96xf32> to vector<2x1x32xf32>
    %650 = vector.extract_strided_slice %620 {offsets = [0, 0, 0], sizes = [2, 1, 32], strides = [1, 1, 1]} : vector<2x1x96xf32> to vector<2x1x32xf32>
    %651 = arith.addf %649, %650 : vector<2x1x32xf32>
    %652 = arith.negf %651 : vector<2x1x32xf32>
    %653 = math.exp %652 : vector<2x1x32xf32>
    %cst_144 = arith.constant 1.000000e+00 : f32
    %654 = vector.broadcast %cst_144 : f32 to vector<2x1x32xf32>
    %655 = arith.addf %654, %653 : vector<2x1x32xf32>
    %656 = arith.divf %654, %655 : vector<2x1x32xf32>
    %657 = vector.extract_strided_slice %648 {offsets = [0, 0, 32], sizes = [2, 1, 32], strides = [1, 1, 1]} : vector<2x1x96xf32> to vector<2x1x32xf32>
    %658 = vector.extract_strided_slice %620 {offsets = [0, 0, 32], sizes = [2, 1, 32], strides = [1, 1, 1]} : vector<2x1x96xf32> to vector<2x1x32xf32>
    %659 = arith.addf %657, %658 : vector<2x1x32xf32>
    %660 = arith.negf %659 : vector<2x1x32xf32>
    %661 = math.exp %660 : vector<2x1x32xf32>
    %cst_145 = arith.constant 1.000000e+00 : f32
    %662 = vector.broadcast %cst_145 : f32 to vector<2x1x32xf32>
    %663 = arith.addf %662, %661 : vector<2x1x32xf32>
    %664 = arith.divf %662, %663 : vector<2x1x32xf32>
    %665 = vector.extract_strided_slice %648 {offsets = [0, 0, 64], sizes = [2, 1, 32], strides = [1, 1, 1]} : vector<2x1x96xf32> to vector<2x1x32xf32>
    %666 = vector.extract_strided_slice %620 {offsets = [0, 0, 64], sizes = [2, 1, 32], strides = [1, 1, 1]} : vector<2x1x96xf32> to vector<2x1x32xf32>
    %667 = arith.mulf %656, %666 : vector<2x1x32xf32>
    %668 = arith.addf %665, %667 : vector<2x1x32xf32>
    %669 = math.tanh %668 : vector<2x1x32xf32>
    %cst_146 = arith.constant 1.000000e+00 : f32
    %670 = vector.broadcast %cst_146 : f32 to vector<2x1x32xf32>
    %671 = arith.subf %670, %664 : vector<2x1x32xf32>
    %672 = arith.mulf %671, %669 : vector<2x1x32xf32>
    %673 = arith.mulf %664, %610 : vector<2x1x32xf32>
    %674 = arith.addf %672, %673 : vector<2x1x32xf32>
    %c0_147 = arith.constant 0 : index
    %c9_148 = arith.constant 9 : index
    %c0_149 = arith.constant 0 : index
    %675 = vector.load %arg11[%c0_147, %c9_148, %c0_149] : memref<2x16x72xf32, #tpu.memory_space<vmem>>, vector<2x1x32xf32>
    tpu.vector_store %arg11[%c0_147, %c9_148, %c0_149], %647 {strides = array<i32>} : memref<2x16x72xf32, #tpu.memory_space<vmem>>, vector<2x1x32xf32>,
    %c0_150 = arith.constant 0 : index
    %c6_151 = arith.constant 6 : index
    %c32_152 = arith.constant 32 : index
    %676 = vector.load %arg11[%c0_150, %c6_151, %c32_152] : memref<2x16x72xf32, #tpu.memory_space<vmem>>, vector<2x1x32xf32>
    tpu.vector_store %arg11[%c0_150, %c6_151, %c32_152], %674 {strides = array<i32>} : memref<2x16x72xf32, #tpu.memory_space<vmem>>, vector<2x1x32xf32>,
    "tpu.trace_start"() <{level = 10 : i32, message = "boh,bhk->bok"}> : () -> ()
    %cst_153 = arith.constant dense<0.000000e+00> : vector<2x1x96xf32>
    %677 = tpu.matmul %647, %28, %cst_153 {dimension_numbers = #tpu.dot_dimension_numbers<[2], [1], [1], [2], [0, 0, 0, 1, 1, 2], [0], [0]>} : vector<2x1x32xf32>, vector<2x32x96xf32>, vector<2x1x96xf32> -> vector<2x1x96xf32>
    "tpu.trace_stop"() : () -> ()
    %678 = vector.shape_cast %4 : vector<1x96xf32> to vector<1x1x96xf32>
    %679 = vector.broadcast %678 : vector<1x1x96xf32> to vector<2x1x96xf32>
    %680 = arith.addf %677, %679 : vector<2x1x96xf32>
    "tpu.trace_start"() <{level = 10 : i32, message = "boh,bhk->bok"}> : () -> ()
    %cst_154 = arith.constant dense<0.000000e+00> : vector<2x1x96xf32>
    %681 = tpu.matmul %674, %30, %cst_154 {dimension_numbers = #tpu.dot_dimension_numbers<[2], [1], [1], [2], [0, 0, 0, 1, 1, 2], [0], [0]>} : vector<2x1x32xf32>, vector<2x32x96xf32>, vector<2x1x96xf32> -> vector<2x1x96xf32>
    "tpu.trace_stop"() : () -> ()
    %682 = vector.shape_cast %8 : vector<1x96xf32> to vector<1x1x96xf32>
    %683 = vector.broadcast %682 : vector<1x1x96xf32> to vector<2x1x96xf32>
    %684 = arith.addf %681, %683 : vector<2x1x96xf32>
    %685 = vector.extract_strided_slice %15 {offsets = [0, 10, 0], sizes = [2, 1, 96], strides = [1, 1, 1]} : vector<2x16x96xf32> to vector<2x1x96xf32>
    %686 = vector.extract_strided_slice %685 {offsets = [0, 0, 0], sizes = [2, 1, 32], strides = [1, 1, 1]} : vector<2x1x96xf32> to vector<2x1x32xf32>
    %687 = vector.extract_strided_slice %680 {offsets = [0, 0, 0], sizes = [2, 1, 32], strides = [1, 1, 1]} : vector<2x1x96xf32> to vector<2x1x32xf32>
    %688 = arith.addf %686, %687 : vector<2x1x32xf32>
    %689 = arith.negf %688 : vector<2x1x32xf32>
    %690 = math.exp %689 : vector<2x1x32xf32>
    %cst_155 = arith.constant 1.000000e+00 : f32
    %691 = vector.broadcast %cst_155 : f32 to vector<2x1x32xf32>
    %692 = arith.addf %691, %690 : vector<2x1x32xf32>
    %693 = arith.divf %691, %692 : vector<2x1x32xf32>
    %694 = vector.extract_strided_slice %685 {offsets = [0, 0, 32], sizes = [2, 1, 32], strides = [1, 1, 1]} : vector<2x1x96xf32> to vector<2x1x32xf32>
    %695 = vector.extract_strided_slice %680 {offsets = [0, 0, 32], sizes = [2, 1, 32], strides = [1, 1, 1]} : vector<2x1x96xf32> to vector<2x1x32xf32>
    %696 = arith.addf %694, %695 : vector<2x1x32xf32>
    %697 = arith.negf %696 : vector<2x1x32xf32>
    %698 = math.exp %697 : vector<2x1x32xf32>
    %cst_156 = arith.constant 1.000000e+00 : f32
    %699 = vector.broadcast %cst_156 : f32 to vector<2x1x32xf32>
    %700 = arith.addf %699, %698 : vector<2x1x32xf32>
    %701 = arith.divf %699, %700 : vector<2x1x32xf32>
    %702 = vector.extract_strided_slice %685 {offsets = [0, 0, 64], sizes = [2, 1, 32], strides = [1, 1, 1]} : vector<2x1x96xf32> to vector<2x1x32xf32>
    %703 = vector.extract_strided_slice %680 {offsets = [0, 0, 64], sizes = [2, 1, 32], strides = [1, 1, 1]} : vector<2x1x96xf32> to vector<2x1x32xf32>
    %704 = arith.mulf %693, %703 : vector<2x1x32xf32>
    %705 = arith.addf %702, %704 : vector<2x1x32xf32>
    %706 = math.tanh %705 : vector<2x1x32xf32>
    %cst_157 = arith.constant 1.000000e+00 : f32
    %707 = vector.broadcast %cst_157 : f32 to vector<2x1x32xf32>
    %708 = arith.subf %707, %701 : vector<2x1x32xf32>
    %709 = arith.mulf %708, %706 : vector<2x1x32xf32>
    %710 = arith.mulf %701, %647 : vector<2x1x32xf32>
    %711 = arith.addf %709, %710 : vector<2x1x32xf32>
    %712 = vector.extract_strided_slice %19 {offsets = [0, 5, 0], sizes = [2, 1, 96], strides = [1, 1, 1]} : vector<2x16x96xf32> to vector<2x1x96xf32>
    %713 = vector.extract_strided_slice %712 {offsets = [0, 0, 0], sizes = [2, 1, 32], strides = [1, 1, 1]} : vector<2x1x96xf32> to vector<2x1x32xf32>
    %714 = vector.extract_strided_slice %684 {offsets = [0, 0, 0], sizes = [2, 1, 32], strides = [1, 1, 1]} : vector<2x1x96xf32> to vector<2x1x32xf32>
    %715 = arith.addf %713, %714 : vector<2x1x32xf32>
    %716 = arith.negf %715 : vector<2x1x32xf32>
    %717 = math.exp %716 : vector<2x1x32xf32>
    %cst_158 = arith.constant 1.000000e+00 : f32
    %718 = vector.broadcast %cst_158 : f32 to vector<2x1x32xf32>
    %719 = arith.addf %718, %717 : vector<2x1x32xf32>
    %720 = arith.divf %718, %719 : vector<2x1x32xf32>
    %721 = vector.extract_strided_slice %712 {offsets = [0, 0, 32], sizes = [2, 1, 32], strides = [1, 1, 1]} : vector<2x1x96xf32> to vector<2x1x32xf32>
    %722 = vector.extract_strided_slice %684 {offsets = [0, 0, 32], sizes = [2, 1, 32], strides = [1, 1, 1]} : vector<2x1x96xf32> to vector<2x1x32xf32>
    %723 = arith.addf %721, %722 : vector<2x1x32xf32>
    %724 = arith.negf %723 : vector<2x1x32xf32>
    %725 = math.exp %724 : vector<2x1x32xf32>
    %cst_159 = arith.constant 1.000000e+00 : f32
    %726 = vector.broadcast %cst_159 : f32 to vector<2x1x32xf32>
    %727 = arith.addf %726, %725 : vector<2x1x32xf32>
    %728 = arith.divf %726, %727 : vector<2x1x32xf32>
    %729 = vector.extract_strided_slice %712 {offsets = [0, 0, 64], sizes = [2, 1, 32], strides = [1, 1, 1]} : vector<2x1x96xf32> to vector<2x1x32xf32>
    %730 = vector.extract_strided_slice %684 {offsets = [0, 0, 64], sizes = [2, 1, 32], strides = [1, 1, 1]} : vector<2x1x96xf32> to vector<2x1x32xf32>
    %731 = arith.mulf %720, %730 : vector<2x1x32xf32>
    %732 = arith.addf %729, %731 : vector<2x1x32xf32>
    %733 = math.tanh %732 : vector<2x1x32xf32>
    %cst_160 = arith.constant 1.000000e+00 : f32
    %734 = vector.broadcast %cst_160 : f32 to vector<2x1x32xf32>
    %735 = arith.subf %734, %728 : vector<2x1x32xf32>
    %736 = arith.mulf %735, %733 : vector<2x1x32xf32>
    %737 = arith.mulf %728, %674 : vector<2x1x32xf32>
    %738 = arith.addf %736, %737 : vector<2x1x32xf32>
    %c0_161 = arith.constant 0 : index
    %c10_162 = arith.constant 10 : index
    %c0_163 = arith.constant 0 : index
    %739 = vector.load %arg11[%c0_161, %c10_162, %c0_163] : memref<2x16x72xf32, #tpu.memory_space<vmem>>, vector<2x1x32xf32>
    tpu.vector_store %arg11[%c0_161, %c10_162, %c0_163], %711 {strides = array<i32>} : memref<2x16x72xf32, #tpu.memory_space<vmem>>, vector<2x1x32xf32>,
    %c0_164 = arith.constant 0 : index
    %c5_165 = arith.constant 5 : index
    %c32_166 = arith.constant 32 : index
    %740 = vector.load %arg11[%c0_164, %c5_165, %c32_166] : memref<2x16x72xf32, #tpu.memory_space<vmem>>, vector<2x1x32xf32>
    tpu.vector_store %arg11[%c0_164, %c5_165, %c32_166], %738 {strides = array<i32>} : memref<2x16x72xf32, #tpu.memory_space<vmem>>, vector<2x1x32xf32>,
    "tpu.trace_start"() <{level = 10 : i32, message = "boh,bhk->bok"}> : () -> ()
    %cst_167 = arith.constant dense<0.000000e+00> : vector<2x1x96xf32>
    %741 = tpu.matmul %711, %28, %cst_167 {dimension_numbers = #tpu.dot_dimension_numbers<[2], [1], [1], [2], [0, 0, 0, 1, 1, 2], [0], [0]>} : vector<2x1x32xf32>, vector<2x32x96xf32>, vector<2x1x96xf32> -> vector<2x1x96xf32>
    "tpu.trace_stop"() : () -> ()
    %742 = vector.shape_cast %4 : vector<1x96xf32> to vector<1x1x96xf32>
    %743 = vector.broadcast %742 : vector<1x1x96xf32> to vector<2x1x96xf32>
    %744 = arith.addf %741, %743 : vector<2x1x96xf32>
    "tpu.trace_start"() <{level = 10 : i32, message = "boh,bhk->bok"}> : () -> ()
    %cst_168 = arith.constant dense<0.000000e+00> : vector<2x1x96xf32>
    %745 = tpu.matmul %738, %30, %cst_168 {dimension_numbers = #tpu.dot_dimension_numbers<[2], [1], [1], [2], [0, 0, 0, 1, 1, 2], [0], [0]>} : vector<2x1x32xf32>, vector<2x32x96xf32>, vector<2x1x96xf32> -> vector<2x1x96xf32>
    "tpu.trace_stop"() : () -> ()
    %746 = vector.shape_cast %8 : vector<1x96xf32> to vector<1x1x96xf32>
    %747 = vector.broadcast %746 : vector<1x1x96xf32> to vector<2x1x96xf32>
    %748 = arith.addf %745, %747 : vector<2x1x96xf32>
    %749 = vector.extract_strided_slice %15 {offsets = [0, 11, 0], sizes = [2, 1, 96], strides = [1, 1, 1]} : vector<2x16x96xf32> to vector<2x1x96xf32>
    %750 = vector.extract_strided_slice %749 {offsets = [0, 0, 0], sizes = [2, 1, 32], strides = [1, 1, 1]} : vector<2x1x96xf32> to vector<2x1x32xf32>
    %751 = vector.extract_strided_slice %744 {offsets = [0, 0, 0], sizes = [2, 1, 32], strides = [1, 1, 1]} : vector<2x1x96xf32> to vector<2x1x32xf32>
    %752 = arith.addf %750, %751 : vector<2x1x32xf32>
    %753 = arith.negf %752 : vector<2x1x32xf32>
    %754 = math.exp %753 : vector<2x1x32xf32>
    %cst_169 = arith.constant 1.000000e+00 : f32
    %755 = vector.broadcast %cst_169 : f32 to vector<2x1x32xf32>
    %756 = arith.addf %755, %754 : vector<2x1x32xf32>
    %757 = arith.divf %755, %756 : vector<2x1x32xf32>
    %758 = vector.extract_strided_slice %749 {offsets = [0, 0, 32], sizes = [2, 1, 32], strides = [1, 1, 1]} : vector<2x1x96xf32> to vector<2x1x32xf32>
    %759 = vector.extract_strided_slice %744 {offsets = [0, 0, 32], sizes = [2, 1, 32], strides = [1, 1, 1]} : vector<2x1x96xf32> to vector<2x1x32xf32>
    %760 = arith.addf %758, %759 : vector<2x1x32xf32>
    %761 = arith.negf %760 : vector<2x1x32xf32>
    %762 = math.exp %761 : vector<2x1x32xf32>
    %cst_170 = arith.constant 1.000000e+00 : f32
    %763 = vector.broadcast %cst_170 : f32 to vector<2x1x32xf32>
    %764 = arith.addf %763, %762 : vector<2x1x32xf32>
    %765 = arith.divf %763, %764 : vector<2x1x32xf32>
    %766 = vector.extract_strided_slice %749 {offsets = [0, 0, 64], sizes = [2, 1, 32], strides = [1, 1, 1]} : vector<2x1x96xf32> to vector<2x1x32xf32>
    %767 = vector.extract_strided_slice %744 {offsets = [0, 0, 64], sizes = [2, 1, 32], strides = [1, 1, 1]} : vector<2x1x96xf32> to vector<2x1x32xf32>
    %768 = arith.mulf %757, %767 : vector<2x1x32xf32>
    %769 = arith.addf %766, %768 : vector<2x1x32xf32>
    %770 = math.tanh %769 : vector<2x1x32xf32>
    %cst_171 = arith.constant 1.000000e+00 : f32
    %771 = vector.broadcast %cst_171 : f32 to vector<2x1x32xf32>
    %772 = arith.subf %771, %765 : vector<2x1x32xf32>
    %773 = arith.mulf %772, %770 : vector<2x1x32xf32>
    %774 = arith.mulf %765, %711 : vector<2x1x32xf32>
    %775 = arith.addf %773, %774 : vector<2x1x32xf32>
    %776 = vector.extract_strided_slice %19 {offsets = [0, 4, 0], sizes = [2, 1, 96], strides = [1, 1, 1]} : vector<2x16x96xf32> to vector<2x1x96xf32>
    %777 = vector.extract_strided_slice %776 {offsets = [0, 0, 0], sizes = [2, 1, 32], strides = [1, 1, 1]} : vector<2x1x96xf32> to vector<2x1x32xf32>
    %778 = vector.extract_strided_slice %748 {offsets = [0, 0, 0], sizes = [2, 1, 32], strides = [1, 1, 1]} : vector<2x1x96xf32> to vector<2x1x32xf32>
    %779 = arith.addf %777, %778 : vector<2x1x32xf32>
    %780 = arith.negf %779 : vector<2x1x32xf32>
    %781 = math.exp %780 : vector<2x1x32xf32>
    %cst_172 = arith.constant 1.000000e+00 : f32
    %782 = vector.broadcast %cst_172 : f32 to vector<2x1x32xf32>
    %783 = arith.addf %782, %781 : vector<2x1x32xf32>
    %784 = arith.divf %782, %783 : vector<2x1x32xf32>
    %785 = vector.extract_strided_slice %776 {offsets = [0, 0, 32], sizes = [2, 1, 32], strides = [1, 1, 1]} : vector<2x1x96xf32> to vector<2x1x32xf32>
    %786 = vector.extract_strided_slice %748 {offsets = [0, 0, 32], sizes = [2, 1, 32], strides = [1, 1, 1]} : vector<2x1x96xf32> to vector<2x1x32xf32>
    %787 = arith.addf %785, %786 : vector<2x1x32xf32>
    %788 = arith.negf %787 : vector<2x1x32xf32>
    %789 = math.exp %788 : vector<2x1x32xf32>
    %cst_173 = arith.constant 1.000000e+00 : f32
    %790 = vector.broadcast %cst_173 : f32 to vector<2x1x32xf32>
    %791 = arith.addf %790, %789 : vector<2x1x32xf32>
    %792 = arith.divf %790, %791 : vector<2x1x32xf32>
    %793 = vector.extract_strided_slice %776 {offsets = [0, 0, 64], sizes = [2, 1, 32], strides = [1, 1, 1]} : vector<2x1x96xf32> to vector<2x1x32xf32>
    %794 = vector.extract_strided_slice %748 {offsets = [0, 0, 64], sizes = [2, 1, 32], strides = [1, 1, 1]} : vector<2x1x96xf32> to vector<2x1x32xf32>
    %795 = arith.mulf %784, %794 : vector<2x1x32xf32>
    %796 = arith.addf %793, %795 : vector<2x1x32xf32>
    %797 = math.tanh %796 : vector<2x1x32xf32>
    %cst_174 = arith.constant 1.000000e+00 : f32
    %798 = vector.broadcast %cst_174 : f32 to vector<2x1x32xf32>
    %799 = arith.subf %798, %792 : vector<2x1x32xf32>
    %800 = arith.mulf %799, %797 : vector<2x1x32xf32>
    %801 = arith.mulf %792, %738 : vector<2x1x32xf32>
    %802 = arith.addf %800, %801 : vector<2x1x32xf32>
    %c0_175 = arith.constant 0 : index
    %c11_176 = arith.constant 11 : index
    %c0_177 = arith.constant 0 : index
    %803 = vector.load %arg11[%c0_175, %c11_176, %c0_177] : memref<2x16x72xf32, #tpu.memory_space<vmem>>, vector<2x1x32xf32>
    tpu.vector_store %arg11[%c0_175, %c11_176, %c0_177], %775 {strides = array<i32>} : memref<2x16x72xf32, #tpu.memory_space<vmem>>, vector<2x1x32xf32>,
    %c0_178 = arith.constant 0 : index
    %c4_179 = arith.constant 4 : index
    %c32_180 = arith.constant 32 : index
    %804 = vector.load %arg11[%c0_178, %c4_179, %c32_180] : memref<2x16x72xf32, #tpu.memory_space<vmem>>, vector<2x1x32xf32>
    tpu.vector_store %arg11[%c0_178, %c4_179, %c32_180], %802 {strides = array<i32>} : memref<2x16x72xf32, #tpu.memory_space<vmem>>, vector<2x1x32xf32>,
    "tpu.trace_start"() <{level = 10 : i32, message = "boh,bhk->bok"}> : () -> ()
    %cst_181 = arith.constant dense<0.000000e+00> : vector<2x1x96xf32>
    %805 = tpu.matmul %775, %28, %cst_181 {dimension_numbers = #tpu.dot_dimension_numbers<[2], [1], [1], [2], [0, 0, 0, 1, 1, 2], [0], [0]>} : vector<2x1x32xf32>, vector<2x32x96xf32>, vector<2x1x96xf32> -> vector<2x1x96xf32>
    "tpu.trace_stop"() : () -> ()
    %806 = vector.shape_cast %4 : vector<1x96xf32> to vector<1x1x96xf32>
    %807 = vector.broadcast %806 : vector<1x1x96xf32> to vector<2x1x96xf32>
    %808 = arith.addf %805, %807 : vector<2x1x96xf32>
    "tpu.trace_start"() <{level = 10 : i32, message = "boh,bhk->bok"}> : () -> ()
    %cst_182 = arith.constant dense<0.000000e+00> : vector<2x1x96xf32>
    %809 = tpu.matmul %802, %30, %cst_182 {dimension_numbers = #tpu.dot_dimension_numbers<[2], [1], [1], [2], [0, 0, 0, 1, 1, 2], [0], [0]>} : vector<2x1x32xf32>, vector<2x32x96xf32>, vector<2x1x96xf32> -> vector<2x1x96xf32>
    "tpu.trace_stop"() : () -> ()
    %810 = vector.shape_cast %8 : vector<1x96xf32> to vector<1x1x96xf32>
    %811 = vector.broadcast %810 : vector<1x1x96xf32> to vector<2x1x96xf32>
    %812 = arith.addf %809, %811 : vector<2x1x96xf32>
    %813 = vector.extract_strided_slice %15 {offsets = [0, 12, 0], sizes = [2, 1, 96], strides = [1, 1, 1]} : vector<2x16x96xf32> to vector<2x1x96xf32>
    %814 = vector.extract_strided_slice %813 {offsets = [0, 0, 0], sizes = [2, 1, 32], strides = [1, 1, 1]} : vector<2x1x96xf32> to vector<2x1x32xf32>
    %815 = vector.extract_strided_slice %808 {offsets = [0, 0, 0], sizes = [2, 1, 32], strides = [1, 1, 1]} : vector<2x1x96xf32> to vector<2x1x32xf32>
    %816 = arith.addf %814, %815 : vector<2x1x32xf32>
    %817 = arith.negf %816 : vector<2x1x32xf32>
    %818 = math.exp %817 : vector<2x1x32xf32>
    %cst_183 = arith.constant 1.000000e+00 : f32
    %819 = vector.broadcast %cst_183 : f32 to vector<2x1x32xf32>
    %820 = arith.addf %819, %818 : vector<2x1x32xf32>
    %821 = arith.divf %819, %820 : vector<2x1x32xf32>
    %822 = vector.extract_strided_slice %813 {offsets = [0, 0, 32], sizes = [2, 1, 32], strides = [1, 1, 1]} : vector<2x1x96xf32> to vector<2x1x32xf32>
    %823 = vector.extract_strided_slice %808 {offsets = [0, 0, 32], sizes = [2, 1, 32], strides = [1, 1, 1]} : vector<2x1x96xf32> to vector<2x1x32xf32>
    %824 = arith.addf %822, %823 : vector<2x1x32xf32>
    %825 = arith.negf %824 : vector<2x1x32xf32>
    %826 = math.exp %825 : vector<2x1x32xf32>
    %cst_184 = arith.constant 1.000000e+00 : f32
    %827 = vector.broadcast %cst_184 : f32 to vector<2x1x32xf32>
    %828 = arith.addf %827, %826 : vector<2x1x32xf32>
    %829 = arith.divf %827, %828 : vector<2x1x32xf32>
    %830 = vector.extract_strided_slice %813 {offsets = [0, 0, 64], sizes = [2, 1, 32], strides = [1, 1, 1]} : vector<2x1x96xf32> to vector<2x1x32xf32>
    %831 = vector.extract_strided_slice %808 {offsets = [0, 0, 64], sizes = [2, 1, 32], strides = [1, 1, 1]} : vector<2x1x96xf32> to vector<2x1x32xf32>
    %832 = arith.mulf %821, %831 : vector<2x1x32xf32>
    %833 = arith.addf %830, %832 : vector<2x1x32xf32>
    %834 = math.tanh %833 : vector<2x1x32xf32>
    %cst_185 = arith.constant 1.000000e+00 : f32
    %835 = vector.broadcast %cst_185 : f32 to vector<2x1x32xf32>
    %836 = arith.subf %835, %829 : vector<2x1x32xf32>
    %837 = arith.mulf %836, %834 : vector<2x1x32xf32>
    %838 = arith.mulf %829, %775 : vector<2x1x32xf32>
    %839 = arith.addf %837, %838 : vector<2x1x32xf32>
    %840 = vector.extract_strided_slice %19 {offsets = [0, 3, 0], sizes = [2, 1, 96], strides = [1, 1, 1]} : vector<2x16x96xf32> to vector<2x1x96xf32>
    %841 = vector.extract_strided_slice %840 {offsets = [0, 0, 0], sizes = [2, 1, 32], strides = [1, 1, 1]} : vector<2x1x96xf32> to vector<2x1x32xf32>
    %842 = vector.extract_strided_slice %812 {offsets = [0, 0, 0], sizes = [2, 1, 32], strides = [1, 1, 1]} : vector<2x1x96xf32> to vector<2x1x32xf32>
    %843 = arith.addf %841, %842 : vector<2x1x32xf32>
    %844 = arith.negf %843 : vector<2x1x32xf32>
    %845 = math.exp %844 : vector<2x1x32xf32>
    %cst_186 = arith.constant 1.000000e+00 : f32
    %846 = vector.broadcast %cst_186 : f32 to vector<2x1x32xf32>
    %847 = arith.addf %846, %845 : vector<2x1x32xf32>
    %848 = arith.divf %846, %847 : vector<2x1x32xf32>
    %849 = vector.extract_strided_slice %840 {offsets = [0, 0, 32], sizes = [2, 1, 32], strides = [1, 1, 1]} : vector<2x1x96xf32> to vector<2x1x32xf32>
    %850 = vector.extract_strided_slice %812 {offsets = [0, 0, 32], sizes = [2, 1, 32], strides = [1, 1, 1]} : vector<2x1x96xf32> to vector<2x1x32xf32>
    %851 = arith.addf %849, %850 : vector<2x1x32xf32>
    %852 = arith.negf %851 : vector<2x1x32xf32>
    %853 = math.exp %852 : vector<2x1x32xf32>
    %cst_187 = arith.constant 1.000000e+00 : f32
    %854 = vector.broadcast %cst_187 : f32 to vector<2x1x32xf32>
    %855 = arith.addf %854, %853 : vector<2x1x32xf32>
    %856 = arith.divf %854, %855 : vector<2x1x32xf32>
    %857 = vector.extract_strided_slice %840 {offsets = [0, 0, 64], sizes = [2, 1, 32], strides = [1, 1, 1]} : vector<2x1x96xf32> to vector<2x1x32xf32>
    %858 = vector.extract_strided_slice %812 {offsets = [0, 0, 64], sizes = [2, 1, 32], strides = [1, 1, 1]} : vector<2x1x96xf32> to vector<2x1x32xf32>
    %859 = arith.mulf %848, %858 : vector<2x1x32xf32>
    %860 = arith.addf %857, %859 : vector<2x1x32xf32>
    %861 = math.tanh %860 : vector<2x1x32xf32>
    %cst_188 = arith.constant 1.000000e+00 : f32
    %862 = vector.broadcast %cst_188 : f32 to vector<2x1x32xf32>
    %863 = arith.subf %862, %856 : vector<2x1x32xf32>
    %864 = arith.mulf %863, %861 : vector<2x1x32xf32>
    %865 = arith.mulf %856, %802 : vector<2x1x32xf32>
    %866 = arith.addf %864, %865 : vector<2x1x32xf32>
    %c0_189 = arith.constant 0 : index
    %c12_190 = arith.constant 12 : index
    %c0_191 = arith.constant 0 : index
    %867 = vector.load %arg11[%c0_189, %c12_190, %c0_191] : memref<2x16x72xf32, #tpu.memory_space<vmem>>, vector<2x1x32xf32>
    tpu.vector_store %arg11[%c0_189, %c12_190, %c0_191], %839 {strides = array<i32>} : memref<2x16x72xf32, #tpu.memory_space<vmem>>, vector<2x1x32xf32>,
    %c0_192 = arith.constant 0 : index
    %c3_193 = arith.constant 3 : index
    %c32_194 = arith.constant 32 : index
    %868 = vector.load %arg11[%c0_192, %c3_193, %c32_194] : memref<2x16x72xf32, #tpu.memory_space<vmem>>, vector<2x1x32xf32>
    tpu.vector_store %arg11[%c0_192, %c3_193, %c32_194], %866 {strides = array<i32>} : memref<2x16x72xf32, #tpu.memory_space<vmem>>, vector<2x1x32xf32>,
    "tpu.trace_start"() <{level = 10 : i32, message = "boh,bhk->bok"}> : () -> ()
    %cst_195 = arith.constant dense<0.000000e+00> : vector<2x1x96xf32>
    %869 = tpu.matmul %839, %28, %cst_195 {dimension_numbers = #tpu.dot_dimension_numbers<[2], [1], [1], [2], [0, 0, 0, 1, 1, 2], [0], [0]>} : vector<2x1x32xf32>, vector<2x32x96xf32>, vector<2x1x96xf32> -> vector<2x1x96xf32>
    "tpu.trace_stop"() : () -> ()
    %870 = vector.shape_cast %4 : vector<1x96xf32> to vector<1x1x96xf32>
    %871 = vector.broadcast %870 : vector<1x1x96xf32> to vector<2x1x96xf32>
    %872 = arith.addf %869, %871 : vector<2x1x96xf32>
    "tpu.trace_start"() <{level = 10 : i32, message = "boh,bhk->bok"}> : () -> ()
    %cst_196 = arith.constant dense<0.000000e+00> : vector<2x1x96xf32>
    %873 = tpu.matmul %866, %30, %cst_196 {dimension_numbers = #tpu.dot_dimension_numbers<[2], [1], [1], [2], [0, 0, 0, 1, 1, 2], [0], [0]>} : vector<2x1x32xf32>, vector<2x32x96xf32>, vector<2x1x96xf32> -> vector<2x1x96xf32>
    "tpu.trace_stop"() : () -> ()
    %874 = vector.shape_cast %8 : vector<1x96xf32> to vector<1x1x96xf32>
    %875 = vector.broadcast %874 : vector<1x1x96xf32> to vector<2x1x96xf32>
    %876 = arith.addf %873, %875 : vector<2x1x96xf32>
    %877 = vector.extract_strided_slice %15 {offsets = [0, 13, 0], sizes = [2, 1, 96], strides = [1, 1, 1]} : vector<2x16x96xf32> to vector<2x1x96xf32>
    %878 = vector.extract_strided_slice %877 {offsets = [0, 0, 0], sizes = [2, 1, 32], strides = [1, 1, 1]} : vector<2x1x96xf32> to vector<2x1x32xf32>
    %879 = vector.extract_strided_slice %872 {offsets = [0, 0, 0], sizes = [2, 1, 32], strides = [1, 1, 1]} : vector<2x1x96xf32> to vector<2x1x32xf32>
    %880 = arith.addf %878, %879 : vector<2x1x32xf32>
    %881 = arith.negf %880 : vector<2x1x32xf32>
    %882 = math.exp %881 : vector<2x1x32xf32>
    %cst_197 = arith.constant 1.000000e+00 : f32
    %883 = vector.broadcast %cst_197 : f32 to vector<2x1x32xf32>
    %884 = arith.addf %883, %882 : vector<2x1x32xf32>
    %885 = arith.divf %883, %884 : vector<2x1x32xf32>
    %886 = vector.extract_strided_slice %877 {offsets = [0, 0, 32], sizes = [2, 1, 32], strides = [1, 1, 1]} : vector<2x1x96xf32> to vector<2x1x32xf32>
    %887 = vector.extract_strided_slice %872 {offsets = [0, 0, 32], sizes = [2, 1, 32], strides = [1, 1, 1]} : vector<2x1x96xf32> to vector<2x1x32xf32>
    %888 = arith.addf %886, %887 : vector<2x1x32xf32>
    %889 = arith.negf %888 : vector<2x1x32xf32>
    %890 = math.exp %889 : vector<2x1x32xf32>
    %cst_198 = arith.constant 1.000000e+00 : f32
    %891 = vector.broadcast %cst_198 : f32 to vector<2x1x32xf32>
    %892 = arith.addf %891, %890 : vector<2x1x32xf32>
    %893 = arith.divf %891, %892 : vector<2x1x32xf32>
    %894 = vector.extract_strided_slice %877 {offsets = [0, 0, 64], sizes = [2, 1, 32], strides = [1, 1, 1]} : vector<2x1x96xf32> to vector<2x1x32xf32>
    %895 = vector.extract_strided_slice %872 {offsets = [0, 0, 64], sizes = [2, 1, 32], strides = [1, 1, 1]} : vector<2x1x96xf32> to vector<2x1x32xf32>
    %896 = arith.mulf %885, %895 : vector<2x1x32xf32>
    %897 = arith.addf %894, %896 : vector<2x1x32xf32>
    %898 = math.tanh %897 : vector<2x1x32xf32>
    %cst_199 = arith.constant 1.000000e+00 : f32
    %899 = vector.broadcast %cst_199 : f32 to vector<2x1x32xf32>
    %900 = arith.subf %899, %893 : vector<2x1x32xf32>
    %901 = arith.mulf %900, %898 : vector<2x1x32xf32>
    %902 = arith.mulf %893, %839 : vector<2x1x32xf32>
    %903 = arith.addf %901, %902 : vector<2x1x32xf32>
    %904 = vector.extract_strided_slice %19 {offsets = [0, 2, 0], sizes = [2, 1, 96], strides = [1, 1, 1]} : vector<2x16x96xf32> to vector<2x1x96xf32>
    %905 = vector.extract_strided_slice %904 {offsets = [0, 0, 0], sizes = [2, 1, 32], strides = [1, 1, 1]} : vector<2x1x96xf32> to vector<2x1x32xf32>
    %906 = vector.extract_strided_slice %876 {offsets = [0, 0, 0], sizes = [2, 1, 32], strides = [1, 1, 1]} : vector<2x1x96xf32> to vector<2x1x32xf32>
    %907 = arith.addf %905, %906 : vector<2x1x32xf32>
    %908 = arith.negf %907 : vector<2x1x32xf32>
    %909 = math.exp %908 : vector<2x1x32xf32>
    %cst_200 = arith.constant 1.000000e+00 : f32
    %910 = vector.broadcast %cst_200 : f32 to vector<2x1x32xf32>
    %911 = arith.addf %910, %909 : vector<2x1x32xf32>
    %912 = arith.divf %910, %911 : vector<2x1x32xf32>
    %913 = vector.extract_strided_slice %904 {offsets = [0, 0, 32], sizes = [2, 1, 32], strides = [1, 1, 1]} : vector<2x1x96xf32> to vector<2x1x32xf32>
    %914 = vector.extract_strided_slice %876 {offsets = [0, 0, 32], sizes = [2, 1, 32], strides = [1, 1, 1]} : vector<2x1x96xf32> to vector<2x1x32xf32>
    %915 = arith.addf %913, %914 : vector<2x1x32xf32>
    %916 = arith.negf %915 : vector<2x1x32xf32>
    %917 = math.exp %916 : vector<2x1x32xf32>
    %cst_201 = arith.constant 1.000000e+00 : f32
    %918 = vector.broadcast %cst_201 : f32 to vector<2x1x32xf32>
    %919 = arith.addf %918, %917 : vector<2x1x32xf32>
    %920 = arith.divf %918, %919 : vector<2x1x32xf32>
    %921 = vector.extract_strided_slice %904 {offsets = [0, 0, 64], sizes = [2, 1, 32], strides = [1, 1, 1]} : vector<2x1x96xf32> to vector<2x1x32xf32>
    %922 = vector.extract_strided_slice %876 {offsets = [0, 0, 64], sizes = [2, 1, 32], strides = [1, 1, 1]} : vector<2x1x96xf32> to vector<2x1x32xf32>
    %923 = arith.mulf %912, %922 : vector<2x1x32xf32>
    %924 = arith.addf %921, %923 : vector<2x1x32xf32>
    %925 = math.tanh %924 : vector<2x1x32xf32>
    %cst_202 = arith.constant 1.000000e+00 : f32
    %926 = vector.broadcast %cst_202 : f32 to vector<2x1x32xf32>
    %927 = arith.subf %926, %920 : vector<2x1x32xf32>
    %928 = arith.mulf %927, %925 : vector<2x1x32xf32>
    %929 = arith.mulf %920, %866 : vector<2x1x32xf32>
    %930 = arith.addf %928, %929 : vector<2x1x32xf32>
    %c0_203 = arith.constant 0 : index
    %c13_204 = arith.constant 13 : index
    %c0_205 = arith.constant 0 : index
    %931 = vector.load %arg11[%c0_203, %c13_204, %c0_205] : memref<2x16x72xf32, #tpu.memory_space<vmem>>, vector<2x1x32xf32>
    tpu.vector_store %arg11[%c0_203, %c13_204, %c0_205], %903 {strides = array<i32>} : memref<2x16x72xf32, #tpu.memory_space<vmem>>, vector<2x1x32xf32>,
    %c0_206 = arith.constant 0 : index
    %c2_207 = arith.constant 2 : index
    %c32_208 = arith.constant 32 : index
    %932 = vector.load %arg11[%c0_206, %c2_207, %c32_208] : memref<2x16x72xf32, #tpu.memory_space<vmem>>, vector<2x1x32xf32>
    tpu.vector_store %arg11[%c0_206, %c2_207, %c32_208], %930 {strides = array<i32>} : memref<2x16x72xf32, #tpu.memory_space<vmem>>, vector<2x1x32xf32>,
    "tpu.trace_start"() <{level = 10 : i32, message = "boh,bhk->bok"}> : () -> ()
    %cst_209 = arith.constant dense<0.000000e+00> : vector<2x1x96xf32>
    %933 = tpu.matmul %903, %28, %cst_209 {dimension_numbers = #tpu.dot_dimension_numbers<[2], [1], [1], [2], [0, 0, 0, 1, 1, 2], [0], [0]>} : vector<2x1x32xf32>, vector<2x32x96xf32>, vector<2x1x96xf32> -> vector<2x1x96xf32>
    "tpu.trace_stop"() : () -> ()
    %934 = vector.shape_cast %4 : vector<1x96xf32> to vector<1x1x96xf32>
    %935 = vector.broadcast %934 : vector<1x1x96xf32> to vector<2x1x96xf32>
    %936 = arith.addf %933, %935 : vector<2x1x96xf32>
    "tpu.trace_start"() <{level = 10 : i32, message = "boh,bhk->bok"}> : () -> ()
    %cst_210 = arith.constant dense<0.000000e+00> : vector<2x1x96xf32>
    %937 = tpu.matmul %930, %30, %cst_210 {dimension_numbers = #tpu.dot_dimension_numbers<[2], [1], [1], [2], [0, 0, 0, 1, 1, 2], [0], [0]>} : vector<2x1x32xf32>, vector<2x32x96xf32>, vector<2x1x96xf32> -> vector<2x1x96xf32>
    "tpu.trace_stop"() : () -> ()
    %938 = vector.shape_cast %8 : vector<1x96xf32> to vector<1x1x96xf32>
    %939 = vector.broadcast %938 : vector<1x1x96xf32> to vector<2x1x96xf32>
    %940 = arith.addf %937, %939 : vector<2x1x96xf32>
    %941 = vector.extract_strided_slice %15 {offsets = [0, 14, 0], sizes = [2, 1, 96], strides = [1, 1, 1]} : vector<2x16x96xf32> to vector<2x1x96xf32>
    %942 = vector.extract_strided_slice %941 {offsets = [0, 0, 0], sizes = [2, 1, 32], strides = [1, 1, 1]} : vector<2x1x96xf32> to vector<2x1x32xf32>
    %943 = vector.extract_strided_slice %936 {offsets = [0, 0, 0], sizes = [2, 1, 32], strides = [1, 1, 1]} : vector<2x1x96xf32> to vector<2x1x32xf32>
    %944 = arith.addf %942, %943 : vector<2x1x32xf32>
    %945 = arith.negf %944 : vector<2x1x32xf32>
    %946 = math.exp %945 : vector<2x1x32xf32>
    %cst_211 = arith.constant 1.000000e+00 : f32
    %947 = vector.broadcast %cst_211 : f32 to vector<2x1x32xf32>
    %948 = arith.addf %947, %946 : vector<2x1x32xf32>
    %949 = arith.divf %947, %948 : vector<2x1x32xf32>
    %950 = vector.extract_strided_slice %941 {offsets = [0, 0, 32], sizes = [2, 1, 32], strides = [1, 1, 1]} : vector<2x1x96xf32> to vector<2x1x32xf32>
    %951 = vector.extract_strided_slice %936 {offsets = [0, 0, 32], sizes = [2, 1, 32], strides = [1, 1, 1]} : vector<2x1x96xf32> to vector<2x1x32xf32>
    %952 = arith.addf %950, %951 : vector<2x1x32xf32>
    %953 = arith.negf %952 : vector<2x1x32xf32>
    %954 = math.exp %953 : vector<2x1x32xf32>
    %cst_212 = arith.constant 1.000000e+00 : f32
    %955 = vector.broadcast %cst_212 : f32 to vector<2x1x32xf32>
    %956 = arith.addf %955, %954 : vector<2x1x32xf32>
    %957 = arith.divf %955, %956 : vector<2x1x32xf32>
    %958 = vector.extract_strided_slice %941 {offsets = [0, 0, 64], sizes = [2, 1, 32], strides = [1, 1, 1]} : vector<2x1x96xf32> to vector<2x1x32xf32>
    %959 = vector.extract_strided_slice %936 {offsets = [0, 0, 64], sizes = [2, 1, 32], strides = [1, 1, 1]} : vector<2x1x96xf32> to vector<2x1x32xf32>
    %960 = arith.mulf %949, %959 : vector<2x1x32xf32>
    %961 = arith.addf %958, %960 : vector<2x1x32xf32>
    %962 = math.tanh %961 : vector<2x1x32xf32>
    %cst_213 = arith.constant 1.000000e+00 : f32
    %963 = vector.broadcast %cst_213 : f32 to vector<2x1x32xf32>
    %964 = arith.subf %963, %957 : vector<2x1x32xf32>
    %965 = arith.mulf %964, %962 : vector<2x1x32xf32>
    %966 = arith.mulf %957, %903 : vector<2x1x32xf32>
    %967 = arith.addf %965, %966 : vector<2x1x32xf32>
    %968 = vector.extract_strided_slice %19 {offsets = [0, 1, 0], sizes = [2, 1, 96], strides = [1, 1, 1]} : vector<2x16x96xf32> to vector<2x1x96xf32>
    %969 = vector.extract_strided_slice %968 {offsets = [0, 0, 0], sizes = [2, 1, 32], strides = [1, 1, 1]} : vector<2x1x96xf32> to vector<2x1x32xf32>
    %970 = vector.extract_strided_slice %940 {offsets = [0, 0, 0], sizes = [2, 1, 32], strides = [1, 1, 1]} : vector<2x1x96xf32> to vector<2x1x32xf32>
    %971 = arith.addf %969, %970 : vector<2x1x32xf32>
    %972 = arith.negf %971 : vector<2x1x32xf32>
    %973 = math.exp %972 : vector<2x1x32xf32>
    %cst_214 = arith.constant 1.000000e+00 : f32
    %974 = vector.broadcast %cst_214 : f32 to vector<2x1x32xf32>
    %975 = arith.addf %974, %973 : vector<2x1x32xf32>
    %976 = arith.divf %974, %975 : vector<2x1x32xf32>
    %977 = vector.extract_strided_slice %968 {offsets = [0, 0, 32], sizes = [2, 1, 32], strides = [1, 1, 1]} : vector<2x1x96xf32> to vector<2x1x32xf32>
    %978 = vector.extract_strided_slice %940 {offsets = [0, 0, 32], sizes = [2, 1, 32], strides = [1, 1, 1]} : vector<2x1x96xf32> to vector<2x1x32xf32>
    %979 = arith.addf %977, %978 : vector<2x1x32xf32>
    %980 = arith.negf %979 : vector<2x1x32xf32>
    %981 = math.exp %980 : vector<2x1x32xf32>
    %cst_215 = arith.constant 1.000000e+00 : f32
    %982 = vector.broadcast %cst_215 : f32 to vector<2x1x32xf32>
    %983 = arith.addf %982, %981 : vector<2x1x32xf32>
    %984 = arith.divf %982, %983 : vector<2x1x32xf32>
    %985 = vector.extract_strided_slice %968 {offsets = [0, 0, 64], sizes = [2, 1, 32], strides = [1, 1, 1]} : vector<2x1x96xf32> to vector<2x1x32xf32>
    %986 = vector.extract_strided_slice %940 {offsets = [0, 0, 64], sizes = [2, 1, 32], strides = [1, 1, 1]} : vector<2x1x96xf32> to vector<2x1x32xf32>
    %987 = arith.mulf %976, %986 : vector<2x1x32xf32>
    %988 = arith.addf %985, %987 : vector<2x1x32xf32>
    %989 = math.tanh %988 : vector<2x1x32xf32>
    %cst_216 = arith.constant 1.000000e+00 : f32
    %990 = vector.broadcast %cst_216 : f32 to vector<2x1x32xf32>
    %991 = arith.subf %990, %984 : vector<2x1x32xf32>
    %992 = arith.mulf %991, %989 : vector<2x1x32xf32>
    %993 = arith.mulf %984, %930 : vector<2x1x32xf32>
    %994 = arith.addf %992, %993 : vector<2x1x32xf32>
    %c0_217 = arith.constant 0 : index
    %c14_218 = arith.constant 14 : index
    %c0_219 = arith.constant 0 : index
    %995 = vector.load %arg11[%c0_217, %c14_218, %c0_219] : memref<2x16x72xf32, #tpu.memory_space<vmem>>, vector<2x1x32xf32>
    tpu.vector_store %arg11[%c0_217, %c14_218, %c0_219], %967 {strides = array<i32>} : memref<2x16x72xf32, #tpu.memory_space<vmem>>, vector<2x1x32xf32>,
    %c0_220 = arith.constant 0 : index
    %c1_221 = arith.constant 1 : index
    %c32_222 = arith.constant 32 : index
    %996 = vector.load %arg11[%c0_220, %c1_221, %c32_222] : memref<2x16x72xf32, #tpu.memory_space<vmem>>, vector<2x1x32xf32>
    tpu.vector_store %arg11[%c0_220, %c1_221, %c32_222], %994 {strides = array<i32>} : memref<2x16x72xf32, #tpu.memory_space<vmem>>, vector<2x1x32xf32>,
    "tpu.trace_start"() <{level = 10 : i32, message = "boh,bhk->bok"}> : () -> ()
    %cst_223 = arith.constant dense<0.000000e+00> : vector<2x1x96xf32>
    %997 = tpu.matmul %967, %28, %cst_223 {dimension_numbers = #tpu.dot_dimension_numbers<[2], [1], [1], [2], [0, 0, 0, 1, 1, 2], [0], [0]>} : vector<2x1x32xf32>, vector<2x32x96xf32>, vector<2x1x96xf32> -> vector<2x1x96xf32>
    "tpu.trace_stop"() : () -> ()
    %998 = vector.shape_cast %4 : vector<1x96xf32> to vector<1x1x96xf32>
    %999 = vector.broadcast %998 : vector<1x1x96xf32> to vector<2x1x96xf32>
    %1000 = arith.addf %997, %999 : vector<2x1x96xf32>
    "tpu.trace_start"() <{level = 10 : i32, message = "boh,bhk->bok"}> : () -> ()
    %cst_224 = arith.constant dense<0.000000e+00> : vector<2x1x96xf32>
    %1001 = tpu.matmul %994, %30, %cst_224 {dimension_numbers = #tpu.dot_dimension_numbers<[2], [1], [1], [2], [0, 0, 0, 1, 1, 2], [0], [0]>} : vector<2x1x32xf32>, vector<2x32x96xf32>, vector<2x1x96xf32> -> vector<2x1x96xf32>
    "tpu.trace_stop"() : () -> ()
    %1002 = vector.shape_cast %8 : vector<1x96xf32> to vector<1x1x96xf32>
    %1003 = vector.broadcast %1002 : vector<1x1x96xf32> to vector<2x1x96xf32>
    %1004 = arith.addf %1001, %1003 : vector<2x1x96xf32>
    %1005 = vector.extract_strided_slice %15 {offsets = [0, 15, 0], sizes = [2, 1, 96], strides = [1, 1, 1]} : vector<2x16x96xf32> to vector<2x1x96xf32>
    %1006 = vector.extract_strided_slice %1005 {offsets = [0, 0, 0], sizes = [2, 1, 32], strides = [1, 1, 1]} : vector<2x1x96xf32> to vector<2x1x32xf32>
    %1007 = vector.extract_strided_slice %1000 {offsets = [0, 0, 0], sizes = [2, 1, 32], strides = [1, 1, 1]} : vector<2x1x96xf32> to vector<2x1x32xf32>
    %1008 = arith.addf %1006, %1007 : vector<2x1x32xf32>
    %1009 = arith.negf %1008 : vector<2x1x32xf32>
    %1010 = math.exp %1009 : vector<2x1x32xf32>
    %cst_225 = arith.constant 1.000000e+00 : f32
    %1011 = vector.broadcast %cst_225 : f32 to vector<2x1x32xf32>
    %1012 = arith.addf %1011, %1010 : vector<2x1x32xf32>
    %1013 = arith.divf %1011, %1012 : vector<2x1x32xf32>
    %1014 = vector.extract_strided_slice %1005 {offsets = [0, 0, 32], sizes = [2, 1, 32], strides = [1, 1, 1]} : vector<2x1x96xf32> to vector<2x1x32xf32>
    %1015 = vector.extract_strided_slice %1000 {offsets = [0, 0, 32], sizes = [2, 1, 32], strides = [1, 1, 1]} : vector<2x1x96xf32> to vector<2x1x32xf32>
    %1016 = arith.addf %1014, %1015 : vector<2x1x32xf32>
    %1017 = arith.negf %1016 : vector<2x1x32xf32>
    %1018 = math.exp %1017 : vector<2x1x32xf32>
    %cst_226 = arith.constant 1.000000e+00 : f32
    %1019 = vector.broadcast %cst_226 : f32 to vector<2x1x32xf32>
    %1020 = arith.addf %1019, %1018 : vector<2x1x32xf32>
    %1021 = arith.divf %1019, %1020 : vector<2x1x32xf32>
    %1022 = vector.extract_strided_slice %1005 {offsets = [0, 0, 64], sizes = [2, 1, 32], strides = [1, 1, 1]} : vector<2x1x96xf32> to vector<2x1x32xf32>
    %1023 = vector.extract_strided_slice %1000 {offsets = [0, 0, 64], sizes = [2, 1, 32], strides = [1, 1, 1]} : vector<2x1x96xf32> to vector<2x1x32xf32>
    %1024 = arith.mulf %1013, %1023 : vector<2x1x32xf32>
    %1025 = arith.addf %1022, %1024 : vector<2x1x32xf32>
    %1026 = math.tanh %1025 : vector<2x1x32xf32>
    %cst_227 = arith.constant 1.000000e+00 : f32
    %1027 = vector.broadcast %cst_227 : f32 to vector<2x1x32xf32>
    %1028 = arith.subf %1027, %1021 : vector<2x1x32xf32>
    %1029 = arith.mulf %1028, %1026 : vector<2x1x32xf32>
    %1030 = arith.mulf %1021, %967 : vector<2x1x32xf32>
    %1031 = arith.addf %1029, %1030 : vector<2x1x32xf32>
    %1032 = vector.extract_strided_slice %19 {offsets = [0, 0, 0], sizes = [2, 1, 96], strides = [1, 1, 1]} : vector<2x16x96xf32> to vector<2x1x96xf32>
    %1033 = vector.extract_strided_slice %1032 {offsets = [0, 0, 0], sizes = [2, 1, 32], strides = [1, 1, 1]} : vector<2x1x96xf32> to vector<2x1x32xf32>
    %1034 = vector.extract_strided_slice %1004 {offsets = [0, 0, 0], sizes = [2, 1, 32], strides = [1, 1, 1]} : vector<2x1x96xf32> to vector<2x1x32xf32>
    %1035 = arith.addf %1033, %1034 : vector<2x1x32xf32>
    %1036 = arith.negf %1035 : vector<2x1x32xf32>
    %1037 = math.exp %1036 : vector<2x1x32xf32>
    %cst_228 = arith.constant 1.000000e+00 : f32
    %1038 = vector.broadcast %cst_228 : f32 to vector<2x1x32xf32>
    %1039 = arith.addf %1038, %1037 : vector<2x1x32xf32>
    %1040 = arith.divf %1038, %1039 : vector<2x1x32xf32>
    %1041 = vector.extract_strided_slice %1032 {offsets = [0, 0, 32], sizes = [2, 1, 32], strides = [1, 1, 1]} : vector<2x1x96xf32> to vector<2x1x32xf32>
    %1042 = vector.extract_strided_slice %1004 {offsets = [0, 0, 32], sizes = [2, 1, 32], strides = [1, 1, 1]} : vector<2x1x96xf32> to vector<2x1x32xf32>
    %1043 = arith.addf %1041, %1042 : vector<2x1x32xf32>
    %1044 = arith.negf %1043 : vector<2x1x32xf32>
    %1045 = math.exp %1044 : vector<2x1x32xf32>
    %cst_229 = arith.constant 1.000000e+00 : f32
    %1046 = vector.broadcast %cst_229 : f32 to vector<2x1x32xf32>
    %1047 = arith.addf %1046, %1045 : vector<2x1x32xf32>
    %1048 = arith.divf %1046, %1047 : vector<2x1x32xf32>
    %1049 = vector.extract_strided_slice %1032 {offsets = [0, 0, 64], sizes = [2, 1, 32], strides = [1, 1, 1]} : vector<2x1x96xf32> to vector<2x1x32xf32>
    %1050 = vector.extract_strided_slice %1004 {offsets = [0, 0, 64], sizes = [2, 1, 32], strides = [1, 1, 1]} : vector<2x1x96xf32> to vector<2x1x32xf32>
    %1051 = arith.mulf %1040, %1050 : vector<2x1x32xf32>
    %1052 = arith.addf %1049, %1051 : vector<2x1x32xf32>
    %1053 = math.tanh %1052 : vector<2x1x32xf32>
    %cst_230 = arith.constant 1.000000e+00 : f32
    %1054 = vector.broadcast %cst_230 : f32 to vector<2x1x32xf32>
    %1055 = arith.subf %1054, %1048 : vector<2x1x32xf32>
    %1056 = arith.mulf %1055, %1053 : vector<2x1x32xf32>
    %1057 = arith.mulf %1048, %994 : vector<2x1x32xf32>
    %1058 = arith.addf %1056, %1057 : vector<2x1x32xf32>
    %c0_231 = arith.constant 0 : index
    %c15_232 = arith.constant 15 : index
    %c0_233 = arith.constant 0 : index
    %1059 = vector.load %arg11[%c0_231, %c15_232, %c0_233] : memref<2x16x72xf32, #tpu.memory_space<vmem>>, vector<2x1x32xf32>
    tpu.vector_store %arg11[%c0_231, %c15_232, %c0_233], %1031 {strides = array<i32>} : memref<2x16x72xf32, #tpu.memory_space<vmem>>, vector<2x1x32xf32>,
    %c0_234 = arith.constant 0 : index
    %c0_235 = arith.constant 0 : index
    %c32_236 = arith.constant 32 : index
    %1060 = vector.load %arg11[%c0_234, %c0_235, %c32_236] : memref<2x16x72xf32, #tpu.memory_space<vmem>>, vector<2x1x32xf32>
    tpu.vector_store %arg11[%c0_234, %c0_235, %c32_236], %1058 {strides = array<i32>} : memref<2x16x72xf32, #tpu.memory_space<vmem>>, vector<2x1x32xf32>,
    return
  }
}

</mosaic_0001>

<llo_original>
// kernel: rnn_doc_reader_forward.3
$region0: #{rnn_doc_reader_forward.3}
  #allocation0 [shape = 'u32[]', space=smem, size = 0x4, offset = 0x4, fixed_abs, tag = 'smem constant byte address 0x4 - core index']
  #allocation1 [shape = 'u32[72,128]{1,0:T(1,128)}', space=vmem, size = 0x9000, scoped, tag = 'internal scratch']
  %s0 = inlined_call_operand.vmem [shape: f32[2,16,32], index: 0, kind: input, shape index: {}]
  %s1 = inlined_call_operand.vmem [shape: f32[2,8,32], index: 1, kind: input, shape index: {}]
  %s2 = inlined_call_operand.vmem [shape: f32[2,1,8], index: 2, kind: input, shape index: {}]
  %s3 = inlined_call_operand.vmem [shape: f32[32,32], index: 3, kind: input, shape index: {}]
  %s4 = inlined_call_operand.vmem [shape: f32[1,32], index: 4, kind: input, shape index: {}]
  %s5 = inlined_call_operand.vmem [shape: f32[2,16,32], index: 5, kind: output, shape index: {}]
  %s6 = sld [smem:[#allocation0]]
  $region30: #{rnn_doc_reader_forward.3} parent=0
    _
  %s8 = ssub.s32 1, %s6
  %s9 = scalar_select 0, %s8, %s6
  // Predicated region
  $region2: #{rnn_doc_reader_forward.3} parent=0 // pred_check
    _
  $region3: #{rnn_doc_reader_forward.3} parent=0 // pred_check_branch
    %11 = sbr.rel (0) target = $region5
  $region4: #{rnn_doc_reader_forward.3} parent=0 // pred_region
    _
  $region5: #{rnn_doc_reader_forward.3} parent=0 // pred_fallthru
    _
  // Predicated region
  $region6: #{rnn_doc_reader_forward.3} parent=0 // pred_check
    _
  $region7: #{rnn_doc_reader_forward.3} parent=0 // pred_check_branch
    %13 = sbr.rel (0) target = $region9
  $region8: #{rnn_doc_reader_forward.3} parent=0 // pred_region
    _
  $region9: #{rnn_doc_reader_forward.3} parent=0 // pred_fallthru
    _
  // Predicated region
  $region10: #{rnn_doc_reader_forward.3} parent=0 // pred_check
    _
  $region11: #{rnn_doc_reader_forward.3} parent=0 // pred_check_branch
    %15 = sbr.rel (0) target = $region13
  $region12: #{rnn_doc_reader_forward.3} parent=0 // pred_region
    _
  $region13: #{rnn_doc_reader_forward.3} parent=0 // pred_fallthru
    _
  // Predicated region
  $region14: #{rnn_doc_reader_forward.3} parent=0 // pred_check
    _
  $region15: #{rnn_doc_reader_forward.3} parent=0 // pred_check_branch
    %17 = sbr.rel (0) target = $region17
  $region16: #{rnn_doc_reader_forward.3} parent=0 // pred_region
    _
  $region17: #{rnn_doc_reader_forward.3} parent=0 // pred_fallthru
    _
  // Predicated region
  $region18: #{rnn_doc_reader_forward.3} parent=0 // pred_check
    _
  $region19: #{rnn_doc_reader_forward.3} parent=0 // pred_check_branch
    %19 = sbr.rel (0) target = $region21
  $region20: #{rnn_doc_reader_forward.3} parent=0 // pred_region
    _
  $region21: #{rnn_doc_reader_forward.3} parent=0 // pred_fallthru
    _
  %v20 = vld [vmem:[%s0] sm:$0xff]
  %v21 = vld [vmem:[%s0 + $0x8] sm:$0xff]
  %v22 = vld [vmem:[%s0 + $0x10] sm:$0xff]
  %v23 = vld [vmem:[%s0 + $0x18] sm:$0xff]
  %v24 = vld [vmem:[%s1] sm:$0xff]
  %v25 = vld [vmem:[%s1 + $0x8] sm:$0xff]
  %v26 = vld [vmem:[%s2] sm:$0x1]
  %v27 = vld [vmem:[%s2 + $0x1] sm:$0x1]
  %v28 = vld [vmem:[%s3] sm:$0xff]
  %v29 = vld [vmem:[%s3 + $0x8] sm:$0xff]
  %v30 = vld [vmem:[%s3 + $0x10] sm:$0xff]
  %v31 = vld [vmem:[%s3 + $0x18] sm:$0xff]
  %v32 = vld [vmem:[%s4] sm:$0x1]
  %v34 = vperm.slane %v32, 0
  %vm36 = vcmask 261120
  %v38 = vsel %vm36, %v20, 0
  %v41 = vsel %vm36, %v21, 0
  %v44 = vsel %vm36, %v22, 0
  %v47 = vsel %vm36, %v23, 0
  %49 = vmatpush.msra.mxu0 0.0
  %50 = vmatpush.msra.mxu0 0.0
  %51 = vmatpush.msra.mxu0 0.0
  %52 = vmatpush.msra.mxu0 0.0
  %53 = vmatpush.msra.mxu0 0.0
  %54 = vmatpush.msra.mxu0 0.0
  %55 = vmatpush.msra.mxu0 0.0
  %56 = vmatpush.msra.mxu0 0.0
  %57 = vmatpush.msra.mxu0 0.0
  %58 = vmatpush.msra.mxu0 0.0
  %59 = vmatpush.msra.mxu0 0.0
  %60 = vmatpush.msra.mxu0 0.0
  %61 = vmatpush.msra.mxu0 %v31
  %62 = vmatpush.msra.mxu0 %v30
  %63 = vmatpush.msra.mxu0 %v29
  %64 = vmatpush.msra.mxu0 %v28
  %65 = vmatmul.f32.gmra.mxu0 %v38
  %v66 = vpop.f32.mrf.mxu0
  %v67 = vadd.f32 %v34, %v66
  %68 = vmatmul.f32.gmra.mxu0 %v41
  %v69 = vpop.f32.mrf.mxu0
  %v70 = vadd.f32 %v34, %v69
  %71 = vmatmul.f32.gmra.mxu0 %v44
  %v72 = vpop.f32.mrf.mxu0
  %v73 = vadd.f32 %v34, %v72
  %74 = vmatmul.f32.gmra.mxu0 %v47
  %v75 = vpop.f32.mrf.mxu0
  %v76 = vadd.f32 %v34, %v75
  %77 = vdwg.mxu0
  %v78 = vmax.f32 %v67, 0.0
  %v79 = vmax.f32 %v70, 0.0
  %v80 = vmax.f32 %v73, 0.0
  %v81 = vmax.f32 %v76, 0.0
  %v83 = vsel %vm36, %v24, 0
  %v86 = vsel %vm36, %v25, 0
  %88 = vmatpush.msra.mxu0 0.0
  %89 = vmatpush.msra.mxu0 0.0
  %90 = vmatpush.msra.mxu0 0.0
  %91 = vmatpush.msra.mxu0 0.0
  %92 = vmatpush.msra.mxu0 0.0
  %93 = vmatpush.msra.mxu0 0.0
  %94 = vmatpush.msra.mxu0 0.0
  %95 = vmatpush.msra.mxu0 0.0
  %96 = vmatpush.msra.mxu0 0.0
  %97 = vmatpush.msra.mxu0 0.0
  %98 = vmatpush.msra.mxu0 0.0
  %99 = vmatpush.msra.mxu0 0.0
  %100 = vmatpush.msra.mxu0 %v31
  %101 = vmatpush.msra.mxu0 %v30
  %102 = vmatpush.msra.mxu0 %v29
  %103 = vmatpush.msra.mxu0 %v28
  %104 = vmatmul.f32.gmra.mxu0 %v83
  %v105 = vpop.f32.mrf.mxu0
  %v106 = vadd.f32 %v34, %v105
  %107 = vmatmul.f32.gmra.mxu0 %v86
  %v108 = vpop.f32.mrf.mxu0
  %v109 = vadd.f32 %v34, %v108
  %110 = vdwg.mxu0
  %v111 = vmax.f32 %v106, 0.0
  %v112 = vmax.f32 %v109, 0.0
  %v114 = vsel %vm36, %v78, 0
  %v117 = vsel %vm36, %v79, 0
  %v120 = vsel %vm36, %v111, 0
  %122 = vmatpush.xpose.msra.mxu0 0.0
  %123 = vmatpush.xpose.msra.mxu0 0.0
  %124 = vmatpush.xpose.msra.mxu0 0.0
  %125 = vmatpush.xpose.msra.mxu0 0.0
  %126 = vmatpush.xpose.msra.mxu0 0.0
  %127 = vmatpush.xpose.msra.mxu0 0.0
  %128 = vmatpush.xpose.msra.mxu0 0.0
  %129 = vmatpush.xpose.msra.mxu0 0.0
  %130 = vmatpush.xpose.msra.mxu0 0.0
  %131 = vmatpush.xpose.msra.mxu0 0.0
  %132 = vmatpush.xpose.msra.mxu0 0.0
  %133 = vmatpush.xpose.msra.mxu0 0.0
  %134 = vmatpush.xpose.msra.mxu0 0.0
  %135 = vmatpush.xpose.msra.mxu0 0.0
  %136 = vmatpush.xpose.msra.mxu0 0.0
  %137 = vmatpush.xpose.msra.mxu0 %v120
  %138 = vmatmul.f32.gmra.mxu0 %v114
  %v139 = vpop.f32.mrf.mxu0
  %v140 = vadd.f32 0.0, %v139
  %141 = vmatmul.f32.gmra.mxu0 %v117
  %v142 = vpop.f32.mrf.mxu0
  %v143 = vadd.f32 0.0, %v142
  %144 = vdwg.mxu0
  %v146 = vsel %vm36, %v80, 0
  %v149 = vsel %vm36, %v81, 0
  %v152 = vsel %vm36, %v112, 0
  %154 = vmatpush.xpose.msra.mxu0 0.0
  %155 = vmatpush.xpose.msra.mxu0 0.0
  %156 = vmatpush.xpose.msra.mxu0 0.0
  %157 = vmatpush.xpose.msra.mxu0 0.0
  %158 = vmatpush.xpose.msra.mxu0 0.0
  %159 = vmatpush.xpose.msra.mxu0 0.0
  %160 = vmatpush.xpose.msra.mxu0 0.0
  %161 = vmatpush.xpose.msra.mxu0 0.0
  %162 = vmatpush.xpose.msra.mxu0 0.0
  %163 = vmatpush.xpose.msra.mxu0 0.0
  %164 = vmatpush.xpose.msra.mxu0 0.0
  %165 = vmatpush.xpose.msra.mxu0 0.0
  %166 = vmatpush.xpose.msra.mxu0 0.0
  %167 = vmatpush.xpose.msra.mxu0 0.0
  %168 = vmatpush.xpose.msra.mxu0 0.0
  %169 = vmatpush.xpose.msra.mxu0 %v152
  %170 = vmatmul.f32.gmra.mxu0 %v146
  %v171 = vpop.f32.mrf.mxu0
  %v172 = vadd.f32 0.0, %v171
  %173 = vmatmul.f32.gmra.mxu0 %v149
  %v174 = vpop.f32.mrf.mxu0
  %v175 = vadd.f32 0.0, %v174
  %176 = vdwg.mxu0
  %vm177 = vcmp.gt.f32.partialorder %v26, 0.0
  %vm178 = vcmp.gt.f32.partialorder %v27, 0.0
  %v179 = vsel %vm177, 1, 0
  %v180 = vsel %vm178, 1, 0
  %v181 = vperm.slane %v179, 0
  %v182 = vperm.slane %v180, 0
  %vm183 = vcmp.eq.s32.totalorder %v181, 1
  %vm184 = vcmp.eq.s32.totalorder %v182, 1
  %v185 = vsel %vm183, -1e+30, %v140
  %v186 = vsel %vm183, -1e+30, %v143
  %v187 = vsel %vm184, -1e+30, %v172
  %v188 = vsel %vm184, -1e+30, %v175
  %vm189 = vcmask 64512
  %v190 = vsel %vm189, %v185, -inf
  %191 = vmax.xlane.f32.xlu0 %v190
  %v192 = vpop.xlane.xlu0 %191
  %v193 = vsel %vm189, %v186, -inf
  %194 = vmax.xlane.f32.xlu0 %v193
  %v195 = vpop.xlane.xlu0 %194
  %v196 = vsel %vm189, %v187, -inf
  %197 = vmax.xlane.f32.xlu0 %v196
  %v198 = vpop.xlane.xlu0 %197
  %v199 = vsel %vm189, %v188, -inf
  %200 = vmax.xlane.f32.xlu0 %v199
  %v201 = vpop.xlane.xlu0 %200
  %v202 = vsub.f32 %v185, %v192
  %v203 = vsub.f32 %v186, %v195
  %v204 = vsub.f32 %v187, %v198
  %v205 = vsub.f32 %v188, %v201
  %v206 = vmul.f32 %v202, 1.442695
  %v207 = vpow.pop %v206
  %v208 = vmul.f32 %v203, 1.442695
  %v209 = vpow.pop %v208
  %v210 = vmul.f32 %v204, 1.442695
  %v211 = vpow.pop %v210
  %v212 = vmul.f32 %v205, 1.442695
  %v213 = vpow.pop %v212
  %v214 = vsel %vm189, %v207, 0.0
  %215 = vadd.xlane.f32.xlu0 %v214
  %v216 = vpop.xlane.xlu0 %215
  %v217 = vsel %vm189, %v209, 0.0
  %218 = vadd.xlane.f32.xlu0 %v217
  %v219 = vpop.xlane.xlu0 %218
  %v220 = vsel %vm189, %v211, 0.0
  %221 = vadd.xlane.f32.xlu0 %v220
  %v222 = vpop.xlane.xlu0 %221
  %v223 = vsel %vm189, %v213, 0.0
  %224 = vadd.xlane.f32.xlu0 %v223
  %v225 = vpop.xlane.xlu0 %224
  %v226 = vrcp.pop %v216
  %v227 = vmul.f32 %v216, %v226
  %v228 = vsub.f32 1.0, %v227
  %v229 = vmul.f32 %v226, %v228
  %v230 = vadd.f32 %v226, %v229
  %vm231 = vweird.f32 %v216
  %vm232 = vweird.f32 %v226
  %vm233 = vmor %vm231, %vm232
  %v234 = vsel %vm233, %v226, %v230
  %v235 = vand.u32 2147483647, %v216
  %vm236 = vcmp.eq.f32.partialorder %v235, 8.507059e+37
  %v237 = vand.u32 %v216, 2147483648
  %v238 = vor.u32 1.1754944e-38, %v237
  %v239 = vsel %vm236, %v238, %v234
  %v240 = vmul.f32 %v207, %v239
  %v241 = vrcp.pop %v219
  %v242 = vmul.f32 %v219, %v241
  %v243 = vsub.f32 1.0, %v242
  %v244 = vmul.f32 %v241, %v243
  %v245 = vadd.f32 %v241, %v244
  %vm246 = vweird.f32 %v219
  %vm247 = vweird.f32 %v241
  %vm248 = vmor %vm246, %vm247
  %v249 = vsel %vm248, %v241, %v245
  %v250 = vand.u32 2147483647, %v219
  %vm251 = vcmp.eq.f32.partialorder %v250, 8.507059e+37
  %v252 = vand.u32 %v219, 2147483648
  %v253 = vor.u32 1.1754944e-38, %v252
  %v254 = vsel %vm251, %v253, %v249
  %v255 = vmul.f32 %v209, %v254
  %v256 = vrcp.pop %v222
  %v257 = vmul.f32 %v222, %v256
  %v258 = vsub.f32 1.0, %v257
  %v259 = vmul.f32 %v256, %v258
  %v260 = vadd.f32 %v256, %v259
  %vm261 = vweird.f32 %v222
  %vm262 = vweird.f32 %v256
  %vm263 = vmor %vm261, %vm262
  %v264 = vsel %vm263, %v256, %v260
  %v265 = vand.u32 2147483647, %v222
  %vm266 = vcmp.eq.f32.partialorder %v265, 8.507059e+37
  %v267 = vand.u32 %v222, 2147483648
  %v268 = vor.u32 1.1754944e-38, %v267
  %v269 = vsel %vm266, %v268, %v264
  %v270 = vmul.f32 %v211, %v269
  %v271 = vrcp.pop %v225
  %v272 = vmul.f32 %v225, %v271
  %v273 = vsub.f32 1.0, %v272
  %v274 = vmul.f32 %v271, %v273
  %v275 = vadd.f32 %v271, %v274
  %vm276 = vweird.f32 %v225
  %vm277 = vweird.f32 %v271
  %vm278 = vmor %vm276, %vm277
  %v279 = vsel %vm278, %v271, %v275
  %v280 = vand.u32 2147483647, %v225
  %vm281 = vcmp.eq.f32.partialorder %v280, 8.507059e+37
  %v282 = vand.u32 %v225, 2147483648
  %v283 = vor.u32 1.1754944e-38, %v282
  %v284 = vsel %vm281, %v283, %v279
  %v285 = vmul.f32 %v213, %v284
  %v287 = vsel %vm189, %v240, 0
  %v290 = vsel %vm189, %v255, 0
  %292 = vmatpush.msra.mxu0 0.0
  %293 = vmatpush.msra.mxu0 0.0
  %294 = vmatpush.msra.mxu0 0.0
  %295 = vmatpush.msra.mxu0 0.0
  %296 = vmatpush.msra.mxu0 0.0
  %297 = vmatpush.msra.mxu0 0.0
  %298 = vmatpush.msra.mxu0 0.0
  %299 = vmatpush.msra.mxu0 0.0
  %300 = vmatpush.msra.mxu0 0.0
  %301 = vmatpush.msra.mxu0 0.0
  %302 = vmatpush.msra.mxu0 0.0
  %303 = vmatpush.msra.mxu0 0.0
  %304 = vmatpush.msra.mxu0 0.0
  %305 = vmatpush.msra.mxu0 0.0
  %306 = vmatpush.msra.mxu0 0.0
  %307 = vmatpush.msra.mxu0 %v24
  %308 = vmatmul.f32.gmra.mxu0 %v287
  %v309 = vpop.f32.mrf.mxu0
  %v310 = vadd.f32 0.0, %v309
  %311 = vmatmul.f32.gmra.mxu0 %v290
  %v312 = vpop.f32.mrf.mxu0
  %v313 = vadd.f32 0.0, %v312
  %314 = vdwg.mxu0
  %v316 = vsel %vm189, %v270, 0
  %v319 = vsel %vm189, %v285, 0
  %321 = vmatpush.msra.mxu0 0.0
  %322 = vmatpush.msra.mxu0 0.0
  %323 = vmatpush.msra.mxu0 0.0
  %324 = vmatpush.msra.mxu0 0.0
  %325 = vmatpush.msra.mxu0 0.0
  %326 = vmatpush.msra.mxu0 0.0
  %327 = vmatpush.msra.mxu0 0.0
  %328 = vmatpush.msra.mxu0 0.0
  %329 = vmatpush.msra.mxu0 0.0
  %330 = vmatpush.msra.mxu0 0.0
  %331 = vmatpush.msra.mxu0 0.0
  %332 = vmatpush.msra.mxu0 0.0
  %333 = vmatpush.msra.mxu0 0.0
  %334 = vmatpush.msra.mxu0 0.0
  %335 = vmatpush.msra.mxu0 0.0
  %336 = vmatpush.msra.mxu0 %v25
  %337 = vmatmul.f32.gmra.mxu0 %v316
  %v338 = vpop.f32.mrf.mxu0
  %v339 = vadd.f32 0.0, %v338
  %340 = vmatmul.f32.gmra.mxu0 %v319
  %v341 = vpop.f32.mrf.mxu0
  %v342 = vadd.f32 0.0, %v341
  %343 = vdwg.mxu0
  %344 = vst.msk [vmem:[%s5] sm:$0xff] %vm36, %v310
  %345 = vst.msk [vmem:[%s5 + $0x8] sm:$0xff] %vm36, %v313
  %346 = vst.msk [vmem:[%s5 + $0x10] sm:$0xff] %vm36, %v339
  %347 = vst.msk [vmem:[%s5 + $0x18] sm:$0xff] %vm36, %v342
  // Predicated region
  $region22: #{rnn_doc_reader_forward.3} parent=0 // pred_check
    _
  $region23: #{rnn_doc_reader_forward.3} parent=0 // pred_check_branch
    %349 = sbr.rel (0) target = $region25
  $region24: #{rnn_doc_reader_forward.3} parent=0 // pred_region
    _
  $region25: #{rnn_doc_reader_forward.3} parent=0 // pred_fallthru
    _
  // Predicated region
  $region26: #{rnn_doc_reader_forward.3} parent=0 // pred_check
    _
  $region27: #{rnn_doc_reader_forward.3} parent=0 // pred_check_branch
    %351 = sbr.rel (0) target = $region29
  $region28: #{rnn_doc_reader_forward.3} parent=0 // pred_region
    _
  $region29: #{rnn_doc_reader_forward.3} parent=0 // pred_fallthru
    _

// kernel: rnn_doc_reader_forward.5
$region0: #{rnn_doc_reader_forward.5}
  #allocation0 [shape = 'u32[]', space=smem, size = 0x4, offset = 0x4, fixed_abs, tag = 'smem constant byte address 0x4 - core index']
  #allocation1 [shape = 'u32[72,128]{1,0:T(1,128)}', space=vmem, size = 0x9000, scoped, tag = 'internal scratch']
  #allocation2 [shape = 'f32[2,8,72]{2,1,0:T(8,128)}', space=vmem, size = 0x2000, scoped, tag = 'scratch operand']
  #allocation3 [shape = 'f32[1,1]{1,0:T(1,128)S(1)}', space=vmem, size = 0x200, scoped, tag = 'scoped memory for rnn_doc_reader_forward.5']
  %s0 = inlined_call_operand.vmem [shape: f32[2,8,32], index: 0, kind: input, shape index: {}]
  %s1 = inlined_call_operand.vmem [shape: f32[2,16,72], index: 1, kind: input, shape index: {}]
  %s2 = inlined_call_operand.vmem [shape: f32[2,8], index: 2, kind: input, shape index: {}]
  %s3 = inlined_call_operand.vmem [shape: f32[2,16], index: 3, kind: input, shape index: {}]
  %s4 = inlined_call_operand.vmem [shape: f32[32,96], index: 4, kind: input, shape index: {}]
  %s5 = inlined_call_operand.vmem [shape: f32[32,96], index: 5, kind: input, shape index: {}]
  %s6 = inlined_call_operand.vmem [shape: f32[1,96], index: 6, kind: input, shape index: {}]
  %s7 = inlined_call_operand.vmem [shape: f32[1,96], index: 7, kind: input, shape index: {}]
  %s8 = inlined_call_operand.vmem [shape: f32[32,96], index: 8, kind: input, shape index: {}]
  %s9 = inlined_call_operand.vmem [shape: f32[32,96], index: 9, kind: input, shape index: {}]
  %s10 = inlined_call_operand.vmem [shape: f32[1,96], index: 10, kind: input, shape index: {}]
  %s11 = inlined_call_operand.vmem [shape: f32[1,96], index: 11, kind: input, shape index: {}]
  %s12 = inlined_call_operand.vmem [shape: f32[32,8], index: 12, kind: input, shape index: {}]
  %s13 = inlined_call_operand.vmem [shape: f32[1,8], index: 13, kind: input, shape index: {}]
  %s14 = inlined_call_operand.vmem [shape: f32[1,72], index: 14, kind: input, shape index: {}]
  %s15 = inlined_call_operand.<no memory space> [shape: f32[1,1], index: 15, kind: input, shape index: {}]
  %s16 = inlined_call_operand.vmem [shape: f32[72,72], index: 16, kind: input, shape index: {}]
  %s17 = inlined_call_operand.vmem [shape: f32[1,72], index: 17, kind: input, shape index: {}]
  %s18 = inlined_call_operand.vmem [shape: f32[72,72], index: 18, kind: input, shape index: {}]
  %s19 = inlined_call_operand.vmem [shape: f32[1,72], index: 19, kind: input, shape index: {}]
  %s20 = inlined_call_operand.hbm [shape: f32[2,16], index: 20, kind: output, shape index: {0}]
  %s21 = inlined_call_operand.hbm [shape: f32[2,16], index: 21, kind: output, shape index: {1}]
  %22 = xla_tuple %s20, %s21
  %s23 = sld [smem:[#allocation0]]
  $region98: #{rnn_doc_reader_forward.5} parent=0
    _
  %s25 = ssub.s32 1, %s23
  %s26 = scalar_select 0, %s25, %s23
  %v27 = vstv %s15
  %28 = vst [vmem:[#allocation3] sm:$0x1] %v27
  $region1: #{rnn_doc_reader_forward.5} parent=0
    #allocation4 [shape = 'u8[1024]{0}', space=vmem, size = 0x400, scoped, tag = 'output window, operand 0, single buffered']
    #allocation5 [shape = 's32[1]{0}', space=sflag, size = 0x4, scoped, tag = 'scoped memory for rnn_doc_reader_forward.5']
    #allocation6 [shape = 'u8[1024]{0}', space=vmem, size = 0x400, scoped, tag = 'output window, operand 1, single buffered']
    #allocation7 [shape = 's32[1]{0}', space=sflag, size = 0x4, scoped, tag = 'scoped memory for rnn_doc_reader_forward.5']
    %29 = vsyncpa [#allocation5], 0
    %30 = vsyncpa [#allocation7], 0
    // Predicated region
    $region2: #{rnn_doc_reader_forward.5} parent=1 // pred_check
      _
    $region3: #{rnn_doc_reader_forward.5} parent=1 // pred_check_branch
      %32 = sbr.rel (0) target = $region5
    $region4: #{rnn_doc_reader_forward.5} parent=1 // pred_region
      _
    $region5: #{rnn_doc_reader_forward.5} parent=1 // pred_fallthru
      _
    // Predicated region
    $region6: #{rnn_doc_reader_forward.5} parent=1 // pred_check
      _
    $region7: #{rnn_doc_reader_forward.5} parent=1 // pred_check_branch
      %34 = sbr.rel (0) target = $region9
    $region8: #{rnn_doc_reader_forward.5} parent=1 // pred_region
      _
    $region9: #{rnn_doc_reader_forward.5} parent=1 // pred_fallthru
      _
    // Predicated region
    $region10: #{rnn_doc_reader_forward.5} parent=1 // pred_check
      _
    $region11: #{rnn_doc_reader_forward.5} parent=1 // pred_check_branch
      %36 = sbr.rel (0) target = $region13
    $region12: #{rnn_doc_reader_forward.5} parent=1 // pred_region
      _
    $region13: #{rnn_doc_reader_forward.5} parent=1 // pred_fallthru
      _
    // Predicated region
    $region14: #{rnn_doc_reader_forward.5} parent=1 // pred_check
      _
    $region15: #{rnn_doc_reader_forward.5} parent=1 // pred_check_branch
      %38 = sbr.rel (0) target = $region17
    $region16: #{rnn_doc_reader_forward.5} parent=1 // pred_region
      _
    $region17: #{rnn_doc_reader_forward.5} parent=1 // pred_fallthru
      _
    // Predicated region
    $region18: #{rnn_doc_reader_forward.5} parent=1 // pred_check
      _
    $region19: #{rnn_doc_reader_forward.5} parent=1 // pred_check_branch
      %40 = sbr.rel (0) target = $region21
    $region20: #{rnn_doc_reader_forward.5} parent=1 // pred_region
      _
    $region21: #{rnn_doc_reader_forward.5} parent=1 // pred_fallthru
      _
    // Predicated region
    $region22: #{rnn_doc_reader_forward.5} parent=1 // pred_check
      _
    $region23: #{rnn_doc_reader_forward.5} parent=1 // pred_check_branch
      %42 = sbr.rel (0) target = $region25
    $region24: #{rnn_doc_reader_forward.5} parent=1 // pred_region
      _
    $region25: #{rnn_doc_reader_forward.5} parent=1 // pred_fallthru
      _
    // Predicated region
    $region26: #{rnn_doc_reader_forward.5} parent=1 // pred_check
      _
    $region27: #{rnn_doc_reader_forward.5} parent=1 // pred_check_branch
      %44 = sbr.rel (0) target = $region29
    $region28: #{rnn_doc_reader_forward.5} parent=1 // pred_region
      _
    $region29: #{rnn_doc_reader_forward.5} parent=1 // pred_fallthru
      _
    // Predicated region
    $region30: #{rnn_doc_reader_forward.5} parent=1 // pred_check
      _
    $region31: #{rnn_doc_reader_forward.5} parent=1 // pred_check_branch
      %46 = sbr.rel (0) target = $region33
    $region32: #{rnn_doc_reader_forward.5} parent=1 // pred_region
      _
    $region33: #{rnn_doc_reader_forward.5} parent=1 // pred_fallthru
      _
    // Predicated region
    $region34: #{rnn_doc_reader_forward.5} parent=1 // pred_check
      _
    $region35: #{rnn_doc_reader_forward.5} parent=1 // pred_check_branch
      %48 = sbr.rel (0) target = $region37
    $region36: #{rnn_doc_reader_forward.5} parent=1 // pred_region
      _
    $region37: #{rnn_doc_reader_forward.5} parent=1 // pred_fallthru
      _
    // Predicated region
    $region38: #{rnn_doc_reader_forward.5} parent=1 // pred_check
      _
    $region39: #{rnn_doc_reader_forward.5} parent=1 // pred_check_branch
      %50 = sbr.rel (0) target = $region41
    $region40: #{rnn_doc_reader_forward.5} parent=1 // pred_region
      _
    $region41: #{rnn_doc_reader_forward.5} parent=1 // pred_fallthru
      _
    // Predicated region
    $region42: #{rnn_doc_reader_forward.5} parent=1 // pred_check
      _
    $region43: #{rnn_doc_reader_forward.5} parent=1 // pred_check_branch
      %52 = sbr.rel (0) target = $region45
    $region44: #{rnn_doc_reader_forward.5} parent=1 // pred_region
      _
    $region45: #{rnn_doc_reader_forward.5} parent=1 // pred_fallthru
      _
    // Predicated region
    $region46: #{rnn_doc_reader_forward.5} parent=1 // pred_check
      _
    $region47: #{rnn_doc_reader_forward.5} parent=1 // pred_check_branch
      %54 = sbr.rel (0) target = $region49
    $region48: #{rnn_doc_reader_forward.5} parent=1 // pred_region
      _
    $region49: #{rnn_doc_reader_forward.5} parent=1 // pred_fallthru
      _
    // Predicated region
    $region50: #{rnn_doc_reader_forward.5} parent=1 // pred_check
      _
    $region51: #{rnn_doc_reader_forward.5} parent=1 // pred_check_branch
      %56 = sbr.rel (0) target = $region53
    $region52: #{rnn_doc_reader_forward.5} parent=1 // pred_region
      _
    $region53: #{rnn_doc_reader_forward.5} parent=1 // pred_fallthru
      _
    // Predicated region
    $region54: #{rnn_doc_reader_forward.5} parent=1 // pred_check
      _
    $region55: #{rnn_doc_reader_forward.5} parent=1 // pred_check_branch
      %58 = sbr.rel (0) target = $region57
    $region56: #{rnn_doc_reader_forward.5} parent=1 // pred_region
      _
    $region57: #{rnn_doc_reader_forward.5} parent=1 // pred_fallthru
      _
    // Predicated region
    $region58: #{rnn_doc_reader_forward.5} parent=1 // pred_check
      _
    $region59: #{rnn_doc_reader_forward.5} parent=1 // pred_check_branch
      %60 = sbr.rel (0) target = $region61
    $region60: #{rnn_doc_reader_forward.5} parent=1 // pred_region
      _
    $region61: #{rnn_doc_reader_forward.5} parent=1 // pred_fallthru
      _
    // Predicated region
    $region62: #{rnn_doc_reader_forward.5} parent=1 // pred_check
      _
    $region63: #{rnn_doc_reader_forward.5} parent=1 // pred_check_branch
      %62 = sbr.rel (0) target = $region65
    $region64: #{rnn_doc_reader_forward.5} parent=1 // pred_region
      _
    $region65: #{rnn_doc_reader_forward.5} parent=1 // pred_fallthru
      _
    // Predicated region
    $region66: #{rnn_doc_reader_forward.5} parent=1 // pred_check
      _
    $region67: #{rnn_doc_reader_forward.5} parent=1 // pred_check_branch
      %64 = sbr.rel (0) target = $region69
    $region68: #{rnn_doc_reader_forward.5} parent=1 // pred_region
      _
    $region69: #{rnn_doc_reader_forward.5} parent=1 // pred_fallthru
      _
    // Predicated region
    $region70: #{rnn_doc_reader_forward.5} parent=1 // pred_check
      _
    $region71: #{rnn_doc_reader_forward.5} parent=1 // pred_check_branch
      %66 = sbr.rel (0) target = $region73
    $region72: #{rnn_doc_reader_forward.5} parent=1 // pred_region
      _
    $region73: #{rnn_doc_reader_forward.5} parent=1 // pred_fallthru
      _
    // Predicated region
    $region74: #{rnn_doc_reader_forward.5} parent=1 // pred_check
      _
    $region75: #{rnn_doc_reader_forward.5} parent=1 // pred_check_branch
      %68 = sbr.rel (0) target = $region77
    $region76: #{rnn_doc_reader_forward.5} parent=1 // pred_region
      _
    $region77: #{rnn_doc_reader_forward.5} parent=1 // pred_fallthru
      _
    // Predicated region
    $region78: #{rnn_doc_reader_forward.5} parent=1 // pred_check
      _
    $region79: #{rnn_doc_reader_forward.5} parent=1 // pred_check_branch
      %70 = sbr.rel (0) target = $region81
    $region80: #{rnn_doc_reader_forward.5} parent=1 // pred_region
      _
    $region81: #{rnn_doc_reader_forward.5} parent=1 // pred_fallthru
      _
    %v71 = vld [vmem:[%s0] sm:$0xff]
    %v72 = vld [vmem:[%s0 + $0x8] sm:$0xff]
    %v73 = vld [vmem:[%s4] sm:$0xff]
    %v74 = vld [vmem:[%s4 + $0x8] sm:$0xff]
    %v75 = vld [vmem:[%s4 + $0x10] sm:$0xff]
    %v76 = vld [vmem:[%s4 + $0x18] sm:$0xff]
    %v77 = vld [vmem:[%s5] sm:$0xff]
    %v78 = vld [vmem:[%s5 + $0x8] sm:$0xff]
    %v79 = vld [vmem:[%s5 + $0x10] sm:$0xff]
    %v80 = vld [vmem:[%s5 + $0x18] sm:$0xff]
    %v81 = vld [vmem:[%s6] sm:$0x1]
    %v82 = vld [vmem:[%s7] sm:$0x1]
    %v83 = vld [vmem:[%s8] sm:$0xff]
    %v84 = vld [vmem:[%s8 + $0x8] sm:$0xff]
    %v85 = vld [vmem:[%s8 + $0x10] sm:$0xff]
    %v86 = vld [vmem:[%s8 + $0x18] sm:$0xff]
    %v87 = vld [vmem:[%s9] sm:$0xff]
    %v88 = vld [vmem:[%s9 + $0x8] sm:$0xff]
    %v89 = vld [vmem:[%s9 + $0x10] sm:$0xff]
    %v90 = vld [vmem:[%s9 + $0x18] sm:$0xff]
    %v91 = vld [vmem:[%s10] sm:$0x1]
    %v92 = vld [vmem:[%s11] sm:$0x1]
    %v93 = vld [vmem:[%s12] sm:$0xff]
    %v94 = vld [vmem:[%s12 + $0x8] sm:$0xff]
    %v95 = vld [vmem:[%s12 + $0x10] sm:$0xff]
    %v96 = vld [vmem:[%s12 + $0x18] sm:$0xff]
    %v97 = vld [vmem:[%s13] sm:$0x1]
    %v99 = vperm.slane %v81, 0
    %vm101 = vcmask 261120
    %v103 = vsel %vm101, %v71, 0
    %v106 = vsel %vm101, %v72, 0
    %108 = vmatpush.msra.mxu0 0.0
    %109 = vmatpush.msra.mxu0 0.0
    %110 = vmatpush.msra.mxu0 0.0
    %111 = vmatpush.msra.mxu0 0.0
    %112 = vmatpush.msra.mxu0 0.0
    %113 = vmatpush.msra.mxu0 0.0
    %114 = vmatpush.msra.mxu0 0.0
    %115 = vmatpush.msra.mxu0 0.0
    %116 = vmatpush.msra.mxu0 0.0
    %117 = vmatpush.msra.mxu0 0.0
    %118 = vmatpush.msra.mxu0 0.0
    %119 = vmatpush.msra.mxu0 0.0
    %120 = vmatpush.msra.mxu0 %v76
    %121 = vmatpush.msra.mxu0 %v75
    %122 = vmatpush.msra.mxu0 %v74
    %123 = vmatpush.msra.mxu0 %v73
    %124 = vmatmul.f32.gmra.mxu0 %v103
    %v125 = vpop.f32.mrf.mxu0
    %v126 = vadd.f32 %v99, %v125
    %127 = vmatmul.f32.gmra.mxu0 %v106
    %v128 = vpop.f32.mrf.mxu0
    %v129 = vadd.f32 %v99, %v128
    %130 = vdwg.mxu0
    %v132 = vperm.slane %v91, 0
    %134 = vmatpush.msra.mxu0 0.0
    %135 = vmatpush.msra.mxu0 0.0
    %136 = vmatpush.msra.mxu0 0.0
    %137 = vmatpush.msra.mxu0 0.0
    %138 = vmatpush.msra.mxu0 0.0
    %139 = vmatpush.msra.mxu0 0.0
    %140 = vmatpush.msra.mxu0 0.0
    %141 = vmatpush.msra.mxu0 0.0
    %142 = vmatpush.msra.mxu0 0.0
    %143 = vmatpush.msra.mxu0 0.0
    %144 = vmatpush.msra.mxu0 0.0
    %145 = vmatpush.msra.mxu0 0.0
    %146 = vmatpush.msra.mxu0 %v86
    %147 = vmatpush.msra.mxu0 %v85
    %148 = vmatpush.msra.mxu0 %v84
    %149 = vmatpush.msra.mxu0 %v83
    %150 = vmatmul.f32.gmra.mxu0 %v103
    %v151 = vpop.f32.mrf.mxu0
    %v152 = vadd.f32 %v132, %v151
    %153 = vmatmul.f32.gmra.mxu0 %v106
    %v154 = vpop.f32.mrf.mxu0
    %v155 = vadd.f32 %v132, %v154
    %156 = vdwg.mxu0
    %v158 = vperm.slane %v97, 0
    %160 = vmatpush.msra.mxu0 0.0
    %161 = vmatpush.msra.mxu0 0.0
    %162 = vmatpush.msra.mxu0 0.0
    %163 = vmatpush.msra.mxu0 0.0
    %164 = vmatpush.msra.mxu0 0.0
    %165 = vmatpush.msra.mxu0 0.0
    %166 = vmatpush.msra.mxu0 0.0
    %167 = vmatpush.msra.mxu0 0.0
    %168 = vmatpush.msra.mxu0 0.0
    %169 = vmatpush.msra.mxu0 0.0
    %170 = vmatpush.msra.mxu0 0.0
    %171 = vmatpush.msra.mxu0 0.0
    %172 = vmatpush.msra.mxu0 %v96
    %173 = vmatpush.msra.mxu0 %v95
    %174 = vmatpush.msra.mxu0 %v94
    %175 = vmatpush.msra.mxu0 %v93
    %176 = vmatmul.f32.gmra.mxu0 %v103
    %v177 = vpop.f32.mrf.mxu0
    %v178 = vadd.f32 %v158, %v177
    %179 = vmatmul.f32.gmra.mxu0 %v106
    %v180 = vpop.f32.mrf.mxu0
    %v181 = vadd.f32 %v158, %v180
    %182 = vdwg.mxu0
    %v183 = vmax.f32 %v178, 0.0
    %v184 = vmax.f32 %v181, 0.0
    %187 = vrot.lane.b32.xlu0 %v183, 64
    %v188 = vpop.permute.xlu0 %187
    %189 = vrot.lane.b32.xlu0 %v184, 64
    %v190 = vpop.permute.xlu0 %189
    %vm193 = vcmask 589312
    %194 = vst.msk [vmem:[#allocation2] sm:$0xff] %vm193, %v188
    %195 = vst.msk [vmem:[#allocation2 + $0x8] sm:$0xff] %vm193, %v190
    %v196 = vmul.f32 %v126, 0.0
    %v197 = vmul.f32 %v129, 0.0
    %v198 = vmul.f32 %v152, 0.0
    %v199 = vmul.f32 %v155, 0.0
    %v201 = vsel %vm101, %v196, 0
    %203 = vmatpush.msra.mxu0 0.0
    %204 = vmatpush.msra.mxu0 0.0
    %205 = vmatpush.msra.mxu0 0.0
    %206 = vmatpush.msra.mxu0 0.0
    %207 = vmatpush.msra.mxu0 0.0
    %208 = vmatpush.msra.mxu0 0.0
    %209 = vmatpush.msra.mxu0 0.0
    %210 = vmatpush.msra.mxu0 0.0
    %211 = vmatpush.msra.mxu0 0.0
    %212 = vmatpush.msra.mxu0 0.0
    %213 = vmatpush.msra.mxu0 0.0
    %214 = vmatpush.msra.mxu0 0.0
    %215 = vmatpush.msra.mxu0 %v80
    %216 = vmatpush.msra.mxu0 %v79
    %217 = vmatpush.msra.mxu0 %v78
    %218 = vmatpush.msra.mxu0 %v77
    %219 = vmatmul.f32.gmra.mxu0 %v201
    %v220 = vpop.f32.mrf.mxu0
    %v221 = vadd.f32 %v82, %v220
    %222 = vdwg.mxu0
    %v224 = vsel %vm101, %v197, 0
    %226 = vmatpush.msra.mxu0 0.0
    %227 = vmatpush.msra.mxu0 0.0
    %228 = vmatpush.msra.mxu0 0.0
    %229 = vmatpush.msra.mxu0 0.0
    %230 = vmatpush.msra.mxu0 0.0
    %231 = vmatpush.msra.mxu0 0.0
    %232 = vmatpush.msra.mxu0 0.0
    %233 = vmatpush.msra.mxu0 0.0
    %234 = vmatpush.msra.mxu0 0.0
    %235 = vmatpush.msra.mxu0 0.0
    %236 = vmatpush.msra.mxu0 0.0
    %237 = vmatpush.msra.mxu0 0.0
    %238 = vmatpush.msra.mxu0 %v80
    %239 = vmatpush.msra.mxu0 %v79
    %240 = vmatpush.msra.mxu0 %v78
    %241 = vmatpush.msra.mxu0 %v77
    %242 = vmatmul.f32.gmra.mxu0 %v224
    %v243 = vpop.f32.mrf.mxu0
    %v244 = vadd.f32 %v82, %v243
    %245 = vdwg.mxu0
    %v247 = vsel %vm101, %v198, 0
    %249 = vmatpush.msra.mxu0 0.0
    %250 = vmatpush.msra.mxu0 0.0
    %251 = vmatpush.msra.mxu0 0.0
    %252 = vmatpush.msra.mxu0 0.0
    %253 = vmatpush.msra.mxu0 0.0
    %254 = vmatpush.msra.mxu0 0.0
    %255 = vmatpush.msra.mxu0 0.0
    %256 = vmatpush.msra.mxu0 0.0
    %257 = vmatpush.msra.mxu0 0.0
    %258 = vmatpush.msra.mxu0 0.0
    %259 = vmatpush.msra.mxu0 0.0
    %260 = vmatpush.msra.mxu0 0.0
    %261 = vmatpush.msra.mxu0 %v90
    %262 = vmatpush.msra.mxu0 %v89
    %263 = vmatpush.msra.mxu0 %v88
    %264 = vmatpush.msra.mxu0 %v87
    %265 = vmatmul.f32.gmra.mxu0 %v247
    %v266 = vpop.f32.mrf.mxu0
    %v267 = vadd.f32 %v92, %v266
    %268 = vdwg.mxu0
    %v270 = vsel %vm101, %v199, 0
    %272 = vmatpush.msra.mxu0 0.0
    %273 = vmatpush.msra.mxu0 0.0
    %274 = vmatpush.msra.mxu0 0.0
    %275 = vmatpush.msra.mxu0 0.0
    %276 = vmatpush.msra.mxu0 0.0
    %277 = vmatpush.msra.mxu0 0.0
    %278 = vmatpush.msra.mxu0 0.0
    %279 = vmatpush.msra.mxu0 0.0
    %280 = vmatpush.msra.mxu0 0.0
    %281 = vmatpush.msra.mxu0 0.0
    %282 = vmatpush.msra.mxu0 0.0
    %283 = vmatpush.msra.mxu0 0.0
    %284 = vmatpush.msra.mxu0 %v90
    %285 = vmatpush.msra.mxu0 %v89
    %286 = vmatpush.msra.mxu0 %v88
    %287 = vmatpush.msra.mxu0 %v87
    %288 = vmatmul.f32.gmra.mxu0 %v270
    %v289 = vpop.f32.mrf.mxu0
    %v290 = vadd.f32 %v92, %v289
    %291 = vdwg.mxu0
    %v292 = vadd.f32 %v126, %v221
    %v293 = vadd.f32 %v129, %v244
    %v294 = vxor.u32 %v292, 2147483648
    %v295 = vxor.u32 %v293, 2147483648
    %v296 = vmul.f32 %v294, 1.442695
    %v297 = vpow.pop %v296
    %v298 = vmul.f32 %v295, 1.442695
    %v299 = vpow.pop %v298
    %v300 = vadd.f32 %v297, 1.0
    %v301 = vadd.f32 %v299, 1.0
    %v302 = vrcp.pop %v300
    %v303 = vmul.f32 %v300, %v302
    %v304 = vsub.f32 1.0, %v303
    %v305 = vmul.f32 %v302, %v304
    %v306 = vadd.f32 %v302, %v305
    %vm307 = vweird.f32 %v300
    %vm308 = vweird.f32 %v302
    %vm309 = vmor %vm307, %vm308
    %v310 = vsel %vm309, %v302, %v306
    %v311 = vand.u32 2147483647, %v300
    %vm312 = vcmp.eq.f32.partialorder %v311, 8.507059e+37
    %v313 = vand.u32 %v300, 2147483648
    %v314 = vor.u32 1.1754944e-38, %v313
    %v315 = vsel %vm312, %v314, %v310
    %v316 = vmul.f32 1.0, %v315
    %v317 = vrcp.pop %v301
    %v318 = vmul.f32 %v301, %v317
    %v319 = vsub.f32 1.0, %v318
    %v320 = vmul.f32 %v317, %v319
    %v321 = vadd.f32 %v317, %v320
    %vm322 = vweird.f32 %v301
    %vm323 = vweird.f32 %v317
    %vm324 = vmor %vm322, %vm323
    %v325 = vsel %vm324, %v317, %v321
    %v326 = vand.u32 2147483647, %v301
    %vm327 = vcmp.eq.f32.partialorder %v326, 8.507059e+37
    %v328 = vand.u32 %v301, 2147483648
    %v329 = vor.u32 1.1754944e-38, %v328
    %v330 = vsel %vm327, %v329, %v325
    %v331 = vmul.f32 1.0, %v330
    %334 = vrot.lane.b32.xlu0 %v221, 64
    %v335 = vpop.permute.xlu0 %334
    %336 = vrot.lane.b32.xlu0 %v244, 64
    %v337 = vpop.permute.xlu0 %336
    %v340 = vmul.f32 %v316, %v335
    %v341 = vmul.f32 %v331, %v337
    %344 = vrot.lane.b32.xlu0 %v340, 64
    %v345 = vpop.permute.xlu0 %344
    %346 = vrot.lane.b32.xlu0 %v341, 64
    %v347 = vpop.permute.xlu0 %346
    %v350 = vadd.f32 %v126, %v345
    %v351 = vadd.f32 %v129, %v347
    %v352 = vtanh.pop %v350
    %v353 = vtanh.pop %v351
    %v354 = vsub.f32 1.0, %v316
    %v355 = vsub.f32 1.0, %v331
    %358 = vrot.lane.b32.xlu0 %v352, 96
    %v359 = vpop.permute.xlu0 %358
    %360 = vrot.lane.b32.xlu0 %v353, 96
    %v361 = vpop.permute.xlu0 %360
    %v364 = vmul.f32 %v354, %v359
    %v365 = vmul.f32 %v355, %v361
    %366 = vrot.lane.b32.xlu0 %v196, 32
    %v367 = vpop.permute.xlu0 %366
    %368 = vrot.lane.b32.xlu0 %v197, 32
    %v369 = vpop.permute.xlu0 %368
    %v372 = vmul.f32 %v316, %v367
    %v373 = vmul.f32 %v331, %v369
    %v374 = vadd.f32 %v364, %v372
    %v375 = vadd.f32 %v365, %v373
    %v378 = vrot.slane %v267, 1
    %v379 = vrot.slane %v290, 1
    %v382 = vadd.f32 %v152, %v378
    %v383 = vadd.f32 %v155, %v379
    %v384 = vxor.u32 %v382, 2147483648
    %v385 = vxor.u32 %v383, 2147483648
    %v386 = vmul.f32 %v384, 1.442695
    %v387 = vpow.pop %v386
    %v388 = vmul.f32 %v385, 1.442695
    %v389 = vpow.pop %v388
    %v390 = vadd.f32 %v387, 1.0
    %v391 = vadd.f32 %v389, 1.0
    %v392 = vrcp.pop %v390
    %v393 = vmul.f32 %v390, %v392
    %v394 = vsub.f32 1.0, %v393
    %v395 = vmul.f32 %v392, %v394
    %v396 = vadd.f32 %v392, %v395
    %vm397 = vweird.f32 %v390
    %vm398 = vweird.f32 %v392
    %vm399 = vmor %vm397, %vm398
    %v400 = vsel %vm399, %v392, %v396
    %v401 = vand.u32 2147483647, %v390
    %vm402 = vcmp.eq.f32.partialorder %v401, 8.507059e+37
    %v403 = vand.u32 %v390, 2147483648
    %v404 = vor.u32 1.1754944e-38, %v403
    %v405 = vsel %vm402, %v404, %v400
    %v406 = vmul.f32 1.0, %v405
    %v407 = vrcp.pop %v391
    %v408 = vmul.f32 %v391, %v407
    %v409 = vsub.f32 1.0, %v408
    %v410 = vmul.f32 %v407, %v409
    %v411 = vadd.f32 %v407, %v410
    %vm412 = vweird.f32 %v391
    %vm413 = vweird.f32 %v407
    %vm414 = vmor %vm412, %vm413
    %v415 = vsel %vm414, %v407, %v411
    %v416 = vand.u32 2147483647, %v391
    %vm417 = vcmp.eq.f32.partialorder %v416, 8.507059e+37
    %v418 = vand.u32 %v391, 2147483648
    %v419 = vor.u32 1.1754944e-38, %v418
    %v420 = vsel %vm417, %v419, %v415
    %v421 = vmul.f32 1.0, %v420
    %422 = vrot.lane.b32.xlu0 %v378, 64
    %v423 = vpop.permute.xlu0 %422
    %424 = vrot.lane.b32.xlu0 %v379, 64
    %v425 = vpop.permute.xlu0 %424
    %v428 = vmul.f32 %v406, %v423
    %v429 = vmul.f32 %v421, %v425
    %432 = vrot.lane.b32.xlu0 %v428, 64
    %v433 = vpop.permute.xlu0 %432
    %434 = vrot.lane.b32.xlu0 %v429, 64
    %v435 = vpop.permute.xlu0 %434
    %v438 = vadd.f32 %v152, %v433
    %v439 = vadd.f32 %v155, %v435
    %v440 = vtanh.pop %v438
    %v441 = vtanh.pop %v439
    %v442 = vsub.f32 1.0, %v406
    %v443 = vsub.f32 1.0, %v421
    %446 = vrot.lane.b32.xlu0 %v440, 96
    %v447 = vpop.permute.xlu0 %446
    %448 = vrot.lane.b32.xlu0 %v441, 96
    %v449 = vpop.permute.xlu0 %448
    %v452 = vmul.f32 %v442, %v447
    %v453 = vmul.f32 %v443, %v449
    %v454 = vrot.slane %v198, 1
    %v455 = vrot.slane %v199, 1
    %456 = vrot.lane.b32.xlu0 %v454, 32
    %v457 = vpop.permute.xlu0 %456
    %458 = vrot.lane.b32.xlu0 %v455, 32
    %v459 = vpop.permute.xlu0 %458
    %v462 = vmul.f32 %v406, %v457
    %v463 = vmul.f32 %v421, %v459
    %v464 = vadd.f32 %v452, %v462
    %v465 = vadd.f32 %v453, %v463
    %468 = vrot.lane.b32.xlu0 %v374, 96
    %v469 = vpop.permute.xlu0 %468
    %470 = vrot.lane.b32.xlu0 %v375, 96
    %v471 = vpop.permute.xlu0 %470
    %vm474 = vcmask 253952
    %475 = vst.msk [vmem:[#allocation2] sm:$0x1] %vm474, %v469
    %476 = vst.msk [vmem:[#allocation2 + $0x8] sm:$0x1] %vm474, %v471
    %vm477 = vcmask 523527
    %478 = vst.msk [vmem:[#allocation2] sm:$0x80] %vm477, %v464
    %479 = vst.msk [vmem:[#allocation2 + $0x8] sm:$0x80] %vm477, %v465
    %v480 = vsel %vm101, %v469, 0
    %482 = vmatpush.msra.mxu0 0.0
    %483 = vmatpush.msra.mxu0 0.0
    %484 = vmatpush.msra.mxu0 0.0
    %485 = vmatpush.msra.mxu0 0.0
    %486 = vmatpush.msra.mxu0 0.0
    %487 = vmatpush.msra.mxu0 0.0
    %488 = vmatpush.msra.mxu0 0.0
    %489 = vmatpush.msra.mxu0 0.0
    %490 = vmatpush.msra.mxu0 0.0
    %491 = vmatpush.msra.mxu0 0.0
    %492 = vmatpush.msra.mxu0 0.0
    %493 = vmatpush.msra.mxu0 0.0
    %494 = vmatpush.msra.mxu0 %v80
    %495 = vmatpush.msra.mxu0 %v79
    %496 = vmatpush.msra.mxu0 %v78
    %497 = vmatpush.msra.mxu0 %v77
    %498 = vmatmul.f32.gmra.mxu0 %v480
    %v499 = vpop.f32.mrf.mxu0
    %v500 = vadd.f32 %v82, %v499
    %501 = vdwg.mxu0
    %v502 = vsel %vm101, %v471, 0
    %504 = vmatpush.msra.mxu0 0.0
    %505 = vmatpush.msra.mxu0 0.0
    %506 = vmatpush.msra.mxu0 0.0
    %507 = vmatpush.msra.mxu0 0.0
    %508 = vmatpush.msra.mxu0 0.0
    %509 = vmatpush.msra.mxu0 0.0
    %510 = vmatpush.msra.mxu0 0.0
    %511 = vmatpush.msra.mxu0 0.0
    %512 = vmatpush.msra.mxu0 0.0
    %513 = vmatpush.msra.mxu0 0.0
    %514 = vmatpush.msra.mxu0 0.0
    %515 = vmatpush.msra.mxu0 0.0
    %516 = vmatpush.msra.mxu0 %v80
    %517 = vmatpush.msra.mxu0 %v79
    %518 = vmatpush.msra.mxu0 %v78
    %519 = vmatpush.msra.mxu0 %v77
    %520 = vmatmul.f32.gmra.mxu0 %v502
    %v521 = vpop.f32.mrf.mxu0
    %v522 = vadd.f32 %v82, %v521
    %523 = vdwg.mxu0
    %v525 = vrot.slane %v464, 7
    %526 = vrot.lane.b32.xlu0 %v525, 96
    %v527 = vpop.permute.xlu0 %526
    %v528 = vsel %vm101, %v527, 0
    %530 = vmatpush.msra.mxu0 0.0
    %531 = vmatpush.msra.mxu0 0.0
    %532 = vmatpush.msra.mxu0 0.0
    %533 = vmatpush.msra.mxu0 0.0
    %534 = vmatpush.msra.mxu0 0.0
    %535 = vmatpush.msra.mxu0 0.0
    %536 = vmatpush.msra.mxu0 0.0
    %537 = vmatpush.msra.mxu0 0.0
    %538 = vmatpush.msra.mxu0 0.0
    %539 = vmatpush.msra.mxu0 0.0
    %540 = vmatpush.msra.mxu0 0.0
    %541 = vmatpush.msra.mxu0 0.0
    %542 = vmatpush.msra.mxu0 %v90
    %543 = vmatpush.msra.mxu0 %v89
    %544 = vmatpush.msra.mxu0 %v88
    %545 = vmatpush.msra.mxu0 %v87
    %546 = vmatmul.f32.gmra.mxu0 %v528
    %v547 = vpop.f32.mrf.mxu0
    %v548 = vadd.f32 %v92, %v547
    %549 = vdwg.mxu0
    %v551 = vrot.slane %v465, 7
    %552 = vrot.lane.b32.xlu0 %v551, 96
    %v553 = vpop.permute.xlu0 %552
    %v554 = vsel %vm101, %v553, 0
    %556 = vmatpush.msra.mxu0 0.0
    %557 = vmatpush.msra.mxu0 0.0
    %558 = vmatpush.msra.mxu0 0.0
    %559 = vmatpush.msra.mxu0 0.0
    %560 = vmatpush.msra.mxu0 0.0
    %561 = vmatpush.msra.mxu0 0.0
    %562 = vmatpush.msra.mxu0 0.0
    %563 = vmatpush.msra.mxu0 0.0
    %564 = vmatpush.msra.mxu0 0.0
    %565 = vmatpush.msra.mxu0 0.0
    %566 = vmatpush.msra.mxu0 0.0
    %567 = vmatpush.msra.mxu0 0.0
    %568 = vmatpush.msra.mxu0 %v90
    %569 = vmatpush.msra.mxu0 %v89
    %570 = vmatpush.msra.mxu0 %v88
    %571 = vmatpush.msra.mxu0 %v87
    %572 = vmatmul.f32.gmra.mxu0 %v554
    %v573 = vpop.f32.mrf.mxu0
    %v574 = vadd.f32 %v92, %v573
    %575 = vdwg.mxu0
    %v578 = vrot.slane %v500, 7
    %v579 = vrot.slane %v522, 7
    %v582 = vadd.f32 %v126, %v578
    %v583 = vadd.f32 %v129, %v579
    %v584 = vxor.u32 %v582, 2147483648
    %v585 = vxor.u32 %v583, 2147483648
    %v586 = vmul.f32 %v584, 1.442695
    %v587 = vpow.pop %v586
    %v588 = vmul.f32 %v585, 1.442695
    %v589 = vpow.pop %v588
    %v590 = vadd.f32 %v587, 1.0
    %v591 = vadd.f32 %v589, 1.0
    %v592 = vrcp.pop %v590
    %v593 = vmul.f32 %v590, %v592
    %v594 = vsub.f32 1.0, %v593
    %v595 = vmul.f32 %v592, %v594
    %v596 = vadd.f32 %v592, %v595
    %vm597 = vweird.f32 %v590
    %vm598 = vweird.f32 %v592
    %vm599 = vmor %vm597, %vm598
    %v600 = vsel %vm599, %v592, %v596
    %v601 = vand.u32 2147483647, %v590
    %vm602 = vcmp.eq.f32.partialorder %v601, 8.507059e+37
    %v603 = vand.u32 %v590, 2147483648
    %v604 = vor.u32 1.1754944e-38, %v603
    %v605 = vsel %vm602, %v604, %v600
    %v606 = vmul.f32 1.0, %v605
    %v607 = vrcp.pop %v591
    %v608 = vmul.f32 %v591, %v607
    %v609 = vsub.f32 1.0, %v608
    %v610 = vmul.f32 %v607, %v609
    %v611 = vadd.f32 %v607, %v610
    %vm612 = vweird.f32 %v591
    %vm613 = vweird.f32 %v607
    %vm614 = vmor %vm612, %vm613
    %v615 = vsel %vm614, %v607, %v611
    %v616 = vand.u32 2147483647, %v591
    %vm617 = vcmp.eq.f32.partialorder %v616, 8.507059e+37
    %v618 = vand.u32 %v591, 2147483648
    %v619 = vor.u32 1.1754944e-38, %v618
    %v620 = vsel %vm617, %v619, %v615
    %v621 = vmul.f32 1.0, %v620
    %622 = vrot.lane.b32.xlu0 %v578, 64
    %v623 = vpop.permute.xlu0 %622
    %624 = vrot.lane.b32.xlu0 %v579, 64
    %v625 = vpop.permute.xlu0 %624
    %v628 = vmul.f32 %v606, %v623
    %v629 = vmul.f32 %v621, %v625
    %632 = vrot.lane.b32.xlu0 %v628, 64
    %v633 = vpop.permute.xlu0 %632
    %634 = vrot.lane.b32.xlu0 %v629, 64
    %v635 = vpop.permute.xlu0 %634
    %v638 = vadd.f32 %v126, %v633
    %v639 = vadd.f32 %v129, %v635
    %v640 = vtanh.pop %v638
    %v641 = vtanh.pop %v639
    %v642 = vsub.f32 1.0, %v606
    %v643 = vsub.f32 1.0, %v621
    %646 = vrot.lane.b32.xlu0 %v640, 96
    %v647 = vpop.permute.xlu0 %646
    %648 = vrot.lane.b32.xlu0 %v641, 96
    %v649 = vpop.permute.xlu0 %648
    %v652 = vmul.f32 %v642, %v647
    %v653 = vmul.f32 %v643, %v649
    %v654 = vrot.slane %v374, 7
    %v655 = vrot.slane %v375, 7
    %v658 = vmul.f32 %v606, %v654
    %v659 = vmul.f32 %v621, %v655
    %v660 = vadd.f32 %v652, %v658
    %v661 = vadd.f32 %v653, %v659
    %v664 = vrot.slane %v548, 2
    %v665 = vrot.slane %v574, 2
    %v668 = vadd.f32 %v152, %v664
    %v669 = vadd.f32 %v155, %v665
    %v670 = vxor.u32 %v668, 2147483648
    %v671 = vxor.u32 %v669, 2147483648
    %v672 = vmul.f32 %v670, 1.442695
    %v673 = vpow.pop %v672
    %v674 = vmul.f32 %v671, 1.442695
    %v675 = vpow.pop %v674
    %v676 = vadd.f32 %v673, 1.0
    %v677 = vadd.f32 %v675, 1.0
    %v678 = vrcp.pop %v676
    %v679 = vmul.f32 %v676, %v678
    %v680 = vsub.f32 1.0, %v679
    %v681 = vmul.f32 %v678, %v680
    %v682 = vadd.f32 %v678, %v681
    %vm683 = vweird.f32 %v676
    %vm684 = vweird.f32 %v678
    %vm685 = vmor %vm683, %vm684
    %v686 = vsel %vm685, %v678, %v682
    %v687 = vand.u32 2147483647, %v676
    %vm688 = vcmp.eq.f32.partialorder %v687, 8.507059e+37
    %v689 = vand.u32 %v676, 2147483648
    %v690 = vor.u32 1.1754944e-38, %v689
    %v691 = vsel %vm688, %v690, %v686
    %v692 = vmul.f32 1.0, %v691
    %v693 = vrcp.pop %v677
    %v694 = vmul.f32 %v677, %v693
    %v695 = vsub.f32 1.0, %v694
    %v696 = vmul.f32 %v693, %v695
    %v697 = vadd.f32 %v693, %v696
    %vm698 = vweird.f32 %v677
    %vm699 = vweird.f32 %v693
    %vm700 = vmor %vm698, %vm699
    %v701 = vsel %vm700, %v693, %v697
    %v702 = vand.u32 2147483647, %v677
    %vm703 = vcmp.eq.f32.partialorder %v702, 8.507059e+37
    %v704 = vand.u32 %v677, 2147483648
    %v705 = vor.u32 1.1754944e-38, %v704
    %v706 = vsel %vm703, %v705, %v701
    %v707 = vmul.f32 1.0, %v706
    %708 = vrot.lane.b32.xlu0 %v664, 64
    %v709 = vpop.permute.xlu0 %708
    %710 = vrot.lane.b32.xlu0 %v665, 64
    %v711 = vpop.permute.xlu0 %710
    %v714 = vmul.f32 %v692, %v709
    %v715 = vmul.f32 %v707, %v711
    %718 = vrot.lane.b32.xlu0 %v714, 64
    %v719 = vpop.permute.xlu0 %718
    %720 = vrot.lane.b32.xlu0 %v715, 64
    %v721 = vpop.permute.xlu0 %720
    %v724 = vadd.f32 %v152, %v719
    %v725 = vadd.f32 %v155, %v721
    %v726 = vtanh.pop %v724
    %v727 = vtanh.pop %v725
    %v728 = vsub.f32 1.0, %v692
    %v729 = vsub.f32 1.0, %v707
    %732 = vrot.lane.b32.xlu0 %v726, 96
    %v733 = vpop.permute.xlu0 %732
    %734 = vrot.lane.b32.xlu0 %v727, 96
    %v735 = vpop.permute.xlu0 %734
    %v738 = vmul.f32 %v728, %v733
    %v739 = vmul.f32 %v729, %v735
    %v740 = vrot.slane %v464, 1
    %v741 = vrot.slane %v465, 1
    %v744 = vmul.f32 %v692, %v740
    %v745 = vmul.f32 %v707, %v741
    %v746 = vadd.f32 %v738, %v744
    %v747 = vadd.f32 %v739, %v745
    %750 = vrot.lane.b32.xlu0 %v660, 96
    %v751 = vpop.permute.xlu0 %750
    %752 = vrot.lane.b32.xlu0 %v661, 96
    %v753 = vpop.permute.xlu0 %752
    %vm756 = vcmask 254977
    %757 = vst.msk [vmem:[#allocation2] sm:$0x2] %vm756, %v751
    %758 = vst.msk [vmem:[#allocation2 + $0x8] sm:$0x2] %vm756, %v753
    %vm759 = vcmask 522502
    %760 = vst.msk [vmem:[#allocation2] sm:$0x40] %vm759, %v746
    %761 = vst.msk [vmem:[#allocation2 + $0x8] sm:$0x40] %vm759, %v747
    %v762 = vrot.slane %v660, 1
    %763 = vrot.lane.b32.xlu0 %v762, 96
    %v764 = vpop.permute.xlu0 %763
    %v765 = vsel %vm101, %v764, 0
    %767 = vmatpush.msra.mxu0 0.0
    %768 = vmatpush.msra.mxu0 0.0
    %769 = vmatpush.msra.mxu0 0.0
    %770 = vmatpush.msra.mxu0 0.0
    %771 = vmatpush.msra.mxu0 0.0
    %772 = vmatpush.msra.mxu0 0.0
    %773 = vmatpush.msra.mxu0 0.0
    %774 = vmatpush.msra.mxu0 0.0
    %775 = vmatpush.msra.mxu0 0.0
    %776 = vmatpush.msra.mxu0 0.0
    %777 = vmatpush.msra.mxu0 0.0
    %778 = vmatpush.msra.mxu0 0.0
    %779 = vmatpush.msra.mxu0 %v80
    %780 = vmatpush.msra.mxu0 %v79
    %781 = vmatpush.msra.mxu0 %v78
    %782 = vmatpush.msra.mxu0 %v77
    %783 = vmatmul.f32.gmra.mxu0 %v765
    %v784 = vpop.f32.mrf.mxu0
    %v785 = vadd.f32 %v82, %v784
    %786 = vdwg.mxu0
    %v787 = vrot.slane %v661, 1
    %788 = vrot.lane.b32.xlu0 %v787, 96
    %v789 = vpop.permute.xlu0 %788
    %v790 = vsel %vm101, %v789, 0
    %792 = vmatpush.msra.mxu0 0.0
    %793 = vmatpush.msra.mxu0 0.0
    %794 = vmatpush.msra.mxu0 0.0
    %795 = vmatpush.msra.mxu0 0.0
    %796 = vmatpush.msra.mxu0 0.0
    %797 = vmatpush.msra.mxu0 0.0
    %798 = vmatpush.msra.mxu0 0.0
    %799 = vmatpush.msra.mxu0 0.0
    %800 = vmatpush.msra.mxu0 0.0
    %801 = vmatpush.msra.mxu0 0.0
    %802 = vmatpush.msra.mxu0 0.0
    %803 = vmatpush.msra.mxu0 0.0
    %804 = vmatpush.msra.mxu0 %v80
    %805 = vmatpush.msra.mxu0 %v79
    %806 = vmatpush.msra.mxu0 %v78
    %807 = vmatpush.msra.mxu0 %v77
    %808 = vmatmul.f32.gmra.mxu0 %v790
    %v809 = vpop.f32.mrf.mxu0
    %v810 = vadd.f32 %v82, %v809
    %811 = vdwg.mxu0
    %v813 = vrot.slane %v746, 6
    %814 = vrot.lane.b32.xlu0 %v813, 96
    %v815 = vpop.permute.xlu0 %814
    %v816 = vsel %vm101, %v815, 0
    %818 = vmatpush.msra.mxu0 0.0
    %819 = vmatpush.msra.mxu0 0.0
    %820 = vmatpush.msra.mxu0 0.0
    %821 = vmatpush.msra.mxu0 0.0
    %822 = vmatpush.msra.mxu0 0.0
    %823 = vmatpush.msra.mxu0 0.0
    %824 = vmatpush.msra.mxu0 0.0
    %825 = vmatpush.msra.mxu0 0.0
    %826 = vmatpush.msra.mxu0 0.0
    %827 = vmatpush.msra.mxu0 0.0
    %828 = vmatpush.msra.mxu0 0.0
    %829 = vmatpush.msra.mxu0 0.0
    %830 = vmatpush.msra.mxu0 %v90
    %831 = vmatpush.msra.mxu0 %v89
    %832 = vmatpush.msra.mxu0 %v88
    %833 = vmatpush.msra.mxu0 %v87
    %834 = vmatmul.f32.gmra.mxu0 %v816
    %v835 = vpop.f32.mrf.mxu0
    %v836 = vadd.f32 %v92, %v835
    %837 = vdwg.mxu0
    %v839 = vrot.slane %v747, 6
    %840 = vrot.lane.b32.xlu0 %v839, 96
    %v841 = vpop.permute.xlu0 %840
    %v842 = vsel %vm101, %v841, 0
    %844 = vmatpush.msra.mxu0 0.0
    %845 = vmatpush.msra.mxu0 0.0
    %846 = vmatpush.msra.mxu0 0.0
    %847 = vmatpush.msra.mxu0 0.0
    %848 = vmatpush.msra.mxu0 0.0
    %849 = vmatpush.msra.mxu0 0.0
    %850 = vmatpush.msra.mxu0 0.0
    %851 = vmatpush.msra.mxu0 0.0
    %852 = vmatpush.msra.mxu0 0.0
    %853 = vmatpush.msra.mxu0 0.0
    %854 = vmatpush.msra.mxu0 0.0
    %855 = vmatpush.msra.mxu0 0.0
    %856 = vmatpush.msra.mxu0 %v90
    %857 = vmatpush.msra.mxu0 %v89
    %858 = vmatpush.msra.mxu0 %v88
    %859 = vmatpush.msra.mxu0 %v87
    %860 = vmatmul.f32.gmra.mxu0 %v842
    %v861 = vpop.f32.mrf.mxu0
    %v862 = vadd.f32 %v92, %v861
    %863 = vdwg.mxu0
    %v866 = vrot.slane %v785, 6
    %v867 = vrot.slane %v810, 6
    %v870 = vadd.f32 %v126, %v866
    %v871 = vadd.f32 %v129, %v867
    %v872 = vxor.u32 %v870, 2147483648
    %v873 = vxor.u32 %v871, 2147483648
    %v874 = vmul.f32 %v872, 1.442695
    %v875 = vpow.pop %v874
    %v876 = vmul.f32 %v873, 1.442695
    %v877 = vpow.pop %v876
    %v878 = vadd.f32 %v875, 1.0
    %v879 = vadd.f32 %v877, 1.0
    %v880 = vrcp.pop %v878
    %v881 = vmul.f32 %v878, %v880
    %v882 = vsub.f32 1.0, %v881
    %v883 = vmul.f32 %v880, %v882
    %v884 = vadd.f32 %v880, %v883
    %vm885 = vweird.f32 %v878
    %vm886 = vweird.f32 %v880
    %vm887 = vmor %vm885, %vm886
    %v888 = vsel %vm887, %v880, %v884
    %v889 = vand.u32 2147483647, %v878
    %vm890 = vcmp.eq.f32.partialorder %v889, 8.507059e+37
    %v891 = vand.u32 %v878, 2147483648
    %v892 = vor.u32 1.1754944e-38, %v891
    %v893 = vsel %vm890, %v892, %v888
    %v894 = vmul.f32 1.0, %v893
    %v895 = vrcp.pop %v879
    %v896 = vmul.f32 %v879, %v895
    %v897 = vsub.f32 1.0, %v896
    %v898 = vmul.f32 %v895, %v897
    %v899 = vadd.f32 %v895, %v898
    %vm900 = vweird.f32 %v879
    %vm901 = vweird.f32 %v895
    %vm902 = vmor %vm900, %vm901
    %v903 = vsel %vm902, %v895, %v899
    %v904 = vand.u32 2147483647, %v879
    %vm905 = vcmp.eq.f32.partialorder %v904, 8.507059e+37
    %v906 = vand.u32 %v879, 2147483648
    %v907 = vor.u32 1.1754944e-38, %v906
    %v908 = vsel %vm905, %v907, %v903
    %v909 = vmul.f32 1.0, %v908
    %910 = vrot.lane.b32.xlu0 %v866, 64
    %v911 = vpop.permute.xlu0 %910
    %912 = vrot.lane.b32.xlu0 %v867, 64
    %v913 = vpop.permute.xlu0 %912
    %v916 = vmul.f32 %v894, %v911
    %v917 = vmul.f32 %v909, %v913
    %920 = vrot.lane.b32.xlu0 %v916, 64
    %v921 = vpop.permute.xlu0 %920
    %922 = vrot.lane.b32.xlu0 %v917, 64
    %v923 = vpop.permute.xlu0 %922
    %v926 = vadd.f32 %v126, %v921
    %v927 = vadd.f32 %v129, %v923
    %v928 = vtanh.pop %v926
    %v929 = vtanh.pop %v927
    %v930 = vsub.f32 1.0, %v894
    %v931 = vsub.f32 1.0, %v909
    %934 = vrot.lane.b32.xlu0 %v928, 96
    %v935 = vpop.permute.xlu0 %934
    %936 = vrot.lane.b32.xlu0 %v929, 96
    %v937 = vpop.permute.xlu0 %936
    %v940 = vmul.f32 %v930, %v935
    %v941 = vmul.f32 %v931, %v937
    %v942 = vrot.slane %v660, 7
    %v943 = vrot.slane %v661, 7
    %v946 = vmul.f32 %v894, %v942
    %v947 = vmul.f32 %v909, %v943
    %v948 = vadd.f32 %v940, %v946
    %v949 = vadd.f32 %v941, %v947
    %v952 = vrot.slane %v836, 3
    %v953 = vrot.slane %v862, 3
    %v956 = vadd.f32 %v152, %v952
    %v957 = vadd.f32 %v155, %v953
    %v958 = vxor.u32 %v956, 2147483648
    %v959 = vxor.u32 %v957, 2147483648
    %v960 = vmul.f32 %v958, 1.442695
    %v961 = vpow.pop %v960
    %v962 = vmul.f32 %v959, 1.442695
    %v963 = vpow.pop %v962
    %v964 = vadd.f32 %v961, 1.0
    %v965 = vadd.f32 %v963, 1.0
    %v966 = vrcp.pop %v964
    %v967 = vmul.f32 %v964, %v966
    %v968 = vsub.f32 1.0, %v967
    %v969 = vmul.f32 %v966, %v968
    %v970 = vadd.f32 %v966, %v969
    %vm971 = vweird.f32 %v964
    %vm972 = vweird.f32 %v966
    %vm973 = vmor %vm971, %vm972
    %v974 = vsel %vm973, %v966, %v970
    %v975 = vand.u32 2147483647, %v964
    %vm976 = vcmp.eq.f32.partialorder %v975, 8.507059e+37
    %v977 = vand.u32 %v964, 2147483648
    %v978 = vor.u32 1.1754944e-38, %v977
    %v979 = vsel %vm976, %v978, %v974
    %v980 = vmul.f32 1.0, %v979
    %v981 = vrcp.pop %v965
    %v982 = vmul.f32 %v965, %v981
    %v983 = vsub.f32 1.0, %v982
    %v984 = vmul.f32 %v981, %v983
    %v985 = vadd.f32 %v981, %v984
    %vm986 = vweird.f32 %v965
    %vm987 = vweird.f32 %v981
    %vm988 = vmor %vm986, %vm987
    %v989 = vsel %vm988, %v981, %v985
    %v990 = vand.u32 2147483647, %v965
    %vm991 = vcmp.eq.f32.partialorder %v990, 8.507059e+37
    %v992 = vand.u32 %v965, 2147483648
    %v993 = vor.u32 1.1754944e-38, %v992
    %v994 = vsel %vm991, %v993, %v989
    %v995 = vmul.f32 1.0, %v994
    %996 = vrot.lane.b32.xlu0 %v952, 64
    %v997 = vpop.permute.xlu0 %996
    %998 = vrot.lane.b32.xlu0 %v953, 64
    %v999 = vpop.permute.xlu0 %998
    %v1002 = vmul.f32 %v980, %v997
    %v1003 = vmul.f32 %v995, %v999
    %1006 = vrot.lane.b32.xlu0 %v1002, 64
    %v1007 = vpop.permute.xlu0 %1006
    %1008 = vrot.lane.b32.xlu0 %v1003, 64
    %v1009 = vpop.permute.xlu0 %1008
    %v1012 = vadd.f32 %v152, %v1007
    %v1013 = vadd.f32 %v155, %v1009
    %v1014 = vtanh.pop %v1012
    %v1015 = vtanh.pop %v1013
    %v1016 = vsub.f32 1.0, %v980
    %v1017 = vsub.f32 1.0, %v995
    %1020 = vrot.lane.b32.xlu0 %v1014, 96
    %v1021 = vpop.permute.xlu0 %1020
    %1022 = vrot.lane.b32.xlu0 %v1015, 96
    %v1023 = vpop.permute.xlu0 %1022
    %v1026 = vmul.f32 %v1016, %v1021
    %v1027 = vmul.f32 %v1017, %v1023
    %v1028 = vrot.slane %v746, 1
    %v1029 = vrot.slane %v747, 1
    %v1032 = vmul.f32 %v980, %v1028
    %v1033 = vmul.f32 %v995, %v1029
    %v1034 = vadd.f32 %v1026, %v1032
    %v1035 = vadd.f32 %v1027, %v1033
    %1038 = vrot.lane.b32.xlu0 %v948, 96
    %v1039 = vpop.permute.xlu0 %1038
    %1040 = vrot.lane.b32.xlu0 %v949, 96
    %v1041 = vpop.permute.xlu0 %1040
    %vm1044 = vcmask 256002
    %1045 = vst.msk [vmem:[#allocation2] sm:$0x4] %vm1044, %v1039
    %1046 = vst.msk [vmem:[#allocation2 + $0x8] sm:$0x4] %vm1044, %v1041
    %vm1047 = vcmask 521477
    %1048 = vst.msk [vmem:[#allocation2] sm:$0x20] %vm1047, %v1034
    %1049 = vst.msk [vmem:[#allocation2 + $0x8] sm:$0x20] %vm1047, %v1035
    %v1050 = vrot.slane %v948, 2
    %1051 = vrot.lane.b32.xlu0 %v1050, 96
    %v1052 = vpop.permute.xlu0 %1051
    %v1053 = vsel %vm101, %v1052, 0
    %1055 = vmatpush.msra.mxu0 0.0
    %1056 = vmatpush.msra.mxu0 0.0
    %1057 = vmatpush.msra.mxu0 0.0
    %1058 = vmatpush.msra.mxu0 0.0
    %1059 = vmatpush.msra.mxu0 0.0
    %1060 = vmatpush.msra.mxu0 0.0
    %1061 = vmatpush.msra.mxu0 0.0
    %1062 = vmatpush.msra.mxu0 0.0
    %1063 = vmatpush.msra.mxu0 0.0
    %1064 = vmatpush.msra.mxu0 0.0
    %1065 = vmatpush.msra.mxu0 0.0
    %1066 = vmatpush.msra.mxu0 0.0
    %1067 = vmatpush.msra.mxu0 %v80
    %1068 = vmatpush.msra.mxu0 %v79
    %1069 = vmatpush.msra.mxu0 %v78
    %1070 = vmatpush.msra.mxu0 %v77
    %1071 = vmatmul.f32.gmra.mxu0 %v1053
    %v1072 = vpop.f32.mrf.mxu0
    %v1073 = vadd.f32 %v82, %v1072
    %1074 = vdwg.mxu0
    %v1075 = vrot.slane %v949, 2
    %1076 = vrot.lane.b32.xlu0 %v1075, 96
    %v1077 = vpop.permute.xlu0 %1076
    %v1078 = vsel %vm101, %v1077, 0
    %1080 = vmatpush.msra.mxu0 0.0
    %1081 = vmatpush.msra.mxu0 0.0
    %1082 = vmatpush.msra.mxu0 0.0
    %1083 = vmatpush.msra.mxu0 0.0
    %1084 = vmatpush.msra.mxu0 0.0
    %1085 = vmatpush.msra.mxu0 0.0
    %1086 = vmatpush.msra.mxu0 0.0
    %1087 = vmatpush.msra.mxu0 0.0
    %1088 = vmatpush.msra.mxu0 0.0
    %1089 = vmatpush.msra.mxu0 0.0
    %1090 = vmatpush.msra.mxu0 0.0
    %1091 = vmatpush.msra.mxu0 0.0
    %1092 = vmatpush.msra.mxu0 %v80
    %1093 = vmatpush.msra.mxu0 %v79
    %1094 = vmatpush.msra.mxu0 %v78
    %1095 = vmatpush.msra.mxu0 %v77
    %1096 = vmatmul.f32.gmra.mxu0 %v1078
    %v1097 = vpop.f32.mrf.mxu0
    %v1098 = vadd.f32 %v82, %v1097
    %1099 = vdwg.mxu0
    %v1101 = vrot.slane %v1034, 5
    %1102 = vrot.lane.b32.xlu0 %v1101, 96
    %v1103 = vpop.permute.xlu0 %1102
    %v1104 = vsel %vm101, %v1103, 0
    %1106 = vmatpush.msra.mxu0 0.0
    %1107 = vmatpush.msra.mxu0 0.0
    %1108 = vmatpush.msra.mxu0 0.0
    %1109 = vmatpush.msra.mxu0 0.0
    %1110 = vmatpush.msra.mxu0 0.0
    %1111 = vmatpush.msra.mxu0 0.0
    %1112 = vmatpush.msra.mxu0 0.0
    %1113 = vmatpush.msra.mxu0 0.0
    %1114 = vmatpush.msra.mxu0 0.0
    %1115 = vmatpush.msra.mxu0 0.0
    %1116 = vmatpush.msra.mxu0 0.0
    %1117 = vmatpush.msra.mxu0 0.0
    %1118 = vmatpush.msra.mxu0 %v90
    %1119 = vmatpush.msra.mxu0 %v89
    %1120 = vmatpush.msra.mxu0 %v88
    %1121 = vmatpush.msra.mxu0 %v87
    %1122 = vmatmul.f32.gmra.mxu0 %v1104
    %v1123 = vpop.f32.mrf.mxu0
    %v1124 = vadd.f32 %v92, %v1123
    %1125 = vdwg.mxu0
    %v1127 = vrot.slane %v1035, 5
    %1128 = vrot.lane.b32.xlu0 %v1127, 96
    %v1129 = vpop.permute.xlu0 %1128
    %v1130 = vsel %vm101, %v1129, 0
    %1132 = vmatpush.msra.mxu0 0.0
    %1133 = vmatpush.msra.mxu0 0.0
    %1134 = vmatpush.msra.mxu0 0.0
    %1135 = vmatpush.msra.mxu0 0.0
    %1136 = vmatpush.msra.mxu0 0.0
    %1137 = vmatpush.msra.mxu0 0.0
    %1138 = vmatpush.msra.mxu0 0.0
    %1139 = vmatpush.msra.mxu0 0.0
    %1140 = vmatpush.msra.mxu0 0.0
    %1141 = vmatpush.msra.mxu0 0.0
    %1142 = vmatpush.msra.mxu0 0.0
    %1143 = vmatpush.msra.mxu0 0.0
    %1144 = vmatpush.msra.mxu0 %v90
    %1145 = vmatpush.msra.mxu0 %v89
    %1146 = vmatpush.msra.mxu0 %v88
    %1147 = vmatpush.msra.mxu0 %v87
    %1148 = vmatmul.f32.gmra.mxu0 %v1130
    %v1149 = vpop.f32.mrf.mxu0
    %v1150 = vadd.f32 %v92, %v1149
    %1151 = vdwg.mxu0
    %v1154 = vrot.slane %v1073, 5
    %v1155 = vrot.slane %v1098, 5
    %v1158 = vadd.f32 %v126, %v1154
    %v1159 = vadd.f32 %v129, %v1155
    %v1160 = vxor.u32 %v1158, 2147483648
    %v1161 = vxor.u32 %v1159, 2147483648
    %v1162 = vmul.f32 %v1160, 1.442695
    %v1163 = vpow.pop %v1162
    %v1164 = vmul.f32 %v1161, 1.442695
    %v1165 = vpow.pop %v1164
    %v1166 = vadd.f32 %v1163, 1.0
    %v1167 = vadd.f32 %v1165, 1.0
    %v1168 = vrcp.pop %v1166
    %v1169 = vmul.f32 %v1166, %v1168
    %v1170 = vsub.f32 1.0, %v1169
    %v1171 = vmul.f32 %v1168, %v1170
    %v1172 = vadd.f32 %v1168, %v1171
    %vm1173 = vweird.f32 %v1166
    %vm1174 = vweird.f32 %v1168
    %vm1175 = vmor %vm1173, %vm1174
    %v1176 = vsel %vm1175, %v1168, %v1172
    %v1177 = vand.u32 2147483647, %v1166
    %vm1178 = vcmp.eq.f32.partialorder %v1177, 8.507059e+37
    %v1179 = vand.u32 %v1166, 2147483648
    %v1180 = vor.u32 1.1754944e-38, %v1179
    %v1181 = vsel %vm1178, %v1180, %v1176
    %v1182 = vmul.f32 1.0, %v1181
    %v1183 = vrcp.pop %v1167
    %v1184 = vmul.f32 %v1167, %v1183
    %v1185 = vsub.f32 1.0, %v1184
    %v1186 = vmul.f32 %v1183, %v1185
    %v1187 = vadd.f32 %v1183, %v1186
    %vm1188 = vweird.f32 %v1167
    %vm1189 = vweird.f32 %v1183
    %vm1190 = vmor %vm1188, %vm1189
    %v1191 = vsel %vm1190, %v1183, %v1187
    %v1192 = vand.u32 2147483647, %v1167
    %vm1193 = vcmp.eq.f32.partialorder %v1192, 8.507059e+37
    %v1194 = vand.u32 %v1167, 2147483648
    %v1195 = vor.u32 1.1754944e-38, %v1194
    %v1196 = vsel %vm1193, %v1195, %v1191
    %v1197 = vmul.f32 1.0, %v1196
    %1198 = vrot.lane.b32.xlu0 %v1154, 64
    %v1199 = vpop.permute.xlu0 %1198
    %1200 = vrot.lane.b32.xlu0 %v1155, 64
    %v1201 = vpop.permute.xlu0 %1200
    %v1204 = vmul.f32 %v1182, %v1199
    %v1205 = vmul.f32 %v1197, %v1201
    %1208 = vrot.lane.b32.xlu0 %v1204, 64
    %v1209 = vpop.permute.xlu0 %1208
    %1210 = vrot.lane.b32.xlu0 %v1205, 64
    %v1211 = vpop.permute.xlu0 %1210
    %v1214 = vadd.f32 %v126, %v1209
    %v1215 = vadd.f32 %v129, %v1211
    %v1216 = vtanh.pop %v1214
    %v1217 = vtanh.pop %v1215
    %v1218 = vsub.f32 1.0, %v1182
    %v1219 = vsub.f32 1.0, %v1197
    %1222 = vrot.lane.b32.xlu0 %v1216, 96
    %v1223 = vpop.permute.xlu0 %1222
    %1224 = vrot.lane.b32.xlu0 %v1217, 96
    %v1225 = vpop.permute.xlu0 %1224
    %v1228 = vmul.f32 %v1218, %v1223
    %v1229 = vmul.f32 %v1219, %v1225
    %v1230 = vrot.slane %v948, 7
    %v1231 = vrot.slane %v949, 7
    %v1234 = vmul.f32 %v1182, %v1230
    %v1235 = vmul.f32 %v1197, %v1231
    %v1236 = vadd.f32 %v1228, %v1234
    %v1237 = vadd.f32 %v1229, %v1235
    %v1240 = vrot.slane %v1124, 4
    %v1241 = vrot.slane %v1150, 4
    %v1244 = vadd.f32 %v152, %v1240
    %v1245 = vadd.f32 %v155, %v1241
    %v1246 = vxor.u32 %v1244, 2147483648
    %v1247 = vxor.u32 %v1245, 2147483648
    %v1248 = vmul.f32 %v1246, 1.442695
    %v1249 = vpow.pop %v1248
    %v1250 = vmul.f32 %v1247, 1.442695
    %v1251 = vpow.pop %v1250
    %v1252 = vadd.f32 %v1249, 1.0
    %v1253 = vadd.f32 %v1251, 1.0
    %v1254 = vrcp.pop %v1252
    %v1255 = vmul.f32 %v1252, %v1254
    %v1256 = vsub.f32 1.0, %v1255
    %v1257 = vmul.f32 %v1254, %v1256
    %v1258 = vadd.f32 %v1254, %v1257
    %vm1259 = vweird.f32 %v1252
    %vm1260 = vweird.f32 %v1254
    %vm1261 = vmor %vm1259, %vm1260
    %v1262 = vsel %vm1261, %v1254, %v1258
    %v1263 = vand.u32 2147483647, %v1252
    %vm1264 = vcmp.eq.f32.partialorder %v1263, 8.507059e+37
    %v1265 = vand.u32 %v1252, 2147483648
    %v1266 = vor.u32 1.1754944e-38, %v1265
    %v1267 = vsel %vm1264, %v1266, %v1262
    %v1268 = vmul.f32 1.0, %v1267
    %v1269 = vrcp.pop %v1253
    %v1270 = vmul.f32 %v1253, %v1269
    %v1271 = vsub.f32 1.0, %v1270
    %v1272 = vmul.f32 %v1269, %v1271
    %v1273 = vadd.f32 %v1269, %v1272
    %vm1274 = vweird.f32 %v1253
    %vm1275 = vweird.f32 %v1269
    %vm1276 = vmor %vm1274, %vm1275
    %v1277 = vsel %vm1276, %v1269, %v1273
    %v1278 = vand.u32 2147483647, %v1253
    %vm1279 = vcmp.eq.f32.partialorder %v1278, 8.507059e+37
    %v1280 = vand.u32 %v1253, 2147483648
    %v1281 = vor.u32 1.1754944e-38, %v1280
    %v1282 = vsel %vm1279, %v1281, %v1277
    %v1283 = vmul.f32 1.0, %v1282
    %1284 = vrot.lane.b32.xlu0 %v1240, 64
    %v1285 = vpop.permute.xlu0 %1284
    %1286 = vrot.lane.b32.xlu0 %v1241, 64
    %v1287 = vpop.permute.xlu0 %1286
    %v1290 = vmul.f32 %v1268, %v1285
    %v1291 = vmul.f32 %v1283, %v1287
    %1294 = vrot.lane.b32.xlu0 %v1290, 64
    %v1295 = vpop.permute.xlu0 %1294
    %1296 = vrot.lane.b32.xlu0 %v1291, 64
    %v1297 = vpop.permute.xlu0 %1296
    %v1300 = vadd.f32 %v152, %v1295
    %v1301 = vadd.f32 %v155, %v1297
    %v1302 = vtanh.pop %v1300
    %v1303 = vtanh.pop %v1301
    %v1304 = vsub.f32 1.0, %v1268
    %v1305 = vsub.f32 1.0, %v1283
    %1308 = vrot.lane.b32.xlu0 %v1302, 96
    %v1309 = vpop.permute.xlu0 %1308
    %1310 = vrot.lane.b32.xlu0 %v1303, 96
    %v1311 = vpop.permute.xlu0 %1310
    %v1314 = vmul.f32 %v1304, %v1309
    %v1315 = vmul.f32 %v1305, %v1311
    %v1316 = vrot.slane %v1034, 1
    %v1317 = vrot.slane %v1035, 1
    %v1320 = vmul.f32 %v1268, %v1316
    %v1321 = vmul.f32 %v1283, %v1317
    %v1322 = vadd.f32 %v1314, %v1320
    %v1323 = vadd.f32 %v1315, %v1321
    %1326 = vrot.lane.b32.xlu0 %v1236, 96
    %v1327 = vpop.permute.xlu0 %1326
    %1328 = vrot.lane.b32.xlu0 %v1237, 96
    %v1329 = vpop.permute.xlu0 %1328
    %vm1332 = vcmask 257027
    %1333 = vst.msk [vmem:[#allocation2] sm:$0x8] %vm1332, %v1327
    %1334 = vst.msk [vmem:[#allocation2 + $0x8] sm:$0x8] %vm1332, %v1329
    %vm1335 = vcmask 520452
    %1336 = vst.msk [vmem:[#allocation2] sm:$0x10] %vm1335, %v1322
    %1337 = vst.msk [vmem:[#allocation2 + $0x8] sm:$0x10] %vm1335, %v1323
    %v1338 = vrot.slane %v1236, 3
    %1339 = vrot.lane.b32.xlu0 %v1338, 96
    %v1340 = vpop.permute.xlu0 %1339
    %v1341 = vsel %vm101, %v1340, 0
    %1343 = vmatpush.msra.mxu0 0.0
    %1344 = vmatpush.msra.mxu0 0.0
    %1345 = vmatpush.msra.mxu0 0.0
    %1346 = vmatpush.msra.mxu0 0.0
    %1347 = vmatpush.msra.mxu0 0.0
    %1348 = vmatpush.msra.mxu0 0.0
    %1349 = vmatpush.msra.mxu0 0.0
    %1350 = vmatpush.msra.mxu0 0.0
    %1351 = vmatpush.msra.mxu0 0.0
    %1352 = vmatpush.msra.mxu0 0.0
    %1353 = vmatpush.msra.mxu0 0.0
    %1354 = vmatpush.msra.mxu0 0.0
    %1355 = vmatpush.msra.mxu0 %v80
    %1356 = vmatpush.msra.mxu0 %v79
    %1357 = vmatpush.msra.mxu0 %v78
    %1358 = vmatpush.msra.mxu0 %v77
    %1359 = vmatmul.f32.gmra.mxu0 %v1341
    %v1360 = vpop.f32.mrf.mxu0
    %v1361 = vadd.f32 %v82, %v1360
    %1362 = vdwg.mxu0
    %v1363 = vrot.slane %v1237, 3
    %1364 = vrot.lane.b32.xlu0 %v1363, 96
    %v1365 = vpop.permute.xlu0 %1364
    %v1366 = vsel %vm101, %v1365, 0
    %1368 = vmatpush.msra.mxu0 0.0
    %1369 = vmatpush.msra.mxu0 0.0
    %1370 = vmatpush.msra.mxu0 0.0
    %1371 = vmatpush.msra.mxu0 0.0
    %1372 = vmatpush.msra.mxu0 0.0
    %1373 = vmatpush.msra.mxu0 0.0
    %1374 = vmatpush.msra.mxu0 0.0
    %1375 = vmatpush.msra.mxu0 0.0
    %1376 = vmatpush.msra.mxu0 0.0
    %1377 = vmatpush.msra.mxu0 0.0
    %1378 = vmatpush.msra.mxu0 0.0
    %1379 = vmatpush.msra.mxu0 0.0
    %1380 = vmatpush.msra.mxu0 %v80
    %1381 = vmatpush.msra.mxu0 %v79
    %1382 = vmatpush.msra.mxu0 %v78
    %1383 = vmatpush.msra.mxu0 %v77
    %1384 = vmatmul.f32.gmra.mxu0 %v1366
    %v1385 = vpop.f32.mrf.mxu0
    %v1386 = vadd.f32 %v82, %v1385
    %1387 = vdwg.mxu0
    %v1389 = vrot.slane %v1322, 4
    %1390 = vrot.lane.b32.xlu0 %v1389, 96
    %v1391 = vpop.permute.xlu0 %1390
    %v1392 = vsel %vm101, %v1391, 0
    %1394 = vmatpush.msra.mxu0 0.0
    %1395 = vmatpush.msra.mxu0 0.0
    %1396 = vmatpush.msra.mxu0 0.0
    %1397 = vmatpush.msra.mxu0 0.0
    %1398 = vmatpush.msra.mxu0 0.0
    %1399 = vmatpush.msra.mxu0 0.0
    %1400 = vmatpush.msra.mxu0 0.0
    %1401 = vmatpush.msra.mxu0 0.0
    %1402 = vmatpush.msra.mxu0 0.0
    %1403 = vmatpush.msra.mxu0 0.0
    %1404 = vmatpush.msra.mxu0 0.0
    %1405 = vmatpush.msra.mxu0 0.0
    %1406 = vmatpush.msra.mxu0 %v90
    %1407 = vmatpush.msra.mxu0 %v89
    %1408 = vmatpush.msra.mxu0 %v88
    %1409 = vmatpush.msra.mxu0 %v87
    %1410 = vmatmul.f32.gmra.mxu0 %v1392
    %v1411 = vpop.f32.mrf.mxu0
    %v1412 = vadd.f32 %v92, %v1411
    %1413 = vdwg.mxu0
    %v1415 = vrot.slane %v1323, 4
    %1416 = vrot.lane.b32.xlu0 %v1415, 96
    %v1417 = vpop.permute.xlu0 %1416
    %v1418 = vsel %vm101, %v1417, 0
    %1420 = vmatpush.msra.mxu0 0.0
    %1421 = vmatpush.msra.mxu0 0.0
    %1422 = vmatpush.msra.mxu0 0.0
    %1423 = vmatpush.msra.mxu0 0.0
    %1424 = vmatpush.msra.mxu0 0.0
    %1425 = vmatpush.msra.mxu0 0.0
    %1426 = vmatpush.msra.mxu0 0.0
    %1427 = vmatpush.msra.mxu0 0.0
    %1428 = vmatpush.msra.mxu0 0.0
    %1429 = vmatpush.msra.mxu0 0.0
    %1430 = vmatpush.msra.mxu0 0.0
    %1431 = vmatpush.msra.mxu0 0.0
    %1432 = vmatpush.msra.mxu0 %v90
    %1433 = vmatpush.msra.mxu0 %v89
    %1434 = vmatpush.msra.mxu0 %v88
    %1435 = vmatpush.msra.mxu0 %v87
    %1436 = vmatmul.f32.gmra.mxu0 %v1418
    %v1437 = vpop.f32.mrf.mxu0
    %v1438 = vadd.f32 %v92, %v1437
    %1439 = vdwg.mxu0
    %v1442 = vrot.slane %v1361, 4
    %v1443 = vrot.slane %v1386, 4
    %v1446 = vadd.f32 %v126, %v1442
    %v1447 = vadd.f32 %v129, %v1443
    %v1448 = vxor.u32 %v1446, 2147483648
    %v1449 = vxor.u32 %v1447, 2147483648
    %v1450 = vmul.f32 %v1448, 1.442695
    %v1451 = vpow.pop %v1450
    %v1452 = vmul.f32 %v1449, 1.442695
    %v1453 = vpow.pop %v1452
    %v1454 = vadd.f32 %v1451, 1.0
    %v1455 = vadd.f32 %v1453, 1.0
    %v1456 = vrcp.pop %v1454
    %v1457 = vmul.f32 %v1454, %v1456
    %v1458 = vsub.f32 1.0, %v1457
    %v1459 = vmul.f32 %v1456, %v1458
    %v1460 = vadd.f32 %v1456, %v1459
    %vm1461 = vweird.f32 %v1454
    %vm1462 = vweird.f32 %v1456
    %vm1463 = vmor %vm1461, %vm1462
    %v1464 = vsel %vm1463, %v1456, %v1460
    %v1465 = vand.u32 2147483647, %v1454
    %vm1466 = vcmp.eq.f32.partialorder %v1465, 8.507059e+37
    %v1467 = vand.u32 %v1454, 2147483648
    %v1468 = vor.u32 1.1754944e-38, %v1467
    %v1469 = vsel %vm1466, %v1468, %v1464
    %v1470 = vmul.f32 1.0, %v1469
    %v1471 = vrcp.pop %v1455
    %v1472 = vmul.f32 %v1455, %v1471
    %v1473 = vsub.f32 1.0, %v1472
    %v1474 = vmul.f32 %v1471, %v1473
    %v1475 = vadd.f32 %v1471, %v1474
    %vm1476 = vweird.f32 %v1455
    %vm1477 = vweird.f32 %v1471
    %vm1478 = vmor %vm1476, %vm1477
    %v1479 = vsel %vm1478, %v1471, %v1475
    %v1480 = vand.u32 2147483647, %v1455
    %vm1481 = vcmp.eq.f32.partialorder %v1480, 8.507059e+37
    %v1482 = vand.u32 %v1455, 2147483648
    %v1483 = vor.u32 1.1754944e-38, %v1482
    %v1484 = vsel %vm1481, %v1483, %v1479
    %v1485 = vmul.f32 1.0, %v1484
    %1486 = vrot.lane.b32.xlu0 %v1442, 64
    %v1487 = vpop.permute.xlu0 %1486
    %1488 = vrot.lane.b32.xlu0 %v1443, 64
    %v1489 = vpop.permute.xlu0 %1488
    %v1492 = vmul.f32 %v1470, %v1487
    %v1493 = vmul.f32 %v1485, %v1489
    %1496 = vrot.lane.b32.xlu0 %v1492, 64
    %v1497 = vpop.permute.xlu0 %1496
    %1498 = vrot.lane.b32.xlu0 %v1493, 64
    %v1499 = vpop.permute.xlu0 %1498
    %v1502 = vadd.f32 %v126, %v1497
    %v1503 = vadd.f32 %v129, %v1499
    %v1504 = vtanh.pop %v1502
    %v1505 = vtanh.pop %v1503
    %v1506 = vsub.f32 1.0, %v1470
    %v1507 = vsub.f32 1.0, %v1485
    %1510 = vrot.lane.b32.xlu0 %v1504, 96
    %v1511 = vpop.permute.xlu0 %1510
    %1512 = vrot.lane.b32.xlu0 %v1505, 96
    %v1513 = vpop.permute.xlu0 %1512
    %v1516 = vmul.f32 %v1506, %v1511
    %v1517 = vmul.f32 %v1507, %v1513
    %v1518 = vrot.slane %v1236, 7
    %v1519 = vrot.slane %v1237, 7
    %v1522 = vmul.f32 %v1470, %v1518
    %v1523 = vmul.f32 %v1485, %v1519
    %v1524 = vadd.f32 %v1516, %v1522
    %v1525 = vadd.f32 %v1517, %v1523
    %v1528 = vrot.slane %v1412, 5
    %v1529 = vrot.slane %v1438, 5
    %v1532 = vadd.f32 %v152, %v1528
    %v1533 = vadd.f32 %v155, %v1529
    %v1534 = vxor.u32 %v1532, 2147483648
    %v1535 = vxor.u32 %v1533, 2147483648
    %v1536 = vmul.f32 %v1534, 1.442695
    %v1537 = vpow.pop %v1536
    %v1538 = vmul.f32 %v1535, 1.442695
    %v1539 = vpow.pop %v1538
    %v1540 = vadd.f32 %v1537, 1.0
    %v1541 = vadd.f32 %v1539, 1.0
    %v1542 = vrcp.pop %v1540
    %v1543 = vmul.f32 %v1540, %v1542
    %v1544 = vsub.f32 1.0, %v1543
    %v1545 = vmul.f32 %v1542, %v1544
    %v1546 = vadd.f32 %v1542, %v1545
    %vm1547 = vweird.f32 %v1540
    %vm1548 = vweird.f32 %v1542
    %vm1549 = vmor %vm1547, %vm1548
    %v1550 = vsel %vm1549, %v1542, %v1546
    %v1551 = vand.u32 2147483647, %v1540
    %vm1552 = vcmp.eq.f32.partialorder %v1551, 8.507059e+37
    %v1553 = vand.u32 %v1540, 2147483648
    %v1554 = vor.u32 1.1754944e-38, %v1553
    %v1555 = vsel %vm1552, %v1554, %v1550
    %v1556 = vmul.f32 1.0, %v1555
    %v1557 = vrcp.pop %v1541
    %v1558 = vmul.f32 %v1541, %v1557
    %v1559 = vsub.f32 1.0, %v1558
    %v1560 = vmul.f32 %v1557, %v1559
    %v1561 = vadd.f32 %v1557, %v1560
    %vm1562 = vweird.f32 %v1541
    %vm1563 = vweird.f32 %v1557
    %vm1564 = vmor %vm1562, %vm1563
    %v1565 = vsel %vm1564, %v1557, %v1561
    %v1566 = vand.u32 2147483647, %v1541
    %vm1567 = vcmp.eq.f32.partialorder %v1566, 8.507059e+37
    %v1568 = vand.u32 %v1541, 2147483648
    %v1569 = vor.u32 1.1754944e-38, %v1568
    %v1570 = vsel %vm1567, %v1569, %v1565
    %v1571 = vmul.f32 1.0, %v1570
    %1572 = vrot.lane.b32.xlu0 %v1528, 64
    %v1573 = vpop.permute.xlu0 %1572
    %1574 = vrot.lane.b32.xlu0 %v1529, 64
    %v1575 = vpop.permute.xlu0 %1574
    %v1578 = vmul.f32 %v1556, %v1573
    %v1579 = vmul.f32 %v1571, %v1575
    %1582 = vrot.lane.b32.xlu0 %v1578, 64
    %v1583 = vpop.permute.xlu0 %1582
    %1584 = vrot.lane.b32.xlu0 %v1579, 64
    %v1585 = vpop.permute.xlu0 %1584
    %v1588 = vadd.f32 %v152, %v1583
    %v1589 = vadd.f32 %v155, %v1585
    %v1590 = vtanh.pop %v1588
    %v1591 = vtanh.pop %v1589
    %v1592 = vsub.f32 1.0, %v1556
    %v1593 = vsub.f32 1.0, %v1571
    %1596 = vrot.lane.b32.xlu0 %v1590, 96
    %v1597 = vpop.permute.xlu0 %1596
    %1598 = vrot.lane.b32.xlu0 %v1591, 96
    %v1599 = vpop.permute.xlu0 %1598
    %v1602 = vmul.f32 %v1592, %v1597
    %v1603 = vmul.f32 %v1593, %v1599
    %v1604 = vrot.slane %v1322, 1
    %v1605 = vrot.slane %v1323, 1
    %v1608 = vmul.f32 %v1556, %v1604
    %v1609 = vmul.f32 %v1571, %v1605
    %v1610 = vadd.f32 %v1602, %v1608
    %v1611 = vadd.f32 %v1603, %v1609
    %1614 = vrot.lane.b32.xlu0 %v1524, 96
    %v1615 = vpop.permute.xlu0 %1614
    %1616 = vrot.lane.b32.xlu0 %v1525, 96
    %v1617 = vpop.permute.xlu0 %1616
    %vm1620 = vcmask 258052
    %1621 = vst.msk [vmem:[#allocation2] sm:$0x10] %vm1620, %v1615
    %1622 = vst.msk [vmem:[#allocation2 + $0x8] sm:$0x10] %vm1620, %v1617
    %vm1623 = vcmask 519427
    %1624 = vst.msk [vmem:[#allocation2] sm:$0x8] %vm1623, %v1610
    %1625 = vst.msk [vmem:[#allocation2 + $0x8] sm:$0x8] %vm1623, %v1611
    %v1626 = vrot.slane %v1524, 4
    %1627 = vrot.lane.b32.xlu0 %v1626, 96
    %v1628 = vpop.permute.xlu0 %1627
    %v1629 = vsel %vm101, %v1628, 0
    %1631 = vmatpush.msra.mxu0 0.0
    %1632 = vmatpush.msra.mxu0 0.0
    %1633 = vmatpush.msra.mxu0 0.0
    %1634 = vmatpush.msra.mxu0 0.0
    %1635 = vmatpush.msra.mxu0 0.0
    %1636 = vmatpush.msra.mxu0 0.0
    %1637 = vmatpush.msra.mxu0 0.0
    %1638 = vmatpush.msra.mxu0 0.0
    %1639 = vmatpush.msra.mxu0 0.0
    %1640 = vmatpush.msra.mxu0 0.0
    %1641 = vmatpush.msra.mxu0 0.0
    %1642 = vmatpush.msra.mxu0 0.0
    %1643 = vmatpush.msra.mxu0 %v80
    %1644 = vmatpush.msra.mxu0 %v79
    %1645 = vmatpush.msra.mxu0 %v78
    %1646 = vmatpush.msra.mxu0 %v77
    %1647 = vmatmul.f32.gmra.mxu0 %v1629
    %v1648 = vpop.f32.mrf.mxu0
    %v1649 = vadd.f32 %v82, %v1648
    %1650 = vdwg.mxu0
    %v1651 = vrot.slane %v1525, 4
    %1652 = vrot.lane.b32.xlu0 %v1651, 96
    %v1653 = vpop.permute.xlu0 %1652
    %v1654 = vsel %vm101, %v1653, 0
    %1656 = vmatpush.msra.mxu0 0.0
    %1657 = vmatpush.msra.mxu0 0.0
    %1658 = vmatpush.msra.mxu0 0.0
    %1659 = vmatpush.msra.mxu0 0.0
    %1660 = vmatpush.msra.mxu0 0.0
    %1661 = vmatpush.msra.mxu0 0.0
    %1662 = vmatpush.msra.mxu0 0.0
    %1663 = vmatpush.msra.mxu0 0.0
    %1664 = vmatpush.msra.mxu0 0.0
    %1665 = vmatpush.msra.mxu0 0.0
    %1666 = vmatpush.msra.mxu0 0.0
    %1667 = vmatpush.msra.mxu0 0.0
    %1668 = vmatpush.msra.mxu0 %v80
    %1669 = vmatpush.msra.mxu0 %v79
    %1670 = vmatpush.msra.mxu0 %v78
    %1671 = vmatpush.msra.mxu0 %v77
    %1672 = vmatmul.f32.gmra.mxu0 %v1654
    %v1673 = vpop.f32.mrf.mxu0
    %v1674 = vadd.f32 %v82, %v1673
    %1675 = vdwg.mxu0
    %v1677 = vrot.slane %v1610, 3
    %1678 = vrot.lane.b32.xlu0 %v1677, 96
    %v1679 = vpop.permute.xlu0 %1678
    %v1680 = vsel %vm101, %v1679, 0
    %1682 = vmatpush.msra.mxu0 0.0
    %1683 = vmatpush.msra.mxu0 0.0
    %1684 = vmatpush.msra.mxu0 0.0
    %1685 = vmatpush.msra.mxu0 0.0
    %1686 = vmatpush.msra.mxu0 0.0
    %1687 = vmatpush.msra.mxu0 0.0
    %1688 = vmatpush.msra.mxu0 0.0
    %1689 = vmatpush.msra.mxu0 0.0
    %1690 = vmatpush.msra.mxu0 0.0
    %1691 = vmatpush.msra.mxu0 0.0
    %1692 = vmatpush.msra.mxu0 0.0
    %1693 = vmatpush.msra.mxu0 0.0
    %1694 = vmatpush.msra.mxu0 %v90
    %1695 = vmatpush.msra.mxu0 %v89
    %1696 = vmatpush.msra.mxu0 %v88
    %1697 = vmatpush.msra.mxu0 %v87
    %1698 = vmatmul.f32.gmra.mxu0 %v1680
    %v1699 = vpop.f32.mrf.mxu0
    %v1700 = vadd.f32 %v92, %v1699
    %1701 = vdwg.mxu0
    %v1703 = vrot.slane %v1611, 3
    %1704 = vrot.lane.b32.xlu0 %v1703, 96
    %v1705 = vpop.permute.xlu0 %1704
    %v1706 = vsel %vm101, %v1705, 0
    %1708 = vmatpush.msra.mxu0 0.0
    %1709 = vmatpush.msra.mxu0 0.0
    %1710 = vmatpush.msra.mxu0 0.0
    %1711 = vmatpush.msra.mxu0 0.0
    %1712 = vmatpush.msra.mxu0 0.0
    %1713 = vmatpush.msra.mxu0 0.0
    %1714 = vmatpush.msra.mxu0 0.0
    %1715 = vmatpush.msra.mxu0 0.0
    %1716 = vmatpush.msra.mxu0 0.0
    %1717 = vmatpush.msra.mxu0 0.0
    %1718 = vmatpush.msra.mxu0 0.0
    %1719 = vmatpush.msra.mxu0 0.0
    %1720 = vmatpush.msra.mxu0 %v90
    %1721 = vmatpush.msra.mxu0 %v89
    %1722 = vmatpush.msra.mxu0 %v88
    %1723 = vmatpush.msra.mxu0 %v87
    %1724 = vmatmul.f32.gmra.mxu0 %v1706
    %v1725 = vpop.f32.mrf.mxu0
    %v1726 = vadd.f32 %v92, %v1725
    %1727 = vdwg.mxu0
    %v1730 = vrot.slane %v1649, 3
    %v1731 = vrot.slane %v1674, 3
    %v1734 = vadd.f32 %v126, %v1730
    %v1735 = vadd.f32 %v129, %v1731
    %v1736 = vxor.u32 %v1734, 2147483648
    %v1737 = vxor.u32 %v1735, 2147483648
    %v1738 = vmul.f32 %v1736, 1.442695
    %v1739 = vpow.pop %v1738
    %v1740 = vmul.f32 %v1737, 1.442695
    %v1741 = vpow.pop %v1740
    %v1742 = vadd.f32 %v1739, 1.0
    %v1743 = vadd.f32 %v1741, 1.0
    %v1744 = vrcp.pop %v1742
    %v1745 = vmul.f32 %v1742, %v1744
    %v1746 = vsub.f32 1.0, %v1745
    %v1747 = vmul.f32 %v1744, %v1746
    %v1748 = vadd.f32 %v1744, %v1747
    %vm1749 = vweird.f32 %v1742
    %vm1750 = vweird.f32 %v1744
    %vm1751 = vmor %vm1749, %vm1750
    %v1752 = vsel %vm1751, %v1744, %v1748
    %v1753 = vand.u32 2147483647, %v1742
    %vm1754 = vcmp.eq.f32.partialorder %v1753, 8.507059e+37
    %v1755 = vand.u32 %v1742, 2147483648
    %v1756 = vor.u32 1.1754944e-38, %v1755
    %v1757 = vsel %vm1754, %v1756, %v1752
    %v1758 = vmul.f32 1.0, %v1757
    %v1759 = vrcp.pop %v1743
    %v1760 = vmul.f32 %v1743, %v1759
    %v1761 = vsub.f32 1.0, %v1760
    %v1762 = vmul.f32 %v1759, %v1761
    %v1763 = vadd.f32 %v1759, %v1762
    %vm1764 = vweird.f32 %v1743
    %vm1765 = vweird.f32 %v1759
    %vm1766 = vmor %vm1764, %vm1765
    %v1767 = vsel %vm1766, %v1759, %v1763
    %v1768 = vand.u32 2147483647, %v1743
    %vm1769 = vcmp.eq.f32.partialorder %v1768, 8.507059e+37
    %v1770 = vand.u32 %v1743, 2147483648
    %v1771 = vor.u32 1.1754944e-38, %v1770
    %v1772 = vsel %vm1769, %v1771, %v1767
    %v1773 = vmul.f32 1.0, %v1772
    %1774 = vrot.lane.b32.xlu0 %v1730, 64
    %v1775 = vpop.permute.xlu0 %1774
    %1776 = vrot.lane.b32.xlu0 %v1731, 64
    %v1777 = vpop.permute.xlu0 %1776
    %v1780 = vmul.f32 %v1758, %v1775
    %v1781 = vmul.f32 %v1773, %v1777
    %1784 = vrot.lane.b32.xlu0 %v1780, 64
    %v1785 = vpop.permute.xlu0 %1784
    %1786 = vrot.lane.b32.xlu0 %v1781, 64
    %v1787 = vpop.permute.xlu0 %1786
    %v1790 = vadd.f32 %v126, %v1785
    %v1791 = vadd.f32 %v129, %v1787
    %v1792 = vtanh.pop %v1790
    %v1793 = vtanh.pop %v1791
    %v1794 = vsub.f32 1.0, %v1758
    %v1795 = vsub.f32 1.0, %v1773
    %1798 = vrot.lane.b32.xlu0 %v1792, 96
    %v1799 = vpop.permute.xlu0 %1798
    %1800 = vrot.lane.b32.xlu0 %v1793, 96
    %v1801 = vpop.permute.xlu0 %1800
    %v1804 = vmul.f32 %v1794, %v1799
    %v1805 = vmul.f32 %v1795, %v1801
    %v1806 = vrot.slane %v1524, 7
    %v1807 = vrot.slane %v1525, 7
    %v1810 = vmul.f32 %v1758, %v1806
    %v1811 = vmul.f32 %v1773, %v1807
    %v1812 = vadd.f32 %v1804, %v1810
    %v1813 = vadd.f32 %v1805, %v1811
    %v1816 = vrot.slane %v1700, 6
    %v1817 = vrot.slane %v1726, 6
    %v1820 = vadd.f32 %v152, %v1816
    %v1821 = vadd.f32 %v155, %v1817
    %v1822 = vxor.u32 %v1820, 2147483648
    %v1823 = vxor.u32 %v1821, 2147483648
    %v1824 = vmul.f32 %v1822, 1.442695
    %v1825 = vpow.pop %v1824
    %v1826 = vmul.f32 %v1823, 1.442695
    %v1827 = vpow.pop %v1826
    %v1828 = vadd.f32 %v1825, 1.0
    %v1829 = vadd.f32 %v1827, 1.0
    %v1830 = vrcp.pop %v1828
    %v1831 = vmul.f32 %v1828, %v1830
    %v1832 = vsub.f32 1.0, %v1831
    %v1833 = vmul.f32 %v1830, %v1832
    %v1834 = vadd.f32 %v1830, %v1833
    %vm1835 = vweird.f32 %v1828
    %vm1836 = vweird.f32 %v1830
    %vm1837 = vmor %vm1835, %vm1836
    %v1838 = vsel %vm1837, %v1830, %v1834
    %v1839 = vand.u32 2147483647, %v1828
    %vm1840 = vcmp.eq.f32.partialorder %v1839, 8.507059e+37
    %v1841 = vand.u32 %v1828, 2147483648
    %v1842 = vor.u32 1.1754944e-38, %v1841
    %v1843 = vsel %vm1840, %v1842, %v1838
    %v1844 = vmul.f32 1.0, %v1843
    %v1845 = vrcp.pop %v1829
    %v1846 = vmul.f32 %v1829, %v1845
    %v1847 = vsub.f32 1.0, %v1846
    %v1848 = vmul.f32 %v1845, %v1847
    %v1849 = vadd.f32 %v1845, %v1848
    %vm1850 = vweird.f32 %v1829
    %vm1851 = vweird.f32 %v1845
    %vm1852 = vmor %vm1850, %vm1851
    %v1853 = vsel %vm1852, %v1845, %v1849
    %v1854 = vand.u32 2147483647, %v1829
    %vm1855 = vcmp.eq.f32.partialorder %v1854, 8.507059e+37
    %v1856 = vand.u32 %v1829, 2147483648
    %v1857 = vor.u32 1.1754944e-38, %v1856
    %v1858 = vsel %vm1855, %v1857, %v1853
    %v1859 = vmul.f32 1.0, %v1858
    %1860 = vrot.lane.b32.xlu0 %v1816, 64
    %v1861 = vpop.permute.xlu0 %1860
    %1862 = vrot.lane.b32.xlu0 %v1817, 64
    %v1863 = vpop.permute.xlu0 %1862
    %v1866 = vmul.f32 %v1844, %v1861
    %v1867 = vmul.f32 %v1859, %v1863
    %1870 = vrot.lane.b32.xlu0 %v1866, 64
    %v1871 = vpop.permute.xlu0 %1870
    %1872 = vrot.lane.b32.xlu0 %v1867, 64
    %v1873 = vpop.permute.xlu0 %1872
    %v1876 = vadd.f32 %v152, %v1871
    %v1877 = vadd.f32 %v155, %v1873
    %v1878 = vtanh.pop %v1876
    %v1879 = vtanh.pop %v1877
    %v1880 = vsub.f32 1.0, %v1844
    %v1881 = vsub.f32 1.0, %v1859
    %1884 = vrot.lane.b32.xlu0 %v1878, 96
    %v1885 = vpop.permute.xlu0 %1884
    %1886 = vrot.lane.b32.xlu0 %v1879, 96
    %v1887 = vpop.permute.xlu0 %1886
    %v1890 = vmul.f32 %v1880, %v1885
    %v1891 = vmul.f32 %v1881, %v1887
    %v1892 = vrot.slane %v1610, 1
    %v1893 = vrot.slane %v1611, 1
    %v1896 = vmul.f32 %v1844, %v1892
    %v1897 = vmul.f32 %v1859, %v1893
    %v1898 = vadd.f32 %v1890, %v1896
    %v1899 = vadd.f32 %v1891, %v1897
    %1902 = vrot.lane.b32.xlu0 %v1812, 96
    %v1903 = vpop.permute.xlu0 %1902
    %1904 = vrot.lane.b32.xlu0 %v1813, 96
    %v1905 = vpop.permute.xlu0 %1904
    %vm1908 = vcmask 259077
    %1909 = vst.msk [vmem:[#allocation2] sm:$0x20] %vm1908, %v1903
    %1910 = vst.msk [vmem:[#allocation2 + $0x8] sm:$0x20] %vm1908, %v1905
    %vm1911 = vcmask 518402
    %1912 = vst.msk [vmem:[#allocation2] sm:$0x4] %vm1911, %v1898
    %1913 = vst.msk [vmem:[#allocation2 + $0x8] sm:$0x4] %vm1911, %v1899
    %v1914 = vrot.slane %v1812, 5
    %1915 = vrot.lane.b32.xlu0 %v1914, 96
    %v1916 = vpop.permute.xlu0 %1915
    %v1917 = vsel %vm101, %v1916, 0
    %1919 = vmatpush.msra.mxu0 0.0
    %1920 = vmatpush.msra.mxu0 0.0
    %1921 = vmatpush.msra.mxu0 0.0
    %1922 = vmatpush.msra.mxu0 0.0
    %1923 = vmatpush.msra.mxu0 0.0
    %1924 = vmatpush.msra.mxu0 0.0
    %1925 = vmatpush.msra.mxu0 0.0
    %1926 = vmatpush.msra.mxu0 0.0
    %1927 = vmatpush.msra.mxu0 0.0
    %1928 = vmatpush.msra.mxu0 0.0
    %1929 = vmatpush.msra.mxu0 0.0
    %1930 = vmatpush.msra.mxu0 0.0
    %1931 = vmatpush.msra.mxu0 %v80
    %1932 = vmatpush.msra.mxu0 %v79
    %1933 = vmatpush.msra.mxu0 %v78
    %1934 = vmatpush.msra.mxu0 %v77
    %1935 = vmatmul.f32.gmra.mxu0 %v1917
    %v1936 = vpop.f32.mrf.mxu0
    %v1937 = vadd.f32 %v82, %v1936
    %1938 = vdwg.mxu0
    %v1939 = vrot.slane %v1813, 5
    %1940 = vrot.lane.b32.xlu0 %v1939, 96
    %v1941 = vpop.permute.xlu0 %1940
    %v1942 = vsel %vm101, %v1941, 0
    %1944 = vmatpush.msra.mxu0 0.0
    %1945 = vmatpush.msra.mxu0 0.0
    %1946 = vmatpush.msra.mxu0 0.0
    %1947 = vmatpush.msra.mxu0 0.0
    %1948 = vmatpush.msra.mxu0 0.0
    %1949 = vmatpush.msra.mxu0 0.0
    %1950 = vmatpush.msra.mxu0 0.0
    %1951 = vmatpush.msra.mxu0 0.0
    %1952 = vmatpush.msra.mxu0 0.0
    %1953 = vmatpush.msra.mxu0 0.0
    %1954 = vmatpush.msra.mxu0 0.0
    %1955 = vmatpush.msra.mxu0 0.0
    %1956 = vmatpush.msra.mxu0 %v80
    %1957 = vmatpush.msra.mxu0 %v79
    %1958 = vmatpush.msra.mxu0 %v78
    %1959 = vmatpush.msra.mxu0 %v77
    %1960 = vmatmul.f32.gmra.mxu0 %v1942
    %v1961 = vpop.f32.mrf.mxu0
    %v1962 = vadd.f32 %v82, %v1961
    %1963 = vdwg.mxu0
    %v1965 = vrot.slane %v1898, 2
    %1966 = vrot.lane.b32.xlu0 %v1965, 96
    %v1967 = vpop.permute.xlu0 %1966
    %v1968 = vsel %vm101, %v1967, 0
    %1970 = vmatpush.msra.mxu0 0.0
    %1971 = vmatpush.msra.mxu0 0.0
    %1972 = vmatpush.msra.mxu0 0.0
    %1973 = vmatpush.msra.mxu0 0.0
    %1974 = vmatpush.msra.mxu0 0.0
    %1975 = vmatpush.msra.mxu0 0.0
    %1976 = vmatpush.msra.mxu0 0.0
    %1977 = vmatpush.msra.mxu0 0.0
    %1978 = vmatpush.msra.mxu0 0.0
    %1979 = vmatpush.msra.mxu0 0.0
    %1980 = vmatpush.msra.mxu0 0.0
    %1981 = vmatpush.msra.mxu0 0.0
    %1982 = vmatpush.msra.mxu0 %v90
    %1983 = vmatpush.msra.mxu0 %v89
    %1984 = vmatpush.msra.mxu0 %v88
    %1985 = vmatpush.msra.mxu0 %v87
    %1986 = vmatmul.f32.gmra.mxu0 %v1968
    %v1987 = vpop.f32.mrf.mxu0
    %v1988 = vadd.f32 %v92, %v1987
    %1989 = vdwg.mxu0
    %v1991 = vrot.slane %v1899, 2
    %1992 = vrot.lane.b32.xlu0 %v1991, 96
    %v1993 = vpop.permute.xlu0 %1992
    %v1994 = vsel %vm101, %v1993, 0
    %1996 = vmatpush.msra.mxu0 0.0
    %1997 = vmatpush.msra.mxu0 0.0
    %1998 = vmatpush.msra.mxu0 0.0
    %1999 = vmatpush.msra.mxu0 0.0
    %2000 = vmatpush.msra.mxu0 0.0
    %2001 = vmatpush.msra.mxu0 0.0
    %2002 = vmatpush.msra.mxu0 0.0
    %2003 = vmatpush.msra.mxu0 0.0
    %2004 = vmatpush.msra.mxu0 0.0
    %2005 = vmatpush.msra.mxu0 0.0
    %2006 = vmatpush.msra.mxu0 0.0
    %2007 = vmatpush.msra.mxu0 0.0
    %2008 = vmatpush.msra.mxu0 %v90
    %2009 = vmatpush.msra.mxu0 %v89
    %2010 = vmatpush.msra.mxu0 %v88
    %2011 = vmatpush.msra.mxu0 %v87
    %2012 = vmatmul.f32.gmra.mxu0 %v1994
    %v2013 = vpop.f32.mrf.mxu0
    %v2014 = vadd.f32 %v92, %v2013
    %2015 = vdwg.mxu0
    %v2018 = vrot.slane %v1937, 2
    %v2019 = vrot.slane %v1962, 2
    %v2022 = vadd.f32 %v126, %v2018
    %v2023 = vadd.f32 %v129, %v2019
    %v2024 = vxor.u32 %v2022, 2147483648
    %v2025 = vxor.u32 %v2023, 2147483648
    %v2026 = vmul.f32 %v2024, 1.442695
    %v2027 = vpow.pop %v2026
    %v2028 = vmul.f32 %v2025, 1.442695
    %v2029 = vpow.pop %v2028
    %v2030 = vadd.f32 %v2027, 1.0
    %v2031 = vadd.f32 %v2029, 1.0
    %v2032 = vrcp.pop %v2030
    %v2033 = vmul.f32 %v2030, %v2032
    %v2034 = vsub.f32 1.0, %v2033
    %v2035 = vmul.f32 %v2032, %v2034
    %v2036 = vadd.f32 %v2032, %v2035
    %vm2037 = vweird.f32 %v2030
    %vm2038 = vweird.f32 %v2032
    %vm2039 = vmor %vm2037, %vm2038
    %v2040 = vsel %vm2039, %v2032, %v2036
    %v2041 = vand.u32 2147483647, %v2030
    %vm2042 = vcmp.eq.f32.partialorder %v2041, 8.507059e+37
    %v2043 = vand.u32 %v2030, 2147483648
    %v2044 = vor.u32 1.1754944e-38, %v2043
    %v2045 = vsel %vm2042, %v2044, %v2040
    %v2046 = vmul.f32 1.0, %v2045
    %v2047 = vrcp.pop %v2031
    %v2048 = vmul.f32 %v2031, %v2047
    %v2049 = vsub.f32 1.0, %v2048
    %v2050 = vmul.f32 %v2047, %v2049
    %v2051 = vadd.f32 %v2047, %v2050
    %vm2052 = vweird.f32 %v2031
    %vm2053 = vweird.f32 %v2047
    %vm2054 = vmor %vm2052, %vm2053
    %v2055 = vsel %vm2054, %v2047, %v2051
    %v2056 = vand.u32 2147483647, %v2031
    %vm2057 = vcmp.eq.f32.partialorder %v2056, 8.507059e+37
    %v2058 = vand.u32 %v2031, 2147483648
    %v2059 = vor.u32 1.1754944e-38, %v2058
    %v2060 = vsel %vm2057, %v2059, %v2055
    %v2061 = vmul.f32 1.0, %v2060
    %2062 = vrot.lane.b32.xlu0 %v2018, 64
    %v2063 = vpop.permute.xlu0 %2062
    %2064 = vrot.lane.b32.xlu0 %v2019, 64
    %v2065 = vpop.permute.xlu0 %2064
    %v2068 = vmul.f32 %v2046, %v2063
    %v2069 = vmul.f32 %v2061, %v2065
    %2072 = vrot.lane.b32.xlu0 %v2068, 64
    %v2073 = vpop.permute.xlu0 %2072
    %2074 = vrot.lane.b32.xlu0 %v2069, 64
    %v2075 = vpop.permute.xlu0 %2074
    %v2078 = vadd.f32 %v126, %v2073
    %v2079 = vadd.f32 %v129, %v2075
    %v2080 = vtanh.pop %v2078
    %v2081 = vtanh.pop %v2079
    %v2082 = vsub.f32 1.0, %v2046
    %v2083 = vsub.f32 1.0, %v2061
    %2086 = vrot.lane.b32.xlu0 %v2080, 96
    %v2087 = vpop.permute.xlu0 %2086
    %2088 = vrot.lane.b32.xlu0 %v2081, 96
    %v2089 = vpop.permute.xlu0 %2088
    %v2092 = vmul.f32 %v2082, %v2087
    %v2093 = vmul.f32 %v2083, %v2089
    %v2094 = vrot.slane %v1812, 7
    %v2095 = vrot.slane %v1813, 7
    %v2098 = vmul.f32 %v2046, %v2094
    %v2099 = vmul.f32 %v2061, %v2095
    %v2100 = vadd.f32 %v2092, %v2098
    %v2101 = vadd.f32 %v2093, %v2099
    %v2104 = vrot.slane %v1988, 7
    %v2105 = vrot.slane %v2014, 7
    %v2108 = vadd.f32 %v152, %v2104
    %v2109 = vadd.f32 %v155, %v2105
    %v2110 = vxor.u32 %v2108, 2147483648
    %v2111 = vxor.u32 %v2109, 2147483648
    %v2112 = vmul.f32 %v2110, 1.442695
    %v2113 = vpow.pop %v2112
    %v2114 = vmul.f32 %v2111, 1.442695
    %v2115 = vpow.pop %v2114
    %v2116 = vadd.f32 %v2113, 1.0
    %v2117 = vadd.f32 %v2115, 1.0
    %v2118 = vrcp.pop %v2116
    %v2119 = vmul.f32 %v2116, %v2118
    %v2120 = vsub.f32 1.0, %v2119
    %v2121 = vmul.f32 %v2118, %v2120
    %v2122 = vadd.f32 %v2118, %v2121
    %vm2123 = vweird.f32 %v2116
    %vm2124 = vweird.f32 %v2118
    %vm2125 = vmor %vm2123, %vm2124
    %v2126 = vsel %vm2125, %v2118, %v2122
    %v2127 = vand.u32 2147483647, %v2116
    %vm2128 = vcmp.eq.f32.partialorder %v2127, 8.507059e+37
    %v2129 = vand.u32 %v2116, 2147483648
    %v2130 = vor.u32 1.1754944e-38, %v2129
    %v2131 = vsel %vm2128, %v2130, %v2126
    %v2132 = vmul.f32 1.0, %v2131
    %v2133 = vrcp.pop %v2117
    %v2134 = vmul.f32 %v2117, %v2133
    %v2135 = vsub.f32 1.0, %v2134
    %v2136 = vmul.f32 %v2133, %v2135
    %v2137 = vadd.f32 %v2133, %v2136
    %vm2138 = vweird.f32 %v2117
    %vm2139 = vweird.f32 %v2133
    %vm2140 = vmor %vm2138, %vm2139
    %v2141 = vsel %vm2140, %v2133, %v2137
    %v2142 = vand.u32 2147483647, %v2117
    %vm2143 = vcmp.eq.f32.partialorder %v2142, 8.507059e+37
    %v2144 = vand.u32 %v2117, 2147483648
    %v2145 = vor.u32 1.1754944e-38, %v2144
    %v2146 = vsel %vm2143, %v2145, %v2141
    %v2147 = vmul.f32 1.0, %v2146
    %2148 = vrot.lane.b32.xlu0 %v2104, 64
    %v2149 = vpop.permute.xlu0 %2148
    %2150 = vrot.lane.b32.xlu0 %v2105, 64
    %v2151 = vpop.permute.xlu0 %2150
    %v2154 = vmul.f32 %v2132, %v2149
    %v2155 = vmul.f32 %v2147, %v2151
    %2158 = vrot.lane.b32.xlu0 %v2154, 64
    %v2159 = vpop.permute.xlu0 %2158
    %2160 = vrot.lane.b32.xlu0 %v2155, 64
    %v2161 = vpop.permute.xlu0 %2160
    %v2164 = vadd.f32 %v152, %v2159
    %v2165 = vadd.f32 %v155, %v2161
    %v2166 = vtanh.pop %v2164
    %v2167 = vtanh.pop %v2165
    %v2168 = vsub.f32 1.0, %v2132
    %v2169 = vsub.f32 1.0, %v2147
    %2172 = vrot.lane.b32.xlu0 %v2166, 96
    %v2173 = vpop.permute.xlu0 %2172
    %2174 = vrot.lane.b32.xlu0 %v2167, 96
    %v2175 = vpop.permute.xlu0 %2174
    %v2178 = vmul.f32 %v2168, %v2173
    %v2179 = vmul.f32 %v2169, %v2175
    %v2180 = vrot.slane %v1898, 1
    %v2181 = vrot.slane %v1899, 1
    %v2184 = vmul.f32 %v2132, %v2180
    %v2185 = vmul.f32 %v2147, %v2181
    %v2186 = vadd.f32 %v2178, %v2184
    %v2187 = vadd.f32 %v2179, %v2185
    %2190 = vrot.lane.b32.xlu0 %v2100, 96
    %v2191 = vpop.permute.xlu0 %2190
    %2192 = vrot.lane.b32.xlu0 %v2101, 96
    %v2193 = vpop.permute.xlu0 %2192
    %vm2196 = vcmask 260102
    %2197 = vst.msk [vmem:[#allocation2] sm:$0x40] %vm2196, %v2191
    %2198 = vst.msk [vmem:[#allocation2 + $0x8] sm:$0x40] %vm2196, %v2193
    %vm2199 = vcmask 517377
    %2200 = vst.msk [vmem:[#allocation2] sm:$0x2] %vm2199, %v2186
    %2201 = vst.msk [vmem:[#allocation2 + $0x8] sm:$0x2] %vm2199, %v2187
    %v2202 = vrot.slane %v2100, 6
    %2203 = vrot.lane.b32.xlu0 %v2202, 96
    %v2204 = vpop.permute.xlu0 %2203
    %v2205 = vsel %vm101, %v2204, 0
    %2207 = vmatpush.msra.mxu0 0.0
    %2208 = vmatpush.msra.mxu0 0.0
    %2209 = vmatpush.msra.mxu0 0.0
    %2210 = vmatpush.msra.mxu0 0.0
    %2211 = vmatpush.msra.mxu0 0.0
    %2212 = vmatpush.msra.mxu0 0.0
    %2213 = vmatpush.msra.mxu0 0.0
    %2214 = vmatpush.msra.mxu0 0.0
    %2215 = vmatpush.msra.mxu0 0.0
    %2216 = vmatpush.msra.mxu0 0.0
    %2217 = vmatpush.msra.mxu0 0.0
    %2218 = vmatpush.msra.mxu0 0.0
    %2219 = vmatpush.msra.mxu0 %v80
    %2220 = vmatpush.msra.mxu0 %v79
    %2221 = vmatpush.msra.mxu0 %v78
    %2222 = vmatpush.msra.mxu0 %v77
    %2223 = vmatmul.f32.gmra.mxu0 %v2205
    %v2224 = vpop.f32.mrf.mxu0
    %v2225 = vadd.f32 %v82, %v2224
    %2226 = vdwg.mxu0
    %v2227 = vrot.slane %v2101, 6
    %2228 = vrot.lane.b32.xlu0 %v2227, 96
    %v2229 = vpop.permute.xlu0 %2228
    %v2230 = vsel %vm101, %v2229, 0
    %2232 = vmatpush.msra.mxu0 0.0
    %2233 = vmatpush.msra.mxu0 0.0
    %2234 = vmatpush.msra.mxu0 0.0
    %2235 = vmatpush.msra.mxu0 0.0
    %2236 = vmatpush.msra.mxu0 0.0
    %2237 = vmatpush.msra.mxu0 0.0
    %2238 = vmatpush.msra.mxu0 0.0
    %2239 = vmatpush.msra.mxu0 0.0
    %2240 = vmatpush.msra.mxu0 0.0
    %2241 = vmatpush.msra.mxu0 0.0
    %2242 = vmatpush.msra.mxu0 0.0
    %2243 = vmatpush.msra.mxu0 0.0
    %2244 = vmatpush.msra.mxu0 %v80
    %2245 = vmatpush.msra.mxu0 %v79
    %2246 = vmatpush.msra.mxu0 %v78
    %2247 = vmatpush.msra.mxu0 %v77
    %2248 = vmatmul.f32.gmra.mxu0 %v2230
    %v2249 = vpop.f32.mrf.mxu0
    %v2250 = vadd.f32 %v82, %v2249
    %2251 = vdwg.mxu0
    %v2253 = vrot.slane %v2186, 1
    %2254 = vrot.lane.b32.xlu0 %v2253, 96
    %v2255 = vpop.permute.xlu0 %2254
    %v2256 = vsel %vm101, %v2255, 0
    %2258 = vmatpush.msra.mxu0 0.0
    %2259 = vmatpush.msra.mxu0 0.0
    %2260 = vmatpush.msra.mxu0 0.0
    %2261 = vmatpush.msra.mxu0 0.0
    %2262 = vmatpush.msra.mxu0 0.0
    %2263 = vmatpush.msra.mxu0 0.0
    %2264 = vmatpush.msra.mxu0 0.0
    %2265 = vmatpush.msra.mxu0 0.0
    %2266 = vmatpush.msra.mxu0 0.0
    %2267 = vmatpush.msra.mxu0 0.0
    %2268 = vmatpush.msra.mxu0 0.0
    %2269 = vmatpush.msra.mxu0 0.0
    %2270 = vmatpush.msra.mxu0 %v90
    %2271 = vmatpush.msra.mxu0 %v89
    %2272 = vmatpush.msra.mxu0 %v88
    %2273 = vmatpush.msra.mxu0 %v87
    %2274 = vmatmul.f32.gmra.mxu0 %v2256
    %v2275 = vpop.f32.mrf.mxu0
    %v2276 = vadd.f32 %v92, %v2275
    %2277 = vdwg.mxu0
    %v2279 = vrot.slane %v2187, 1
    %2280 = vrot.lane.b32.xlu0 %v2279, 96
    %v2281 = vpop.permute.xlu0 %2280
    %v2282 = vsel %vm101, %v2281, 0
    %2284 = vmatpush.msra.mxu0 0.0
    %2285 = vmatpush.msra.mxu0 0.0
    %2286 = vmatpush.msra.mxu0 0.0
    %2287 = vmatpush.msra.mxu0 0.0
    %2288 = vmatpush.msra.mxu0 0.0
    %2289 = vmatpush.msra.mxu0 0.0
    %2290 = vmatpush.msra.mxu0 0.0
    %2291 = vmatpush.msra.mxu0 0.0
    %2292 = vmatpush.msra.mxu0 0.0
    %2293 = vmatpush.msra.mxu0 0.0
    %2294 = vmatpush.msra.mxu0 0.0
    %2295 = vmatpush.msra.mxu0 0.0
    %2296 = vmatpush.msra.mxu0 %v90
    %2297 = vmatpush.msra.mxu0 %v89
    %2298 = vmatpush.msra.mxu0 %v88
    %2299 = vmatpush.msra.mxu0 %v87
    %2300 = vmatmul.f32.gmra.mxu0 %v2282
    %v2301 = vpop.f32.mrf.mxu0
    %v2302 = vadd.f32 %v92, %v2301
    %2303 = vdwg.mxu0
    %v2306 = vrot.slane %v2225, 1
    %v2307 = vrot.slane %v2250, 1
    %v2310 = vadd.f32 %v126, %v2306
    %v2311 = vadd.f32 %v129, %v2307
    %v2312 = vxor.u32 %v2310, 2147483648
    %v2313 = vxor.u32 %v2311, 2147483648
    %v2314 = vmul.f32 %v2312, 1.442695
    %v2315 = vpow.pop %v2314
    %v2316 = vmul.f32 %v2313, 1.442695
    %v2317 = vpow.pop %v2316
    %v2318 = vadd.f32 %v2315, 1.0
    %v2319 = vadd.f32 %v2317, 1.0
    %v2320 = vrcp.pop %v2318
    %v2321 = vmul.f32 %v2318, %v2320
    %v2322 = vsub.f32 1.0, %v2321
    %v2323 = vmul.f32 %v2320, %v2322
    %v2324 = vadd.f32 %v2320, %v2323
    %vm2325 = vweird.f32 %v2318
    %vm2326 = vweird.f32 %v2320
    %vm2327 = vmor %vm2325, %vm2326
    %v2328 = vsel %vm2327, %v2320, %v2324
    %v2329 = vand.u32 2147483647, %v2318
    %vm2330 = vcmp.eq.f32.partialorder %v2329, 8.507059e+37
    %v2331 = vand.u32 %v2318, 2147483648
    %v2332 = vor.u32 1.1754944e-38, %v2331
    %v2333 = vsel %vm2330, %v2332, %v2328
    %v2334 = vmul.f32 1.0, %v2333
    %v2335 = vrcp.pop %v2319
    %v2336 = vmul.f32 %v2319, %v2335
    %v2337 = vsub.f32 1.0, %v2336
    %v2338 = vmul.f32 %v2335, %v2337
    %v2339 = vadd.f32 %v2335, %v2338
    %vm2340 = vweird.f32 %v2319
    %vm2341 = vweird.f32 %v2335
    %vm2342 = vmor %vm2340, %vm2341
    %v2343 = vsel %vm2342, %v2335, %v2339
    %v2344 = vand.u32 2147483647, %v2319
    %vm2345 = vcmp.eq.f32.partialorder %v2344, 8.507059e+37
    %v2346 = vand.u32 %v2319, 2147483648
    %v2347 = vor.u32 1.1754944e-38, %v2346
    %v2348 = vsel %vm2345, %v2347, %v2343
    %v2349 = vmul.f32 1.0, %v2348
    %2350 = vrot.lane.b32.xlu0 %v2306, 64
    %v2351 = vpop.permute.xlu0 %2350
    %2352 = vrot.lane.b32.xlu0 %v2307, 64
    %v2353 = vpop.permute.xlu0 %2352
    %v2356 = vmul.f32 %v2334, %v2351
    %v2357 = vmul.f32 %v2349, %v2353
    %2360 = vrot.lane.b32.xlu0 %v2356, 64
    %v2361 = vpop.permute.xlu0 %2360
    %2362 = vrot.lane.b32.xlu0 %v2357, 64
    %v2363 = vpop.permute.xlu0 %2362
    %v2366 = vadd.f32 %v126, %v2361
    %v2367 = vadd.f32 %v129, %v2363
    %v2368 = vtanh.pop %v2366
    %v2369 = vtanh.pop %v2367
    %v2370 = vsub.f32 1.0, %v2334
    %v2371 = vsub.f32 1.0, %v2349
    %2374 = vrot.lane.b32.xlu0 %v2368, 96
    %v2375 = vpop.permute.xlu0 %2374
    %2376 = vrot.lane.b32.xlu0 %v2369, 96
    %v2377 = vpop.permute.xlu0 %2376
    %v2380 = vmul.f32 %v2370, %v2375
    %v2381 = vmul.f32 %v2371, %v2377
    %v2382 = vrot.slane %v2100, 7
    %v2383 = vrot.slane %v2101, 7
    %v2386 = vmul.f32 %v2334, %v2382
    %v2387 = vmul.f32 %v2349, %v2383
    %v2388 = vadd.f32 %v2380, %v2386
    %v2389 = vadd.f32 %v2381, %v2387
    %v2390 = vadd.f32 %v152, %v2276
    %v2391 = vadd.f32 %v155, %v2302
    %v2392 = vxor.u32 %v2390, 2147483648
    %v2393 = vxor.u32 %v2391, 2147483648
    %v2394 = vmul.f32 %v2392, 1.442695
    %v2395 = vpow.pop %v2394
    %v2396 = vmul.f32 %v2393, 1.442695
    %v2397 = vpow.pop %v2396
    %v2398 = vadd.f32 %v2395, 1.0
    %v2399 = vadd.f32 %v2397, 1.0
    %v2400 = vrcp.pop %v2398
    %v2401 = vmul.f32 %v2398, %v2400
    %v2402 = vsub.f32 1.0, %v2401
    %v2403 = vmul.f32 %v2400, %v2402
    %v2404 = vadd.f32 %v2400, %v2403
    %vm2405 = vweird.f32 %v2398
    %vm2406 = vweird.f32 %v2400
    %vm2407 = vmor %vm2405, %vm2406
    %v2408 = vsel %vm2407, %v2400, %v2404
    %v2409 = vand.u32 2147483647, %v2398
    %vm2410 = vcmp.eq.f32.partialorder %v2409, 8.507059e+37
    %v2411 = vand.u32 %v2398, 2147483648
    %v2412 = vor.u32 1.1754944e-38, %v2411
    %v2413 = vsel %vm2410, %v2412, %v2408
    %v2414 = vmul.f32 1.0, %v2413
    %v2415 = vrcp.pop %v2399
    %v2416 = vmul.f32 %v2399, %v2415
    %v2417 = vsub.f32 1.0, %v2416
    %v2418 = vmul.f32 %v2415, %v2417
    %v2419 = vadd.f32 %v2415, %v2418
    %vm2420 = vweird.f32 %v2399
    %vm2421 = vweird.f32 %v2415
    %vm2422 = vmor %vm2420, %vm2421
    %v2423 = vsel %vm2422, %v2415, %v2419
    %v2424 = vand.u32 2147483647, %v2399
    %vm2425 = vcmp.eq.f32.partialorder %v2424, 8.507059e+37
    %v2426 = vand.u32 %v2399, 2147483648
    %v2427 = vor.u32 1.1754944e-38, %v2426
    %v2428 = vsel %vm2425, %v2427, %v2423
    %v2429 = vmul.f32 1.0, %v2428
    %2432 = vrot.lane.b32.xlu0 %v2276, 64
    %v2433 = vpop.permute.xlu0 %2432
    %2434 = vrot.lane.b32.xlu0 %v2302, 64
    %v2435 = vpop.permute.xlu0 %2434
    %v2438 = vmul.f32 %v2414, %v2433
    %v2439 = vmul.f32 %v2429, %v2435
    %2442 = vrot.lane.b32.xlu0 %v2438, 64
    %v2443 = vpop.permute.xlu0 %2442
    %2444 = vrot.lane.b32.xlu0 %v2439, 64
    %v2445 = vpop.permute.xlu0 %2444
    %v2448 = vadd.f32 %v152, %v2443
    %v2449 = vadd.f32 %v155, %v2445
    %v2450 = vtanh.pop %v2448
    %v2451 = vtanh.pop %v2449
    %v2452 = vsub.f32 1.0, %v2414
    %v2453 = vsub.f32 1.0, %v2429
    %2456 = vrot.lane.b32.xlu0 %v2450, 96
    %v2457 = vpop.permute.xlu0 %2456
    %2458 = vrot.lane.b32.xlu0 %v2451, 96
    %v2459 = vpop.permute.xlu0 %2458
    %v2462 = vmul.f32 %v2452, %v2457
    %v2463 = vmul.f32 %v2453, %v2459
    %v2466 = vmul.f32 %v2414, %v2253
    %v2467 = vmul.f32 %v2429, %v2279
    %v2468 = vadd.f32 %v2462, %v2466
    %v2469 = vadd.f32 %v2463, %v2467
    %2472 = vrot.lane.b32.xlu0 %v2388, 96
    %v2473 = vpop.permute.xlu0 %2472
    %2474 = vrot.lane.b32.xlu0 %v2389, 96
    %v2475 = vpop.permute.xlu0 %2474
    %vm2478 = vcmask 261127
    %2479 = vst.msk [vmem:[#allocation2] sm:$0x80] %vm2478, %v2473
    %2480 = vst.msk [vmem:[#allocation2 + $0x8] sm:$0x80] %vm2478, %v2475
    %vm2481 = vcmask 516352
    %2482 = vst.msk [vmem:[#allocation2] sm:$0x1] %vm2481, %v2468
    %2483 = vst.msk [vmem:[#allocation2 + $0x8] sm:$0x1] %vm2481, %v2469
    %v2484 = vld [vmem:[#allocation2] sm:$0xff]
    %v2485 = vld [vmem:[#allocation2 + $0x8] sm:$0xff]
    %v2486 = vld [vmem:[%s2] sm:$0x3]
    %v2487 = vld [vmem:[%s1] sm:$0xff]
    %v2488 = vld [vmem:[%s1 + $0x8] sm:$0xff]
    %v2489 = vld [vmem:[%s1 + $0x10] sm:$0xff]
    %v2490 = vld [vmem:[%s1 + $0x18] sm:$0xff]
    %v2491 = vld [vmem:[%s3] sm:$0x3]
    %v2492 = vld [vmem:[%s14] sm:$0x1]
    %v2494 = vperm.slane %v2492, 0
    %v2496 = vmul.f32 %v2484, %v2494
    %v2497 = vmul.f32 %v2485, %v2494
    %vm2498 = vcmask 588800
    %v2499 = vsel %vm2498, %v2496, 0.0
    %2500 = vadd.xlane.f32.xlu0 %v2499
    %v2501 = vpop.xlane.xlu0 %2500
    %v2502 = vsel %vm2498, %v2497, 0.0
    %2503 = vadd.xlane.f32.xlu0 %v2502
    %v2504 = vpop.xlane.xlu0 %2503
    %v2505 = vld [vmem:[#allocation3] sm:$0x1]
    %v2507 = vperm.slane %v2505, 0
    %2508 = vset.pattern.permute.xlu0 0
    %2509 = vperm.xlu0 %2508, %v2507
    %v2510 = vpop.permute.xlu0 %2509
    %v2512 = vadd.f32 %v2501, %v2510
    %v2513 = vadd.f32 %v2504, %v2510
    %vm2514 = vcmp.gt.f32.partialorder %v2486, 0.0
    %v2517 = vlaneseq
    %v2518 = vand.u32 %v2517, 127
    %v2519 = vperm.slane %v2512, %v2518
    %v2520 = vperm.slane %v2513, %v2518
    %vm2521 = vcmask 1041409
    %v2522 = vsel %vm2521, %v2520, %v2519
    %v2524 = vsel %vm2514, -1e+30, %v2522
    %vm2525 = vcmask 58368
    %v2526 = vsel %vm2525, %v2524, -inf
    %2527 = vmax.xlane.f32.xlu0 %v2526
    %v2528 = vpop.xlane.xlu0 %2527
    %v2529 = vsub.f32 %v2524, %v2528
    %v2530 = vmul.f32 %v2529, 1.442695
    %v2531 = vpow.pop %v2530
    %v2532 = vsel %vm2525, %v2531, 0.0
    %2533 = vadd.xlane.f32.xlu0 %v2532
    %v2534 = vpop.xlane.xlu0 %2533
    %v2535 = vrcp.pop %v2534
    %v2536 = vmul.f32 %v2534, %v2535
    %v2537 = vsub.f32 1.0, %v2536
    %v2538 = vmul.f32 %v2535, %v2537
    %v2539 = vadd.f32 %v2535, %v2538
    %vm2540 = vweird.f32 %v2534
    %vm2541 = vweird.f32 %v2535
    %vm2542 = vmor %vm2540, %vm2541
    %v2543 = vsel %vm2542, %v2535, %v2539
    %v2544 = vand.u32 2147483647, %v2534
    %vm2545 = vcmp.eq.f32.partialorder %v2544, 8.507059e+37
    %v2546 = vand.u32 %v2534, 2147483648
    %v2547 = vor.u32 1.1754944e-38, %v2546
    %v2548 = vsel %vm2545, %v2547, %v2543
    %v2549 = vmul.f32 %v2531, %v2548
    %v2550 = vperm.slane %v2549, 0
    %v2551 = vlaneseq
    %v2552 = vshrl.u32 %v2551, 7
    %2554 = vset.pattern.permute.xlu0 %v2552
    %2555 = vperm.xlu0 %2554, %v2550
    %v2556 = vpop.permute.xlu0 %2555
    %v2557 = vperm.slane %v2549, 1
    %v2558 = vlaneseq
    %v2559 = vshrl.u32 %v2558, 7
    %2561 = vset.pattern.permute.xlu0 %v2559
    %2562 = vperm.xlu0 %2561, %v2557
    %v2563 = vpop.permute.xlu0 %2562
    %v2564 = vmul.f32 %v2556, %v2484
    %v2565 = vmul.f32 %v2563, %v2485
    %v2566 = vsel %vm2498, %v2564, 0.0
    %v2567 = vrot.slane %v2566, 4
    %v2568 = vadd.f32 %v2566, %v2567
    %v2569 = vrot.slane %v2568, 2
    %v2570 = vadd.f32 %v2568, %v2569
    %v2571 = vrot.slane %v2570, 1
    %v2572 = vadd.f32 %v2570, %v2571
    %v2573 = vsel %vm2498, %v2565, 0.0
    %v2574 = vrot.slane %v2573, 4
    %v2575 = vadd.f32 %v2573, %v2574
    %v2576 = vrot.slane %v2575, 2
    %v2577 = vadd.f32 %v2575, %v2576
    %v2578 = vrot.slane %v2577, 1
    %v2579 = vadd.f32 %v2577, %v2578
    %v2580 = vld [vmem:[%s16] sm:$0xff]
    %v2581 = vld [vmem:[%s16 + $0x8] sm:$0xff]
    %v2582 = vld [vmem:[%s16 + $0x10] sm:$0xff]
    %v2583 = vld [vmem:[%s16 + $0x18] sm:$0xff]
    %v2584 = vld [vmem:[%s16 + $0x20] sm:$0xff]
    %v2585 = vld [vmem:[%s16 + $0x28] sm:$0xff]
    %v2586 = vld [vmem:[%s16 + $0x30] sm:$0xff]
    %v2587 = vld [vmem:[%s16 + $0x38] sm:$0xff]
    %v2588 = vld [vmem:[%s16 + $0x40] sm:$0xff]
    %v2589 = vld [vmem:[%s17] sm:$0x1]
    %v2591 = vperm.slane %v2589, 0
    %v2595 = vsel %vm2521, %v2579, %v2572
    %v2596 = vsel %vm2498, %v2595, 0
    %2598 = vmatpush.msra.mxu0 0.0
    %2599 = vmatpush.msra.mxu0 0.0
    %2600 = vmatpush.msra.mxu0 0.0
    %2601 = vmatpush.msra.mxu0 0.0
    %2602 = vmatpush.msra.mxu0 0.0
    %2603 = vmatpush.msra.mxu0 0.0
    %2604 = vmatpush.msra.mxu0 0.0
    %2605 = vmatpush.msra.mxu0 %v2588
    %2606 = vmatpush.msra.mxu0 %v2587
    %2607 = vmatpush.msra.mxu0 %v2586
    %2608 = vmatpush.msra.mxu0 %v2585
    %2609 = vmatpush.msra.mxu0 %v2584
    %2610 = vmatpush.msra.mxu0 %v2583
    %2611 = vmatpush.msra.mxu0 %v2582
    %2612 = vmatpush.msra.mxu0 %v2581
    %2613 = vmatpush.msra.mxu0 %v2580
    %2614 = vmatmul.f32.gmra.mxu0 %v2596
    %v2615 = vpop.f32.mrf.mxu0
    %v2616 = vadd.f32 %v2591, %v2615
    %2617 = vdwg.mxu0
    %v2618 = vld [vmem:[%s18] sm:$0xff]
    %v2619 = vld [vmem:[%s18 + $0x8] sm:$0xff]
    %v2620 = vld [vmem:[%s18 + $0x10] sm:$0xff]
    %v2621 = vld [vmem:[%s18 + $0x18] sm:$0xff]
    %v2622 = vld [vmem:[%s18 + $0x20] sm:$0xff]
    %v2623 = vld [vmem:[%s18 + $0x28] sm:$0xff]
    %v2624 = vld [vmem:[%s18 + $0x30] sm:$0xff]
    %v2625 = vld [vmem:[%s18 + $0x38] sm:$0xff]
    %v2626 = vld [vmem:[%s18 + $0x40] sm:$0xff]
    %v2627 = vld [vmem:[%s19] sm:$0x1]
    %v2629 = vperm.slane %v2627, 0
    %2631 = vmatpush.msra.mxu0 0.0
    %2632 = vmatpush.msra.mxu0 0.0
    %2633 = vmatpush.msra.mxu0 0.0
    %2634 = vmatpush.msra.mxu0 0.0
    %2635 = vmatpush.msra.mxu0 0.0
    %2636 = vmatpush.msra.mxu0 0.0
    %2637 = vmatpush.msra.mxu0 0.0
    %2638 = vmatpush.msra.mxu0 %v2626
    %2639 = vmatpush.msra.mxu0 %v2625
    %2640 = vmatpush.msra.mxu0 %v2624
    %2641 = vmatpush.msra.mxu0 %v2623
    %2642 = vmatpush.msra.mxu0 %v2622
    %2643 = vmatpush.msra.mxu0 %v2621
    %2644 = vmatpush.msra.mxu0 %v2620
    %2645 = vmatpush.msra.mxu0 %v2619
    %2646 = vmatpush.msra.mxu0 %v2618
    %2647 = vmatmul.f32.gmra.mxu0 %v2596
    %v2648 = vpop.f32.mrf.mxu0
    %v2649 = vadd.f32 %v2629, %v2648
    %2650 = vdwg.mxu0
    %v2652 = vrot.slane %v2616, 1
    %v2653 = vperm.slane %v2616, 0
    %v2654 = vperm.slane %v2652, 0
    %v2657 = vmul.f32 %v2487, %v2653
    %v2658 = vmul.f32 %v2488, %v2653
    %v2659 = vmul.f32 %v2489, %v2654
    %v2660 = vmul.f32 %v2490, %v2654
    %v2661 = vsel %vm2498, %v2657, 0.0
    %2662 = vadd.xlane.f32.xlu0 %v2661
    %v2663 = vpop.xlane.xlu0 %2662
    %v2664 = vsel %vm2498, %v2658, 0.0
    %2665 = vadd.xlane.f32.xlu0 %v2664
    %v2666 = vpop.xlane.xlu0 %2665
    %v2667 = vsel %vm2498, %v2659, 0.0
    %2668 = vadd.xlane.f32.xlu0 %v2667
    %v2669 = vpop.xlane.xlu0 %2668
    %v2670 = vsel %vm2498, %v2660, 0.0
    %2671 = vadd.xlane.f32.xlu0 %v2670
    %v2672 = vpop.xlane.xlu0 %2671
    %vm2673 = vcmp.gt.f32.partialorder %v2491, 0.0
    %v2678 = vperm.slane %v2663, %v2518
    %v2679 = vadd.s32 %v2518, 4294967288
    %v2680 = vperm.slane %v2666, %v2679
    %vm2681 = vcmask 130112
    %v2682 = vsel %vm2681, %v2680, %v2678
    %v2683 = vperm.slane %v2669, %v2518
    %v2684 = vperm.slane %v2672, %v2679
    %v2685 = vsel %vm2681, %v2684, %v2683
    %v2686 = vsel %vm2521, %v2685, %v2682
    %v2688 = vsel %vm2673, -1e+30, %v2686
    %vm2689 = vcmask 123904
    %v2690 = vsel %vm2689, %v2688, -inf
    %2691 = vmax.xlane.f32.xlu0 %v2690
    %v2692 = vpop.xlane.xlu0 %2691
    %v2693 = vsub.f32 %v2688, %v2692
    %v2694 = vmul.f32 %v2693, 1.442695
    %v2695 = vpow.pop %v2694
    %v2696 = vsel %vm2689, %v2695, 0.0
    %2697 = vadd.xlane.f32.xlu0 %v2696
    %v2698 = vpop.xlane.xlu0 %2697
    %v2699 = vrcp.pop %v2698
    %v2700 = vmul.f32 %v2698, %v2699
    %v2701 = vsub.f32 1.0, %v2700
    %v2702 = vmul.f32 %v2699, %v2701
    %v2703 = vadd.f32 %v2699, %v2702
    %vm2704 = vweird.f32 %v2698
    %vm2705 = vweird.f32 %v2699
    %vm2706 = vmor %vm2704, %vm2705
    %v2707 = vsel %vm2706, %v2699, %v2703
    %v2708 = vand.u32 2147483647, %v2698
    %vm2709 = vcmp.eq.f32.partialorder %v2708, 8.507059e+37
    %v2710 = vand.u32 %v2698, 2147483648
    %v2711 = vor.u32 1.1754944e-38, %v2710
    %v2712 = vsel %vm2709, %v2711, %v2707
    %v2713 = vmul.f32 %v2695, %v2712
    %2714 = vst.msk [vmem:[#allocation4] sm:$0x3] %vm2689, %v2713
    %v2716 = vrot.slane %v2649, 1
    %v2717 = vperm.slane %v2649, 0
    %v2718 = vperm.slane %v2716, 0
    %v2721 = vmul.f32 %v2487, %v2717
    %v2722 = vmul.f32 %v2488, %v2717
    %v2723 = vmul.f32 %v2489, %v2718
    %v2724 = vmul.f32 %v2490, %v2718
    %v2725 = vsel %vm2498, %v2721, 0.0
    %2726 = vadd.xlane.f32.xlu0 %v2725
    %v2727 = vpop.xlane.xlu0 %2726
    %v2728 = vsel %vm2498, %v2722, 0.0
    %2729 = vadd.xlane.f32.xlu0 %v2728
    %v2730 = vpop.xlane.xlu0 %2729
    %v2731 = vsel %vm2498, %v2723, 0.0
    %2732 = vadd.xlane.f32.xlu0 %v2731
    %v2733 = vpop.xlane.xlu0 %2732
    %v2734 = vsel %vm2498, %v2724, 0.0
    %2735 = vadd.xlane.f32.xlu0 %v2734
    %v2736 = vpop.xlane.xlu0 %2735
    %v2741 = vperm.slane %v2727, %v2518
    %v2742 = vperm.slane %v2730, %v2679
    %v2743 = vsel %vm2681, %v2742, %v2741
    %v2744 = vperm.slane %v2733, %v2518
    %v2745 = vperm.slane %v2736, %v2679
    %v2746 = vsel %vm2681, %v2745, %v2744
    %v2747 = vsel %vm2521, %v2746, %v2743
    %v2749 = vsel %vm2673, -1e+30, %v2747
    %v2750 = vsel %vm2689, %v2749, -inf
    %2751 = vmax.xlane.f32.xlu0 %v2750
    %v2752 = vpop.xlane.xlu0 %2751
    %v2753 = vsub.f32 %v2749, %v2752
    %v2754 = vmul.f32 %v2753, 1.442695
    %v2755 = vpow.pop %v2754
    %v2756 = vsel %vm2689, %v2755, 0.0
    %2757 = vadd.xlane.f32.xlu0 %v2756
    %v2758 = vpop.xlane.xlu0 %2757
    %v2759 = vrcp.pop %v2758
    %v2760 = vmul.f32 %v2758, %v2759
    %v2761 = vsub.f32 1.0, %v2760
    %v2762 = vmul.f32 %v2759, %v2761
    %v2763 = vadd.f32 %v2759, %v2762
    %vm2764 = vweird.f32 %v2758
    %vm2765 = vweird.f32 %v2759
    %vm2766 = vmor %vm2764, %vm2765
    %v2767 = vsel %vm2766, %v2759, %v2763
    %v2768 = vand.u32 2147483647, %v2758
    %vm2769 = vcmp.eq.f32.partialorder %v2768, 8.507059e+37
    %v2770 = vand.u32 %v2758, 2147483648
    %v2771 = vor.u32 1.1754944e-38, %v2770
    %v2772 = vsel %vm2769, %v2771, %v2767
    %v2773 = vmul.f32 %v2755, %v2772
    %2774 = vst.msk [vmem:[#allocation6] sm:$0x3] %vm2689, %v2773
    // Predicated region
    $region82: #{rnn_doc_reader_forward.5} parent=1 // pred_check
      _
    $region83: #{rnn_doc_reader_forward.5} parent=1 // pred_check_branch
      %2776 = sbr.rel (0) target = $region85
    $region84: #{rnn_doc_reader_forward.5} parent=1 // pred_region
      %2778 = vsyncadd [#allocation5], 0
      %s2780 = sshll.u32 [#allocation4], 4
      %s2781 = int_to_ptr.vmem [resolvable:$true] %s2780
      %s2782 = sshll.u32 %s20, 4
      %s2783 = int_to_ptr.hbm [resolvable:$true] %s2782
      %2785 = dma.vmem_to_hbm [thread:$0]  %s2781, 32, %s2783, [#allocation5]
    $region85: #{rnn_doc_reader_forward.5} parent=1 // pred_fallthru
      _
    // Predicated region
    $region86: #{rnn_doc_reader_forward.5} parent=1 // pred_check
      _
    $region87: #{rnn_doc_reader_forward.5} parent=1 // pred_check_branch
      %2787 = sbr.rel (0) target = $region89
    $region88: #{rnn_doc_reader_forward.5} parent=1 // pred_region
      %2789 = vsyncadd [#allocation7], 0
      %s2791 = sshll.u32 [#allocation6], 4
      %s2792 = int_to_ptr.vmem [resolvable:$true] %s2791
      %s2793 = sshll.u32 %s21, 4
      %s2794 = int_to_ptr.hbm [resolvable:$true] %s2793
      %2796 = dma.vmem_to_hbm [thread:$0]  %s2792, 32, %s2794, [#allocation7]
    $region89: #{rnn_doc_reader_forward.5} parent=1 // pred_fallthru
      _
    // Predicated region
    $region90: #{rnn_doc_reader_forward.5} parent=1 // pred_check
      _
    $region91: #{rnn_doc_reader_forward.5} parent=1 // pred_check_branch
      %2798 = sbr.rel (0) target = $region93
    $region92: #{rnn_doc_reader_forward.5} parent=1 // pred_region
      %2800 = dma.done [#allocation5], 32
    $region93: #{rnn_doc_reader_forward.5} parent=1 // pred_fallthru
      _
    // Predicated region
    $region94: #{rnn_doc_reader_forward.5} parent=1 // pred_check
      _
    $region95: #{rnn_doc_reader_forward.5} parent=1 // pred_check_branch
      %2802 = sbr.rel (0) target = $region97
    $region96: #{rnn_doc_reader_forward.5} parent=1 // pred_region
      %2804 = dma.done [#allocation7], 32
    $region97: #{rnn_doc_reader_forward.5} parent=1 // pred_fallthru
      _
    %2805 = vsyncpa [#allocation5], 1
    %2806 = vsyncpa [#allocation7], 1

// kernel: rnn_doc_reader_forward.4
$region0: #{rnn_doc_reader_forward.4}
  #allocation0 [shape = 'u32[]', space=smem, size = 0x4, offset = 0x4, fixed_abs, tag = 'smem constant byte address 0x4 - core index']
  #allocation1 [shape = 'u32[72,128]{1,0:T(1,128)}', space=vmem, size = 0x9000, scoped, tag = 'internal scratch']
  %s0 = inlined_call_operand.vmem [shape: f32[2,16,84], index: 0, kind: input, shape index: {}]
  %s1 = inlined_call_operand.vmem [shape: f32[84,96], index: 1, kind: input, shape index: {}]
  %s2 = inlined_call_operand.vmem [shape: f32[32,96], index: 2, kind: input, shape index: {}]
  %s3 = inlined_call_operand.vmem [shape: f32[1,96], index: 3, kind: input, shape index: {}]
  %s4 = inlined_call_operand.vmem [shape: f32[1,96], index: 4, kind: input, shape index: {}]
  %s5 = inlined_call_operand.vmem [shape: f32[84,96], index: 5, kind: input, shape index: {}]
  %s6 = inlined_call_operand.vmem [shape: f32[32,96], index: 6, kind: input, shape index: {}]
  %s7 = inlined_call_operand.vmem [shape: f32[1,96], index: 7, kind: input, shape index: {}]
  %s8 = inlined_call_operand.vmem [shape: f32[1,96], index: 8, kind: input, shape index: {}]
  %s9 = inlined_call_operand.vmem [shape: f32[84,8], index: 9, kind: input, shape index: {}]
  %s10 = inlined_call_operand.vmem [shape: f32[1,8], index: 10, kind: input, shape index: {}]
  %s11 = inlined_call_operand.vmem [shape: f32[2,16,72], index: 11, kind: output, shape index: {}]
  %s12 = sld [smem:[#allocation0]]
  $region54: #{rnn_doc_reader_forward.4} parent=0
    _
  %s14 = ssub.s32 1, %s12
  %s15 = scalar_select 0, %s14, %s12
  // Predicated region
  $region2: #{rnn_doc_reader_forward.4} parent=0 // pred_check
    _
  $region3: #{rnn_doc_reader_forward.4} parent=0 // pred_check_branch
    %17 = sbr.rel (0) target = $region5
  $region4: #{rnn_doc_reader_forward.4} parent=0 // pred_region
    _
  $region5: #{rnn_doc_reader_forward.4} parent=0 // pred_fallthru
    _
  // Predicated region
  $region6: #{rnn_doc_reader_forward.4} parent=0 // pred_check
    _
  $region7: #{rnn_doc_reader_forward.4} parent=0 // pred_check_branch
    %19 = sbr.rel (0) target = $region9
  $region8: #{rnn_doc_reader_forward.4} parent=0 // pred_region
    _
  $region9: #{rnn_doc_reader_forward.4} parent=0 // pred_fallthru
    _
  // Predicated region
  $region10: #{rnn_doc_reader_forward.4} parent=0 // pred_check
    _
  $region11: #{rnn_doc_reader_forward.4} parent=0 // pred_check_branch
    %21 = sbr.rel (0) target = $region13
  $region12: #{rnn_doc_reader_forward.4} parent=0 // pred_region
    _
  $region13: #{rnn_doc_reader_forward.4} parent=0 // pred_fallthru
    _
  // Predicated region
  $region14: #{rnn_doc_reader_forward.4} parent=0 // pred_check
    _
  $region15: #{rnn_doc_reader_forward.4} parent=0 // pred_check_branch
    %23 = sbr.rel (0) target = $region17
  $region16: #{rnn_doc_reader_forward.4} parent=0 // pred_region
    _
  $region17: #{rnn_doc_reader_forward.4} parent=0 // pred_fallthru
    _
  // Predicated region
  $region18: #{rnn_doc_reader_forward.4} parent=0 // pred_check
    _
  $region19: #{rnn_doc_reader_forward.4} parent=0 // pred_check_branch
    %25 = sbr.rel (0) target = $region21
  $region20: #{rnn_doc_reader_forward.4} parent=0 // pred_region
    _
  $region21: #{rnn_doc_reader_forward.4} parent=0 // pred_fallthru
    _
  // Predicated region
  $region22: #{rnn_doc_reader_forward.4} parent=0 // pred_check
    _
  $region23: #{rnn_doc_reader_forward.4} parent=0 // pred_check_branch
    %27 = sbr.rel (0) target = $region25
  $region24: #{rnn_doc_reader_forward.4} parent=0 // pred_region
    _
  $region25: #{rnn_doc_reader_forward.4} parent=0 // pred_fallthru
    _
  // Predicated region
  $region26: #{rnn_doc_reader_forward.4} parent=0 // pred_check
    _
  $region27: #{rnn_doc_reader_forward.4} parent=0 // pred_check_branch
    %29 = sbr.rel (0) target = $region29
  $region28: #{rnn_doc_reader_forward.4} parent=0 // pred_region
    _
  $region29: #{rnn_doc_reader_forward.4} parent=0 // pred_fallthru
    _
  // Predicated region
  $region30: #{rnn_doc_reader_forward.4} parent=0 // pred_check
    _
  $region31: #{rnn_doc_reader_forward.4} parent=0 // pred_check_branch
    %31 = sbr.rel (0) target = $region33
  $region32: #{rnn_doc_reader_forward.4} parent=0 // pred_region
    _
  $region33: #{rnn_doc_reader_forward.4} parent=0 // pred_fallthru
    _
  // Predicated region
  $region34: #{rnn_doc_reader_forward.4} parent=0 // pred_check
    _
  $region35: #{rnn_doc_reader_forward.4} parent=0 // pred_check_branch
    %33 = sbr.rel (0) target = $region37
  $region36: #{rnn_doc_reader_forward.4} parent=0 // pred_region
    _
  $region37: #{rnn_doc_reader_forward.4} parent=0 // pred_fallthru
    _
  // Predicated region
  $region38: #{rnn_doc_reader_forward.4} parent=0 // pred_check
    _
  $region39: #{rnn_doc_reader_forward.4} parent=0 // pred_check_branch
    %35 = sbr.rel (0) target = $region41
  $region40: #{rnn_doc_reader_forward.4} parent=0 // pred_region
    _
  $region41: #{rnn_doc_reader_forward.4} parent=0 // pred_fallthru
    _
  // Predicated region
  $region42: #{rnn_doc_reader_forward.4} parent=0 // pred_check
    _
  $region43: #{rnn_doc_reader_forward.4} parent=0 // pred_check_branch
    %37 = sbr.rel (0) target = $region45
  $region44: #{rnn_doc_reader_forward.4} parent=0 // pred_region
    _
  $region45: #{rnn_doc_reader_forward.4} parent=0 // pred_fallthru
    _
  %v38 = vld [vmem:[%s0] sm:$0xff]
  %v39 = vld [vmem:[%s0 + $0x8] sm:$0xff]
  %v40 = vld [vmem:[%s0 + $0x10] sm:$0xff]
  %v41 = vld [vmem:[%s0 + $0x18] sm:$0xff]
  %v42 = vld [vmem:[%s1] sm:$0xff]
  %v43 = vld [vmem:[%s1 + $0x8] sm:$0xff]
  %v44 = vld [vmem:[%s1 + $0x10] sm:$0xff]
  %v45 = vld [vmem:[%s1 + $0x18] sm:$0xff]
  %v46 = vld [vmem:[%s1 + $0x20] sm:$0xff]
  %v47 = vld [vmem:[%s1 + $0x28] sm:$0xff]
  %v48 = vld [vmem:[%s1 + $0x30] sm:$0xff]
  %v49 = vld [vmem:[%s1 + $0x38] sm:$0xff]
  %v50 = vld [vmem:[%s1 + $0x40] sm:$0xff]
  %v51 = vld [vmem:[%s1 + $0x48] sm:$0xff]
  %v52 = vld [vmem:[%s1 + $0x50] sm:$0xf]
  %v53 = vld [vmem:[%s2] sm:$0xff]
  %v54 = vld [vmem:[%s2 + $0x8] sm:$0xff]
  %v55 = vld [vmem:[%s2 + $0x10] sm:$0xff]
  %v56 = vld [vmem:[%s2 + $0x18] sm:$0xff]
  %v57 = vld [vmem:[%s3] sm:$0x1]
  %v58 = vld [vmem:[%s4] sm:$0x1]
  %v59 = vld [vmem:[%s5] sm:$0xff]
  %v60 = vld [vmem:[%s5 + $0x8] sm:$0xff]
  %v61 = vld [vmem:[%s5 + $0x10] sm:$0xff]
  %v62 = vld [vmem:[%s5 + $0x18] sm:$0xff]
  %v63 = vld [vmem:[%s5 + $0x20] sm:$0xff]
  %v64 = vld [vmem:[%s5 + $0x28] sm:$0xff]
  %v65 = vld [vmem:[%s5 + $0x30] sm:$0xff]
  %v66 = vld [vmem:[%s5 + $0x38] sm:$0xff]
  %v67 = vld [vmem:[%s5 + $0x40] sm:$0xff]
  %v68 = vld [vmem:[%s5 + $0x48] sm:$0xff]
  %v69 = vld [vmem:[%s5 + $0x50] sm:$0xf]
  %v70 = vld [vmem:[%s6] sm:$0xff]
  %v71 = vld [vmem:[%s6 + $0x8] sm:$0xff]
  %v72 = vld [vmem:[%s6 + $0x10] sm:$0xff]
  %v73 = vld [vmem:[%s6 + $0x18] sm:$0xff]
  %v74 = vld [vmem:[%s7] sm:$0x1]
  %v75 = vld [vmem:[%s8] sm:$0x1]
  %v76 = vld [vmem:[%s9] sm:$0xff]
  %v77 = vld [vmem:[%s9 + $0x8] sm:$0xff]
  %v78 = vld [vmem:[%s9 + $0x10] sm:$0xff]
  %v79 = vld [vmem:[%s9 + $0x18] sm:$0xff]
  %v80 = vld [vmem:[%s9 + $0x20] sm:$0xff]
  %v81 = vld [vmem:[%s9 + $0x28] sm:$0xff]
  %v82 = vld [vmem:[%s9 + $0x30] sm:$0xff]
  %v83 = vld [vmem:[%s9 + $0x38] sm:$0xff]
  %v84 = vld [vmem:[%s9 + $0x40] sm:$0xff]
  %v85 = vld [vmem:[%s9 + $0x48] sm:$0xff]
  %v86 = vld [vmem:[%s9 + $0x50] sm:$0xf]
  %v87 = vld [vmem:[%s10] sm:$0x1]
  %v89 = vperm.slane %v57, 0
  %vm91 = vcmask 687104
  %v93 = vsel %vm91, %v38, 0
  %v96 = vsel %vm91, %v39, 0
  %v99 = vsel %vm91, %v40, 0
  %v102 = vsel %vm91, %v41, 0
  %vm104 = vcmask 1043456
  %v106 = vsel %vm104, %v52, 0
  %108 = vmatpush.msra.mxu0 0.0
  %109 = vmatpush.msra.mxu0 0.0
  %110 = vmatpush.msra.mxu0 0.0
  %111 = vmatpush.msra.mxu0 0.0
  %112 = vmatpush.msra.mxu0 0.0
  %113 = vmatpush.msra.mxu0 %v106
  %114 = vmatpush.msra.mxu0 %v51
  %115 = vmatpush.msra.mxu0 %v50
  %116 = vmatpush.msra.mxu0 %v49
  %117 = vmatpush.msra.mxu0 %v48
  %118 = vmatpush.msra.mxu0 %v47
  %119 = vmatpush.msra.mxu0 %v46
  %120 = vmatpush.msra.mxu0 %v45
  %121 = vmatpush.msra.mxu0 %v44
  %122 = vmatpush.msra.mxu0 %v43
  %123 = vmatpush.msra.mxu0 %v42
  %124 = vmatmul.f32.gmra.mxu0 %v93
  %v125 = vpop.f32.mrf.mxu0
  %v126 = vadd.f32 %v89, %v125
  %127 = vmatmul.f32.gmra.mxu0 %v96
  %v128 = vpop.f32.mrf.mxu0
  %v129 = vadd.f32 %v89, %v128
  %130 = vmatmul.f32.gmra.mxu0 %v99
  %v131 = vpop.f32.mrf.mxu0
  %v132 = vadd.f32 %v89, %v131
  %133 = vmatmul.f32.gmra.mxu0 %v102
  %v134 = vpop.f32.mrf.mxu0
  %v135 = vadd.f32 %v89, %v134
  %136 = vdwg.mxu0
  %v138 = vperm.slane %v74, 0
  %v141 = vsel %vm104, %v69, 0
  %143 = vmatpush.msra.mxu0 0.0
  %144 = vmatpush.msra.mxu0 0.0
  %145 = vmatpush.msra.mxu0 0.0
  %146 = vmatpush.msra.mxu0 0.0
  %147 = vmatpush.msra.mxu0 0.0
  %148 = vmatpush.msra.mxu0 %v141
  %149 = vmatpush.msra.mxu0 %v68
  %150 = vmatpush.msra.mxu0 %v67
  %151 = vmatpush.msra.mxu0 %v66
  %152 = vmatpush.msra.mxu0 %v65
  %153 = vmatpush.msra.mxu0 %v64
  %154 = vmatpush.msra.mxu0 %v63
  %155 = vmatpush.msra.mxu0 %v62
  %156 = vmatpush.msra.mxu0 %v61
  %157 = vmatpush.msra.mxu0 %v60
  %158 = vmatpush.msra.mxu0 %v59
  %159 = vmatmul.f32.gmra.mxu0 %v93
  %v160 = vpop.f32.mrf.mxu0
  %v161 = vadd.f32 %v138, %v160
  %162 = vmatmul.f32.gmra.mxu0 %v96
  %v163 = vpop.f32.mrf.mxu0
  %v164 = vadd.f32 %v138, %v163
  %165 = vmatmul.f32.gmra.mxu0 %v99
  %v166 = vpop.f32.mrf.mxu0
  %v167 = vadd.f32 %v138, %v166
  %168 = vmatmul.f32.gmra.mxu0 %v102
  %v169 = vpop.f32.mrf.mxu0
  %v170 = vadd.f32 %v138, %v169
  %171 = vdwg.mxu0
  %v173 = vperm.slane %v87, 0
  %v176 = vsel %vm104, %v86, 0
  %178 = vmatpush.msra.mxu0 0.0
  %179 = vmatpush.msra.mxu0 0.0
  %180 = vmatpush.msra.mxu0 0.0
  %181 = vmatpush.msra.mxu0 0.0
  %182 = vmatpush.msra.mxu0 0.0
  %183 = vmatpush.msra.mxu0 %v176
  %184 = vmatpush.msra.mxu0 %v85
  %185 = vmatpush.msra.mxu0 %v84
  %186 = vmatpush.msra.mxu0 %v83
  %187 = vmatpush.msra.mxu0 %v82
  %188 = vmatpush.msra.mxu0 %v81
  %189 = vmatpush.msra.mxu0 %v80
  %190 = vmatpush.msra.mxu0 %v79
  %191 = vmatpush.msra.mxu0 %v78
  %192 = vmatpush.msra.mxu0 %v77
  %193 = vmatpush.msra.mxu0 %v76
  %194 = vmatmul.f32.gmra.mxu0 %v93
  %v195 = vpop.f32.mrf.mxu0
  %v196 = vadd.f32 %v173, %v195
  %197 = vmatmul.f32.gmra.mxu0 %v96
  %v198 = vpop.f32.mrf.mxu0
  %v199 = vadd.f32 %v173, %v198
  %200 = vmatmul.f32.gmra.mxu0 %v99
  %v201 = vpop.f32.mrf.mxu0
  %v202 = vadd.f32 %v173, %v201
  %203 = vmatmul.f32.gmra.mxu0 %v102
  %v204 = vpop.f32.mrf.mxu0
  %v205 = vadd.f32 %v173, %v204
  %206 = vdwg.mxu0
  %v207 = vmax.f32 %v196, 0.0
  %v208 = vmax.f32 %v199, 0.0
  %v209 = vmax.f32 %v202, 0.0
  %v210 = vmax.f32 %v205, 0.0
  %215 = vrot.lane.b32.xlu0 %v207, 64
  %v216 = vpop.permute.xlu0 %215
  %217 = vrot.lane.b32.xlu0 %v208, 64
  %v218 = vpop.permute.xlu0 %217
  %219 = vrot.lane.b32.xlu0 %v209, 64
  %v220 = vpop.permute.xlu0 %219
  %221 = vrot.lane.b32.xlu0 %v210, 64
  %v222 = vpop.permute.xlu0 %221
  %vm227 = vcmask 589312
  %228 = vst.msk [vmem:[%s11] sm:$0xff] %vm227, %v216
  %229 = vst.msk [vmem:[%s11 + $0x8] sm:$0xff] %vm227, %v218
  %230 = vst.msk [vmem:[%s11 + $0x10] sm:$0xff] %vm227, %v220
  %231 = vst.msk [vmem:[%s11 + $0x18] sm:$0xff] %vm227, %v222
  %v232 = vmul.f32 %v126, 0.0
  %v233 = vmul.f32 %v132, 0.0
  %v234 = vmul.f32 %v161, 0.0
  %v235 = vmul.f32 %v167, 0.0
  %vm236 = vcmask 261120
  %v238 = vsel %vm236, %v232, 0
  %240 = vmatpush.msra.mxu0 0.0
  %241 = vmatpush.msra.mxu0 0.0
  %242 = vmatpush.msra.mxu0 0.0
  %243 = vmatpush.msra.mxu0 0.0
  %244 = vmatpush.msra.mxu0 0.0
  %245 = vmatpush.msra.mxu0 0.0
  %246 = vmatpush.msra.mxu0 0.0
  %247 = vmatpush.msra.mxu0 0.0
  %248 = vmatpush.msra.mxu0 0.0
  %249 = vmatpush.msra.mxu0 0.0
  %250 = vmatpush.msra.mxu0 0.0
  %251 = vmatpush.msra.mxu0 0.0
  %252 = vmatpush.msra.mxu0 %v56
  %253 = vmatpush.msra.mxu0 %v55
  %254 = vmatpush.msra.mxu0 %v54
  %255 = vmatpush.msra.mxu0 %v53
  %256 = vmatmul.f32.gmra.mxu0 %v238
  %v257 = vpop.f32.mrf.mxu0
  %v258 = vadd.f32 %v58, %v257
  %259 = vdwg.mxu0
  %v261 = vsel %vm236, %v233, 0
  %263 = vmatpush.msra.mxu0 0.0
  %264 = vmatpush.msra.mxu0 0.0
  %265 = vmatpush.msra.mxu0 0.0
  %266 = vmatpush.msra.mxu0 0.0
  %267 = vmatpush.msra.mxu0 0.0
  %268 = vmatpush.msra.mxu0 0.0
  %269 = vmatpush.msra.mxu0 0.0
  %270 = vmatpush.msra.mxu0 0.0
  %271 = vmatpush.msra.mxu0 0.0
  %272 = vmatpush.msra.mxu0 0.0
  %273 = vmatpush.msra.mxu0 0.0
  %274 = vmatpush.msra.mxu0 0.0
  %275 = vmatpush.msra.mxu0 %v56
  %276 = vmatpush.msra.mxu0 %v55
  %277 = vmatpush.msra.mxu0 %v54
  %278 = vmatpush.msra.mxu0 %v53
  %279 = vmatmul.f32.gmra.mxu0 %v261
  %v280 = vpop.f32.mrf.mxu0
  %v281 = vadd.f32 %v58, %v280
  %282 = vdwg.mxu0
  %v284 = vsel %vm236, %v234, 0
  %286 = vmatpush.msra.mxu0 0.0
  %287 = vmatpush.msra.mxu0 0.0
  %288 = vmatpush.msra.mxu0 0.0
  %289 = vmatpush.msra.mxu0 0.0
  %290 = vmatpush.msra.mxu0 0.0
  %291 = vmatpush.msra.mxu0 0.0
  %292 = vmatpush.msra.mxu0 0.0
  %293 = vmatpush.msra.mxu0 0.0
  %294 = vmatpush.msra.mxu0 0.0
  %295 = vmatpush.msra.mxu0 0.0
  %296 = vmatpush.msra.mxu0 0.0
  %297 = vmatpush.msra.mxu0 0.0
  %298 = vmatpush.msra.mxu0 %v73
  %299 = vmatpush.msra.mxu0 %v72
  %300 = vmatpush.msra.mxu0 %v71
  %301 = vmatpush.msra.mxu0 %v70
  %302 = vmatmul.f32.gmra.mxu0 %v284
  %v303 = vpop.f32.mrf.mxu0
  %v304 = vadd.f32 %v75, %v303
  %305 = vdwg.mxu0
  %v307 = vsel %vm236, %v235, 0
  %309 = vmatpush.msra.mxu0 0.0
  %310 = vmatpush.msra.mxu0 0.0
  %311 = vmatpush.msra.mxu0 0.0
  %312 = vmatpush.msra.mxu0 0.0
  %313 = vmatpush.msra.mxu0 0.0
  %314 = vmatpush.msra.mxu0 0.0
  %315 = vmatpush.msra.mxu0 0.0
  %316 = vmatpush.msra.mxu0 0.0
  %317 = vmatpush.msra.mxu0 0.0
  %318 = vmatpush.msra.mxu0 0.0
  %319 = vmatpush.msra.mxu0 0.0
  %320 = vmatpush.msra.mxu0 0.0
  %321 = vmatpush.msra.mxu0 %v73
  %322 = vmatpush.msra.mxu0 %v72
  %323 = vmatpush.msra.mxu0 %v71
  %324 = vmatpush.msra.mxu0 %v70
  %325 = vmatmul.f32.gmra.mxu0 %v307
  %v326 = vpop.f32.mrf.mxu0
  %v327 = vadd.f32 %v75, %v326
  %328 = vdwg.mxu0
  %v329 = vadd.f32 %v126, %v258
  %v330 = vadd.f32 %v132, %v281
  %v331 = vxor.u32 %v329, 2147483648
  %v332 = vxor.u32 %v330, 2147483648
  %v333 = vmul.f32 %v331, 1.442695
  %v334 = vpow.pop %v333
  %v335 = vmul.f32 %v332, 1.442695
  %v336 = vpow.pop %v335
  %v337 = vadd.f32 %v334, 1.0
  %v338 = vadd.f32 %v336, 1.0
  %v339 = vrcp.pop %v337
  %v340 = vmul.f32 %v337, %v339
  %v341 = vsub.f32 1.0, %v340
  %v342 = vmul.f32 %v339, %v341
  %v343 = vadd.f32 %v339, %v342
  %vm344 = vweird.f32 %v337
  %vm345 = vweird.f32 %v339
  %vm346 = vmor %vm344, %vm345
  %v347 = vsel %vm346, %v339, %v343
  %v348 = vand.u32 2147483647, %v337
  %vm349 = vcmp.eq.f32.partialorder %v348, 8.507059e+37
  %v350 = vand.u32 %v337, 2147483648
  %v351 = vor.u32 1.1754944e-38, %v350
  %v352 = vsel %vm349, %v351, %v347
  %v353 = vmul.f32 1.0, %v352
  %v354 = vrcp.pop %v338
  %v355 = vmul.f32 %v338, %v354
  %v356 = vsub.f32 1.0, %v355
  %v357 = vmul.f32 %v354, %v356
  %v358 = vadd.f32 %v354, %v357
  %vm359 = vweird.f32 %v338
  %vm360 = vweird.f32 %v354
  %vm361 = vmor %vm359, %vm360
  %v362 = vsel %vm361, %v354, %v358
  %v363 = vand.u32 2147483647, %v338
  %vm364 = vcmp.eq.f32.partialorder %v363, 8.507059e+37
  %v365 = vand.u32 %v338, 2147483648
  %v366 = vor.u32 1.1754944e-38, %v365
  %v367 = vsel %vm364, %v366, %v362
  %v368 = vmul.f32 1.0, %v367
  %371 = vrot.lane.b32.xlu0 %v258, 64
  %v372 = vpop.permute.xlu0 %371
  %373 = vrot.lane.b32.xlu0 %v281, 64
  %v374 = vpop.permute.xlu0 %373
  %v377 = vmul.f32 %v353, %v372
  %v378 = vmul.f32 %v368, %v374
  %381 = vrot.lane.b32.xlu0 %v377, 64
  %v382 = vpop.permute.xlu0 %381
  %383 = vrot.lane.b32.xlu0 %v378, 64
  %v384 = vpop.permute.xlu0 %383
  %v387 = vadd.f32 %v126, %v382
  %v388 = vadd.f32 %v132, %v384
  %v389 = vtanh.pop %v387
  %v390 = vtanh.pop %v388
  %v391 = vsub.f32 1.0, %v353
  %v392 = vsub.f32 1.0, %v368
  %395 = vrot.lane.b32.xlu0 %v389, 96
  %v396 = vpop.permute.xlu0 %395
  %397 = vrot.lane.b32.xlu0 %v390, 96
  %v398 = vpop.permute.xlu0 %397
  %v401 = vmul.f32 %v391, %v396
  %v402 = vmul.f32 %v392, %v398
  %403 = vrot.lane.b32.xlu0 %v232, 32
  %v404 = vpop.permute.xlu0 %403
  %405 = vrot.lane.b32.xlu0 %v233, 32
  %v406 = vpop.permute.xlu0 %405
  %v409 = vmul.f32 %v353, %v404
  %v410 = vmul.f32 %v368, %v406
  %v411 = vadd.f32 %v401, %v409
  %v412 = vadd.f32 %v402, %v410
  %v415 = vrot.slane %v304, 1
  %v416 = vrot.slane %v327, 1
  %v419 = vadd.f32 %v164, %v415
  %v420 = vadd.f32 %v170, %v416
  %v421 = vxor.u32 %v419, 2147483648
  %v422 = vxor.u32 %v420, 2147483648
  %v423 = vmul.f32 %v421, 1.442695
  %v424 = vpow.pop %v423
  %v425 = vmul.f32 %v422, 1.442695
  %v426 = vpow.pop %v425
  %v427 = vadd.f32 %v424, 1.0
  %v428 = vadd.f32 %v426, 1.0
  %v429 = vrcp.pop %v427
  %v430 = vmul.f32 %v427, %v429
  %v431 = vsub.f32 1.0, %v430
  %v432 = vmul.f32 %v429, %v431
  %v433 = vadd.f32 %v429, %v432
  %vm434 = vweird.f32 %v427
  %vm435 = vweird.f32 %v429
  %vm436 = vmor %vm434, %vm435
  %v437 = vsel %vm436, %v429, %v433
  %v438 = vand.u32 2147483647, %v427
  %vm439 = vcmp.eq.f32.partialorder %v438, 8.507059e+37
  %v440 = vand.u32 %v427, 2147483648
  %v441 = vor.u32 1.1754944e-38, %v440
  %v442 = vsel %vm439, %v441, %v437
  %v443 = vmul.f32 1.0, %v442
  %v444 = vrcp.pop %v428
  %v445 = vmul.f32 %v428, %v444
  %v446 = vsub.f32 1.0, %v445
  %v447 = vmul.f32 %v444, %v446
  %v448 = vadd.f32 %v444, %v447
  %vm449 = vweird.f32 %v428
  %vm450 = vweird.f32 %v444
  %vm451 = vmor %vm449, %vm450
  %v452 = vsel %vm451, %v444, %v448
  %v453 = vand.u32 2147483647, %v428
  %vm454 = vcmp.eq.f32.partialorder %v453, 8.507059e+37
  %v455 = vand.u32 %v428, 2147483648
  %v456 = vor.u32 1.1754944e-38, %v455
  %v457 = vsel %vm454, %v456, %v452
  %v458 = vmul.f32 1.0, %v457
  %459 = vrot.lane.b32.xlu0 %v415, 64
  %v460 = vpop.permute.xlu0 %459
  %461 = vrot.lane.b32.xlu0 %v416, 64
  %v462 = vpop.permute.xlu0 %461
  %v465 = vmul.f32 %v443, %v460
  %v466 = vmul.f32 %v458, %v462
  %469 = vrot.lane.b32.xlu0 %v465, 64
  %v470 = vpop.permute.xlu0 %469
  %471 = vrot.lane.b32.xlu0 %v466, 64
  %v472 = vpop.permute.xlu0 %471
  %v475 = vadd.f32 %v164, %v470
  %v476 = vadd.f32 %v170, %v472
  %v477 = vtanh.pop %v475
  %v478 = vtanh.pop %v476
  %v479 = vsub.f32 1.0, %v443
  %v480 = vsub.f32 1.0, %v458
  %483 = vrot.lane.b32.xlu0 %v477, 96
  %v484 = vpop.permute.xlu0 %483
  %485 = vrot.lane.b32.xlu0 %v478, 96
  %v486 = vpop.permute.xlu0 %485
  %v489 = vmul.f32 %v479, %v484
  %v490 = vmul.f32 %v480, %v486
  %v491 = vrot.slane %v234, 1
  %v492 = vrot.slane %v235, 1
  %493 = vrot.lane.b32.xlu0 %v491, 32
  %v494 = vpop.permute.xlu0 %493
  %495 = vrot.lane.b32.xlu0 %v492, 32
  %v496 = vpop.permute.xlu0 %495
  %v499 = vmul.f32 %v443, %v494
  %v500 = vmul.f32 %v458, %v496
  %v501 = vadd.f32 %v489, %v499
  %v502 = vadd.f32 %v490, %v500
  %505 = vrot.lane.b32.xlu0 %v411, 96
  %v506 = vpop.permute.xlu0 %505
  %507 = vrot.lane.b32.xlu0 %v412, 96
  %v508 = vpop.permute.xlu0 %507
  %vm511 = vcmask 253952
  %512 = vst.msk [vmem:[%s11] sm:$0x1] %vm511, %v506
  %513 = vst.msk [vmem:[%s11 + $0x10] sm:$0x1] %vm511, %v508
  %vm514 = vcmask 523527
  %515 = vst.msk [vmem:[%s11 + $0x8] sm:$0x80] %vm514, %v501
  %516 = vst.msk [vmem:[%s11 + $0x18] sm:$0x80] %vm514, %v502
  %v517 = vsel %vm236, %v506, 0
  %519 = vmatpush.msra.mxu0 0.0
  %520 = vmatpush.msra.mxu0 0.0
  %521 = vmatpush.msra.mxu0 0.0
  %522 = vmatpush.msra.mxu0 0.0
  %523 = vmatpush.msra.mxu0 0.0
  %524 = vmatpush.msra.mxu0 0.0
  %525 = vmatpush.msra.mxu0 0.0
  %526 = vmatpush.msra.mxu0 0.0
  %527 = vmatpush.msra.mxu0 0.0
  %528 = vmatpush.msra.mxu0 0.0
  %529 = vmatpush.msra.mxu0 0.0
  %530 = vmatpush.msra.mxu0 0.0
  %531 = vmatpush.msra.mxu0 %v56
  %532 = vmatpush.msra.mxu0 %v55
  %533 = vmatpush.msra.mxu0 %v54
  %534 = vmatpush.msra.mxu0 %v53
  %535 = vmatmul.f32.gmra.mxu0 %v517
  %v536 = vpop.f32.mrf.mxu0
  %v537 = vadd.f32 %v58, %v536
  %538 = vdwg.mxu0
  %v539 = vsel %vm236, %v508, 0
  %541 = vmatpush.msra.mxu0 0.0
  %542 = vmatpush.msra.mxu0 0.0
  %543 = vmatpush.msra.mxu0 0.0
  %544 = vmatpush.msra.mxu0 0.0
  %545 = vmatpush.msra.mxu0 0.0
  %546 = vmatpush.msra.mxu0 0.0
  %547 = vmatpush.msra.mxu0 0.0
  %548 = vmatpush.msra.mxu0 0.0
  %549 = vmatpush.msra.mxu0 0.0
  %550 = vmatpush.msra.mxu0 0.0
  %551 = vmatpush.msra.mxu0 0.0
  %552 = vmatpush.msra.mxu0 0.0
  %553 = vmatpush.msra.mxu0 %v56
  %554 = vmatpush.msra.mxu0 %v55
  %555 = vmatpush.msra.mxu0 %v54
  %556 = vmatpush.msra.mxu0 %v53
  %557 = vmatmul.f32.gmra.mxu0 %v539
  %v558 = vpop.f32.mrf.mxu0
  %v559 = vadd.f32 %v58, %v558
  %560 = vdwg.mxu0
  %v562 = vrot.slane %v501, 7
  %563 = vrot.lane.b32.xlu0 %v562, 96
  %v564 = vpop.permute.xlu0 %563
  %v565 = vsel %vm236, %v564, 0
  %567 = vmatpush.msra.mxu0 0.0
  %568 = vmatpush.msra.mxu0 0.0
  %569 = vmatpush.msra.mxu0 0.0
  %570 = vmatpush.msra.mxu0 0.0
  %571 = vmatpush.msra.mxu0 0.0
  %572 = vmatpush.msra.mxu0 0.0
  %573 = vmatpush.msra.mxu0 0.0
  %574 = vmatpush.msra.mxu0 0.0
  %575 = vmatpush.msra.mxu0 0.0
  %576 = vmatpush.msra.mxu0 0.0
  %577 = vmatpush.msra.mxu0 0.0
  %578 = vmatpush.msra.mxu0 0.0
  %579 = vmatpush.msra.mxu0 %v73
  %580 = vmatpush.msra.mxu0 %v72
  %581 = vmatpush.msra.mxu0 %v71
  %582 = vmatpush.msra.mxu0 %v70
  %583 = vmatmul.f32.gmra.mxu0 %v565
  %v584 = vpop.f32.mrf.mxu0
  %v585 = vadd.f32 %v75, %v584
  %586 = vdwg.mxu0
  %v588 = vrot.slane %v502, 7
  %589 = vrot.lane.b32.xlu0 %v588, 96
  %v590 = vpop.permute.xlu0 %589
  %v591 = vsel %vm236, %v590, 0
  %593 = vmatpush.msra.mxu0 0.0
  %594 = vmatpush.msra.mxu0 0.0
  %595 = vmatpush.msra.mxu0 0.0
  %596 = vmatpush.msra.mxu0 0.0
  %597 = vmatpush.msra.mxu0 0.0
  %598 = vmatpush.msra.mxu0 0.0
  %599 = vmatpush.msra.mxu0 0.0
  %600 = vmatpush.msra.mxu0 0.0
  %601 = vmatpush.msra.mxu0 0.0
  %602 = vmatpush.msra.mxu0 0.0
  %603 = vmatpush.msra.mxu0 0.0
  %604 = vmatpush.msra.mxu0 0.0
  %605 = vmatpush.msra.mxu0 %v73
  %606 = vmatpush.msra.mxu0 %v72
  %607 = vmatpush.msra.mxu0 %v71
  %608 = vmatpush.msra.mxu0 %v70
  %609 = vmatmul.f32.gmra.mxu0 %v591
  %v610 = vpop.f32.mrf.mxu0
  %v611 = vadd.f32 %v75, %v610
  %612 = vdwg.mxu0
  %v615 = vrot.slane %v537, 7
  %v616 = vrot.slane %v559, 7
  %v619 = vadd.f32 %v126, %v615
  %v620 = vadd.f32 %v132, %v616
  %v621 = vxor.u32 %v619, 2147483648
  %v622 = vxor.u32 %v620, 2147483648
  %v623 = vmul.f32 %v621, 1.442695
  %v624 = vpow.pop %v623
  %v625 = vmul.f32 %v622, 1.442695
  %v626 = vpow.pop %v625
  %v627 = vadd.f32 %v624, 1.0
  %v628 = vadd.f32 %v626, 1.0
  %v629 = vrcp.pop %v627
  %v630 = vmul.f32 %v627, %v629
  %v631 = vsub.f32 1.0, %v630
  %v632 = vmul.f32 %v629, %v631
  %v633 = vadd.f32 %v629, %v632
  %vm634 = vweird.f32 %v627
  %vm635 = vweird.f32 %v629
  %vm636 = vmor %vm634, %vm635
  %v637 = vsel %vm636, %v629, %v633
  %v638 = vand.u32 2147483647, %v627
  %vm639 = vcmp.eq.f32.partialorder %v638, 8.507059e+37
  %v640 = vand.u32 %v627, 2147483648
  %v641 = vor.u32 1.1754944e-38, %v640
  %v642 = vsel %vm639, %v641, %v637
  %v643 = vmul.f32 1.0, %v642
  %v644 = vrcp.pop %v628
  %v645 = vmul.f32 %v628, %v644
  %v646 = vsub.f32 1.0, %v645
  %v647 = vmul.f32 %v644, %v646
  %v648 = vadd.f32 %v644, %v647
  %vm649 = vweird.f32 %v628
  %vm650 = vweird.f32 %v644
  %vm651 = vmor %vm649, %vm650
  %v652 = vsel %vm651, %v644, %v648
  %v653 = vand.u32 2147483647, %v628
  %vm654 = vcmp.eq.f32.partialorder %v653, 8.507059e+37
  %v655 = vand.u32 %v628, 2147483648
  %v656 = vor.u32 1.1754944e-38, %v655
  %v657 = vsel %vm654, %v656, %v652
  %v658 = vmul.f32 1.0, %v657
  %659 = vrot.lane.b32.xlu0 %v615, 64
  %v660 = vpop.permute.xlu0 %659
  %661 = vrot.lane.b32.xlu0 %v616, 64
  %v662 = vpop.permute.xlu0 %661
  %v665 = vmul.f32 %v643, %v660
  %v666 = vmul.f32 %v658, %v662
  %669 = vrot.lane.b32.xlu0 %v665, 64
  %v670 = vpop.permute.xlu0 %669
  %671 = vrot.lane.b32.xlu0 %v666, 64
  %v672 = vpop.permute.xlu0 %671
  %v675 = vadd.f32 %v126, %v670
  %v676 = vadd.f32 %v132, %v672
  %v677 = vtanh.pop %v675
  %v678 = vtanh.pop %v676
  %v679 = vsub.f32 1.0, %v643
  %v680 = vsub.f32 1.0, %v658
  %683 = vrot.lane.b32.xlu0 %v677, 96
  %v684 = vpop.permute.xlu0 %683
  %685 = vrot.lane.b32.xlu0 %v678, 96
  %v686 = vpop.permute.xlu0 %685
  %v689 = vmul.f32 %v679, %v684
  %v690 = vmul.f32 %v680, %v686
  %v691 = vrot.slane %v411, 7
  %v692 = vrot.slane %v412, 7
  %v695 = vmul.f32 %v643, %v691
  %v696 = vmul.f32 %v658, %v692
  %v697 = vadd.f32 %v689, %v695
  %v698 = vadd.f32 %v690, %v696
  %v701 = vrot.slane %v585, 2
  %v702 = vrot.slane %v611, 2
  %v705 = vadd.f32 %v164, %v701
  %v706 = vadd.f32 %v170, %v702
  %v707 = vxor.u32 %v705, 2147483648
  %v708 = vxor.u32 %v706, 2147483648
  %v709 = vmul.f32 %v707, 1.442695
  %v710 = vpow.pop %v709
  %v711 = vmul.f32 %v708, 1.442695
  %v712 = vpow.pop %v711
  %v713 = vadd.f32 %v710, 1.0
  %v714 = vadd.f32 %v712, 1.0
  %v715 = vrcp.pop %v713
  %v716 = vmul.f32 %v713, %v715
  %v717 = vsub.f32 1.0, %v716
  %v718 = vmul.f32 %v715, %v717
  %v719 = vadd.f32 %v715, %v718
  %vm720 = vweird.f32 %v713
  %vm721 = vweird.f32 %v715
  %vm722 = vmor %vm720, %vm721
  %v723 = vsel %vm722, %v715, %v719
  %v724 = vand.u32 2147483647, %v713
  %vm725 = vcmp.eq.f32.partialorder %v724, 8.507059e+37
  %v726 = vand.u32 %v713, 2147483648
  %v727 = vor.u32 1.1754944e-38, %v726
  %v728 = vsel %vm725, %v727, %v723
  %v729 = vmul.f32 1.0, %v728
  %v730 = vrcp.pop %v714
  %v731 = vmul.f32 %v714, %v730
  %v732 = vsub.f32 1.0, %v731
  %v733 = vmul.f32 %v730, %v732
  %v734 = vadd.f32 %v730, %v733
  %vm735 = vweird.f32 %v714
  %vm736 = vweird.f32 %v730
  %vm737 = vmor %vm735, %vm736
  %v738 = vsel %vm737, %v730, %v734
  %v739 = vand.u32 2147483647, %v714
  %vm740 = vcmp.eq.f32.partialorder %v739, 8.507059e+37
  %v741 = vand.u32 %v714, 2147483648
  %v742 = vor.u32 1.1754944e-38, %v741
  %v743 = vsel %vm740, %v742, %v738
  %v744 = vmul.f32 1.0, %v743
  %745 = vrot.lane.b32.xlu0 %v701, 64
  %v746 = vpop.permute.xlu0 %745
  %747 = vrot.lane.b32.xlu0 %v702, 64
  %v748 = vpop.permute.xlu0 %747
  %v751 = vmul.f32 %v729, %v746
  %v752 = vmul.f32 %v744, %v748
  %755 = vrot.lane.b32.xlu0 %v751, 64
  %v756 = vpop.permute.xlu0 %755
  %757 = vrot.lane.b32.xlu0 %v752, 64
  %v758 = vpop.permute.xlu0 %757
  %v761 = vadd.f32 %v164, %v756
  %v762 = vadd.f32 %v170, %v758
  %v763 = vtanh.pop %v761
  %v764 = vtanh.pop %v762
  %v765 = vsub.f32 1.0, %v729
  %v766 = vsub.f32 1.0, %v744
  %769 = vrot.lane.b32.xlu0 %v763, 96
  %v770 = vpop.permute.xlu0 %769
  %771 = vrot.lane.b32.xlu0 %v764, 96
  %v772 = vpop.permute.xlu0 %771
  %v775 = vmul.f32 %v765, %v770
  %v776 = vmul.f32 %v766, %v772
  %v777 = vrot.slane %v501, 1
  %v778 = vrot.slane %v502, 1
  %v781 = vmul.f32 %v729, %v777
  %v782 = vmul.f32 %v744, %v778
  %v783 = vadd.f32 %v775, %v781
  %v784 = vadd.f32 %v776, %v782
  %787 = vrot.lane.b32.xlu0 %v697, 96
  %v788 = vpop.permute.xlu0 %787
  %789 = vrot.lane.b32.xlu0 %v698, 96
  %v790 = vpop.permute.xlu0 %789
  %vm793 = vcmask 254977
  %794 = vst.msk [vmem:[%s11] sm:$0x2] %vm793, %v788
  %795 = vst.msk [vmem:[%s11 + $0x10] sm:$0x2] %vm793, %v790
  %vm796 = vcmask 522502
  %797 = vst.msk [vmem:[%s11 + $0x8] sm:$0x40] %vm796, %v783
  %798 = vst.msk [vmem:[%s11 + $0x18] sm:$0x40] %vm796, %v784
  %v799 = vrot.slane %v697, 1
  %800 = vrot.lane.b32.xlu0 %v799, 96
  %v801 = vpop.permute.xlu0 %800
  %v802 = vsel %vm236, %v801, 0
  %804 = vmatpush.msra.mxu0 0.0
  %805 = vmatpush.msra.mxu0 0.0
  %806 = vmatpush.msra.mxu0 0.0
  %807 = vmatpush.msra.mxu0 0.0
  %808 = vmatpush.msra.mxu0 0.0
  %809 = vmatpush.msra.mxu0 0.0
  %810 = vmatpush.msra.mxu0 0.0
  %811 = vmatpush.msra.mxu0 0.0
  %812 = vmatpush.msra.mxu0 0.0
  %813 = vmatpush.msra.mxu0 0.0
  %814 = vmatpush.msra.mxu0 0.0
  %815 = vmatpush.msra.mxu0 0.0
  %816 = vmatpush.msra.mxu0 %v56
  %817 = vmatpush.msra.mxu0 %v55
  %818 = vmatpush.msra.mxu0 %v54
  %819 = vmatpush.msra.mxu0 %v53
  %820 = vmatmul.f32.gmra.mxu0 %v802
  %v821 = vpop.f32.mrf.mxu0
  %v822 = vadd.f32 %v58, %v821
  %823 = vdwg.mxu0
  %v824 = vrot.slane %v698, 1
  %825 = vrot.lane.b32.xlu0 %v824, 96
  %v826 = vpop.permute.xlu0 %825
  %v827 = vsel %vm236, %v826, 0
  %829 = vmatpush.msra.mxu0 0.0
  %830 = vmatpush.msra.mxu0 0.0
  %831 = vmatpush.msra.mxu0 0.0
  %832 = vmatpush.msra.mxu0 0.0
  %833 = vmatpush.msra.mxu0 0.0
  %834 = vmatpush.msra.mxu0 0.0
  %835 = vmatpush.msra.mxu0 0.0
  %836 = vmatpush.msra.mxu0 0.0
  %837 = vmatpush.msra.mxu0 0.0
  %838 = vmatpush.msra.mxu0 0.0
  %839 = vmatpush.msra.mxu0 0.0
  %840 = vmatpush.msra.mxu0 0.0
  %841 = vmatpush.msra.mxu0 %v56
  %842 = vmatpush.msra.mxu0 %v55
  %843 = vmatpush.msra.mxu0 %v54
  %844 = vmatpush.msra.mxu0 %v53
  %845 = vmatmul.f32.gmra.mxu0 %v827
  %v846 = vpop.f32.mrf.mxu0
  %v847 = vadd.f32 %v58, %v846
  %848 = vdwg.mxu0
  %v850 = vrot.slane %v783, 6
  %851 = vrot.lane.b32.xlu0 %v850, 96
  %v852 = vpop.permute.xlu0 %851
  %v853 = vsel %vm236, %v852, 0
  %855 = vmatpush.msra.mxu0 0.0
  %856 = vmatpush.msra.mxu0 0.0
  %857 = vmatpush.msra.mxu0 0.0
  %858 = vmatpush.msra.mxu0 0.0
  %859 = vmatpush.msra.mxu0 0.0
  %860 = vmatpush.msra.mxu0 0.0
  %861 = vmatpush.msra.mxu0 0.0
  %862 = vmatpush.msra.mxu0 0.0
  %863 = vmatpush.msra.mxu0 0.0
  %864 = vmatpush.msra.mxu0 0.0
  %865 = vmatpush.msra.mxu0 0.0
  %866 = vmatpush.msra.mxu0 0.0
  %867 = vmatpush.msra.mxu0 %v73
  %868 = vmatpush.msra.mxu0 %v72
  %869 = vmatpush.msra.mxu0 %v71
  %870 = vmatpush.msra.mxu0 %v70
  %871 = vmatmul.f32.gmra.mxu0 %v853
  %v872 = vpop.f32.mrf.mxu0
  %v873 = vadd.f32 %v75, %v872
  %874 = vdwg.mxu0
  %v876 = vrot.slane %v784, 6
  %877 = vrot.lane.b32.xlu0 %v876, 96
  %v878 = vpop.permute.xlu0 %877
  %v879 = vsel %vm236, %v878, 0
  %881 = vmatpush.msra.mxu0 0.0
  %882 = vmatpush.msra.mxu0 0.0
  %883 = vmatpush.msra.mxu0 0.0
  %884 = vmatpush.msra.mxu0 0.0
  %885 = vmatpush.msra.mxu0 0.0
  %886 = vmatpush.msra.mxu0 0.0
  %887 = vmatpush.msra.mxu0 0.0
  %888 = vmatpush.msra.mxu0 0.0
  %889 = vmatpush.msra.mxu0 0.0
  %890 = vmatpush.msra.mxu0 0.0
  %891 = vmatpush.msra.mxu0 0.0
  %892 = vmatpush.msra.mxu0 0.0
  %893 = vmatpush.msra.mxu0 %v73
  %894 = vmatpush.msra.mxu0 %v72
  %895 = vmatpush.msra.mxu0 %v71
  %896 = vmatpush.msra.mxu0 %v70
  %897 = vmatmul.f32.gmra.mxu0 %v879
  %v898 = vpop.f32.mrf.mxu0
  %v899 = vadd.f32 %v75, %v898
  %900 = vdwg.mxu0
  %v903 = vrot.slane %v822, 6
  %v904 = vrot.slane %v847, 6
  %v907 = vadd.f32 %v126, %v903
  %v908 = vadd.f32 %v132, %v904
  %v909 = vxor.u32 %v907, 2147483648
  %v910 = vxor.u32 %v908, 2147483648
  %v911 = vmul.f32 %v909, 1.442695
  %v912 = vpow.pop %v911
  %v913 = vmul.f32 %v910, 1.442695
  %v914 = vpow.pop %v913
  %v915 = vadd.f32 %v912, 1.0
  %v916 = vadd.f32 %v914, 1.0
  %v917 = vrcp.pop %v915
  %v918 = vmul.f32 %v915, %v917
  %v919 = vsub.f32 1.0, %v918
  %v920 = vmul.f32 %v917, %v919
  %v921 = vadd.f32 %v917, %v920
  %vm922 = vweird.f32 %v915
  %vm923 = vweird.f32 %v917
  %vm924 = vmor %vm922, %vm923
  %v925 = vsel %vm924, %v917, %v921
  %v926 = vand.u32 2147483647, %v915
  %vm927 = vcmp.eq.f32.partialorder %v926, 8.507059e+37
  %v928 = vand.u32 %v915, 2147483648
  %v929 = vor.u32 1.1754944e-38, %v928
  %v930 = vsel %vm927, %v929, %v925
  %v931 = vmul.f32 1.0, %v930
  %v932 = vrcp.pop %v916
  %v933 = vmul.f32 %v916, %v932
  %v934 = vsub.f32 1.0, %v933
  %v935 = vmul.f32 %v932, %v934
  %v936 = vadd.f32 %v932, %v935
  %vm937 = vweird.f32 %v916
  %vm938 = vweird.f32 %v932
  %vm939 = vmor %vm937, %vm938
  %v940 = vsel %vm939, %v932, %v936
  %v941 = vand.u32 2147483647, %v916
  %vm942 = vcmp.eq.f32.partialorder %v941, 8.507059e+37
  %v943 = vand.u32 %v916, 2147483648
  %v944 = vor.u32 1.1754944e-38, %v943
  %v945 = vsel %vm942, %v944, %v940
  %v946 = vmul.f32 1.0, %v945
  %947 = vrot.lane.b32.xlu0 %v903, 64
  %v948 = vpop.permute.xlu0 %947
  %949 = vrot.lane.b32.xlu0 %v904, 64
  %v950 = vpop.permute.xlu0 %949
  %v953 = vmul.f32 %v931, %v948
  %v954 = vmul.f32 %v946, %v950
  %957 = vrot.lane.b32.xlu0 %v953, 64
  %v958 = vpop.permute.xlu0 %957
  %959 = vrot.lane.b32.xlu0 %v954, 64
  %v960 = vpop.permute.xlu0 %959
  %v963 = vadd.f32 %v126, %v958
  %v964 = vadd.f32 %v132, %v960
  %v965 = vtanh.pop %v963
  %v966 = vtanh.pop %v964
  %v967 = vsub.f32 1.0, %v931
  %v968 = vsub.f32 1.0, %v946
  %971 = vrot.lane.b32.xlu0 %v965, 96
  %v972 = vpop.permute.xlu0 %971
  %973 = vrot.lane.b32.xlu0 %v966, 96
  %v974 = vpop.permute.xlu0 %973
  %v977 = vmul.f32 %v967, %v972
  %v978 = vmul.f32 %v968, %v974
  %v979 = vrot.slane %v697, 7
  %v980 = vrot.slane %v698, 7
  %v983 = vmul.f32 %v931, %v979
  %v984 = vmul.f32 %v946, %v980
  %v985 = vadd.f32 %v977, %v983
  %v986 = vadd.f32 %v978, %v984
  %v989 = vrot.slane %v873, 3
  %v990 = vrot.slane %v899, 3
  %v993 = vadd.f32 %v164, %v989
  %v994 = vadd.f32 %v170, %v990
  %v995 = vxor.u32 %v993, 2147483648
  %v996 = vxor.u32 %v994, 2147483648
  %v997 = vmul.f32 %v995, 1.442695
  %v998 = vpow.pop %v997
  %v999 = vmul.f32 %v996, 1.442695
  %v1000 = vpow.pop %v999
  %v1001 = vadd.f32 %v998, 1.0
  %v1002 = vadd.f32 %v1000, 1.0
  %v1003 = vrcp.pop %v1001
  %v1004 = vmul.f32 %v1001, %v1003
  %v1005 = vsub.f32 1.0, %v1004
  %v1006 = vmul.f32 %v1003, %v1005
  %v1007 = vadd.f32 %v1003, %v1006
  %vm1008 = vweird.f32 %v1001
  %vm1009 = vweird.f32 %v1003
  %vm1010 = vmor %vm1008, %vm1009
  %v1011 = vsel %vm1010, %v1003, %v1007
  %v1012 = vand.u32 2147483647, %v1001
  %vm1013 = vcmp.eq.f32.partialorder %v1012, 8.507059e+37
  %v1014 = vand.u32 %v1001, 2147483648
  %v1015 = vor.u32 1.1754944e-38, %v1014
  %v1016 = vsel %vm1013, %v1015, %v1011
  %v1017 = vmul.f32 1.0, %v1016
  %v1018 = vrcp.pop %v1002
  %v1019 = vmul.f32 %v1002, %v1018
  %v1020 = vsub.f32 1.0, %v1019
  %v1021 = vmul.f32 %v1018, %v1020
  %v1022 = vadd.f32 %v1018, %v1021
  %vm1023 = vweird.f32 %v1002
  %vm1024 = vweird.f32 %v1018
  %vm1025 = vmor %vm1023, %vm1024
  %v1026 = vsel %vm1025, %v1018, %v1022
  %v1027 = vand.u32 2147483647, %v1002
  %vm1028 = vcmp.eq.f32.partialorder %v1027, 8.507059e+37
  %v1029 = vand.u32 %v1002, 2147483648
  %v1030 = vor.u32 1.1754944e-38, %v1029
  %v1031 = vsel %vm1028, %v1030, %v1026
  %v1032 = vmul.f32 1.0, %v1031
  %1033 = vrot.lane.b32.xlu0 %v989, 64
  %v1034 = vpop.permute.xlu0 %1033
  %1035 = vrot.lane.b32.xlu0 %v990, 64
  %v1036 = vpop.permute.xlu0 %1035
  %v1039 = vmul.f32 %v1017, %v1034
  %v1040 = vmul.f32 %v1032, %v1036
  %1043 = vrot.lane.b32.xlu0 %v1039, 64
  %v1044 = vpop.permute.xlu0 %1043
  %1045 = vrot.lane.b32.xlu0 %v1040, 64
  %v1046 = vpop.permute.xlu0 %1045
  %v1049 = vadd.f32 %v164, %v1044
  %v1050 = vadd.f32 %v170, %v1046
  %v1051 = vtanh.pop %v1049
  %v1052 = vtanh.pop %v1050
  %v1053 = vsub.f32 1.0, %v1017
  %v1054 = vsub.f32 1.0, %v1032
  %1057 = vrot.lane.b32.xlu0 %v1051, 96
  %v1058 = vpop.permute.xlu0 %1057
  %1059 = vrot.lane.b32.xlu0 %v1052, 96
  %v1060 = vpop.permute.xlu0 %1059
  %v1063 = vmul.f32 %v1053, %v1058
  %v1064 = vmul.f32 %v1054, %v1060
  %v1065 = vrot.slane %v783, 1
  %v1066 = vrot.slane %v784, 1
  %v1069 = vmul.f32 %v1017, %v1065
  %v1070 = vmul.f32 %v1032, %v1066
  %v1071 = vadd.f32 %v1063, %v1069
  %v1072 = vadd.f32 %v1064, %v1070
  %1075 = vrot.lane.b32.xlu0 %v985, 96
  %v1076 = vpop.permute.xlu0 %1075
  %1077 = vrot.lane.b32.xlu0 %v986, 96
  %v1078 = vpop.permute.xlu0 %1077
  %vm1081 = vcmask 256002
  %1082 = vst.msk [vmem:[%s11] sm:$0x4] %vm1081, %v1076
  %1083 = vst.msk [vmem:[%s11 + $0x10] sm:$0x4] %vm1081, %v1078
  %vm1084 = vcmask 521477
  %1085 = vst.msk [vmem:[%s11 + $0x8] sm:$0x20] %vm1084, %v1071
  %1086 = vst.msk [vmem:[%s11 + $0x18] sm:$0x20] %vm1084, %v1072
  %v1087 = vrot.slane %v985, 2
  %1088 = vrot.lane.b32.xlu0 %v1087, 96
  %v1089 = vpop.permute.xlu0 %1088
  %v1090 = vsel %vm236, %v1089, 0
  %1092 = vmatpush.msra.mxu0 0.0
  %1093 = vmatpush.msra.mxu0 0.0
  %1094 = vmatpush.msra.mxu0 0.0
  %1095 = vmatpush.msra.mxu0 0.0
  %1096 = vmatpush.msra.mxu0 0.0
  %1097 = vmatpush.msra.mxu0 0.0
  %1098 = vmatpush.msra.mxu0 0.0
  %1099 = vmatpush.msra.mxu0 0.0
  %1100 = vmatpush.msra.mxu0 0.0
  %1101 = vmatpush.msra.mxu0 0.0
  %1102 = vmatpush.msra.mxu0 0.0
  %1103 = vmatpush.msra.mxu0 0.0
  %1104 = vmatpush.msra.mxu0 %v56
  %1105 = vmatpush.msra.mxu0 %v55
  %1106 = vmatpush.msra.mxu0 %v54
  %1107 = vmatpush.msra.mxu0 %v53
  %1108 = vmatmul.f32.gmra.mxu0 %v1090
  %v1109 = vpop.f32.mrf.mxu0
  %v1110 = vadd.f32 %v58, %v1109
  %1111 = vdwg.mxu0
  %v1112 = vrot.slane %v986, 2
  %1113 = vrot.lane.b32.xlu0 %v1112, 96
  %v1114 = vpop.permute.xlu0 %1113
  %v1115 = vsel %vm236, %v1114, 0
  %1117 = vmatpush.msra.mxu0 0.0
  %1118 = vmatpush.msra.mxu0 0.0
  %1119 = vmatpush.msra.mxu0 0.0
  %1120 = vmatpush.msra.mxu0 0.0
  %1121 = vmatpush.msra.mxu0 0.0
  %1122 = vmatpush.msra.mxu0 0.0
  %1123 = vmatpush.msra.mxu0 0.0
  %1124 = vmatpush.msra.mxu0 0.0
  %1125 = vmatpush.msra.mxu0 0.0
  %1126 = vmatpush.msra.mxu0 0.0
  %1127 = vmatpush.msra.mxu0 0.0
  %1128 = vmatpush.msra.mxu0 0.0
  %1129 = vmatpush.msra.mxu0 %v56
  %1130 = vmatpush.msra.mxu0 %v55
  %1131 = vmatpush.msra.mxu0 %v54
  %1132 = vmatpush.msra.mxu0 %v53
  %1133 = vmatmul.f32.gmra.mxu0 %v1115
  %v1134 = vpop.f32.mrf.mxu0
  %v1135 = vadd.f32 %v58, %v1134
  %1136 = vdwg.mxu0
  %v1138 = vrot.slane %v1071, 5
  %1139 = vrot.lane.b32.xlu0 %v1138, 96
  %v1140 = vpop.permute.xlu0 %1139
  %v1141 = vsel %vm236, %v1140, 0
  %1143 = vmatpush.msra.mxu0 0.0
  %1144 = vmatpush.msra.mxu0 0.0
  %1145 = vmatpush.msra.mxu0 0.0
  %1146 = vmatpush.msra.mxu0 0.0
  %1147 = vmatpush.msra.mxu0 0.0
  %1148 = vmatpush.msra.mxu0 0.0
  %1149 = vmatpush.msra.mxu0 0.0
  %1150 = vmatpush.msra.mxu0 0.0
  %1151 = vmatpush.msra.mxu0 0.0
  %1152 = vmatpush.msra.mxu0 0.0
  %1153 = vmatpush.msra.mxu0 0.0
  %1154 = vmatpush.msra.mxu0 0.0
  %1155 = vmatpush.msra.mxu0 %v73
  %1156 = vmatpush.msra.mxu0 %v72
  %1157 = vmatpush.msra.mxu0 %v71
  %1158 = vmatpush.msra.mxu0 %v70
  %1159 = vmatmul.f32.gmra.mxu0 %v1141
  %v1160 = vpop.f32.mrf.mxu0
  %v1161 = vadd.f32 %v75, %v1160
  %1162 = vdwg.mxu0
  %v1164 = vrot.slane %v1072, 5
  %1165 = vrot.lane.b32.xlu0 %v1164, 96
  %v1166 = vpop.permute.xlu0 %1165
  %v1167 = vsel %vm236, %v1166, 0
  %1169 = vmatpush.msra.mxu0 0.0
  %1170 = vmatpush.msra.mxu0 0.0
  %1171 = vmatpush.msra.mxu0 0.0
  %1172 = vmatpush.msra.mxu0 0.0
  %1173 = vmatpush.msra.mxu0 0.0
  %1174 = vmatpush.msra.mxu0 0.0
  %1175 = vmatpush.msra.mxu0 0.0
  %1176 = vmatpush.msra.mxu0 0.0
  %1177 = vmatpush.msra.mxu0 0.0
  %1178 = vmatpush.msra.mxu0 0.0
  %1179 = vmatpush.msra.mxu0 0.0
  %1180 = vmatpush.msra.mxu0 0.0
  %1181 = vmatpush.msra.mxu0 %v73
  %1182 = vmatpush.msra.mxu0 %v72
  %1183 = vmatpush.msra.mxu0 %v71
  %1184 = vmatpush.msra.mxu0 %v70
  %1185 = vmatmul.f32.gmra.mxu0 %v1167
  %v1186 = vpop.f32.mrf.mxu0
  %v1187 = vadd.f32 %v75, %v1186
  %1188 = vdwg.mxu0
  %v1191 = vrot.slane %v1110, 5
  %v1192 = vrot.slane %v1135, 5
  %v1195 = vadd.f32 %v126, %v1191
  %v1196 = vadd.f32 %v132, %v1192
  %v1197 = vxor.u32 %v1195, 2147483648
  %v1198 = vxor.u32 %v1196, 2147483648
  %v1199 = vmul.f32 %v1197, 1.442695
  %v1200 = vpow.pop %v1199
  %v1201 = vmul.f32 %v1198, 1.442695
  %v1202 = vpow.pop %v1201
  %v1203 = vadd.f32 %v1200, 1.0
  %v1204 = vadd.f32 %v1202, 1.0
  %v1205 = vrcp.pop %v1203
  %v1206 = vmul.f32 %v1203, %v1205
  %v1207 = vsub.f32 1.0, %v1206
  %v1208 = vmul.f32 %v1205, %v1207
  %v1209 = vadd.f32 %v1205, %v1208
  %vm1210 = vweird.f32 %v1203
  %vm1211 = vweird.f32 %v1205
  %vm1212 = vmor %vm1210, %vm1211
  %v1213 = vsel %vm1212, %v1205, %v1209
  %v1214 = vand.u32 2147483647, %v1203
  %vm1215 = vcmp.eq.f32.partialorder %v1214, 8.507059e+37
  %v1216 = vand.u32 %v1203, 2147483648
  %v1217 = vor.u32 1.1754944e-38, %v1216
  %v1218 = vsel %vm1215, %v1217, %v1213
  %v1219 = vmul.f32 1.0, %v1218
  %v1220 = vrcp.pop %v1204
  %v1221 = vmul.f32 %v1204, %v1220
  %v1222 = vsub.f32 1.0, %v1221
  %v1223 = vmul.f32 %v1220, %v1222
  %v1224 = vadd.f32 %v1220, %v1223
  %vm1225 = vweird.f32 %v1204
  %vm1226 = vweird.f32 %v1220
  %vm1227 = vmor %vm1225, %vm1226
  %v1228 = vsel %vm1227, %v1220, %v1224
  %v1229 = vand.u32 2147483647, %v1204
  %vm1230 = vcmp.eq.f32.partialorder %v1229, 8.507059e+37
  %v1231 = vand.u32 %v1204, 2147483648
  %v1232 = vor.u32 1.1754944e-38, %v1231
  %v1233 = vsel %vm1230, %v1232, %v1228
  %v1234 = vmul.f32 1.0, %v1233
  %1235 = vrot.lane.b32.xlu0 %v1191, 64
  %v1236 = vpop.permute.xlu0 %1235
  %1237 = vrot.lane.b32.xlu0 %v1192, 64
  %v1238 = vpop.permute.xlu0 %1237
  %v1241 = vmul.f32 %v1219, %v1236
  %v1242 = vmul.f32 %v1234, %v1238
  %1245 = vrot.lane.b32.xlu0 %v1241, 64
  %v1246 = vpop.permute.xlu0 %1245
  %1247 = vrot.lane.b32.xlu0 %v1242, 64
  %v1248 = vpop.permute.xlu0 %1247
  %v1251 = vadd.f32 %v126, %v1246
  %v1252 = vadd.f32 %v132, %v1248
  %v1253 = vtanh.pop %v1251
  %v1254 = vtanh.pop %v1252
  %v1255 = vsub.f32 1.0, %v1219
  %v1256 = vsub.f32 1.0, %v1234
  %1259 = vrot.lane.b32.xlu0 %v1253, 96
  %v1260 = vpop.permute.xlu0 %1259
  %1261 = vrot.lane.b32.xlu0 %v1254, 96
  %v1262 = vpop.permute.xlu0 %1261
  %v1265 = vmul.f32 %v1255, %v1260
  %v1266 = vmul.f32 %v1256, %v1262
  %v1267 = vrot.slane %v985, 7
  %v1268 = vrot.slane %v986, 7
  %v1271 = vmul.f32 %v1219, %v1267
  %v1272 = vmul.f32 %v1234, %v1268
  %v1273 = vadd.f32 %v1265, %v1271
  %v1274 = vadd.f32 %v1266, %v1272
  %v1277 = vrot.slane %v1161, 4
  %v1278 = vrot.slane %v1187, 4
  %v1281 = vadd.f32 %v164, %v1277
  %v1282 = vadd.f32 %v170, %v1278
  %v1283 = vxor.u32 %v1281, 2147483648
  %v1284 = vxor.u32 %v1282, 2147483648
  %v1285 = vmul.f32 %v1283, 1.442695
  %v1286 = vpow.pop %v1285
  %v1287 = vmul.f32 %v1284, 1.442695
  %v1288 = vpow.pop %v1287
  %v1289 = vadd.f32 %v1286, 1.0
  %v1290 = vadd.f32 %v1288, 1.0
  %v1291 = vrcp.pop %v1289
  %v1292 = vmul.f32 %v1289, %v1291
  %v1293 = vsub.f32 1.0, %v1292
  %v1294 = vmul.f32 %v1291, %v1293
  %v1295 = vadd.f32 %v1291, %v1294
  %vm1296 = vweird.f32 %v1289
  %vm1297 = vweird.f32 %v1291
  %vm1298 = vmor %vm1296, %vm1297
  %v1299 = vsel %vm1298, %v1291, %v1295
  %v1300 = vand.u32 2147483647, %v1289
  %vm1301 = vcmp.eq.f32.partialorder %v1300, 8.507059e+37
  %v1302 = vand.u32 %v1289, 2147483648
  %v1303 = vor.u32 1.1754944e-38, %v1302
  %v1304 = vsel %vm1301, %v1303, %v1299
  %v1305 = vmul.f32 1.0, %v1304
  %v1306 = vrcp.pop %v1290
  %v1307 = vmul.f32 %v1290, %v1306
  %v1308 = vsub.f32 1.0, %v1307
  %v1309 = vmul.f32 %v1306, %v1308
  %v1310 = vadd.f32 %v1306, %v1309
  %vm1311 = vweird.f32 %v1290
  %vm1312 = vweird.f32 %v1306
  %vm1313 = vmor %vm1311, %vm1312
  %v1314 = vsel %vm1313, %v1306, %v1310
  %v1315 = vand.u32 2147483647, %v1290
  %vm1316 = vcmp.eq.f32.partialorder %v1315, 8.507059e+37
  %v1317 = vand.u32 %v1290, 2147483648
  %v1318 = vor.u32 1.1754944e-38, %v1317
  %v1319 = vsel %vm1316, %v1318, %v1314
  %v1320 = vmul.f32 1.0, %v1319
  %1321 = vrot.lane.b32.xlu0 %v1277, 64
  %v1322 = vpop.permute.xlu0 %1321
  %1323 = vrot.lane.b32.xlu0 %v1278, 64
  %v1324 = vpop.permute.xlu0 %1323
  %v1327 = vmul.f32 %v1305, %v1322
  %v1328 = vmul.f32 %v1320, %v1324
  %1331 = vrot.lane.b32.xlu0 %v1327, 64
  %v1332 = vpop.permute.xlu0 %1331
  %1333 = vrot.lane.b32.xlu0 %v1328, 64
  %v1334 = vpop.permute.xlu0 %1333
  %v1337 = vadd.f32 %v164, %v1332
  %v1338 = vadd.f32 %v170, %v1334
  %v1339 = vtanh.pop %v1337
  %v1340 = vtanh.pop %v1338
  %v1341 = vsub.f32 1.0, %v1305
  %v1342 = vsub.f32 1.0, %v1320
  %1345 = vrot.lane.b32.xlu0 %v1339, 96
  %v1346 = vpop.permute.xlu0 %1345
  %1347 = vrot.lane.b32.xlu0 %v1340, 96
  %v1348 = vpop.permute.xlu0 %1347
  %v1351 = vmul.f32 %v1341, %v1346
  %v1352 = vmul.f32 %v1342, %v1348
  %v1353 = vrot.slane %v1071, 1
  %v1354 = vrot.slane %v1072, 1
  %v1357 = vmul.f32 %v1305, %v1353
  %v1358 = vmul.f32 %v1320, %v1354
  %v1359 = vadd.f32 %v1351, %v1357
  %v1360 = vadd.f32 %v1352, %v1358
  %1363 = vrot.lane.b32.xlu0 %v1273, 96
  %v1364 = vpop.permute.xlu0 %1363
  %1365 = vrot.lane.b32.xlu0 %v1274, 96
  %v1366 = vpop.permute.xlu0 %1365
  %vm1369 = vcmask 257027
  %1370 = vst.msk [vmem:[%s11] sm:$0x8] %vm1369, %v1364
  %1371 = vst.msk [vmem:[%s11 + $0x10] sm:$0x8] %vm1369, %v1366
  %vm1372 = vcmask 520452
  %1373 = vst.msk [vmem:[%s11 + $0x8] sm:$0x10] %vm1372, %v1359
  %1374 = vst.msk [vmem:[%s11 + $0x18] sm:$0x10] %vm1372, %v1360
  %v1375 = vrot.slane %v1273, 3
  %1376 = vrot.lane.b32.xlu0 %v1375, 96
  %v1377 = vpop.permute.xlu0 %1376
  %v1378 = vsel %vm236, %v1377, 0
  %1380 = vmatpush.msra.mxu0 0.0
  %1381 = vmatpush.msra.mxu0 0.0
  %1382 = vmatpush.msra.mxu0 0.0
  %1383 = vmatpush.msra.mxu0 0.0
  %1384 = vmatpush.msra.mxu0 0.0
  %1385 = vmatpush.msra.mxu0 0.0
  %1386 = vmatpush.msra.mxu0 0.0
  %1387 = vmatpush.msra.mxu0 0.0
  %1388 = vmatpush.msra.mxu0 0.0
  %1389 = vmatpush.msra.mxu0 0.0
  %1390 = vmatpush.msra.mxu0 0.0
  %1391 = vmatpush.msra.mxu0 0.0
  %1392 = vmatpush.msra.mxu0 %v56
  %1393 = vmatpush.msra.mxu0 %v55
  %1394 = vmatpush.msra.mxu0 %v54
  %1395 = vmatpush.msra.mxu0 %v53
  %1396 = vmatmul.f32.gmra.mxu0 %v1378
  %v1397 = vpop.f32.mrf.mxu0
  %v1398 = vadd.f32 %v58, %v1397
  %1399 = vdwg.mxu0
  %v1400 = vrot.slane %v1274, 3
  %1401 = vrot.lane.b32.xlu0 %v1400, 96
  %v1402 = vpop.permute.xlu0 %1401
  %v1403 = vsel %vm236, %v1402, 0
  %1405 = vmatpush.msra.mxu0 0.0
  %1406 = vmatpush.msra.mxu0 0.0
  %1407 = vmatpush.msra.mxu0 0.0
  %1408 = vmatpush.msra.mxu0 0.0
  %1409 = vmatpush.msra.mxu0 0.0
  %1410 = vmatpush.msra.mxu0 0.0
  %1411 = vmatpush.msra.mxu0 0.0
  %1412 = vmatpush.msra.mxu0 0.0
  %1413 = vmatpush.msra.mxu0 0.0
  %1414 = vmatpush.msra.mxu0 0.0
  %1415 = vmatpush.msra.mxu0 0.0
  %1416 = vmatpush.msra.mxu0 0.0
  %1417 = vmatpush.msra.mxu0 %v56
  %1418 = vmatpush.msra.mxu0 %v55
  %1419 = vmatpush.msra.mxu0 %v54
  %1420 = vmatpush.msra.mxu0 %v53
  %1421 = vmatmul.f32.gmra.mxu0 %v1403
  %v1422 = vpop.f32.mrf.mxu0
  %v1423 = vadd.f32 %v58, %v1422
  %1424 = vdwg.mxu0
  %v1426 = vrot.slane %v1359, 4
  %1427 = vrot.lane.b32.xlu0 %v1426, 96
  %v1428 = vpop.permute.xlu0 %1427
  %v1429 = vsel %vm236, %v1428, 0
  %1431 = vmatpush.msra.mxu0 0.0
  %1432 = vmatpush.msra.mxu0 0.0
  %1433 = vmatpush.msra.mxu0 0.0
  %1434 = vmatpush.msra.mxu0 0.0
  %1435 = vmatpush.msra.mxu0 0.0
  %1436 = vmatpush.msra.mxu0 0.0
  %1437 = vmatpush.msra.mxu0 0.0
  %1438 = vmatpush.msra.mxu0 0.0
  %1439 = vmatpush.msra.mxu0 0.0
  %1440 = vmatpush.msra.mxu0 0.0
  %1441 = vmatpush.msra.mxu0 0.0
  %1442 = vmatpush.msra.mxu0 0.0
  %1443 = vmatpush.msra.mxu0 %v73
  %1444 = vmatpush.msra.mxu0 %v72
  %1445 = vmatpush.msra.mxu0 %v71
  %1446 = vmatpush.msra.mxu0 %v70
  %1447 = vmatmul.f32.gmra.mxu0 %v1429
  %v1448 = vpop.f32.mrf.mxu0
  %v1449 = vadd.f32 %v75, %v1448
  %1450 = vdwg.mxu0
  %v1452 = vrot.slane %v1360, 4
  %1453 = vrot.lane.b32.xlu0 %v1452, 96
  %v1454 = vpop.permute.xlu0 %1453
  %v1455 = vsel %vm236, %v1454, 0
  %1457 = vmatpush.msra.mxu0 0.0
  %1458 = vmatpush.msra.mxu0 0.0
  %1459 = vmatpush.msra.mxu0 0.0
  %1460 = vmatpush.msra.mxu0 0.0
  %1461 = vmatpush.msra.mxu0 0.0
  %1462 = vmatpush.msra.mxu0 0.0
  %1463 = vmatpush.msra.mxu0 0.0
  %1464 = vmatpush.msra.mxu0 0.0
  %1465 = vmatpush.msra.mxu0 0.0
  %1466 = vmatpush.msra.mxu0 0.0
  %1467 = vmatpush.msra.mxu0 0.0
  %1468 = vmatpush.msra.mxu0 0.0
  %1469 = vmatpush.msra.mxu0 %v73
  %1470 = vmatpush.msra.mxu0 %v72
  %1471 = vmatpush.msra.mxu0 %v71
  %1472 = vmatpush.msra.mxu0 %v70
  %1473 = vmatmul.f32.gmra.mxu0 %v1455
  %v1474 = vpop.f32.mrf.mxu0
  %v1475 = vadd.f32 %v75, %v1474
  %1476 = vdwg.mxu0
  %v1479 = vrot.slane %v1398, 4
  %v1480 = vrot.slane %v1423, 4
  %v1483 = vadd.f32 %v126, %v1479
  %v1484 = vadd.f32 %v132, %v1480
  %v1485 = vxor.u32 %v1483, 2147483648
  %v1486 = vxor.u32 %v1484, 2147483648
  %v1487 = vmul.f32 %v1485, 1.442695
  %v1488 = vpow.pop %v1487
  %v1489 = vmul.f32 %v1486, 1.442695
  %v1490 = vpow.pop %v1489
  %v1491 = vadd.f32 %v1488, 1.0
  %v1492 = vadd.f32 %v1490, 1.0
  %v1493 = vrcp.pop %v1491
  %v1494 = vmul.f32 %v1491, %v1493
  %v1495 = vsub.f32 1.0, %v1494
  %v1496 = vmul.f32 %v1493, %v1495
  %v1497 = vadd.f32 %v1493, %v1496
  %vm1498 = vweird.f32 %v1491
  %vm1499 = vweird.f32 %v1493
  %vm1500 = vmor %vm1498, %vm1499
  %v1501 = vsel %vm1500, %v1493, %v1497
  %v1502 = vand.u32 2147483647, %v1491
  %vm1503 = vcmp.eq.f32.partialorder %v1502, 8.507059e+37
  %v1504 = vand.u32 %v1491, 2147483648
  %v1505 = vor.u32 1.1754944e-38, %v1504
  %v1506 = vsel %vm1503, %v1505, %v1501
  %v1507 = vmul.f32 1.0, %v1506
  %v1508 = vrcp.pop %v1492
  %v1509 = vmul.f32 %v1492, %v1508
  %v1510 = vsub.f32 1.0, %v1509
  %v1511 = vmul.f32 %v1508, %v1510
  %v1512 = vadd.f32 %v1508, %v1511
  %vm1513 = vweird.f32 %v1492
  %vm1514 = vweird.f32 %v1508
  %vm1515 = vmor %vm1513, %vm1514
  %v1516 = vsel %vm1515, %v1508, %v1512
  %v1517 = vand.u32 2147483647, %v1492
  %vm1518 = vcmp.eq.f32.partialorder %v1517, 8.507059e+37
  %v1519 = vand.u32 %v1492, 2147483648
  %v1520 = vor.u32 1.1754944e-38, %v1519
  %v1521 = vsel %vm1518, %v1520, %v1516
  %v1522 = vmul.f32 1.0, %v1521
  %1523 = vrot.lane.b32.xlu0 %v1479, 64
  %v1524 = vpop.permute.xlu0 %1523
  %1525 = vrot.lane.b32.xlu0 %v1480, 64
  %v1526 = vpop.permute.xlu0 %1525
  %v1529 = vmul.f32 %v1507, %v1524
  %v1530 = vmul.f32 %v1522, %v1526
  %1533 = vrot.lane.b32.xlu0 %v1529, 64
  %v1534 = vpop.permute.xlu0 %1533
  %1535 = vrot.lane.b32.xlu0 %v1530, 64
  %v1536 = vpop.permute.xlu0 %1535
  %v1539 = vadd.f32 %v126, %v1534
  %v1540 = vadd.f32 %v132, %v1536
  %v1541 = vtanh.pop %v1539
  %v1542 = vtanh.pop %v1540
  %v1543 = vsub.f32 1.0, %v1507
  %v1544 = vsub.f32 1.0, %v1522
  %1547 = vrot.lane.b32.xlu0 %v1541, 96
  %v1548 = vpop.permute.xlu0 %1547
  %1549 = vrot.lane.b32.xlu0 %v1542, 96
  %v1550 = vpop.permute.xlu0 %1549
  %v1553 = vmul.f32 %v1543, %v1548
  %v1554 = vmul.f32 %v1544, %v1550
  %v1555 = vrot.slane %v1273, 7
  %v1556 = vrot.slane %v1274, 7
  %v1559 = vmul.f32 %v1507, %v1555
  %v1560 = vmul.f32 %v1522, %v1556
  %v1561 = vadd.f32 %v1553, %v1559
  %v1562 = vadd.f32 %v1554, %v1560
  %v1565 = vrot.slane %v1449, 5
  %v1566 = vrot.slane %v1475, 5
  %v1569 = vadd.f32 %v164, %v1565
  %v1570 = vadd.f32 %v170, %v1566
  %v1571 = vxor.u32 %v1569, 2147483648
  %v1572 = vxor.u32 %v1570, 2147483648
  %v1573 = vmul.f32 %v1571, 1.442695
  %v1574 = vpow.pop %v1573
  %v1575 = vmul.f32 %v1572, 1.442695
  %v1576 = vpow.pop %v1575
  %v1577 = vadd.f32 %v1574, 1.0
  %v1578 = vadd.f32 %v1576, 1.0
  %v1579 = vrcp.pop %v1577
  %v1580 = vmul.f32 %v1577, %v1579
  %v1581 = vsub.f32 1.0, %v1580
  %v1582 = vmul.f32 %v1579, %v1581
  %v1583 = vadd.f32 %v1579, %v1582
  %vm1584 = vweird.f32 %v1577
  %vm1585 = vweird.f32 %v1579
  %vm1586 = vmor %vm1584, %vm1585
  %v1587 = vsel %vm1586, %v1579, %v1583
  %v1588 = vand.u32 2147483647, %v1577
  %vm1589 = vcmp.eq.f32.partialorder %v1588, 8.507059e+37
  %v1590 = vand.u32 %v1577, 2147483648
  %v1591 = vor.u32 1.1754944e-38, %v1590
  %v1592 = vsel %vm1589, %v1591, %v1587
  %v1593 = vmul.f32 1.0, %v1592
  %v1594 = vrcp.pop %v1578
  %v1595 = vmul.f32 %v1578, %v1594
  %v1596 = vsub.f32 1.0, %v1595
  %v1597 = vmul.f32 %v1594, %v1596
  %v1598 = vadd.f32 %v1594, %v1597
  %vm1599 = vweird.f32 %v1578
  %vm1600 = vweird.f32 %v1594
  %vm1601 = vmor %vm1599, %vm1600
  %v1602 = vsel %vm1601, %v1594, %v1598
  %v1603 = vand.u32 2147483647, %v1578
  %vm1604 = vcmp.eq.f32.partialorder %v1603, 8.507059e+37
  %v1605 = vand.u32 %v1578, 2147483648
  %v1606 = vor.u32 1.1754944e-38, %v1605
  %v1607 = vsel %vm1604, %v1606, %v1602
  %v1608 = vmul.f32 1.0, %v1607
  %1609 = vrot.lane.b32.xlu0 %v1565, 64
  %v1610 = vpop.permute.xlu0 %1609
  %1611 = vrot.lane.b32.xlu0 %v1566, 64
  %v1612 = vpop.permute.xlu0 %1611
  %v1615 = vmul.f32 %v1593, %v1610
  %v1616 = vmul.f32 %v1608, %v1612
  %1619 = vrot.lane.b32.xlu0 %v1615, 64
  %v1620 = vpop.permute.xlu0 %1619
  %1621 = vrot.lane.b32.xlu0 %v1616, 64
  %v1622 = vpop.permute.xlu0 %1621
  %v1625 = vadd.f32 %v164, %v1620
  %v1626 = vadd.f32 %v170, %v1622
  %v1627 = vtanh.pop %v1625
  %v1628 = vtanh.pop %v1626
  %v1629 = vsub.f32 1.0, %v1593
  %v1630 = vsub.f32 1.0, %v1608
  %1633 = vrot.lane.b32.xlu0 %v1627, 96
  %v1634 = vpop.permute.xlu0 %1633
  %1635 = vrot.lane.b32.xlu0 %v1628, 96
  %v1636 = vpop.permute.xlu0 %1635
  %v1639 = vmul.f32 %v1629, %v1634
  %v1640 = vmul.f32 %v1630, %v1636
  %v1641 = vrot.slane %v1359, 1
  %v1642 = vrot.slane %v1360, 1
  %v1645 = vmul.f32 %v1593, %v1641
  %v1646 = vmul.f32 %v1608, %v1642
  %v1647 = vadd.f32 %v1639, %v1645
  %v1648 = vadd.f32 %v1640, %v1646
  %1651 = vrot.lane.b32.xlu0 %v1561, 96
  %v1652 = vpop.permute.xlu0 %1651
  %1653 = vrot.lane.b32.xlu0 %v1562, 96
  %v1654 = vpop.permute.xlu0 %1653
  %vm1657 = vcmask 258052
  %1658 = vst.msk [vmem:[%s11] sm:$0x10] %vm1657, %v1652
  %1659 = vst.msk [vmem:[%s11 + $0x10] sm:$0x10] %vm1657, %v1654
  %vm1660 = vcmask 519427
  %1661 = vst.msk [vmem:[%s11 + $0x8] sm:$0x8] %vm1660, %v1647
  %1662 = vst.msk [vmem:[%s11 + $0x18] sm:$0x8] %vm1660, %v1648
  %v1663 = vrot.slane %v1561, 4
  %1664 = vrot.lane.b32.xlu0 %v1663, 96
  %v1665 = vpop.permute.xlu0 %1664
  %v1666 = vsel %vm236, %v1665, 0
  %1668 = vmatpush.msra.mxu0 0.0
  %1669 = vmatpush.msra.mxu0 0.0
  %1670 = vmatpush.msra.mxu0 0.0
  %1671 = vmatpush.msra.mxu0 0.0
  %1672 = vmatpush.msra.mxu0 0.0
  %1673 = vmatpush.msra.mxu0 0.0
  %1674 = vmatpush.msra.mxu0 0.0
  %1675 = vmatpush.msra.mxu0 0.0
  %1676 = vmatpush.msra.mxu0 0.0
  %1677 = vmatpush.msra.mxu0 0.0
  %1678 = vmatpush.msra.mxu0 0.0
  %1679 = vmatpush.msra.mxu0 0.0
  %1680 = vmatpush.msra.mxu0 %v56
  %1681 = vmatpush.msra.mxu0 %v55
  %1682 = vmatpush.msra.mxu0 %v54
  %1683 = vmatpush.msra.mxu0 %v53
  %1684 = vmatmul.f32.gmra.mxu0 %v1666
  %v1685 = vpop.f32.mrf.mxu0
  %v1686 = vadd.f32 %v58, %v1685
  %1687 = vdwg.mxu0
  %v1688 = vrot.slane %v1562, 4
  %1689 = vrot.lane.b32.xlu0 %v1688, 96
  %v1690 = vpop.permute.xlu0 %1689
  %v1691 = vsel %vm236, %v1690, 0
  %1693 = vmatpush.msra.mxu0 0.0
  %1694 = vmatpush.msra.mxu0 0.0
  %1695 = vmatpush.msra.mxu0 0.0
  %1696 = vmatpush.msra.mxu0 0.0
  %1697 = vmatpush.msra.mxu0 0.0
  %1698 = vmatpush.msra.mxu0 0.0
  %1699 = vmatpush.msra.mxu0 0.0
  %1700 = vmatpush.msra.mxu0 0.0
  %1701 = vmatpush.msra.mxu0 0.0
  %1702 = vmatpush.msra.mxu0 0.0
  %1703 = vmatpush.msra.mxu0 0.0
  %1704 = vmatpush.msra.mxu0 0.0
  %1705 = vmatpush.msra.mxu0 %v56
  %1706 = vmatpush.msra.mxu0 %v55
  %1707 = vmatpush.msra.mxu0 %v54
  %1708 = vmatpush.msra.mxu0 %v53
  %1709 = vmatmul.f32.gmra.mxu0 %v1691
  %v1710 = vpop.f32.mrf.mxu0
  %v1711 = vadd.f32 %v58, %v1710
  %1712 = vdwg.mxu0
  %v1714 = vrot.slane %v1647, 3
  %1715 = vrot.lane.b32.xlu0 %v1714, 96
  %v1716 = vpop.permute.xlu0 %1715
  %v1717 = vsel %vm236, %v1716, 0
  %1719 = vmatpush.msra.mxu0 0.0
  %1720 = vmatpush.msra.mxu0 0.0
  %1721 = vmatpush.msra.mxu0 0.0
  %1722 = vmatpush.msra.mxu0 0.0
  %1723 = vmatpush.msra.mxu0 0.0
  %1724 = vmatpush.msra.mxu0 0.0
  %1725 = vmatpush.msra.mxu0 0.0
  %1726 = vmatpush.msra.mxu0 0.0
  %1727 = vmatpush.msra.mxu0 0.0
  %1728 = vmatpush.msra.mxu0 0.0
  %1729 = vmatpush.msra.mxu0 0.0
  %1730 = vmatpush.msra.mxu0 0.0
  %1731 = vmatpush.msra.mxu0 %v73
  %1732 = vmatpush.msra.mxu0 %v72
  %1733 = vmatpush.msra.mxu0 %v71
  %1734 = vmatpush.msra.mxu0 %v70
  %1735 = vmatmul.f32.gmra.mxu0 %v1717
  %v1736 = vpop.f32.mrf.mxu0
  %v1737 = vadd.f32 %v75, %v1736
  %1738 = vdwg.mxu0
  %v1740 = vrot.slane %v1648, 3
  %1741 = vrot.lane.b32.xlu0 %v1740, 96
  %v1742 = vpop.permute.xlu0 %1741
  %v1743 = vsel %vm236, %v1742, 0
  %1745 = vmatpush.msra.mxu0 0.0
  %1746 = vmatpush.msra.mxu0 0.0
  %1747 = vmatpush.msra.mxu0 0.0
  %1748 = vmatpush.msra.mxu0 0.0
  %1749 = vmatpush.msra.mxu0 0.0
  %1750 = vmatpush.msra.mxu0 0.0
  %1751 = vmatpush.msra.mxu0 0.0
  %1752 = vmatpush.msra.mxu0 0.0
  %1753 = vmatpush.msra.mxu0 0.0
  %1754 = vmatpush.msra.mxu0 0.0
  %1755 = vmatpush.msra.mxu0 0.0
  %1756 = vmatpush.msra.mxu0 0.0
  %1757 = vmatpush.msra.mxu0 %v73
  %1758 = vmatpush.msra.mxu0 %v72
  %1759 = vmatpush.msra.mxu0 %v71
  %1760 = vmatpush.msra.mxu0 %v70
  %1761 = vmatmul.f32.gmra.mxu0 %v1743
  %v1762 = vpop.f32.mrf.mxu0
  %v1763 = vadd.f32 %v75, %v1762
  %1764 = vdwg.mxu0
  %v1767 = vrot.slane %v1686, 3
  %v1768 = vrot.slane %v1711, 3
  %v1771 = vadd.f32 %v126, %v1767
  %v1772 = vadd.f32 %v132, %v1768
  %v1773 = vxor.u32 %v1771, 2147483648
  %v1774 = vxor.u32 %v1772, 2147483648
  %v1775 = vmul.f32 %v1773, 1.442695
  %v1776 = vpow.pop %v1775
  %v1777 = vmul.f32 %v1774, 1.442695
  %v1778 = vpow.pop %v1777
  %v1779 = vadd.f32 %v1776, 1.0
  %v1780 = vadd.f32 %v1778, 1.0
  %v1781 = vrcp.pop %v1779
  %v1782 = vmul.f32 %v1779, %v1781
  %v1783 = vsub.f32 1.0, %v1782
  %v1784 = vmul.f32 %v1781, %v1783
  %v1785 = vadd.f32 %v1781, %v1784
  %vm1786 = vweird.f32 %v1779
  %vm1787 = vweird.f32 %v1781
  %vm1788 = vmor %vm1786, %vm1787
  %v1789 = vsel %vm1788, %v1781, %v1785
  %v1790 = vand.u32 2147483647, %v1779
  %vm1791 = vcmp.eq.f32.partialorder %v1790, 8.507059e+37
  %v1792 = vand.u32 %v1779, 2147483648
  %v1793 = vor.u32 1.1754944e-38, %v1792
  %v1794 = vsel %vm1791, %v1793, %v1789
  %v1795 = vmul.f32 1.0, %v1794
  %v1796 = vrcp.pop %v1780
  %v1797 = vmul.f32 %v1780, %v1796
  %v1798 = vsub.f32 1.0, %v1797
  %v1799 = vmul.f32 %v1796, %v1798
  %v1800 = vadd.f32 %v1796, %v1799
  %vm1801 = vweird.f32 %v1780
  %vm1802 = vweird.f32 %v1796
  %vm1803 = vmor %vm1801, %vm1802
  %v1804 = vsel %vm1803, %v1796, %v1800
  %v1805 = vand.u32 2147483647, %v1780
  %vm1806 = vcmp.eq.f32.partialorder %v1805, 8.507059e+37
  %v1807 = vand.u32 %v1780, 2147483648
  %v1808 = vor.u32 1.1754944e-38, %v1807
  %v1809 = vsel %vm1806, %v1808, %v1804
  %v1810 = vmul.f32 1.0, %v1809
  %1811 = vrot.lane.b32.xlu0 %v1767, 64
  %v1812 = vpop.permute.xlu0 %1811
  %1813 = vrot.lane.b32.xlu0 %v1768, 64
  %v1814 = vpop.permute.xlu0 %1813
  %v1817 = vmul.f32 %v1795, %v1812
  %v1818 = vmul.f32 %v1810, %v1814
  %1821 = vrot.lane.b32.xlu0 %v1817, 64
  %v1822 = vpop.permute.xlu0 %1821
  %1823 = vrot.lane.b32.xlu0 %v1818, 64
  %v1824 = vpop.permute.xlu0 %1823
  %v1827 = vadd.f32 %v126, %v1822
  %v1828 = vadd.f32 %v132, %v1824
  %v1829 = vtanh.pop %v1827
  %v1830 = vtanh.pop %v1828
  %v1831 = vsub.f32 1.0, %v1795
  %v1832 = vsub.f32 1.0, %v1810
  %1835 = vrot.lane.b32.xlu0 %v1829, 96
  %v1836 = vpop.permute.xlu0 %1835
  %1837 = vrot.lane.b32.xlu0 %v1830, 96
  %v1838 = vpop.permute.xlu0 %1837
  %v1841 = vmul.f32 %v1831, %v1836
  %v1842 = vmul.f32 %v1832, %v1838
  %v1843 = vrot.slane %v1561, 7
  %v1844 = vrot.slane %v1562, 7
  %v1847 = vmul.f32 %v1795, %v1843
  %v1848 = vmul.f32 %v1810, %v1844
  %v1849 = vadd.f32 %v1841, %v1847
  %v1850 = vadd.f32 %v1842, %v1848
  %v1853 = vrot.slane %v1737, 6
  %v1854 = vrot.slane %v1763, 6
  %v1857 = vadd.f32 %v164, %v1853
  %v1858 = vadd.f32 %v170, %v1854
  %v1859 = vxor.u32 %v1857, 2147483648
  %v1860 = vxor.u32 %v1858, 2147483648
  %v1861 = vmul.f32 %v1859, 1.442695
  %v1862 = vpow.pop %v1861
  %v1863 = vmul.f32 %v1860, 1.442695
  %v1864 = vpow.pop %v1863
  %v1865 = vadd.f32 %v1862, 1.0
  %v1866 = vadd.f32 %v1864, 1.0
  %v1867 = vrcp.pop %v1865
  %v1868 = vmul.f32 %v1865, %v1867
  %v1869 = vsub.f32 1.0, %v1868
  %v1870 = vmul.f32 %v1867, %v1869
  %v1871 = vadd.f32 %v1867, %v1870
  %vm1872 = vweird.f32 %v1865
  %vm1873 = vweird.f32 %v1867
  %vm1874 = vmor %vm1872, %vm1873
  %v1875 = vsel %vm1874, %v1867, %v1871
  %v1876 = vand.u32 2147483647, %v1865
  %vm1877 = vcmp.eq.f32.partialorder %v1876, 8.507059e+37
  %v1878 = vand.u32 %v1865, 2147483648
  %v1879 = vor.u32 1.1754944e-38, %v1878
  %v1880 = vsel %vm1877, %v1879, %v1875
  %v1881 = vmul.f32 1.0, %v1880
  %v1882 = vrcp.pop %v1866
  %v1883 = vmul.f32 %v1866, %v1882
  %v1884 = vsub.f32 1.0, %v1883
  %v1885 = vmul.f32 %v1882, %v1884
  %v1886 = vadd.f32 %v1882, %v1885
  %vm1887 = vweird.f32 %v1866
  %vm1888 = vweird.f32 %v1882
  %vm1889 = vmor %vm1887, %vm1888
  %v1890 = vsel %vm1889, %v1882, %v1886
  %v1891 = vand.u32 2147483647, %v1866
  %vm1892 = vcmp.eq.f32.partialorder %v1891, 8.507059e+37
  %v1893 = vand.u32 %v1866, 2147483648
  %v1894 = vor.u32 1.1754944e-38, %v1893
  %v1895 = vsel %vm1892, %v1894, %v1890
  %v1896 = vmul.f32 1.0, %v1895
  %1897 = vrot.lane.b32.xlu0 %v1853, 64
  %v1898 = vpop.permute.xlu0 %1897
  %1899 = vrot.lane.b32.xlu0 %v1854, 64
  %v1900 = vpop.permute.xlu0 %1899
  %v1903 = vmul.f32 %v1881, %v1898
  %v1904 = vmul.f32 %v1896, %v1900
  %1907 = vrot.lane.b32.xlu0 %v1903, 64
  %v1908 = vpop.permute.xlu0 %1907
  %1909 = vrot.lane.b32.xlu0 %v1904, 64
  %v1910 = vpop.permute.xlu0 %1909
  %v1913 = vadd.f32 %v164, %v1908
  %v1914 = vadd.f32 %v170, %v1910
  %v1915 = vtanh.pop %v1913
  %v1916 = vtanh.pop %v1914
  %v1917 = vsub.f32 1.0, %v1881
  %v1918 = vsub.f32 1.0, %v1896
  %1921 = vrot.lane.b32.xlu0 %v1915, 96
  %v1922 = vpop.permute.xlu0 %1921
  %1923 = vrot.lane.b32.xlu0 %v1916, 96
  %v1924 = vpop.permute.xlu0 %1923
  %v1927 = vmul.f32 %v1917, %v1922
  %v1928 = vmul.f32 %v1918, %v1924
  %v1929 = vrot.slane %v1647, 1
  %v1930 = vrot.slane %v1648, 1
  %v1933 = vmul.f32 %v1881, %v1929
  %v1934 = vmul.f32 %v1896, %v1930
  %v1935 = vadd.f32 %v1927, %v1933
  %v1936 = vadd.f32 %v1928, %v1934
  %1939 = vrot.lane.b32.xlu0 %v1849, 96
  %v1940 = vpop.permute.xlu0 %1939
  %1941 = vrot.lane.b32.xlu0 %v1850, 96
  %v1942 = vpop.permute.xlu0 %1941
  %vm1945 = vcmask 259077
  %1946 = vst.msk [vmem:[%s11] sm:$0x20] %vm1945, %v1940
  %1947 = vst.msk [vmem:[%s11 + $0x10] sm:$0x20] %vm1945, %v1942
  %vm1948 = vcmask 518402
  %1949 = vst.msk [vmem:[%s11 + $0x8] sm:$0x4] %vm1948, %v1935
  %1950 = vst.msk [vmem:[%s11 + $0x18] sm:$0x4] %vm1948, %v1936
  %v1951 = vrot.slane %v1849, 5
  %1952 = vrot.lane.b32.xlu0 %v1951, 96
  %v1953 = vpop.permute.xlu0 %1952
  %v1954 = vsel %vm236, %v1953, 0
  %1956 = vmatpush.msra.mxu0 0.0
  %1957 = vmatpush.msra.mxu0 0.0
  %1958 = vmatpush.msra.mxu0 0.0
  %1959 = vmatpush.msra.mxu0 0.0
  %1960 = vmatpush.msra.mxu0 0.0
  %1961 = vmatpush.msra.mxu0 0.0
  %1962 = vmatpush.msra.mxu0 0.0
  %1963 = vmatpush.msra.mxu0 0.0
  %1964 = vmatpush.msra.mxu0 0.0
  %1965 = vmatpush.msra.mxu0 0.0
  %1966 = vmatpush.msra.mxu0 0.0
  %1967 = vmatpush.msra.mxu0 0.0
  %1968 = vmatpush.msra.mxu0 %v56
  %1969 = vmatpush.msra.mxu0 %v55
  %1970 = vmatpush.msra.mxu0 %v54
  %1971 = vmatpush.msra.mxu0 %v53
  %1972 = vmatmul.f32.gmra.mxu0 %v1954
  %v1973 = vpop.f32.mrf.mxu0
  %v1974 = vadd.f32 %v58, %v1973
  %1975 = vdwg.mxu0
  %v1976 = vrot.slane %v1850, 5
  %1977 = vrot.lane.b32.xlu0 %v1976, 96
  %v1978 = vpop.permute.xlu0 %1977
  %v1979 = vsel %vm236, %v1978, 0
  %1981 = vmatpush.msra.mxu0 0.0
  %1982 = vmatpush.msra.mxu0 0.0
  %1983 = vmatpush.msra.mxu0 0.0
  %1984 = vmatpush.msra.mxu0 0.0
  %1985 = vmatpush.msra.mxu0 0.0
  %1986 = vmatpush.msra.mxu0 0.0
  %1987 = vmatpush.msra.mxu0 0.0
  %1988 = vmatpush.msra.mxu0 0.0
  %1989 = vmatpush.msra.mxu0 0.0
  %1990 = vmatpush.msra.mxu0 0.0
  %1991 = vmatpush.msra.mxu0 0.0
  %1992 = vmatpush.msra.mxu0 0.0
  %1993 = vmatpush.msra.mxu0 %v56
  %1994 = vmatpush.msra.mxu0 %v55
  %1995 = vmatpush.msra.mxu0 %v54
  %1996 = vmatpush.msra.mxu0 %v53
  %1997 = vmatmul.f32.gmra.mxu0 %v1979
  %v1998 = vpop.f32.mrf.mxu0
  %v1999 = vadd.f32 %v58, %v1998
  %2000 = vdwg.mxu0
  %v2002 = vrot.slane %v1935, 2
  %2003 = vrot.lane.b32.xlu0 %v2002, 96
  %v2004 = vpop.permute.xlu0 %2003
  %v2005 = vsel %vm236, %v2004, 0
  %2007 = vmatpush.msra.mxu0 0.0
  %2008 = vmatpush.msra.mxu0 0.0
  %2009 = vmatpush.msra.mxu0 0.0
  %2010 = vmatpush.msra.mxu0 0.0
  %2011 = vmatpush.msra.mxu0 0.0
  %2012 = vmatpush.msra.mxu0 0.0
  %2013 = vmatpush.msra.mxu0 0.0
  %2014 = vmatpush.msra.mxu0 0.0
  %2015 = vmatpush.msra.mxu0 0.0
  %2016 = vmatpush.msra.mxu0 0.0
  %2017 = vmatpush.msra.mxu0 0.0
  %2018 = vmatpush.msra.mxu0 0.0
  %2019 = vmatpush.msra.mxu0 %v73
  %2020 = vmatpush.msra.mxu0 %v72
  %2021 = vmatpush.msra.mxu0 %v71
  %2022 = vmatpush.msra.mxu0 %v70
  %2023 = vmatmul.f32.gmra.mxu0 %v2005
  %v2024 = vpop.f32.mrf.mxu0
  %v2025 = vadd.f32 %v75, %v2024
  %2026 = vdwg.mxu0
  %v2028 = vrot.slane %v1936, 2
  %2029 = vrot.lane.b32.xlu0 %v2028, 96
  %v2030 = vpop.permute.xlu0 %2029
  %v2031 = vsel %vm236, %v2030, 0
  %2033 = vmatpush.msra.mxu0 0.0
  %2034 = vmatpush.msra.mxu0 0.0
  %2035 = vmatpush.msra.mxu0 0.0
  %2036 = vmatpush.msra.mxu0 0.0
  %2037 = vmatpush.msra.mxu0 0.0
  %2038 = vmatpush.msra.mxu0 0.0
  %2039 = vmatpush.msra.mxu0 0.0
  %2040 = vmatpush.msra.mxu0 0.0
  %2041 = vmatpush.msra.mxu0 0.0
  %2042 = vmatpush.msra.mxu0 0.0
  %2043 = vmatpush.msra.mxu0 0.0
  %2044 = vmatpush.msra.mxu0 0.0
  %2045 = vmatpush.msra.mxu0 %v73
  %2046 = vmatpush.msra.mxu0 %v72
  %2047 = vmatpush.msra.mxu0 %v71
  %2048 = vmatpush.msra.mxu0 %v70
  %2049 = vmatmul.f32.gmra.mxu0 %v2031
  %v2050 = vpop.f32.mrf.mxu0
  %v2051 = vadd.f32 %v75, %v2050
  %2052 = vdwg.mxu0
  %v2055 = vrot.slane %v1974, 2
  %v2056 = vrot.slane %v1999, 2
  %v2059 = vadd.f32 %v126, %v2055
  %v2060 = vadd.f32 %v132, %v2056
  %v2061 = vxor.u32 %v2059, 2147483648
  %v2062 = vxor.u32 %v2060, 2147483648
  %v2063 = vmul.f32 %v2061, 1.442695
  %v2064 = vpow.pop %v2063
  %v2065 = vmul.f32 %v2062, 1.442695
  %v2066 = vpow.pop %v2065
  %v2067 = vadd.f32 %v2064, 1.0
  %v2068 = vadd.f32 %v2066, 1.0
  %v2069 = vrcp.pop %v2067
  %v2070 = vmul.f32 %v2067, %v2069
  %v2071 = vsub.f32 1.0, %v2070
  %v2072 = vmul.f32 %v2069, %v2071
  %v2073 = vadd.f32 %v2069, %v2072
  %vm2074 = vweird.f32 %v2067
  %vm2075 = vweird.f32 %v2069
  %vm2076 = vmor %vm2074, %vm2075
  %v2077 = vsel %vm2076, %v2069, %v2073
  %v2078 = vand.u32 2147483647, %v2067
  %vm2079 = vcmp.eq.f32.partialorder %v2078, 8.507059e+37
  %v2080 = vand.u32 %v2067, 2147483648
  %v2081 = vor.u32 1.1754944e-38, %v2080
  %v2082 = vsel %vm2079, %v2081, %v2077
  %v2083 = vmul.f32 1.0, %v2082
  %v2084 = vrcp.pop %v2068
  %v2085 = vmul.f32 %v2068, %v2084
  %v2086 = vsub.f32 1.0, %v2085
  %v2087 = vmul.f32 %v2084, %v2086
  %v2088 = vadd.f32 %v2084, %v2087
  %vm2089 = vweird.f32 %v2068
  %vm2090 = vweird.f32 %v2084
  %vm2091 = vmor %vm2089, %vm2090
  %v2092 = vsel %vm2091, %v2084, %v2088
  %v2093 = vand.u32 2147483647, %v2068
  %vm2094 = vcmp.eq.f32.partialorder %v2093, 8.507059e+37
  %v2095 = vand.u32 %v2068, 2147483648
  %v2096 = vor.u32 1.1754944e-38, %v2095
  %v2097 = vsel %vm2094, %v2096, %v2092
  %v2098 = vmul.f32 1.0, %v2097
  %2099 = vrot.lane.b32.xlu0 %v2055, 64
  %v2100 = vpop.permute.xlu0 %2099
  %2101 = vrot.lane.b32.xlu0 %v2056, 64
  %v2102 = vpop.permute.xlu0 %2101
  %v2105 = vmul.f32 %v2083, %v2100
  %v2106 = vmul.f32 %v2098, %v2102
  %2109 = vrot.lane.b32.xlu0 %v2105, 64
  %v2110 = vpop.permute.xlu0 %2109
  %2111 = vrot.lane.b32.xlu0 %v2106, 64
  %v2112 = vpop.permute.xlu0 %2111
  %v2115 = vadd.f32 %v126, %v2110
  %v2116 = vadd.f32 %v132, %v2112
  %v2117 = vtanh.pop %v2115
  %v2118 = vtanh.pop %v2116
  %v2119 = vsub.f32 1.0, %v2083
  %v2120 = vsub.f32 1.0, %v2098
  %2123 = vrot.lane.b32.xlu0 %v2117, 96
  %v2124 = vpop.permute.xlu0 %2123
  %2125 = vrot.lane.b32.xlu0 %v2118, 96
  %v2126 = vpop.permute.xlu0 %2125
  %v2129 = vmul.f32 %v2119, %v2124
  %v2130 = vmul.f32 %v2120, %v2126
  %v2131 = vrot.slane %v1849, 7
  %v2132 = vrot.slane %v1850, 7
  %v2135 = vmul.f32 %v2083, %v2131
  %v2136 = vmul.f32 %v2098, %v2132
  %v2137 = vadd.f32 %v2129, %v2135
  %v2138 = vadd.f32 %v2130, %v2136
  %v2141 = vrot.slane %v2025, 7
  %v2142 = vrot.slane %v2051, 7
  %v2145 = vadd.f32 %v164, %v2141
  %v2146 = vadd.f32 %v170, %v2142
  %v2147 = vxor.u32 %v2145, 2147483648
  %v2148 = vxor.u32 %v2146, 2147483648
  %v2149 = vmul.f32 %v2147, 1.442695
  %v2150 = vpow.pop %v2149
  %v2151 = vmul.f32 %v2148, 1.442695
  %v2152 = vpow.pop %v2151
  %v2153 = vadd.f32 %v2150, 1.0
  %v2154 = vadd.f32 %v2152, 1.0
  %v2155 = vrcp.pop %v2153
  %v2156 = vmul.f32 %v2153, %v2155
  %v2157 = vsub.f32 1.0, %v2156
  %v2158 = vmul.f32 %v2155, %v2157
  %v2159 = vadd.f32 %v2155, %v2158
  %vm2160 = vweird.f32 %v2153
  %vm2161 = vweird.f32 %v2155
  %vm2162 = vmor %vm2160, %vm2161
  %v2163 = vsel %vm2162, %v2155, %v2159
  %v2164 = vand.u32 2147483647, %v2153
  %vm2165 = vcmp.eq.f32.partialorder %v2164, 8.507059e+37
  %v2166 = vand.u32 %v2153, 2147483648
  %v2167 = vor.u32 1.1754944e-38, %v2166
  %v2168 = vsel %vm2165, %v2167, %v2163
  %v2169 = vmul.f32 1.0, %v2168
  %v2170 = vrcp.pop %v2154
  %v2171 = vmul.f32 %v2154, %v2170
  %v2172 = vsub.f32 1.0, %v2171
  %v2173 = vmul.f32 %v2170, %v2172
  %v2174 = vadd.f32 %v2170, %v2173
  %vm2175 = vweird.f32 %v2154
  %vm2176 = vweird.f32 %v2170
  %vm2177 = vmor %vm2175, %vm2176
  %v2178 = vsel %vm2177, %v2170, %v2174
  %v2179 = vand.u32 2147483647, %v2154
  %vm2180 = vcmp.eq.f32.partialorder %v2179, 8.507059e+37
  %v2181 = vand.u32 %v2154, 2147483648
  %v2182 = vor.u32 1.1754944e-38, %v2181
  %v2183 = vsel %vm2180, %v2182, %v2178
  %v2184 = vmul.f32 1.0, %v2183
  %2185 = vrot.lane.b32.xlu0 %v2141, 64
  %v2186 = vpop.permute.xlu0 %2185
  %2187 = vrot.lane.b32.xlu0 %v2142, 64
  %v2188 = vpop.permute.xlu0 %2187
  %v2191 = vmul.f32 %v2169, %v2186
  %v2192 = vmul.f32 %v2184, %v2188
  %2195 = vrot.lane.b32.xlu0 %v2191, 64
  %v2196 = vpop.permute.xlu0 %2195
  %2197 = vrot.lane.b32.xlu0 %v2192, 64
  %v2198 = vpop.permute.xlu0 %2197
  %v2201 = vadd.f32 %v164, %v2196
  %v2202 = vadd.f32 %v170, %v2198
  %v2203 = vtanh.pop %v2201
  %v2204 = vtanh.pop %v2202
  %v2205 = vsub.f32 1.0, %v2169
  %v2206 = vsub.f32 1.0, %v2184
  %2209 = vrot.lane.b32.xlu0 %v2203, 96
  %v2210 = vpop.permute.xlu0 %2209
  %2211 = vrot.lane.b32.xlu0 %v2204, 96
  %v2212 = vpop.permute.xlu0 %2211
  %v2215 = vmul.f32 %v2205, %v2210
  %v2216 = vmul.f32 %v2206, %v2212
  %v2217 = vrot.slane %v1935, 1
  %v2218 = vrot.slane %v1936, 1
  %v2221 = vmul.f32 %v2169, %v2217
  %v2222 = vmul.f32 %v2184, %v2218
  %v2223 = vadd.f32 %v2215, %v2221
  %v2224 = vadd.f32 %v2216, %v2222
  %2227 = vrot.lane.b32.xlu0 %v2137, 96
  %v2228 = vpop.permute.xlu0 %2227
  %2229 = vrot.lane.b32.xlu0 %v2138, 96
  %v2230 = vpop.permute.xlu0 %2229
  %vm2233 = vcmask 260102
  %2234 = vst.msk [vmem:[%s11] sm:$0x40] %vm2233, %v2228
  %2235 = vst.msk [vmem:[%s11 + $0x10] sm:$0x40] %vm2233, %v2230
  %vm2236 = vcmask 517377
  %2237 = vst.msk [vmem:[%s11 + $0x8] sm:$0x2] %vm2236, %v2223
  %2238 = vst.msk [vmem:[%s11 + $0x18] sm:$0x2] %vm2236, %v2224
  %v2239 = vrot.slane %v2137, 6
  %2240 = vrot.lane.b32.xlu0 %v2239, 96
  %v2241 = vpop.permute.xlu0 %2240
  %v2242 = vsel %vm236, %v2241, 0
  %2244 = vmatpush.msra.mxu0 0.0
  %2245 = vmatpush.msra.mxu0 0.0
  %2246 = vmatpush.msra.mxu0 0.0
  %2247 = vmatpush.msra.mxu0 0.0
  %2248 = vmatpush.msra.mxu0 0.0
  %2249 = vmatpush.msra.mxu0 0.0
  %2250 = vmatpush.msra.mxu0 0.0
  %2251 = vmatpush.msra.mxu0 0.0
  %2252 = vmatpush.msra.mxu0 0.0
  %2253 = vmatpush.msra.mxu0 0.0
  %2254 = vmatpush.msra.mxu0 0.0
  %2255 = vmatpush.msra.mxu0 0.0
  %2256 = vmatpush.msra.mxu0 %v56
  %2257 = vmatpush.msra.mxu0 %v55
  %2258 = vmatpush.msra.mxu0 %v54
  %2259 = vmatpush.msra.mxu0 %v53
  %2260 = vmatmul.f32.gmra.mxu0 %v2242
  %v2261 = vpop.f32.mrf.mxu0
  %v2262 = vadd.f32 %v58, %v2261
  %2263 = vdwg.mxu0
  %v2264 = vrot.slane %v2138, 6
  %2265 = vrot.lane.b32.xlu0 %v2264, 96
  %v2266 = vpop.permute.xlu0 %2265
  %v2267 = vsel %vm236, %v2266, 0
  %2269 = vmatpush.msra.mxu0 0.0
  %2270 = vmatpush.msra.mxu0 0.0
  %2271 = vmatpush.msra.mxu0 0.0
  %2272 = vmatpush.msra.mxu0 0.0
  %2273 = vmatpush.msra.mxu0 0.0
  %2274 = vmatpush.msra.mxu0 0.0
  %2275 = vmatpush.msra.mxu0 0.0
  %2276 = vmatpush.msra.mxu0 0.0
  %2277 = vmatpush.msra.mxu0 0.0
  %2278 = vmatpush.msra.mxu0 0.0
  %2279 = vmatpush.msra.mxu0 0.0
  %2280 = vmatpush.msra.mxu0 0.0
  %2281 = vmatpush.msra.mxu0 %v56
  %2282 = vmatpush.msra.mxu0 %v55
  %2283 = vmatpush.msra.mxu0 %v54
  %2284 = vmatpush.msra.mxu0 %v53
  %2285 = vmatmul.f32.gmra.mxu0 %v2267
  %v2286 = vpop.f32.mrf.mxu0
  %v2287 = vadd.f32 %v58, %v2286
  %2288 = vdwg.mxu0
  %v2290 = vrot.slane %v2223, 1
  %2291 = vrot.lane.b32.xlu0 %v2290, 96
  %v2292 = vpop.permute.xlu0 %2291
  %v2293 = vsel %vm236, %v2292, 0
  %2295 = vmatpush.msra.mxu0 0.0
  %2296 = vmatpush.msra.mxu0 0.0
  %2297 = vmatpush.msra.mxu0 0.0
  %2298 = vmatpush.msra.mxu0 0.0
  %2299 = vmatpush.msra.mxu0 0.0
  %2300 = vmatpush.msra.mxu0 0.0
  %2301 = vmatpush.msra.mxu0 0.0
  %2302 = vmatpush.msra.mxu0 0.0
  %2303 = vmatpush.msra.mxu0 0.0
  %2304 = vmatpush.msra.mxu0 0.0
  %2305 = vmatpush.msra.mxu0 0.0
  %2306 = vmatpush.msra.mxu0 0.0
  %2307 = vmatpush.msra.mxu0 %v73
  %2308 = vmatpush.msra.mxu0 %v72
  %2309 = vmatpush.msra.mxu0 %v71
  %2310 = vmatpush.msra.mxu0 %v70
  %2311 = vmatmul.f32.gmra.mxu0 %v2293
  %v2312 = vpop.f32.mrf.mxu0
  %v2313 = vadd.f32 %v75, %v2312
  %2314 = vdwg.mxu0
  %v2316 = vrot.slane %v2224, 1
  %2317 = vrot.lane.b32.xlu0 %v2316, 96
  %v2318 = vpop.permute.xlu0 %2317
  %v2319 = vsel %vm236, %v2318, 0
  %2321 = vmatpush.msra.mxu0 0.0
  %2322 = vmatpush.msra.mxu0 0.0
  %2323 = vmatpush.msra.mxu0 0.0
  %2324 = vmatpush.msra.mxu0 0.0
  %2325 = vmatpush.msra.mxu0 0.0
  %2326 = vmatpush.msra.mxu0 0.0
  %2327 = vmatpush.msra.mxu0 0.0
  %2328 = vmatpush.msra.mxu0 0.0
  %2329 = vmatpush.msra.mxu0 0.0
  %2330 = vmatpush.msra.mxu0 0.0
  %2331 = vmatpush.msra.mxu0 0.0
  %2332 = vmatpush.msra.mxu0 0.0
  %2333 = vmatpush.msra.mxu0 %v73
  %2334 = vmatpush.msra.mxu0 %v72
  %2335 = vmatpush.msra.mxu0 %v71
  %2336 = vmatpush.msra.mxu0 %v70
  %2337 = vmatmul.f32.gmra.mxu0 %v2319
  %v2338 = vpop.f32.mrf.mxu0
  %v2339 = vadd.f32 %v75, %v2338
  %2340 = vdwg.mxu0
  %v2343 = vrot.slane %v2262, 1
  %v2344 = vrot.slane %v2287, 1
  %v2347 = vadd.f32 %v126, %v2343
  %v2348 = vadd.f32 %v132, %v2344
  %v2349 = vxor.u32 %v2347, 2147483648
  %v2350 = vxor.u32 %v2348, 2147483648
  %v2351 = vmul.f32 %v2349, 1.442695
  %v2352 = vpow.pop %v2351
  %v2353 = vmul.f32 %v2350, 1.442695
  %v2354 = vpow.pop %v2353
  %v2355 = vadd.f32 %v2352, 1.0
  %v2356 = vadd.f32 %v2354, 1.0
  %v2357 = vrcp.pop %v2355
  %v2358 = vmul.f32 %v2355, %v2357
  %v2359 = vsub.f32 1.0, %v2358
  %v2360 = vmul.f32 %v2357, %v2359
  %v2361 = vadd.f32 %v2357, %v2360
  %vm2362 = vweird.f32 %v2355
  %vm2363 = vweird.f32 %v2357
  %vm2364 = vmor %vm2362, %vm2363
  %v2365 = vsel %vm2364, %v2357, %v2361
  %v2366 = vand.u32 2147483647, %v2355
  %vm2367 = vcmp.eq.f32.partialorder %v2366, 8.507059e+37
  %v2368 = vand.u32 %v2355, 2147483648
  %v2369 = vor.u32 1.1754944e-38, %v2368
  %v2370 = vsel %vm2367, %v2369, %v2365
  %v2371 = vmul.f32 1.0, %v2370
  %v2372 = vrcp.pop %v2356
  %v2373 = vmul.f32 %v2356, %v2372
  %v2374 = vsub.f32 1.0, %v2373
  %v2375 = vmul.f32 %v2372, %v2374
  %v2376 = vadd.f32 %v2372, %v2375
  %vm2377 = vweird.f32 %v2356
  %vm2378 = vweird.f32 %v2372
  %vm2379 = vmor %vm2377, %vm2378
  %v2380 = vsel %vm2379, %v2372, %v2376
  %v2381 = vand.u32 2147483647, %v2356
  %vm2382 = vcmp.eq.f32.partialorder %v2381, 8.507059e+37
  %v2383 = vand.u32 %v2356, 2147483648
  %v2384 = vor.u32 1.1754944e-38, %v2383
  %v2385 = vsel %vm2382, %v2384, %v2380
  %v2386 = vmul.f32 1.0, %v2385
  %2387 = vrot.lane.b32.xlu0 %v2343, 64
  %v2388 = vpop.permute.xlu0 %2387
  %2389 = vrot.lane.b32.xlu0 %v2344, 64
  %v2390 = vpop.permute.xlu0 %2389
  %v2393 = vmul.f32 %v2371, %v2388
  %v2394 = vmul.f32 %v2386, %v2390
  %2397 = vrot.lane.b32.xlu0 %v2393, 64
  %v2398 = vpop.permute.xlu0 %2397
  %2399 = vrot.lane.b32.xlu0 %v2394, 64
  %v2400 = vpop.permute.xlu0 %2399
  %v2403 = vadd.f32 %v126, %v2398
  %v2404 = vadd.f32 %v132, %v2400
  %v2405 = vtanh.pop %v2403
  %v2406 = vtanh.pop %v2404
  %v2407 = vsub.f32 1.0, %v2371
  %v2408 = vsub.f32 1.0, %v2386
  %2411 = vrot.lane.b32.xlu0 %v2405, 96
  %v2412 = vpop.permute.xlu0 %2411
  %2413 = vrot.lane.b32.xlu0 %v2406, 96
  %v2414 = vpop.permute.xlu0 %2413
  %v2417 = vmul.f32 %v2407, %v2412
  %v2418 = vmul.f32 %v2408, %v2414
  %v2419 = vrot.slane %v2137, 7
  %v2420 = vrot.slane %v2138, 7
  %v2423 = vmul.f32 %v2371, %v2419
  %v2424 = vmul.f32 %v2386, %v2420
  %v2425 = vadd.f32 %v2417, %v2423
  %v2426 = vadd.f32 %v2418, %v2424
  %v2427 = vadd.f32 %v164, %v2313
  %v2428 = vadd.f32 %v170, %v2339
  %v2429 = vxor.u32 %v2427, 2147483648
  %v2430 = vxor.u32 %v2428, 2147483648
  %v2431 = vmul.f32 %v2429, 1.442695
  %v2432 = vpow.pop %v2431
  %v2433 = vmul.f32 %v2430, 1.442695
  %v2434 = vpow.pop %v2433
  %v2435 = vadd.f32 %v2432, 1.0
  %v2436 = vadd.f32 %v2434, 1.0
  %v2437 = vrcp.pop %v2435
  %v2438 = vmul.f32 %v2435, %v2437
  %v2439 = vsub.f32 1.0, %v2438
  %v2440 = vmul.f32 %v2437, %v2439
  %v2441 = vadd.f32 %v2437, %v2440
  %vm2442 = vweird.f32 %v2435
  %vm2443 = vweird.f32 %v2437
  %vm2444 = vmor %vm2442, %vm2443
  %v2445 = vsel %vm2444, %v2437, %v2441
  %v2446 = vand.u32 2147483647, %v2435
  %vm2447 = vcmp.eq.f32.partialorder %v2446, 8.507059e+37
  %v2448 = vand.u32 %v2435, 2147483648
  %v2449 = vor.u32 1.1754944e-38, %v2448
  %v2450 = vsel %vm2447, %v2449, %v2445
  %v2451 = vmul.f32 1.0, %v2450
  %v2452 = vrcp.pop %v2436
  %v2453 = vmul.f32 %v2436, %v2452
  %v2454 = vsub.f32 1.0, %v2453
  %v2455 = vmul.f32 %v2452, %v2454
  %v2456 = vadd.f32 %v2452, %v2455
  %vm2457 = vweird.f32 %v2436
  %vm2458 = vweird.f32 %v2452
  %vm2459 = vmor %vm2457, %vm2458
  %v2460 = vsel %vm2459, %v2452, %v2456
  %v2461 = vand.u32 2147483647, %v2436
  %vm2462 = vcmp.eq.f32.partialorder %v2461, 8.507059e+37
  %v2463 = vand.u32 %v2436, 2147483648
  %v2464 = vor.u32 1.1754944e-38, %v2463
  %v2465 = vsel %vm2462, %v2464, %v2460
  %v2466 = vmul.f32 1.0, %v2465
  %2469 = vrot.lane.b32.xlu0 %v2313, 64
  %v2470 = vpop.permute.xlu0 %2469
  %2471 = vrot.lane.b32.xlu0 %v2339, 64
  %v2472 = vpop.permute.xlu0 %2471
  %v2475 = vmul.f32 %v2451, %v2470
  %v2476 = vmul.f32 %v2466, %v2472
  %2479 = vrot.lane.b32.xlu0 %v2475, 64
  %v2480 = vpop.permute.xlu0 %2479
  %2481 = vrot.lane.b32.xlu0 %v2476, 64
  %v2482 = vpop.permute.xlu0 %2481
  %v2485 = vadd.f32 %v164, %v2480
  %v2486 = vadd.f32 %v170, %v2482
  %v2487 = vtanh.pop %v2485
  %v2488 = vtanh.pop %v2486
  %v2489 = vsub.f32 1.0, %v2451
  %v2490 = vsub.f32 1.0, %v2466
  %2493 = vrot.lane.b32.xlu0 %v2487, 96
  %v2494 = vpop.permute.xlu0 %2493
  %2495 = vrot.lane.b32.xlu0 %v2488, 96
  %v2496 = vpop.permute.xlu0 %2495
  %v2499 = vmul.f32 %v2489, %v2494
  %v2500 = vmul.f32 %v2490, %v2496
  %v2503 = vmul.f32 %v2451, %v2290
  %v2504 = vmul.f32 %v2466, %v2316
  %v2505 = vadd.f32 %v2499, %v2503
  %v2506 = vadd.f32 %v2500, %v2504
  %2509 = vrot.lane.b32.xlu0 %v2425, 96
  %v2510 = vpop.permute.xlu0 %2509
  %2511 = vrot.lane.b32.xlu0 %v2426, 96
  %v2512 = vpop.permute.xlu0 %2511
  %vm2515 = vcmask 261127
  %2516 = vst.msk [vmem:[%s11] sm:$0x80] %vm2515, %v2510
  %2517 = vst.msk [vmem:[%s11 + $0x10] sm:$0x80] %vm2515, %v2512
  %vm2518 = vcmask 516352
  %2519 = vst.msk [vmem:[%s11 + $0x8] sm:$0x1] %vm2518, %v2505
  %2520 = vst.msk [vmem:[%s11 + $0x18] sm:$0x1] %vm2518, %v2506
  %v2521 = vrot.slane %v2425, 7
  %2522 = vrot.lane.b32.xlu0 %v2521, 96
  %v2523 = vpop.permute.xlu0 %2522
  %v2524 = vsel %vm236, %v2523, 0
  %2526 = vmatpush.msra.mxu0 0.0
  %2527 = vmatpush.msra.mxu0 0.0
  %2528 = vmatpush.msra.mxu0 0.0
  %2529 = vmatpush.msra.mxu0 0.0
  %2530 = vmatpush.msra.mxu0 0.0
  %2531 = vmatpush.msra.mxu0 0.0
  %2532 = vmatpush.msra.mxu0 0.0
  %2533 = vmatpush.msra.mxu0 0.0
  %2534 = vmatpush.msra.mxu0 0.0
  %2535 = vmatpush.msra.mxu0 0.0
  %2536 = vmatpush.msra.mxu0 0.0
  %2537 = vmatpush.msra.mxu0 0.0
  %2538 = vmatpush.msra.mxu0 %v56
  %2539 = vmatpush.msra.mxu0 %v55
  %2540 = vmatpush.msra.mxu0 %v54
  %2541 = vmatpush.msra.mxu0 %v53
  %2542 = vmatmul.f32.gmra.mxu0 %v2524
  %v2543 = vpop.f32.mrf.mxu0
  %v2544 = vadd.f32 %v58, %v2543
  %2545 = vdwg.mxu0
  %v2546 = vrot.slane %v2426, 7
  %2547 = vrot.lane.b32.xlu0 %v2546, 96
  %v2548 = vpop.permute.xlu0 %2547
  %v2549 = vsel %vm236, %v2548, 0
  %2551 = vmatpush.msra.mxu0 0.0
  %2552 = vmatpush.msra.mxu0 0.0
  %2553 = vmatpush.msra.mxu0 0.0
  %2554 = vmatpush.msra.mxu0 0.0
  %2555 = vmatpush.msra.mxu0 0.0
  %2556 = vmatpush.msra.mxu0 0.0
  %2557 = vmatpush.msra.mxu0 0.0
  %2558 = vmatpush.msra.mxu0 0.0
  %2559 = vmatpush.msra.mxu0 0.0
  %2560 = vmatpush.msra.mxu0 0.0
  %2561 = vmatpush.msra.mxu0 0.0
  %2562 = vmatpush.msra.mxu0 0.0
  %2563 = vmatpush.msra.mxu0 %v56
  %2564 = vmatpush.msra.mxu0 %v55
  %2565 = vmatpush.msra.mxu0 %v54
  %2566 = vmatpush.msra.mxu0 %v53
  %2567 = vmatmul.f32.gmra.mxu0 %v2549
  %v2568 = vpop.f32.mrf.mxu0
  %v2569 = vadd.f32 %v58, %v2568
  %2570 = vdwg.mxu0
  %2572 = vrot.lane.b32.xlu0 %v2505, 96
  %v2573 = vpop.permute.xlu0 %2572
  %v2574 = vsel %vm236, %v2573, 0
  %2576 = vmatpush.msra.mxu0 0.0
  %2577 = vmatpush.msra.mxu0 0.0
  %2578 = vmatpush.msra.mxu0 0.0
  %2579 = vmatpush.msra.mxu0 0.0
  %2580 = vmatpush.msra.mxu0 0.0
  %2581 = vmatpush.msra.mxu0 0.0
  %2582 = vmatpush.msra.mxu0 0.0
  %2583 = vmatpush.msra.mxu0 0.0
  %2584 = vmatpush.msra.mxu0 0.0
  %2585 = vmatpush.msra.mxu0 0.0
  %2586 = vmatpush.msra.mxu0 0.0
  %2587 = vmatpush.msra.mxu0 0.0
  %2588 = vmatpush.msra.mxu0 %v73
  %2589 = vmatpush.msra.mxu0 %v72
  %2590 = vmatpush.msra.mxu0 %v71
  %2591 = vmatpush.msra.mxu0 %v70
  %2592 = vmatmul.f32.gmra.mxu0 %v2574
  %v2593 = vpop.f32.mrf.mxu0
  %v2594 = vadd.f32 %v75, %v2593
  %2595 = vdwg.mxu0
  %2597 = vrot.lane.b32.xlu0 %v2506, 96
  %v2598 = vpop.permute.xlu0 %2597
  %v2599 = vsel %vm236, %v2598, 0
  %2601 = vmatpush.msra.mxu0 0.0
  %2602 = vmatpush.msra.mxu0 0.0
  %2603 = vmatpush.msra.mxu0 0.0
  %2604 = vmatpush.msra.mxu0 0.0
  %2605 = vmatpush.msra.mxu0 0.0
  %2606 = vmatpush.msra.mxu0 0.0
  %2607 = vmatpush.msra.mxu0 0.0
  %2608 = vmatpush.msra.mxu0 0.0
  %2609 = vmatpush.msra.mxu0 0.0
  %2610 = vmatpush.msra.mxu0 0.0
  %2611 = vmatpush.msra.mxu0 0.0
  %2612 = vmatpush.msra.mxu0 0.0
  %2613 = vmatpush.msra.mxu0 %v73
  %2614 = vmatpush.msra.mxu0 %v72
  %2615 = vmatpush.msra.mxu0 %v71
  %2616 = vmatpush.msra.mxu0 %v70
  %2617 = vmatmul.f32.gmra.mxu0 %v2599
  %v2618 = vpop.f32.mrf.mxu0
  %v2619 = vadd.f32 %v75, %v2618
  %2620 = vdwg.mxu0
  %v2621 = vadd.f32 %v129, %v2544
  %v2622 = vadd.f32 %v135, %v2569
  %v2623 = vxor.u32 %v2621, 2147483648
  %v2624 = vxor.u32 %v2622, 2147483648
  %v2625 = vmul.f32 %v2623, 1.442695
  %v2626 = vpow.pop %v2625
  %v2627 = vmul.f32 %v2624, 1.442695
  %v2628 = vpow.pop %v2627
  %v2629 = vadd.f32 %v2626, 1.0
  %v2630 = vadd.f32 %v2628, 1.0
  %v2631 = vrcp.pop %v2629
  %v2632 = vmul.f32 %v2629, %v2631
  %v2633 = vsub.f32 1.0, %v2632
  %v2634 = vmul.f32 %v2631, %v2633
  %v2635 = vadd.f32 %v2631, %v2634
  %vm2636 = vweird.f32 %v2629
  %vm2637 = vweird.f32 %v2631
  %vm2638 = vmor %vm2636, %vm2637
  %v2639 = vsel %vm2638, %v2631, %v2635
  %v2640 = vand.u32 2147483647, %v2629
  %vm2641 = vcmp.eq.f32.partialorder %v2640, 8.507059e+37
  %v2642 = vand.u32 %v2629, 2147483648
  %v2643 = vor.u32 1.1754944e-38, %v2642
  %v2644 = vsel %vm2641, %v2643, %v2639
  %v2645 = vmul.f32 1.0, %v2644
  %v2646 = vrcp.pop %v2630
  %v2647 = vmul.f32 %v2630, %v2646
  %v2648 = vsub.f32 1.0, %v2647
  %v2649 = vmul.f32 %v2646, %v2648
  %v2650 = vadd.f32 %v2646, %v2649
  %vm2651 = vweird.f32 %v2630
  %vm2652 = vweird.f32 %v2646
  %vm2653 = vmor %vm2651, %vm2652
  %v2654 = vsel %vm2653, %v2646, %v2650
  %v2655 = vand.u32 2147483647, %v2630
  %vm2656 = vcmp.eq.f32.partialorder %v2655, 8.507059e+37
  %v2657 = vand.u32 %v2630, 2147483648
  %v2658 = vor.u32 1.1754944e-38, %v2657
  %v2659 = vsel %vm2656, %v2658, %v2654
  %v2660 = vmul.f32 1.0, %v2659
  %2663 = vrot.lane.b32.xlu0 %v2544, 64
  %v2664 = vpop.permute.xlu0 %2663
  %2665 = vrot.lane.b32.xlu0 %v2569, 64
  %v2666 = vpop.permute.xlu0 %2665
  %v2669 = vmul.f32 %v2645, %v2664
  %v2670 = vmul.f32 %v2660, %v2666
  %2673 = vrot.lane.b32.xlu0 %v2669, 64
  %v2674 = vpop.permute.xlu0 %2673
  %2675 = vrot.lane.b32.xlu0 %v2670, 64
  %v2676 = vpop.permute.xlu0 %2675
  %v2679 = vadd.f32 %v129, %v2674
  %v2680 = vadd.f32 %v135, %v2676
  %v2681 = vtanh.pop %v2679
  %v2682 = vtanh.pop %v2680
  %v2683 = vsub.f32 1.0, %v2645
  %v2684 = vsub.f32 1.0, %v2660
  %2687 = vrot.lane.b32.xlu0 %v2681, 96
  %v2688 = vpop.permute.xlu0 %2687
  %2689 = vrot.lane.b32.xlu0 %v2682, 96
  %v2690 = vpop.permute.xlu0 %2689
  %v2693 = vmul.f32 %v2683, %v2688
  %v2694 = vmul.f32 %v2684, %v2690
  %v2697 = vmul.f32 %v2645, %v2521
  %v2698 = vmul.f32 %v2660, %v2546
  %v2699 = vadd.f32 %v2693, %v2697
  %v2700 = vadd.f32 %v2694, %v2698
  %v2703 = vrot.slane %v2594, 1
  %v2704 = vrot.slane %v2619, 1
  %v2707 = vadd.f32 %v161, %v2703
  %v2708 = vadd.f32 %v167, %v2704
  %v2709 = vxor.u32 %v2707, 2147483648
  %v2710 = vxor.u32 %v2708, 2147483648
  %v2711 = vmul.f32 %v2709, 1.442695
  %v2712 = vpow.pop %v2711
  %v2713 = vmul.f32 %v2710, 1.442695
  %v2714 = vpow.pop %v2713
  %v2715 = vadd.f32 %v2712, 1.0
  %v2716 = vadd.f32 %v2714, 1.0
  %v2717 = vrcp.pop %v2715
  %v2718 = vmul.f32 %v2715, %v2717
  %v2719 = vsub.f32 1.0, %v2718
  %v2720 = vmul.f32 %v2717, %v2719
  %v2721 = vadd.f32 %v2717, %v2720
  %vm2722 = vweird.f32 %v2715
  %vm2723 = vweird.f32 %v2717
  %vm2724 = vmor %vm2722, %vm2723
  %v2725 = vsel %vm2724, %v2717, %v2721
  %v2726 = vand.u32 2147483647, %v2715
  %vm2727 = vcmp.eq.f32.partialorder %v2726, 8.507059e+37
  %v2728 = vand.u32 %v2715, 2147483648
  %v2729 = vor.u32 1.1754944e-38, %v2728
  %v2730 = vsel %vm2727, %v2729, %v2725
  %v2731 = vmul.f32 1.0, %v2730
  %v2732 = vrcp.pop %v2716
  %v2733 = vmul.f32 %v2716, %v2732
  %v2734 = vsub.f32 1.0, %v2733
  %v2735 = vmul.f32 %v2732, %v2734
  %v2736 = vadd.f32 %v2732, %v2735
  %vm2737 = vweird.f32 %v2716
  %vm2738 = vweird.f32 %v2732
  %vm2739 = vmor %vm2737, %vm2738
  %v2740 = vsel %vm2739, %v2732, %v2736
  %v2741 = vand.u32 2147483647, %v2716
  %vm2742 = vcmp.eq.f32.partialorder %v2741, 8.507059e+37
  %v2743 = vand.u32 %v2716, 2147483648
  %v2744 = vor.u32 1.1754944e-38, %v2743
  %v2745 = vsel %vm2742, %v2744, %v2740
  %v2746 = vmul.f32 1.0, %v2745
  %2747 = vrot.lane.b32.xlu0 %v2703, 64
  %v2748 = vpop.permute.xlu0 %2747
  %2749 = vrot.lane.b32.xlu0 %v2704, 64
  %v2750 = vpop.permute.xlu0 %2749
  %v2753 = vmul.f32 %v2731, %v2748
  %v2754 = vmul.f32 %v2746, %v2750
  %2757 = vrot.lane.b32.xlu0 %v2753, 64
  %v2758 = vpop.permute.xlu0 %2757
  %2759 = vrot.lane.b32.xlu0 %v2754, 64
  %v2760 = vpop.permute.xlu0 %2759
  %v2763 = vadd.f32 %v161, %v2758
  %v2764 = vadd.f32 %v167, %v2760
  %v2765 = vtanh.pop %v2763
  %v2766 = vtanh.pop %v2764
  %v2767 = vsub.f32 1.0, %v2731
  %v2768 = vsub.f32 1.0, %v2746
  %2771 = vrot.lane.b32.xlu0 %v2765, 96
  %v2772 = vpop.permute.xlu0 %2771
  %2773 = vrot.lane.b32.xlu0 %v2766, 96
  %v2774 = vpop.permute.xlu0 %2773
  %v2777 = vmul.f32 %v2767, %v2772
  %v2778 = vmul.f32 %v2768, %v2774
  %v2779 = vrot.slane %v2505, 1
  %v2780 = vrot.slane %v2506, 1
  %v2783 = vmul.f32 %v2731, %v2779
  %v2784 = vmul.f32 %v2746, %v2780
  %v2785 = vadd.f32 %v2777, %v2783
  %v2786 = vadd.f32 %v2778, %v2784
  %2789 = vrot.lane.b32.xlu0 %v2699, 96
  %v2790 = vpop.permute.xlu0 %2789
  %2791 = vrot.lane.b32.xlu0 %v2700, 96
  %v2792 = vpop.permute.xlu0 %2791
  %2795 = vst.msk [vmem:[%s11 + $0x8] sm:$0x1] %vm511, %v2790
  %2796 = vst.msk [vmem:[%s11 + $0x18] sm:$0x1] %vm511, %v2792
  %2797 = vst.msk [vmem:[%s11] sm:$0x80] %vm514, %v2785
  %2798 = vst.msk [vmem:[%s11 + $0x10] sm:$0x80] %vm514, %v2786
  %v2799 = vsel %vm236, %v2790, 0
  %2801 = vmatpush.msra.mxu0 0.0
  %2802 = vmatpush.msra.mxu0 0.0
  %2803 = vmatpush.msra.mxu0 0.0
  %2804 = vmatpush.msra.mxu0 0.0
  %2805 = vmatpush.msra.mxu0 0.0
  %2806 = vmatpush.msra.mxu0 0.0
  %2807 = vmatpush.msra.mxu0 0.0
  %2808 = vmatpush.msra.mxu0 0.0
  %2809 = vmatpush.msra.mxu0 0.0
  %2810 = vmatpush.msra.mxu0 0.0
  %2811 = vmatpush.msra.mxu0 0.0
  %2812 = vmatpush.msra.mxu0 0.0
  %2813 = vmatpush.msra.mxu0 %v56
  %2814 = vmatpush.msra.mxu0 %v55
  %2815 = vmatpush.msra.mxu0 %v54
  %2816 = vmatpush.msra.mxu0 %v53
  %2817 = vmatmul.f32.gmra.mxu0 %v2799
  %v2818 = vpop.f32.mrf.mxu0
  %v2819 = vadd.f32 %v58, %v2818
  %2820 = vdwg.mxu0
  %v2821 = vsel %vm236, %v2792, 0
  %2823 = vmatpush.msra.mxu0 0.0
  %2824 = vmatpush.msra.mxu0 0.0
  %2825 = vmatpush.msra.mxu0 0.0
  %2826 = vmatpush.msra.mxu0 0.0
  %2827 = vmatpush.msra.mxu0 0.0
  %2828 = vmatpush.msra.mxu0 0.0
  %2829 = vmatpush.msra.mxu0 0.0
  %2830 = vmatpush.msra.mxu0 0.0
  %2831 = vmatpush.msra.mxu0 0.0
  %2832 = vmatpush.msra.mxu0 0.0
  %2833 = vmatpush.msra.mxu0 0.0
  %2834 = vmatpush.msra.mxu0 0.0
  %2835 = vmatpush.msra.mxu0 %v56
  %2836 = vmatpush.msra.mxu0 %v55
  %2837 = vmatpush.msra.mxu0 %v54
  %2838 = vmatpush.msra.mxu0 %v53
  %2839 = vmatmul.f32.gmra.mxu0 %v2821
  %v2840 = vpop.f32.mrf.mxu0
  %v2841 = vadd.f32 %v58, %v2840
  %2842 = vdwg.mxu0
  %v2844 = vrot.slane %v2785, 7
  %2845 = vrot.lane.b32.xlu0 %v2844, 96
  %v2846 = vpop.permute.xlu0 %2845
  %v2847 = vsel %vm236, %v2846, 0
  %2849 = vmatpush.msra.mxu0 0.0
  %2850 = vmatpush.msra.mxu0 0.0
  %2851 = vmatpush.msra.mxu0 0.0
  %2852 = vmatpush.msra.mxu0 0.0
  %2853 = vmatpush.msra.mxu0 0.0
  %2854 = vmatpush.msra.mxu0 0.0
  %2855 = vmatpush.msra.mxu0 0.0
  %2856 = vmatpush.msra.mxu0 0.0
  %2857 = vmatpush.msra.mxu0 0.0
  %2858 = vmatpush.msra.mxu0 0.0
  %2859 = vmatpush.msra.mxu0 0.0
  %2860 = vmatpush.msra.mxu0 0.0
  %2861 = vmatpush.msra.mxu0 %v73
  %2862 = vmatpush.msra.mxu0 %v72
  %2863 = vmatpush.msra.mxu0 %v71
  %2864 = vmatpush.msra.mxu0 %v70
  %2865 = vmatmul.f32.gmra.mxu0 %v2847
  %v2866 = vpop.f32.mrf.mxu0
  %v2867 = vadd.f32 %v75, %v2866
  %2868 = vdwg.mxu0
  %v2870 = vrot.slane %v2786, 7
  %2871 = vrot.lane.b32.xlu0 %v2870, 96
  %v2872 = vpop.permute.xlu0 %2871
  %v2873 = vsel %vm236, %v2872, 0
  %2875 = vmatpush.msra.mxu0 0.0
  %2876 = vmatpush.msra.mxu0 0.0
  %2877 = vmatpush.msra.mxu0 0.0
  %2878 = vmatpush.msra.mxu0 0.0
  %2879 = vmatpush.msra.mxu0 0.0
  %2880 = vmatpush.msra.mxu0 0.0
  %2881 = vmatpush.msra.mxu0 0.0
  %2882 = vmatpush.msra.mxu0 0.0
  %2883 = vmatpush.msra.mxu0 0.0
  %2884 = vmatpush.msra.mxu0 0.0
  %2885 = vmatpush.msra.mxu0 0.0
  %2886 = vmatpush.msra.mxu0 0.0
  %2887 = vmatpush.msra.mxu0 %v73
  %2888 = vmatpush.msra.mxu0 %v72
  %2889 = vmatpush.msra.mxu0 %v71
  %2890 = vmatpush.msra.mxu0 %v70
  %2891 = vmatmul.f32.gmra.mxu0 %v2873
  %v2892 = vpop.f32.mrf.mxu0
  %v2893 = vadd.f32 %v75, %v2892
  %2894 = vdwg.mxu0
  %v2897 = vrot.slane %v2819, 7
  %v2898 = vrot.slane %v2841, 7
  %v2901 = vadd.f32 %v129, %v2897
  %v2902 = vadd.f32 %v135, %v2898
  %v2903 = vxor.u32 %v2901, 2147483648
  %v2904 = vxor.u32 %v2902, 2147483648
  %v2905 = vmul.f32 %v2903, 1.442695
  %v2906 = vpow.pop %v2905
  %v2907 = vmul.f32 %v2904, 1.442695
  %v2908 = vpow.pop %v2907
  %v2909 = vadd.f32 %v2906, 1.0
  %v2910 = vadd.f32 %v2908, 1.0
  %v2911 = vrcp.pop %v2909
  %v2912 = vmul.f32 %v2909, %v2911
  %v2913 = vsub.f32 1.0, %v2912
  %v2914 = vmul.f32 %v2911, %v2913
  %v2915 = vadd.f32 %v2911, %v2914
  %vm2916 = vweird.f32 %v2909
  %vm2917 = vweird.f32 %v2911
  %vm2918 = vmor %vm2916, %vm2917
  %v2919 = vsel %vm2918, %v2911, %v2915
  %v2920 = vand.u32 2147483647, %v2909
  %vm2921 = vcmp.eq.f32.partialorder %v2920, 8.507059e+37
  %v2922 = vand.u32 %v2909, 2147483648
  %v2923 = vor.u32 1.1754944e-38, %v2922
  %v2924 = vsel %vm2921, %v2923, %v2919
  %v2925 = vmul.f32 1.0, %v2924
  %v2926 = vrcp.pop %v2910
  %v2927 = vmul.f32 %v2910, %v2926
  %v2928 = vsub.f32 1.0, %v2927
  %v2929 = vmul.f32 %v2926, %v2928
  %v2930 = vadd.f32 %v2926, %v2929
  %vm2931 = vweird.f32 %v2910
  %vm2932 = vweird.f32 %v2926
  %vm2933 = vmor %vm2931, %vm2932
  %v2934 = vsel %vm2933, %v2926, %v2930
  %v2935 = vand.u32 2147483647, %v2910
  %vm2936 = vcmp.eq.f32.partialorder %v2935, 8.507059e+37
  %v2937 = vand.u32 %v2910, 2147483648
  %v2938 = vor.u32 1.1754944e-38, %v2937
  %v2939 = vsel %vm2936, %v2938, %v2934
  %v2940 = vmul.f32 1.0, %v2939
  %2941 = vrot.lane.b32.xlu0 %v2897, 64
  %v2942 = vpop.permute.xlu0 %2941
  %2943 = vrot.lane.b32.xlu0 %v2898, 64
  %v2944 = vpop.permute.xlu0 %2943
  %v2947 = vmul.f32 %v2925, %v2942
  %v2948 = vmul.f32 %v2940, %v2944
  %2951 = vrot.lane.b32.xlu0 %v2947, 64
  %v2952 = vpop.permute.xlu0 %2951
  %2953 = vrot.lane.b32.xlu0 %v2948, 64
  %v2954 = vpop.permute.xlu0 %2953
  %v2957 = vadd.f32 %v129, %v2952
  %v2958 = vadd.f32 %v135, %v2954
  %v2959 = vtanh.pop %v2957
  %v2960 = vtanh.pop %v2958
  %v2961 = vsub.f32 1.0, %v2925
  %v2962 = vsub.f32 1.0, %v2940
  %2965 = vrot.lane.b32.xlu0 %v2959, 96
  %v2966 = vpop.permute.xlu0 %2965
  %2967 = vrot.lane.b32.xlu0 %v2960, 96
  %v2968 = vpop.permute.xlu0 %2967
  %v2971 = vmul.f32 %v2961, %v2966
  %v2972 = vmul.f32 %v2962, %v2968
  %v2973 = vrot.slane %v2699, 7
  %v2974 = vrot.slane %v2700, 7
  %v2977 = vmul.f32 %v2925, %v2973
  %v2978 = vmul.f32 %v2940, %v2974
  %v2979 = vadd.f32 %v2971, %v2977
  %v2980 = vadd.f32 %v2972, %v2978
  %v2983 = vrot.slane %v2867, 2
  %v2984 = vrot.slane %v2893, 2
  %v2987 = vadd.f32 %v161, %v2983
  %v2988 = vadd.f32 %v167, %v2984
  %v2989 = vxor.u32 %v2987, 2147483648
  %v2990 = vxor.u32 %v2988, 2147483648
  %v2991 = vmul.f32 %v2989, 1.442695
  %v2992 = vpow.pop %v2991
  %v2993 = vmul.f32 %v2990, 1.442695
  %v2994 = vpow.pop %v2993
  %v2995 = vadd.f32 %v2992, 1.0
  %v2996 = vadd.f32 %v2994, 1.0
  %v2997 = vrcp.pop %v2995
  %v2998 = vmul.f32 %v2995, %v2997
  %v2999 = vsub.f32 1.0, %v2998
  %v3000 = vmul.f32 %v2997, %v2999
  %v3001 = vadd.f32 %v2997, %v3000
  %vm3002 = vweird.f32 %v2995
  %vm3003 = vweird.f32 %v2997
  %vm3004 = vmor %vm3002, %vm3003
  %v3005 = vsel %vm3004, %v2997, %v3001
  %v3006 = vand.u32 2147483647, %v2995
  %vm3007 = vcmp.eq.f32.partialorder %v3006, 8.507059e+37
  %v3008 = vand.u32 %v2995, 2147483648
  %v3009 = vor.u32 1.1754944e-38, %v3008
  %v3010 = vsel %vm3007, %v3009, %v3005
  %v3011 = vmul.f32 1.0, %v3010
  %v3012 = vrcp.pop %v2996
  %v3013 = vmul.f32 %v2996, %v3012
  %v3014 = vsub.f32 1.0, %v3013
  %v3015 = vmul.f32 %v3012, %v3014
  %v3016 = vadd.f32 %v3012, %v3015
  %vm3017 = vweird.f32 %v2996
  %vm3018 = vweird.f32 %v3012
  %vm3019 = vmor %vm3017, %vm3018
  %v3020 = vsel %vm3019, %v3012, %v3016
  %v3021 = vand.u32 2147483647, %v2996
  %vm3022 = vcmp.eq.f32.partialorder %v3021, 8.507059e+37
  %v3023 = vand.u32 %v2996, 2147483648
  %v3024 = vor.u32 1.1754944e-38, %v3023
  %v3025 = vsel %vm3022, %v3024, %v3020
  %v3026 = vmul.f32 1.0, %v3025
  %3027 = vrot.lane.b32.xlu0 %v2983, 64
  %v3028 = vpop.permute.xlu0 %3027
  %3029 = vrot.lane.b32.xlu0 %v2984, 64
  %v3030 = vpop.permute.xlu0 %3029
  %v3033 = vmul.f32 %v3011, %v3028
  %v3034 = vmul.f32 %v3026, %v3030
  %3037 = vrot.lane.b32.xlu0 %v3033, 64
  %v3038 = vpop.permute.xlu0 %3037
  %3039 = vrot.lane.b32.xlu0 %v3034, 64
  %v3040 = vpop.permute.xlu0 %3039
  %v3043 = vadd.f32 %v161, %v3038
  %v3044 = vadd.f32 %v167, %v3040
  %v3045 = vtanh.pop %v3043
  %v3046 = vtanh.pop %v3044
  %v3047 = vsub.f32 1.0, %v3011
  %v3048 = vsub.f32 1.0, %v3026
  %3051 = vrot.lane.b32.xlu0 %v3045, 96
  %v3052 = vpop.permute.xlu0 %3051
  %3053 = vrot.lane.b32.xlu0 %v3046, 96
  %v3054 = vpop.permute.xlu0 %3053
  %v3057 = vmul.f32 %v3047, %v3052
  %v3058 = vmul.f32 %v3048, %v3054
  %v3059 = vrot.slane %v2785, 1
  %v3060 = vrot.slane %v2786, 1
  %v3063 = vmul.f32 %v3011, %v3059
  %v3064 = vmul.f32 %v3026, %v3060
  %v3065 = vadd.f32 %v3057, %v3063
  %v3066 = vadd.f32 %v3058, %v3064
  %3069 = vrot.lane.b32.xlu0 %v2979, 96
  %v3070 = vpop.permute.xlu0 %3069
  %3071 = vrot.lane.b32.xlu0 %v2980, 96
  %v3072 = vpop.permute.xlu0 %3071
  %3075 = vst.msk [vmem:[%s11 + $0x8] sm:$0x2] %vm793, %v3070
  %3076 = vst.msk [vmem:[%s11 + $0x18] sm:$0x2] %vm793, %v3072
  %3077 = vst.msk [vmem:[%s11] sm:$0x40] %vm796, %v3065
  %3078 = vst.msk [vmem:[%s11 + $0x10] sm:$0x40] %vm796, %v3066
  %v3079 = vrot.slane %v2979, 1
  %3080 = vrot.lane.b32.xlu0 %v3079, 96
  %v3081 = vpop.permute.xlu0 %3080
  %v3082 = vsel %vm236, %v3081, 0
  %3084 = vmatpush.msra.mxu0 0.0
  %3085 = vmatpush.msra.mxu0 0.0
  %3086 = vmatpush.msra.mxu0 0.0
  %3087 = vmatpush.msra.mxu0 0.0
  %3088 = vmatpush.msra.mxu0 0.0
  %3089 = vmatpush.msra.mxu0 0.0
  %3090 = vmatpush.msra.mxu0 0.0
  %3091 = vmatpush.msra.mxu0 0.0
  %3092 = vmatpush.msra.mxu0 0.0
  %3093 = vmatpush.msra.mxu0 0.0
  %3094 = vmatpush.msra.mxu0 0.0
  %3095 = vmatpush.msra.mxu0 0.0
  %3096 = vmatpush.msra.mxu0 %v56
  %3097 = vmatpush.msra.mxu0 %v55
  %3098 = vmatpush.msra.mxu0 %v54
  %3099 = vmatpush.msra.mxu0 %v53
  %3100 = vmatmul.f32.gmra.mxu0 %v3082
  %v3101 = vpop.f32.mrf.mxu0
  %v3102 = vadd.f32 %v58, %v3101
  %3103 = vdwg.mxu0
  %v3104 = vrot.slane %v2980, 1
  %3105 = vrot.lane.b32.xlu0 %v3104, 96
  %v3106 = vpop.permute.xlu0 %3105
  %v3107 = vsel %vm236, %v3106, 0
  %3109 = vmatpush.msra.mxu0 0.0
  %3110 = vmatpush.msra.mxu0 0.0
  %3111 = vmatpush.msra.mxu0 0.0
  %3112 = vmatpush.msra.mxu0 0.0
  %3113 = vmatpush.msra.mxu0 0.0
  %3114 = vmatpush.msra.mxu0 0.0
  %3115 = vmatpush.msra.mxu0 0.0
  %3116 = vmatpush.msra.mxu0 0.0
  %3117 = vmatpush.msra.mxu0 0.0
  %3118 = vmatpush.msra.mxu0 0.0
  %3119 = vmatpush.msra.mxu0 0.0
  %3120 = vmatpush.msra.mxu0 0.0
  %3121 = vmatpush.msra.mxu0 %v56
  %3122 = vmatpush.msra.mxu0 %v55
  %3123 = vmatpush.msra.mxu0 %v54
  %3124 = vmatpush.msra.mxu0 %v53
  %3125 = vmatmul.f32.gmra.mxu0 %v3107
  %v3126 = vpop.f32.mrf.mxu0
  %v3127 = vadd.f32 %v58, %v3126
  %3128 = vdwg.mxu0
  %v3130 = vrot.slane %v3065, 6
  %3131 = vrot.lane.b32.xlu0 %v3130, 96
  %v3132 = vpop.permute.xlu0 %3131
  %v3133 = vsel %vm236, %v3132, 0
  %3135 = vmatpush.msra.mxu0 0.0
  %3136 = vmatpush.msra.mxu0 0.0
  %3137 = vmatpush.msra.mxu0 0.0
  %3138 = vmatpush.msra.mxu0 0.0
  %3139 = vmatpush.msra.mxu0 0.0
  %3140 = vmatpush.msra.mxu0 0.0
  %3141 = vmatpush.msra.mxu0 0.0
  %3142 = vmatpush.msra.mxu0 0.0
  %3143 = vmatpush.msra.mxu0 0.0
  %3144 = vmatpush.msra.mxu0 0.0
  %3145 = vmatpush.msra.mxu0 0.0
  %3146 = vmatpush.msra.mxu0 0.0
  %3147 = vmatpush.msra.mxu0 %v73
  %3148 = vmatpush.msra.mxu0 %v72
  %3149 = vmatpush.msra.mxu0 %v71
  %3150 = vmatpush.msra.mxu0 %v70
  %3151 = vmatmul.f32.gmra.mxu0 %v3133
  %v3152 = vpop.f32.mrf.mxu0
  %v3153 = vadd.f32 %v75, %v3152
  %3154 = vdwg.mxu0
  %v3156 = vrot.slane %v3066, 6
  %3157 = vrot.lane.b32.xlu0 %v3156, 96
  %v3158 = vpop.permute.xlu0 %3157
  %v3159 = vsel %vm236, %v3158, 0
  %3161 = vmatpush.msra.mxu0 0.0
  %3162 = vmatpush.msra.mxu0 0.0
  %3163 = vmatpush.msra.mxu0 0.0
  %3164 = vmatpush.msra.mxu0 0.0
  %3165 = vmatpush.msra.mxu0 0.0
  %3166 = vmatpush.msra.mxu0 0.0
  %3167 = vmatpush.msra.mxu0 0.0
  %3168 = vmatpush.msra.mxu0 0.0
  %3169 = vmatpush.msra.mxu0 0.0
  %3170 = vmatpush.msra.mxu0 0.0
  %3171 = vmatpush.msra.mxu0 0.0
  %3172 = vmatpush.msra.mxu0 0.0
  %3173 = vmatpush.msra.mxu0 %v73
  %3174 = vmatpush.msra.mxu0 %v72
  %3175 = vmatpush.msra.mxu0 %v71
  %3176 = vmatpush.msra.mxu0 %v70
  %3177 = vmatmul.f32.gmra.mxu0 %v3159
  %v3178 = vpop.f32.mrf.mxu0
  %v3179 = vadd.f32 %v75, %v3178
  %3180 = vdwg.mxu0
  %v3183 = vrot.slane %v3102, 6
  %v3184 = vrot.slane %v3127, 6
  %v3187 = vadd.f32 %v129, %v3183
  %v3188 = vadd.f32 %v135, %v3184
  %v3189 = vxor.u32 %v3187, 2147483648
  %v3190 = vxor.u32 %v3188, 2147483648
  %v3191 = vmul.f32 %v3189, 1.442695
  %v3192 = vpow.pop %v3191
  %v3193 = vmul.f32 %v3190, 1.442695
  %v3194 = vpow.pop %v3193
  %v3195 = vadd.f32 %v3192, 1.0
  %v3196 = vadd.f32 %v3194, 1.0
  %v3197 = vrcp.pop %v3195
  %v3198 = vmul.f32 %v3195, %v3197
  %v3199 = vsub.f32 1.0, %v3198
  %v3200 = vmul.f32 %v3197, %v3199
  %v3201 = vadd.f32 %v3197, %v3200
  %vm3202 = vweird.f32 %v3195
  %vm3203 = vweird.f32 %v3197
  %vm3204 = vmor %vm3202, %vm3203
  %v3205 = vsel %vm3204, %v3197, %v3201
  %v3206 = vand.u32 2147483647, %v3195
  %vm3207 = vcmp.eq.f32.partialorder %v3206, 8.507059e+37
  %v3208 = vand.u32 %v3195, 2147483648
  %v3209 = vor.u32 1.1754944e-38, %v3208
  %v3210 = vsel %vm3207, %v3209, %v3205
  %v3211 = vmul.f32 1.0, %v3210
  %v3212 = vrcp.pop %v3196
  %v3213 = vmul.f32 %v3196, %v3212
  %v3214 = vsub.f32 1.0, %v3213
  %v3215 = vmul.f32 %v3212, %v3214
  %v3216 = vadd.f32 %v3212, %v3215
  %vm3217 = vweird.f32 %v3196
  %vm3218 = vweird.f32 %v3212
  %vm3219 = vmor %vm3217, %vm3218
  %v3220 = vsel %vm3219, %v3212, %v3216
  %v3221 = vand.u32 2147483647, %v3196
  %vm3222 = vcmp.eq.f32.partialorder %v3221, 8.507059e+37
  %v3223 = vand.u32 %v3196, 2147483648
  %v3224 = vor.u32 1.1754944e-38, %v3223
  %v3225 = vsel %vm3222, %v3224, %v3220
  %v3226 = vmul.f32 1.0, %v3225
  %3227 = vrot.lane.b32.xlu0 %v3183, 64
  %v3228 = vpop.permute.xlu0 %3227
  %3229 = vrot.lane.b32.xlu0 %v3184, 64
  %v3230 = vpop.permute.xlu0 %3229
  %v3233 = vmul.f32 %v3211, %v3228
  %v3234 = vmul.f32 %v3226, %v3230
  %3237 = vrot.lane.b32.xlu0 %v3233, 64
  %v3238 = vpop.permute.xlu0 %3237
  %3239 = vrot.lane.b32.xlu0 %v3234, 64
  %v3240 = vpop.permute.xlu0 %3239
  %v3243 = vadd.f32 %v129, %v3238
  %v3244 = vadd.f32 %v135, %v3240
  %v3245 = vtanh.pop %v3243
  %v3246 = vtanh.pop %v3244
  %v3247 = vsub.f32 1.0, %v3211
  %v3248 = vsub.f32 1.0, %v3226
  %3251 = vrot.lane.b32.xlu0 %v3245, 96
  %v3252 = vpop.permute.xlu0 %3251
  %3253 = vrot.lane.b32.xlu0 %v3246, 96
  %v3254 = vpop.permute.xlu0 %3253
  %v3257 = vmul.f32 %v3247, %v3252
  %v3258 = vmul.f32 %v3248, %v3254
  %v3259 = vrot.slane %v2979, 7
  %v3260 = vrot.slane %v2980, 7
  %v3263 = vmul.f32 %v3211, %v3259
  %v3264 = vmul.f32 %v3226, %v3260
  %v3265 = vadd.f32 %v3257, %v3263
  %v3266 = vadd.f32 %v3258, %v3264
  %v3269 = vrot.slane %v3153, 3
  %v3270 = vrot.slane %v3179, 3
  %v3273 = vadd.f32 %v161, %v3269
  %v3274 = vadd.f32 %v167, %v3270
  %v3275 = vxor.u32 %v3273, 2147483648
  %v3276 = vxor.u32 %v3274, 2147483648
  %v3277 = vmul.f32 %v3275, 1.442695
  %v3278 = vpow.pop %v3277
  %v3279 = vmul.f32 %v3276, 1.442695
  %v3280 = vpow.pop %v3279
  %v3281 = vadd.f32 %v3278, 1.0
  %v3282 = vadd.f32 %v3280, 1.0
  %v3283 = vrcp.pop %v3281
  %v3284 = vmul.f32 %v3281, %v3283
  %v3285 = vsub.f32 1.0, %v3284
  %v3286 = vmul.f32 %v3283, %v3285
  %v3287 = vadd.f32 %v3283, %v3286
  %vm3288 = vweird.f32 %v3281
  %vm3289 = vweird.f32 %v3283
  %vm3290 = vmor %vm3288, %vm3289
  %v3291 = vsel %vm3290, %v3283, %v3287
  %v3292 = vand.u32 2147483647, %v3281
  %vm3293 = vcmp.eq.f32.partialorder %v3292, 8.507059e+37
  %v3294 = vand.u32 %v3281, 2147483648
  %v3295 = vor.u32 1.1754944e-38, %v3294
  %v3296 = vsel %vm3293, %v3295, %v3291
  %v3297 = vmul.f32 1.0, %v3296
  %v3298 = vrcp.pop %v3282
  %v3299 = vmul.f32 %v3282, %v3298
  %v3300 = vsub.f32 1.0, %v3299
  %v3301 = vmul.f32 %v3298, %v3300
  %v3302 = vadd.f32 %v3298, %v3301
  %vm3303 = vweird.f32 %v3282
  %vm3304 = vweird.f32 %v3298
  %vm3305 = vmor %vm3303, %vm3304
  %v3306 = vsel %vm3305, %v3298, %v3302
  %v3307 = vand.u32 2147483647, %v3282
  %vm3308 = vcmp.eq.f32.partialorder %v3307, 8.507059e+37
  %v3309 = vand.u32 %v3282, 2147483648
  %v3310 = vor.u32 1.1754944e-38, %v3309
  %v3311 = vsel %vm3308, %v3310, %v3306
  %v3312 = vmul.f32 1.0, %v3311
  %3313 = vrot.lane.b32.xlu0 %v3269, 64
  %v3314 = vpop.permute.xlu0 %3313
  %3315 = vrot.lane.b32.xlu0 %v3270, 64
  %v3316 = vpop.permute.xlu0 %3315
  %v3319 = vmul.f32 %v3297, %v3314
  %v3320 = vmul.f32 %v3312, %v3316
  %3323 = vrot.lane.b32.xlu0 %v3319, 64
  %v3324 = vpop.permute.xlu0 %3323
  %3325 = vrot.lane.b32.xlu0 %v3320, 64
  %v3326 = vpop.permute.xlu0 %3325
  %v3329 = vadd.f32 %v161, %v3324
  %v3330 = vadd.f32 %v167, %v3326
  %v3331 = vtanh.pop %v3329
  %v3332 = vtanh.pop %v3330
  %v3333 = vsub.f32 1.0, %v3297
  %v3334 = vsub.f32 1.0, %v3312
  %3337 = vrot.lane.b32.xlu0 %v3331, 96
  %v3338 = vpop.permute.xlu0 %3337
  %3339 = vrot.lane.b32.xlu0 %v3332, 96
  %v3340 = vpop.permute.xlu0 %3339
  %v3343 = vmul.f32 %v3333, %v3338
  %v3344 = vmul.f32 %v3334, %v3340
  %v3345 = vrot.slane %v3065, 1
  %v3346 = vrot.slane %v3066, 1
  %v3349 = vmul.f32 %v3297, %v3345
  %v3350 = vmul.f32 %v3312, %v3346
  %v3351 = vadd.f32 %v3343, %v3349
  %v3352 = vadd.f32 %v3344, %v3350
  %3355 = vrot.lane.b32.xlu0 %v3265, 96
  %v3356 = vpop.permute.xlu0 %3355
  %3357 = vrot.lane.b32.xlu0 %v3266, 96
  %v3358 = vpop.permute.xlu0 %3357
  %3361 = vst.msk [vmem:[%s11 + $0x8] sm:$0x4] %vm1081, %v3356
  %3362 = vst.msk [vmem:[%s11 + $0x18] sm:$0x4] %vm1081, %v3358
  %3363 = vst.msk [vmem:[%s11] sm:$0x20] %vm1084, %v3351
  %3364 = vst.msk [vmem:[%s11 + $0x10] sm:$0x20] %vm1084, %v3352
  %v3365 = vrot.slane %v3265, 2
  %3366 = vrot.lane.b32.xlu0 %v3365, 96
  %v3367 = vpop.permute.xlu0 %3366
  %v3368 = vsel %vm236, %v3367, 0
  %3370 = vmatpush.msra.mxu0 0.0
  %3371 = vmatpush.msra.mxu0 0.0
  %3372 = vmatpush.msra.mxu0 0.0
  %3373 = vmatpush.msra.mxu0 0.0
  %3374 = vmatpush.msra.mxu0 0.0
  %3375 = vmatpush.msra.mxu0 0.0
  %3376 = vmatpush.msra.mxu0 0.0
  %3377 = vmatpush.msra.mxu0 0.0
  %3378 = vmatpush.msra.mxu0 0.0
  %3379 = vmatpush.msra.mxu0 0.0
  %3380 = vmatpush.msra.mxu0 0.0
  %3381 = vmatpush.msra.mxu0 0.0
  %3382 = vmatpush.msra.mxu0 %v56
  %3383 = vmatpush.msra.mxu0 %v55
  %3384 = vmatpush.msra.mxu0 %v54
  %3385 = vmatpush.msra.mxu0 %v53
  %3386 = vmatmul.f32.gmra.mxu0 %v3368
  %v3387 = vpop.f32.mrf.mxu0
  %v3388 = vadd.f32 %v58, %v3387
  %3389 = vdwg.mxu0
  %v3390 = vrot.slane %v3266, 2
  %3391 = vrot.lane.b32.xlu0 %v3390, 96
  %v3392 = vpop.permute.xlu0 %3391
  %v3393 = vsel %vm236, %v3392, 0
  %3395 = vmatpush.msra.mxu0 0.0
  %3396 = vmatpush.msra.mxu0 0.0
  %3397 = vmatpush.msra.mxu0 0.0
  %3398 = vmatpush.msra.mxu0 0.0
  %3399 = vmatpush.msra.mxu0 0.0
  %3400 = vmatpush.msra.mxu0 0.0
  %3401 = vmatpush.msra.mxu0 0.0
  %3402 = vmatpush.msra.mxu0 0.0
  %3403 = vmatpush.msra.mxu0 0.0
  %3404 = vmatpush.msra.mxu0 0.0
  %3405 = vmatpush.msra.mxu0 0.0
  %3406 = vmatpush.msra.mxu0 0.0
  %3407 = vmatpush.msra.mxu0 %v56
  %3408 = vmatpush.msra.mxu0 %v55
  %3409 = vmatpush.msra.mxu0 %v54
  %3410 = vmatpush.msra.mxu0 %v53
  %3411 = vmatmul.f32.gmra.mxu0 %v3393
  %v3412 = vpop.f32.mrf.mxu0
  %v3413 = vadd.f32 %v58, %v3412
  %3414 = vdwg.mxu0
  %v3416 = vrot.slane %v3351, 5
  %3417 = vrot.lane.b32.xlu0 %v3416, 96
  %v3418 = vpop.permute.xlu0 %3417
  %v3419 = vsel %vm236, %v3418, 0
  %3421 = vmatpush.msra.mxu0 0.0
  %3422 = vmatpush.msra.mxu0 0.0
  %3423 = vmatpush.msra.mxu0 0.0
  %3424 = vmatpush.msra.mxu0 0.0
  %3425 = vmatpush.msra.mxu0 0.0
  %3426 = vmatpush.msra.mxu0 0.0
  %3427 = vmatpush.msra.mxu0 0.0
  %3428 = vmatpush.msra.mxu0 0.0
  %3429 = vmatpush.msra.mxu0 0.0
  %3430 = vmatpush.msra.mxu0 0.0
  %3431 = vmatpush.msra.mxu0 0.0
  %3432 = vmatpush.msra.mxu0 0.0
  %3433 = vmatpush.msra.mxu0 %v73
  %3434 = vmatpush.msra.mxu0 %v72
  %3435 = vmatpush.msra.mxu0 %v71
  %3436 = vmatpush.msra.mxu0 %v70
  %3437 = vmatmul.f32.gmra.mxu0 %v3419
  %v3438 = vpop.f32.mrf.mxu0
  %v3439 = vadd.f32 %v75, %v3438
  %3440 = vdwg.mxu0
  %v3442 = vrot.slane %v3352, 5
  %3443 = vrot.lane.b32.xlu0 %v3442, 96
  %v3444 = vpop.permute.xlu0 %3443
  %v3445 = vsel %vm236, %v3444, 0
  %3447 = vmatpush.msra.mxu0 0.0
  %3448 = vmatpush.msra.mxu0 0.0
  %3449 = vmatpush.msra.mxu0 0.0
  %3450 = vmatpush.msra.mxu0 0.0
  %3451 = vmatpush.msra.mxu0 0.0
  %3452 = vmatpush.msra.mxu0 0.0
  %3453 = vmatpush.msra.mxu0 0.0
  %3454 = vmatpush.msra.mxu0 0.0
  %3455 = vmatpush.msra.mxu0 0.0
  %3456 = vmatpush.msra.mxu0 0.0
  %3457 = vmatpush.msra.mxu0 0.0
  %3458 = vmatpush.msra.mxu0 0.0
  %3459 = vmatpush.msra.mxu0 %v73
  %3460 = vmatpush.msra.mxu0 %v72
  %3461 = vmatpush.msra.mxu0 %v71
  %3462 = vmatpush.msra.mxu0 %v70
  %3463 = vmatmul.f32.gmra.mxu0 %v3445
  %v3464 = vpop.f32.mrf.mxu0
  %v3465 = vadd.f32 %v75, %v3464
  %3466 = vdwg.mxu0
  %v3469 = vrot.slane %v3388, 5
  %v3470 = vrot.slane %v3413, 5
  %v3473 = vadd.f32 %v129, %v3469
  %v3474 = vadd.f32 %v135, %v3470
  %v3475 = vxor.u32 %v3473, 2147483648
  %v3476 = vxor.u32 %v3474, 2147483648
  %v3477 = vmul.f32 %v3475, 1.442695
  %v3478 = vpow.pop %v3477
  %v3479 = vmul.f32 %v3476, 1.442695
  %v3480 = vpow.pop %v3479
  %v3481 = vadd.f32 %v3478, 1.0
  %v3482 = vadd.f32 %v3480, 1.0
  %v3483 = vrcp.pop %v3481
  %v3484 = vmul.f32 %v3481, %v3483
  %v3485 = vsub.f32 1.0, %v3484
  %v3486 = vmul.f32 %v3483, %v3485
  %v3487 = vadd.f32 %v3483, %v3486
  %vm3488 = vweird.f32 %v3481
  %vm3489 = vweird.f32 %v3483
  %vm3490 = vmor %vm3488, %vm3489
  %v3491 = vsel %vm3490, %v3483, %v3487
  %v3492 = vand.u32 2147483647, %v3481
  %vm3493 = vcmp.eq.f32.partialorder %v3492, 8.507059e+37
  %v3494 = vand.u32 %v3481, 2147483648
  %v3495 = vor.u32 1.1754944e-38, %v3494
  %v3496 = vsel %vm3493, %v3495, %v3491
  %v3497 = vmul.f32 1.0, %v3496
  %v3498 = vrcp.pop %v3482
  %v3499 = vmul.f32 %v3482, %v3498
  %v3500 = vsub.f32 1.0, %v3499
  %v3501 = vmul.f32 %v3498, %v3500
  %v3502 = vadd.f32 %v3498, %v3501
  %vm3503 = vweird.f32 %v3482
  %vm3504 = vweird.f32 %v3498
  %vm3505 = vmor %vm3503, %vm3504
  %v3506 = vsel %vm3505, %v3498, %v3502
  %v3507 = vand.u32 2147483647, %v3482
  %vm3508 = vcmp.eq.f32.partialorder %v3507, 8.507059e+37
  %v3509 = vand.u32 %v3482, 2147483648
  %v3510 = vor.u32 1.1754944e-38, %v3509
  %v3511 = vsel %vm3508, %v3510, %v3506
  %v3512 = vmul.f32 1.0, %v3511
  %3513 = vrot.lane.b32.xlu0 %v3469, 64
  %v3514 = vpop.permute.xlu0 %3513
  %3515 = vrot.lane.b32.xlu0 %v3470, 64
  %v3516 = vpop.permute.xlu0 %3515
  %v3519 = vmul.f32 %v3497, %v3514
  %v3520 = vmul.f32 %v3512, %v3516
  %3523 = vrot.lane.b32.xlu0 %v3519, 64
  %v3524 = vpop.permute.xlu0 %3523
  %3525 = vrot.lane.b32.xlu0 %v3520, 64
  %v3526 = vpop.permute.xlu0 %3525
  %v3529 = vadd.f32 %v129, %v3524
  %v3530 = vadd.f32 %v135, %v3526
  %v3531 = vtanh.pop %v3529
  %v3532 = vtanh.pop %v3530
  %v3533 = vsub.f32 1.0, %v3497
  %v3534 = vsub.f32 1.0, %v3512
  %3537 = vrot.lane.b32.xlu0 %v3531, 96
  %v3538 = vpop.permute.xlu0 %3537
  %3539 = vrot.lane.b32.xlu0 %v3532, 96
  %v3540 = vpop.permute.xlu0 %3539
  %v3543 = vmul.f32 %v3533, %v3538
  %v3544 = vmul.f32 %v3534, %v3540
  %v3545 = vrot.slane %v3265, 7
  %v3546 = vrot.slane %v3266, 7
  %v3549 = vmul.f32 %v3497, %v3545
  %v3550 = vmul.f32 %v3512, %v3546
  %v3551 = vadd.f32 %v3543, %v3549
  %v3552 = vadd.f32 %v3544, %v3550
  %v3555 = vrot.slane %v3439, 4
  %v3556 = vrot.slane %v3465, 4
  %v3559 = vadd.f32 %v161, %v3555
  %v3560 = vadd.f32 %v167, %v3556
  %v3561 = vxor.u32 %v3559, 2147483648
  %v3562 = vxor.u32 %v3560, 2147483648
  %v3563 = vmul.f32 %v3561, 1.442695
  %v3564 = vpow.pop %v3563
  %v3565 = vmul.f32 %v3562, 1.442695
  %v3566 = vpow.pop %v3565
  %v3567 = vadd.f32 %v3564, 1.0
  %v3568 = vadd.f32 %v3566, 1.0
  %v3569 = vrcp.pop %v3567
  %v3570 = vmul.f32 %v3567, %v3569
  %v3571 = vsub.f32 1.0, %v3570
  %v3572 = vmul.f32 %v3569, %v3571
  %v3573 = vadd.f32 %v3569, %v3572
  %vm3574 = vweird.f32 %v3567
  %vm3575 = vweird.f32 %v3569
  %vm3576 = vmor %vm3574, %vm3575
  %v3577 = vsel %vm3576, %v3569, %v3573
  %v3578 = vand.u32 2147483647, %v3567
  %vm3579 = vcmp.eq.f32.partialorder %v3578, 8.507059e+37
  %v3580 = vand.u32 %v3567, 2147483648
  %v3581 = vor.u32 1.1754944e-38, %v3580
  %v3582 = vsel %vm3579, %v3581, %v3577
  %v3583 = vmul.f32 1.0, %v3582
  %v3584 = vrcp.pop %v3568
  %v3585 = vmul.f32 %v3568, %v3584
  %v3586 = vsub.f32 1.0, %v3585
  %v3587 = vmul.f32 %v3584, %v3586
  %v3588 = vadd.f32 %v3584, %v3587
  %vm3589 = vweird.f32 %v3568
  %vm3590 = vweird.f32 %v3584
  %vm3591 = vmor %vm3589, %vm3590
  %v3592 = vsel %vm3591, %v3584, %v3588
  %v3593 = vand.u32 2147483647, %v3568
  %vm3594 = vcmp.eq.f32.partialorder %v3593, 8.507059e+37
  %v3595 = vand.u32 %v3568, 2147483648
  %v3596 = vor.u32 1.1754944e-38, %v3595
  %v3597 = vsel %vm3594, %v3596, %v3592
  %v3598 = vmul.f32 1.0, %v3597
  %3599 = vrot.lane.b32.xlu0 %v3555, 64
  %v3600 = vpop.permute.xlu0 %3599
  %3601 = vrot.lane.b32.xlu0 %v3556, 64
  %v3602 = vpop.permute.xlu0 %3601
  %v3605 = vmul.f32 %v3583, %v3600
  %v3606 = vmul.f32 %v3598, %v3602
  %3609 = vrot.lane.b32.xlu0 %v3605, 64
  %v3610 = vpop.permute.xlu0 %3609
  %3611 = vrot.lane.b32.xlu0 %v3606, 64
  %v3612 = vpop.permute.xlu0 %3611
  %v3615 = vadd.f32 %v161, %v3610
  %v3616 = vadd.f32 %v167, %v3612
  %v3617 = vtanh.pop %v3615
  %v3618 = vtanh.pop %v3616
  %v3619 = vsub.f32 1.0, %v3583
  %v3620 = vsub.f32 1.0, %v3598
  %3623 = vrot.lane.b32.xlu0 %v3617, 96
  %v3624 = vpop.permute.xlu0 %3623
  %3625 = vrot.lane.b32.xlu0 %v3618, 96
  %v3626 = vpop.permute.xlu0 %3625
  %v3629 = vmul.f32 %v3619, %v3624
  %v3630 = vmul.f32 %v3620, %v3626
  %v3631 = vrot.slane %v3351, 1
  %v3632 = vrot.slane %v3352, 1
  %v3635 = vmul.f32 %v3583, %v3631
  %v3636 = vmul.f32 %v3598, %v3632
  %v3637 = vadd.f32 %v3629, %v3635
  %v3638 = vadd.f32 %v3630, %v3636
  %3641 = vrot.lane.b32.xlu0 %v3551, 96
  %v3642 = vpop.permute.xlu0 %3641
  %3643 = vrot.lane.b32.xlu0 %v3552, 96
  %v3644 = vpop.permute.xlu0 %3643
  %3647 = vst.msk [vmem:[%s11 + $0x8] sm:$0x8] %vm1369, %v3642
  %3648 = vst.msk [vmem:[%s11 + $0x18] sm:$0x8] %vm1369, %v3644
  %3649 = vst.msk [vmem:[%s11] sm:$0x10] %vm1372, %v3637
  %3650 = vst.msk [vmem:[%s11 + $0x10] sm:$0x10] %vm1372, %v3638
  %v3651 = vrot.slane %v3551, 3
  %3652 = vrot.lane.b32.xlu0 %v3651, 96
  %v3653 = vpop.permute.xlu0 %3652
  %v3654 = vsel %vm236, %v3653, 0
  %3656 = vmatpush.msra.mxu0 0.0
  %3657 = vmatpush.msra.mxu0 0.0
  %3658 = vmatpush.msra.mxu0 0.0
  %3659 = vmatpush.msra.mxu0 0.0
  %3660 = vmatpush.msra.mxu0 0.0
  %3661 = vmatpush.msra.mxu0 0.0
  %3662 = vmatpush.msra.mxu0 0.0
  %3663 = vmatpush.msra.mxu0 0.0
  %3664 = vmatpush.msra.mxu0 0.0
  %3665 = vmatpush.msra.mxu0 0.0
  %3666 = vmatpush.msra.mxu0 0.0
  %3667 = vmatpush.msra.mxu0 0.0
  %3668 = vmatpush.msra.mxu0 %v56
  %3669 = vmatpush.msra.mxu0 %v55
  %3670 = vmatpush.msra.mxu0 %v54
  %3671 = vmatpush.msra.mxu0 %v53
  %3672 = vmatmul.f32.gmra.mxu0 %v3654
  %v3673 = vpop.f32.mrf.mxu0
  %v3674 = vadd.f32 %v58, %v3673
  %3675 = vdwg.mxu0
  %v3676 = vrot.slane %v3552, 3
  %3677 = vrot.lane.b32.xlu0 %v3676, 96
  %v3678 = vpop.permute.xlu0 %3677
  %v3679 = vsel %vm236, %v3678, 0
  %3681 = vmatpush.msra.mxu0 0.0
  %3682 = vmatpush.msra.mxu0 0.0
  %3683 = vmatpush.msra.mxu0 0.0
  %3684 = vmatpush.msra.mxu0 0.0
  %3685 = vmatpush.msra.mxu0 0.0
  %3686 = vmatpush.msra.mxu0 0.0
  %3687 = vmatpush.msra.mxu0 0.0
  %3688 = vmatpush.msra.mxu0 0.0
  %3689 = vmatpush.msra.mxu0 0.0
  %3690 = vmatpush.msra.mxu0 0.0
  %3691 = vmatpush.msra.mxu0 0.0
  %3692 = vmatpush.msra.mxu0 0.0
  %3693 = vmatpush.msra.mxu0 %v56
  %3694 = vmatpush.msra.mxu0 %v55
  %3695 = vmatpush.msra.mxu0 %v54
  %3696 = vmatpush.msra.mxu0 %v53
  %3697 = vmatmul.f32.gmra.mxu0 %v3679
  %v3698 = vpop.f32.mrf.mxu0
  %v3699 = vadd.f32 %v58, %v3698
  %3700 = vdwg.mxu0
  %v3702 = vrot.slane %v3637, 4
  %3703 = vrot.lane.b32.xlu0 %v3702, 96
  %v3704 = vpop.permute.xlu0 %3703
  %v3705 = vsel %vm236, %v3704, 0
  %3707 = vmatpush.msra.mxu0 0.0
  %3708 = vmatpush.msra.mxu0 0.0
  %3709 = vmatpush.msra.mxu0 0.0
  %3710 = vmatpush.msra.mxu0 0.0
  %3711 = vmatpush.msra.mxu0 0.0
  %3712 = vmatpush.msra.mxu0 0.0
  %3713 = vmatpush.msra.mxu0 0.0
  %3714 = vmatpush.msra.mxu0 0.0
  %3715 = vmatpush.msra.mxu0 0.0
  %3716 = vmatpush.msra.mxu0 0.0
  %3717 = vmatpush.msra.mxu0 0.0
  %3718 = vmatpush.msra.mxu0 0.0
  %3719 = vmatpush.msra.mxu0 %v73
  %3720 = vmatpush.msra.mxu0 %v72
  %3721 = vmatpush.msra.mxu0 %v71
  %3722 = vmatpush.msra.mxu0 %v70
  %3723 = vmatmul.f32.gmra.mxu0 %v3705
  %v3724 = vpop.f32.mrf.mxu0
  %v3725 = vadd.f32 %v75, %v3724
  %3726 = vdwg.mxu0
  %v3728 = vrot.slane %v3638, 4
  %3729 = vrot.lane.b32.xlu0 %v3728, 96
  %v3730 = vpop.permute.xlu0 %3729
  %v3731 = vsel %vm236, %v3730, 0
  %3733 = vmatpush.msra.mxu0 0.0
  %3734 = vmatpush.msra.mxu0 0.0
  %3735 = vmatpush.msra.mxu0 0.0
  %3736 = vmatpush.msra.mxu0 0.0
  %3737 = vmatpush.msra.mxu0 0.0
  %3738 = vmatpush.msra.mxu0 0.0
  %3739 = vmatpush.msra.mxu0 0.0
  %3740 = vmatpush.msra.mxu0 0.0
  %3741 = vmatpush.msra.mxu0 0.0
  %3742 = vmatpush.msra.mxu0 0.0
  %3743 = vmatpush.msra.mxu0 0.0
  %3744 = vmatpush.msra.mxu0 0.0
  %3745 = vmatpush.msra.mxu0 %v73
  %3746 = vmatpush.msra.mxu0 %v72
  %3747 = vmatpush.msra.mxu0 %v71
  %3748 = vmatpush.msra.mxu0 %v70
  %3749 = vmatmul.f32.gmra.mxu0 %v3731
  %v3750 = vpop.f32.mrf.mxu0
  %v3751 = vadd.f32 %v75, %v3750
  %3752 = vdwg.mxu0
  %v3755 = vrot.slane %v3674, 4
  %v3756 = vrot.slane %v3699, 4
  %v3759 = vadd.f32 %v129, %v3755
  %v3760 = vadd.f32 %v135, %v3756
  %v3761 = vxor.u32 %v3759, 2147483648
  %v3762 = vxor.u32 %v3760, 2147483648
  %v3763 = vmul.f32 %v3761, 1.442695
  %v3764 = vpow.pop %v3763
  %v3765 = vmul.f32 %v3762, 1.442695
  %v3766 = vpow.pop %v3765
  %v3767 = vadd.f32 %v3764, 1.0
  %v3768 = vadd.f32 %v3766, 1.0
  %v3769 = vrcp.pop %v3767
  %v3770 = vmul.f32 %v3767, %v3769
  %v3771 = vsub.f32 1.0, %v3770
  %v3772 = vmul.f32 %v3769, %v3771
  %v3773 = vadd.f32 %v3769, %v3772
  %vm3774 = vweird.f32 %v3767
  %vm3775 = vweird.f32 %v3769
  %vm3776 = vmor %vm3774, %vm3775
  %v3777 = vsel %vm3776, %v3769, %v3773
  %v3778 = vand.u32 2147483647, %v3767
  %vm3779 = vcmp.eq.f32.partialorder %v3778, 8.507059e+37
  %v3780 = vand.u32 %v3767, 2147483648
  %v3781 = vor.u32 1.1754944e-38, %v3780
  %v3782 = vsel %vm3779, %v3781, %v3777
  %v3783 = vmul.f32 1.0, %v3782
  %v3784 = vrcp.pop %v3768
  %v3785 = vmul.f32 %v3768, %v3784
  %v3786 = vsub.f32 1.0, %v3785
  %v3787 = vmul.f32 %v3784, %v3786
  %v3788 = vadd.f32 %v3784, %v3787
  %vm3789 = vweird.f32 %v3768
  %vm3790 = vweird.f32 %v3784
  %vm3791 = vmor %vm3789, %vm3790
  %v3792 = vsel %vm3791, %v3784, %v3788
  %v3793 = vand.u32 2147483647, %v3768
  %vm3794 = vcmp.eq.f32.partialorder %v3793, 8.507059e+37
  %v3795 = vand.u32 %v3768, 2147483648
  %v3796 = vor.u32 1.1754944e-38, %v3795
  %v3797 = vsel %vm3794, %v3796, %v3792
  %v3798 = vmul.f32 1.0, %v3797
  %3799 = vrot.lane.b32.xlu0 %v3755, 64
  %v3800 = vpop.permute.xlu0 %3799
  %3801 = vrot.lane.b32.xlu0 %v3756, 64
  %v3802 = vpop.permute.xlu0 %3801
  %v3805 = vmul.f32 %v3783, %v3800
  %v3806 = vmul.f32 %v3798, %v3802
  %3809 = vrot.lane.b32.xlu0 %v3805, 64
  %v3810 = vpop.permute.xlu0 %3809
  %3811 = vrot.lane.b32.xlu0 %v3806, 64
  %v3812 = vpop.permute.xlu0 %3811
  %v3815 = vadd.f32 %v129, %v3810
  %v3816 = vadd.f32 %v135, %v3812
  %v3817 = vtanh.pop %v3815
  %v3818 = vtanh.pop %v3816
  %v3819 = vsub.f32 1.0, %v3783
  %v3820 = vsub.f32 1.0, %v3798
  %3823 = vrot.lane.b32.xlu0 %v3817, 96
  %v3824 = vpop.permute.xlu0 %3823
  %3825 = vrot.lane.b32.xlu0 %v3818, 96
  %v3826 = vpop.permute.xlu0 %3825
  %v3829 = vmul.f32 %v3819, %v3824
  %v3830 = vmul.f32 %v3820, %v3826
  %v3831 = vrot.slane %v3551, 7
  %v3832 = vrot.slane %v3552, 7
  %v3835 = vmul.f32 %v3783, %v3831
  %v3836 = vmul.f32 %v3798, %v3832
  %v3837 = vadd.f32 %v3829, %v3835
  %v3838 = vadd.f32 %v3830, %v3836
  %v3841 = vrot.slane %v3725, 5
  %v3842 = vrot.slane %v3751, 5
  %v3845 = vadd.f32 %v161, %v3841
  %v3846 = vadd.f32 %v167, %v3842
  %v3847 = vxor.u32 %v3845, 2147483648
  %v3848 = vxor.u32 %v3846, 2147483648
  %v3849 = vmul.f32 %v3847, 1.442695
  %v3850 = vpow.pop %v3849
  %v3851 = vmul.f32 %v3848, 1.442695
  %v3852 = vpow.pop %v3851
  %v3853 = vadd.f32 %v3850, 1.0
  %v3854 = vadd.f32 %v3852, 1.0
  %v3855 = vrcp.pop %v3853
  %v3856 = vmul.f32 %v3853, %v3855
  %v3857 = vsub.f32 1.0, %v3856
  %v3858 = vmul.f32 %v3855, %v3857
  %v3859 = vadd.f32 %v3855, %v3858
  %vm3860 = vweird.f32 %v3853
  %vm3861 = vweird.f32 %v3855
  %vm3862 = vmor %vm3860, %vm3861
  %v3863 = vsel %vm3862, %v3855, %v3859
  %v3864 = vand.u32 2147483647, %v3853
  %vm3865 = vcmp.eq.f32.partialorder %v3864, 8.507059e+37
  %v3866 = vand.u32 %v3853, 2147483648
  %v3867 = vor.u32 1.1754944e-38, %v3866
  %v3868 = vsel %vm3865, %v3867, %v3863
  %v3869 = vmul.f32 1.0, %v3868
  %v3870 = vrcp.pop %v3854
  %v3871 = vmul.f32 %v3854, %v3870
  %v3872 = vsub.f32 1.0, %v3871
  %v3873 = vmul.f32 %v3870, %v3872
  %v3874 = vadd.f32 %v3870, %v3873
  %vm3875 = vweird.f32 %v3854
  %vm3876 = vweird.f32 %v3870
  %vm3877 = vmor %vm3875, %vm3876
  %v3878 = vsel %vm3877, %v3870, %v3874
  %v3879 = vand.u32 2147483647, %v3854
  %vm3880 = vcmp.eq.f32.partialorder %v3879, 8.507059e+37
  %v3881 = vand.u32 %v3854, 2147483648
  %v3882 = vor.u32 1.1754944e-38, %v3881
  %v3883 = vsel %vm3880, %v3882, %v3878
  %v3884 = vmul.f32 1.0, %v3883
  %3885 = vrot.lane.b32.xlu0 %v3841, 64
  %v3886 = vpop.permute.xlu0 %3885
  %3887 = vrot.lane.b32.xlu0 %v3842, 64
  %v3888 = vpop.permute.xlu0 %3887
  %v3891 = vmul.f32 %v3869, %v3886
  %v3892 = vmul.f32 %v3884, %v3888
  %3895 = vrot.lane.b32.xlu0 %v3891, 64
  %v3896 = vpop.permute.xlu0 %3895
  %3897 = vrot.lane.b32.xlu0 %v3892, 64
  %v3898 = vpop.permute.xlu0 %3897
  %v3901 = vadd.f32 %v161, %v3896
  %v3902 = vadd.f32 %v167, %v3898
  %v3903 = vtanh.pop %v3901
  %v3904 = vtanh.pop %v3902
  %v3905 = vsub.f32 1.0, %v3869
  %v3906 = vsub.f32 1.0, %v3884
  %3909 = vrot.lane.b32.xlu0 %v3903, 96
  %v3910 = vpop.permute.xlu0 %3909
  %3911 = vrot.lane.b32.xlu0 %v3904, 96
  %v3912 = vpop.permute.xlu0 %3911
  %v3915 = vmul.f32 %v3905, %v3910
  %v3916 = vmul.f32 %v3906, %v3912
  %v3917 = vrot.slane %v3637, 1
  %v3918 = vrot.slane %v3638, 1
  %v3921 = vmul.f32 %v3869, %v3917
  %v3922 = vmul.f32 %v3884, %v3918
  %v3923 = vadd.f32 %v3915, %v3921
  %v3924 = vadd.f32 %v3916, %v3922
  %3927 = vrot.lane.b32.xlu0 %v3837, 96
  %v3928 = vpop.permute.xlu0 %3927
  %3929 = vrot.lane.b32.xlu0 %v3838, 96
  %v3930 = vpop.permute.xlu0 %3929
  %3933 = vst.msk [vmem:[%s11 + $0x8] sm:$0x10] %vm1657, %v3928
  %3934 = vst.msk [vmem:[%s11 + $0x18] sm:$0x10] %vm1657, %v3930
  %3935 = vst.msk [vmem:[%s11] sm:$0x8] %vm1660, %v3923
  %3936 = vst.msk [vmem:[%s11 + $0x10] sm:$0x8] %vm1660, %v3924
  %v3937 = vrot.slane %v3837, 4
  %3938 = vrot.lane.b32.xlu0 %v3937, 96
  %v3939 = vpop.permute.xlu0 %3938
  %v3940 = vsel %vm236, %v3939, 0
  %3942 = vmatpush.msra.mxu0 0.0
  %3943 = vmatpush.msra.mxu0 0.0
  %3944 = vmatpush.msra.mxu0 0.0
  %3945 = vmatpush.msra.mxu0 0.0
  %3946 = vmatpush.msra.mxu0 0.0
  %3947 = vmatpush.msra.mxu0 0.0
  %3948 = vmatpush.msra.mxu0 0.0
  %3949 = vmatpush.msra.mxu0 0.0
  %3950 = vmatpush.msra.mxu0 0.0
  %3951 = vmatpush.msra.mxu0 0.0
  %3952 = vmatpush.msra.mxu0 0.0
  %3953 = vmatpush.msra.mxu0 0.0
  %3954 = vmatpush.msra.mxu0 %v56
  %3955 = vmatpush.msra.mxu0 %v55
  %3956 = vmatpush.msra.mxu0 %v54
  %3957 = vmatpush.msra.mxu0 %v53
  %3958 = vmatmul.f32.gmra.mxu0 %v3940
  %v3959 = vpop.f32.mrf.mxu0
  %v3960 = vadd.f32 %v58, %v3959
  %3961 = vdwg.mxu0
  %v3962 = vrot.slane %v3838, 4
  %3963 = vrot.lane.b32.xlu0 %v3962, 96
  %v3964 = vpop.permute.xlu0 %3963
  %v3965 = vsel %vm236, %v3964, 0
  %3967 = vmatpush.msra.mxu0 0.0
  %3968 = vmatpush.msra.mxu0 0.0
  %3969 = vmatpush.msra.mxu0 0.0
  %3970 = vmatpush.msra.mxu0 0.0
  %3971 = vmatpush.msra.mxu0 0.0
  %3972 = vmatpush.msra.mxu0 0.0
  %3973 = vmatpush.msra.mxu0 0.0
  %3974 = vmatpush.msra.mxu0 0.0
  %3975 = vmatpush.msra.mxu0 0.0
  %3976 = vmatpush.msra.mxu0 0.0
  %3977 = vmatpush.msra.mxu0 0.0
  %3978 = vmatpush.msra.mxu0 0.0
  %3979 = vmatpush.msra.mxu0 %v56
  %3980 = vmatpush.msra.mxu0 %v55
  %3981 = vmatpush.msra.mxu0 %v54
  %3982 = vmatpush.msra.mxu0 %v53
  %3983 = vmatmul.f32.gmra.mxu0 %v3965
  %v3984 = vpop.f32.mrf.mxu0
  %v3985 = vadd.f32 %v58, %v3984
  %3986 = vdwg.mxu0
  %v3988 = vrot.slane %v3923, 3
  %3989 = vrot.lane.b32.xlu0 %v3988, 96
  %v3990 = vpop.permute.xlu0 %3989
  %v3991 = vsel %vm236, %v3990, 0
  %3993 = vmatpush.msra.mxu0 0.0
  %3994 = vmatpush.msra.mxu0 0.0
  %3995 = vmatpush.msra.mxu0 0.0
  %3996 = vmatpush.msra.mxu0 0.0
  %3997 = vmatpush.msra.mxu0 0.0
  %3998 = vmatpush.msra.mxu0 0.0
  %3999 = vmatpush.msra.mxu0 0.0
  %4000 = vmatpush.msra.mxu0 0.0
  %4001 = vmatpush.msra.mxu0 0.0
  %4002 = vmatpush.msra.mxu0 0.0
  %4003 = vmatpush.msra.mxu0 0.0
  %4004 = vmatpush.msra.mxu0 0.0
  %4005 = vmatpush.msra.mxu0 %v73
  %4006 = vmatpush.msra.mxu0 %v72
  %4007 = vmatpush.msra.mxu0 %v71
  %4008 = vmatpush.msra.mxu0 %v70
  %4009 = vmatmul.f32.gmra.mxu0 %v3991
  %v4010 = vpop.f32.mrf.mxu0
  %v4011 = vadd.f32 %v75, %v4010
  %4012 = vdwg.mxu0
  %v4014 = vrot.slane %v3924, 3
  %4015 = vrot.lane.b32.xlu0 %v4014, 96
  %v4016 = vpop.permute.xlu0 %4015
  %v4017 = vsel %vm236, %v4016, 0
  %4019 = vmatpush.msra.mxu0 0.0
  %4020 = vmatpush.msra.mxu0 0.0
  %4021 = vmatpush.msra.mxu0 0.0
  %4022 = vmatpush.msra.mxu0 0.0
  %4023 = vmatpush.msra.mxu0 0.0
  %4024 = vmatpush.msra.mxu0 0.0
  %4025 = vmatpush.msra.mxu0 0.0
  %4026 = vmatpush.msra.mxu0 0.0
  %4027 = vmatpush.msra.mxu0 0.0
  %4028 = vmatpush.msra.mxu0 0.0
  %4029 = vmatpush.msra.mxu0 0.0
  %4030 = vmatpush.msra.mxu0 0.0
  %4031 = vmatpush.msra.mxu0 %v73
  %4032 = vmatpush.msra.mxu0 %v72
  %4033 = vmatpush.msra.mxu0 %v71
  %4034 = vmatpush.msra.mxu0 %v70
  %4035 = vmatmul.f32.gmra.mxu0 %v4017
  %v4036 = vpop.f32.mrf.mxu0
  %v4037 = vadd.f32 %v75, %v4036
  %4038 = vdwg.mxu0
  %v4041 = vrot.slane %v3960, 3
  %v4042 = vrot.slane %v3985, 3
  %v4045 = vadd.f32 %v129, %v4041
  %v4046 = vadd.f32 %v135, %v4042
  %v4047 = vxor.u32 %v4045, 2147483648
  %v4048 = vxor.u32 %v4046, 2147483648
  %v4049 = vmul.f32 %v4047, 1.442695
  %v4050 = vpow.pop %v4049
  %v4051 = vmul.f32 %v4048, 1.442695
  %v4052 = vpow.pop %v4051
  %v4053 = vadd.f32 %v4050, 1.0
  %v4054 = vadd.f32 %v4052, 1.0
  %v4055 = vrcp.pop %v4053
  %v4056 = vmul.f32 %v4053, %v4055
  %v4057 = vsub.f32 1.0, %v4056
  %v4058 = vmul.f32 %v4055, %v4057
  %v4059 = vadd.f32 %v4055, %v4058
  %vm4060 = vweird.f32 %v4053
  %vm4061 = vweird.f32 %v4055
  %vm4062 = vmor %vm4060, %vm4061
  %v4063 = vsel %vm4062, %v4055, %v4059
  %v4064 = vand.u32 2147483647, %v4053
  %vm4065 = vcmp.eq.f32.partialorder %v4064, 8.507059e+37
  %v4066 = vand.u32 %v4053, 2147483648
  %v4067 = vor.u32 1.1754944e-38, %v4066
  %v4068 = vsel %vm4065, %v4067, %v4063
  %v4069 = vmul.f32 1.0, %v4068
  %v4070 = vrcp.pop %v4054
  %v4071 = vmul.f32 %v4054, %v4070
  %v4072 = vsub.f32 1.0, %v4071
  %v4073 = vmul.f32 %v4070, %v4072
  %v4074 = vadd.f32 %v4070, %v4073
  %vm4075 = vweird.f32 %v4054
  %vm4076 = vweird.f32 %v4070
  %vm4077 = vmor %vm4075, %vm4076
  %v4078 = vsel %vm4077, %v4070, %v4074
  %v4079 = vand.u32 2147483647, %v4054
  %vm4080 = vcmp.eq.f32.partialorder %v4079, 8.507059e+37
  %v4081 = vand.u32 %v4054, 2147483648
  %v4082 = vor.u32 1.1754944e-38, %v4081
  %v4083 = vsel %vm4080, %v4082, %v4078
  %v4084 = vmul.f32 1.0, %v4083
  %4085 = vrot.lane.b32.xlu0 %v4041, 64
  %v4086 = vpop.permute.xlu0 %4085
  %4087 = vrot.lane.b32.xlu0 %v4042, 64
  %v4088 = vpop.permute.xlu0 %4087
  %v4091 = vmul.f32 %v4069, %v4086
  %v4092 = vmul.f32 %v4084, %v4088
  %4095 = vrot.lane.b32.xlu0 %v4091, 64
  %v4096 = vpop.permute.xlu0 %4095
  %4097 = vrot.lane.b32.xlu0 %v4092, 64
  %v4098 = vpop.permute.xlu0 %4097
  %v4101 = vadd.f32 %v129, %v4096
  %v4102 = vadd.f32 %v135, %v4098
  %v4103 = vtanh.pop %v4101
  %v4104 = vtanh.pop %v4102
  %v4105 = vsub.f32 1.0, %v4069
  %v4106 = vsub.f32 1.0, %v4084
  %4109 = vrot.lane.b32.xlu0 %v4103, 96
  %v4110 = vpop.permute.xlu0 %4109
  %4111 = vrot.lane.b32.xlu0 %v4104, 96
  %v4112 = vpop.permute.xlu0 %4111
  %v4115 = vmul.f32 %v4105, %v4110
  %v4116 = vmul.f32 %v4106, %v4112
  %v4117 = vrot.slane %v3837, 7
  %v4118 = vrot.slane %v3838, 7
  %v4121 = vmul.f32 %v4069, %v4117
  %v4122 = vmul.f32 %v4084, %v4118
  %v4123 = vadd.f32 %v4115, %v4121
  %v4124 = vadd.f32 %v4116, %v4122
  %v4127 = vrot.slane %v4011, 6
  %v4128 = vrot.slane %v4037, 6
  %v4131 = vadd.f32 %v161, %v4127
  %v4132 = vadd.f32 %v167, %v4128
  %v4133 = vxor.u32 %v4131, 2147483648
  %v4134 = vxor.u32 %v4132, 2147483648
  %v4135 = vmul.f32 %v4133, 1.442695
  %v4136 = vpow.pop %v4135
  %v4137 = vmul.f32 %v4134, 1.442695
  %v4138 = vpow.pop %v4137
  %v4139 = vadd.f32 %v4136, 1.0
  %v4140 = vadd.f32 %v4138, 1.0
  %v4141 = vrcp.pop %v4139
  %v4142 = vmul.f32 %v4139, %v4141
  %v4143 = vsub.f32 1.0, %v4142
  %v4144 = vmul.f32 %v4141, %v4143
  %v4145 = vadd.f32 %v4141, %v4144
  %vm4146 = vweird.f32 %v4139
  %vm4147 = vweird.f32 %v4141
  %vm4148 = vmor %vm4146, %vm4147
  %v4149 = vsel %vm4148, %v4141, %v4145
  %v4150 = vand.u32 2147483647, %v4139
  %vm4151 = vcmp.eq.f32.partialorder %v4150, 8.507059e+37
  %v4152 = vand.u32 %v4139, 2147483648
  %v4153 = vor.u32 1.1754944e-38, %v4152
  %v4154 = vsel %vm4151, %v4153, %v4149
  %v4155 = vmul.f32 1.0, %v4154
  %v4156 = vrcp.pop %v4140
  %v4157 = vmul.f32 %v4140, %v4156
  %v4158 = vsub.f32 1.0, %v4157
  %v4159 = vmul.f32 %v4156, %v4158
  %v4160 = vadd.f32 %v4156, %v4159
  %vm4161 = vweird.f32 %v4140
  %vm4162 = vweird.f32 %v4156
  %vm4163 = vmor %vm4161, %vm4162
  %v4164 = vsel %vm4163, %v4156, %v4160
  %v4165 = vand.u32 2147483647, %v4140
  %vm4166 = vcmp.eq.f32.partialorder %v4165, 8.507059e+37
  %v4167 = vand.u32 %v4140, 2147483648
  %v4168 = vor.u32 1.1754944e-38, %v4167
  %v4169 = vsel %vm4166, %v4168, %v4164
  %v4170 = vmul.f32 1.0, %v4169
  %4171 = vrot.lane.b32.xlu0 %v4127, 64
  %v4172 = vpop.permute.xlu0 %4171
  %4173 = vrot.lane.b32.xlu0 %v4128, 64
  %v4174 = vpop.permute.xlu0 %4173
  %v4177 = vmul.f32 %v4155, %v4172
  %v4178 = vmul.f32 %v4170, %v4174
  %4181 = vrot.lane.b32.xlu0 %v4177, 64
  %v4182 = vpop.permute.xlu0 %4181
  %4183 = vrot.lane.b32.xlu0 %v4178, 64
  %v4184 = vpop.permute.xlu0 %4183
  %v4187 = vadd.f32 %v161, %v4182
  %v4188 = vadd.f32 %v167, %v4184
  %v4189 = vtanh.pop %v4187
  %v4190 = vtanh.pop %v4188
  %v4191 = vsub.f32 1.0, %v4155
  %v4192 = vsub.f32 1.0, %v4170
  %4195 = vrot.lane.b32.xlu0 %v4189, 96
  %v4196 = vpop.permute.xlu0 %4195
  %4197 = vrot.lane.b32.xlu0 %v4190, 96
  %v4198 = vpop.permute.xlu0 %4197
  %v4201 = vmul.f32 %v4191, %v4196
  %v4202 = vmul.f32 %v4192, %v4198
  %v4203 = vrot.slane %v3923, 1
  %v4204 = vrot.slane %v3924, 1
  %v4207 = vmul.f32 %v4155, %v4203
  %v4208 = vmul.f32 %v4170, %v4204
  %v4209 = vadd.f32 %v4201, %v4207
  %v4210 = vadd.f32 %v4202, %v4208
  %4213 = vrot.lane.b32.xlu0 %v4123, 96
  %v4214 = vpop.permute.xlu0 %4213
  %4215 = vrot.lane.b32.xlu0 %v4124, 96
  %v4216 = vpop.permute.xlu0 %4215
  %4219 = vst.msk [vmem:[%s11 + $0x8] sm:$0x20] %vm1945, %v4214
  %4220 = vst.msk [vmem:[%s11 + $0x18] sm:$0x20] %vm1945, %v4216
  %4221 = vst.msk [vmem:[%s11] sm:$0x4] %vm1948, %v4209
  %4222 = vst.msk [vmem:[%s11 + $0x10] sm:$0x4] %vm1948, %v4210
  %v4223 = vrot.slane %v4123, 5
  %4224 = vrot.lane.b32.xlu0 %v4223, 96
  %v4225 = vpop.permute.xlu0 %4224
  %v4226 = vsel %vm236, %v4225, 0
  %4228 = vmatpush.msra.mxu0 0.0
  %4229 = vmatpush.msra.mxu0 0.0
  %4230 = vmatpush.msra.mxu0 0.0
  %4231 = vmatpush.msra.mxu0 0.0
  %4232 = vmatpush.msra.mxu0 0.0
  %4233 = vmatpush.msra.mxu0 0.0
  %4234 = vmatpush.msra.mxu0 0.0
  %4235 = vmatpush.msra.mxu0 0.0
  %4236 = vmatpush.msra.mxu0 0.0
  %4237 = vmatpush.msra.mxu0 0.0
  %4238 = vmatpush.msra.mxu0 0.0
  %4239 = vmatpush.msra.mxu0 0.0
  %4240 = vmatpush.msra.mxu0 %v56
  %4241 = vmatpush.msra.mxu0 %v55
  %4242 = vmatpush.msra.mxu0 %v54
  %4243 = vmatpush.msra.mxu0 %v53
  %4244 = vmatmul.f32.gmra.mxu0 %v4226
  %v4245 = vpop.f32.mrf.mxu0
  %v4246 = vadd.f32 %v58, %v4245
  %4247 = vdwg.mxu0
  %v4248 = vrot.slane %v4124, 5
  %4249 = vrot.lane.b32.xlu0 %v4248, 96
  %v4250 = vpop.permute.xlu0 %4249
  %v4251 = vsel %vm236, %v4250, 0
  %4253 = vmatpush.msra.mxu0 0.0
  %4254 = vmatpush.msra.mxu0 0.0
  %4255 = vmatpush.msra.mxu0 0.0
  %4256 = vmatpush.msra.mxu0 0.0
  %4257 = vmatpush.msra.mxu0 0.0
  %4258 = vmatpush.msra.mxu0 0.0
  %4259 = vmatpush.msra.mxu0 0.0
  %4260 = vmatpush.msra.mxu0 0.0
  %4261 = vmatpush.msra.mxu0 0.0
  %4262 = vmatpush.msra.mxu0 0.0
  %4263 = vmatpush.msra.mxu0 0.0
  %4264 = vmatpush.msra.mxu0 0.0
  %4265 = vmatpush.msra.mxu0 %v56
  %4266 = vmatpush.msra.mxu0 %v55
  %4267 = vmatpush.msra.mxu0 %v54
  %4268 = vmatpush.msra.mxu0 %v53
  %4269 = vmatmul.f32.gmra.mxu0 %v4251
  %v4270 = vpop.f32.mrf.mxu0
  %v4271 = vadd.f32 %v58, %v4270
  %4272 = vdwg.mxu0
  %v4274 = vrot.slane %v4209, 2
  %4275 = vrot.lane.b32.xlu0 %v4274, 96
  %v4276 = vpop.permute.xlu0 %4275
  %v4277 = vsel %vm236, %v4276, 0
  %4279 = vmatpush.msra.mxu0 0.0
  %4280 = vmatpush.msra.mxu0 0.0
  %4281 = vmatpush.msra.mxu0 0.0
  %4282 = vmatpush.msra.mxu0 0.0
  %4283 = vmatpush.msra.mxu0 0.0
  %4284 = vmatpush.msra.mxu0 0.0
  %4285 = vmatpush.msra.mxu0 0.0
  %4286 = vmatpush.msra.mxu0 0.0
  %4287 = vmatpush.msra.mxu0 0.0
  %4288 = vmatpush.msra.mxu0 0.0
  %4289 = vmatpush.msra.mxu0 0.0
  %4290 = vmatpush.msra.mxu0 0.0
  %4291 = vmatpush.msra.mxu0 %v73
  %4292 = vmatpush.msra.mxu0 %v72
  %4293 = vmatpush.msra.mxu0 %v71
  %4294 = vmatpush.msra.mxu0 %v70
  %4295 = vmatmul.f32.gmra.mxu0 %v4277
  %v4296 = vpop.f32.mrf.mxu0
  %v4297 = vadd.f32 %v75, %v4296
  %4298 = vdwg.mxu0
  %v4300 = vrot.slane %v4210, 2
  %4301 = vrot.lane.b32.xlu0 %v4300, 96
  %v4302 = vpop.permute.xlu0 %4301
  %v4303 = vsel %vm236, %v4302, 0
  %4305 = vmatpush.msra.mxu0 0.0
  %4306 = vmatpush.msra.mxu0 0.0
  %4307 = vmatpush.msra.mxu0 0.0
  %4308 = vmatpush.msra.mxu0 0.0
  %4309 = vmatpush.msra.mxu0 0.0
  %4310 = vmatpush.msra.mxu0 0.0
  %4311 = vmatpush.msra.mxu0 0.0
  %4312 = vmatpush.msra.mxu0 0.0
  %4313 = vmatpush.msra.mxu0 0.0
  %4314 = vmatpush.msra.mxu0 0.0
  %4315 = vmatpush.msra.mxu0 0.0
  %4316 = vmatpush.msra.mxu0 0.0
  %4317 = vmatpush.msra.mxu0 %v73
  %4318 = vmatpush.msra.mxu0 %v72
  %4319 = vmatpush.msra.mxu0 %v71
  %4320 = vmatpush.msra.mxu0 %v70
  %4321 = vmatmul.f32.gmra.mxu0 %v4303
  %v4322 = vpop.f32.mrf.mxu0
  %v4323 = vadd.f32 %v75, %v4322
  %4324 = vdwg.mxu0
  %v4327 = vrot.slane %v4246, 2
  %v4328 = vrot.slane %v4271, 2
  %v4331 = vadd.f32 %v129, %v4327
  %v4332 = vadd.f32 %v135, %v4328
  %v4333 = vxor.u32 %v4331, 2147483648
  %v4334 = vxor.u32 %v4332, 2147483648
  %v4335 = vmul.f32 %v4333, 1.442695
  %v4336 = vpow.pop %v4335
  %v4337 = vmul.f32 %v4334, 1.442695
  %v4338 = vpow.pop %v4337
  %v4339 = vadd.f32 %v4336, 1.0
  %v4340 = vadd.f32 %v4338, 1.0
  %v4341 = vrcp.pop %v4339
  %v4342 = vmul.f32 %v4339, %v4341
  %v4343 = vsub.f32 1.0, %v4342
  %v4344 = vmul.f32 %v4341, %v4343
  %v4345 = vadd.f32 %v4341, %v4344
  %vm4346 = vweird.f32 %v4339
  %vm4347 = vweird.f32 %v4341
  %vm4348 = vmor %vm4346, %vm4347
  %v4349 = vsel %vm4348, %v4341, %v4345
  %v4350 = vand.u32 2147483647, %v4339
  %vm4351 = vcmp.eq.f32.partialorder %v4350, 8.507059e+37
  %v4352 = vand.u32 %v4339, 2147483648
  %v4353 = vor.u32 1.1754944e-38, %v4352
  %v4354 = vsel %vm4351, %v4353, %v4349
  %v4355 = vmul.f32 1.0, %v4354
  %v4356 = vrcp.pop %v4340
  %v4357 = vmul.f32 %v4340, %v4356
  %v4358 = vsub.f32 1.0, %v4357
  %v4359 = vmul.f32 %v4356, %v4358
  %v4360 = vadd.f32 %v4356, %v4359
  %vm4361 = vweird.f32 %v4340
  %vm4362 = vweird.f32 %v4356
  %vm4363 = vmor %vm4361, %vm4362
  %v4364 = vsel %vm4363, %v4356, %v4360
  %v4365 = vand.u32 2147483647, %v4340
  %vm4366 = vcmp.eq.f32.partialorder %v4365, 8.507059e+37
  %v4367 = vand.u32 %v4340, 2147483648
  %v4368 = vor.u32 1.1754944e-38, %v4367
  %v4369 = vsel %vm4366, %v4368, %v4364
  %v4370 = vmul.f32 1.0, %v4369
  %4371 = vrot.lane.b32.xlu0 %v4327, 64
  %v4372 = vpop.permute.xlu0 %4371
  %4373 = vrot.lane.b32.xlu0 %v4328, 64
  %v4374 = vpop.permute.xlu0 %4373
  %v4377 = vmul.f32 %v4355, %v4372
  %v4378 = vmul.f32 %v4370, %v4374
  %4381 = vrot.lane.b32.xlu0 %v4377, 64
  %v4382 = vpop.permute.xlu0 %4381
  %4383 = vrot.lane.b32.xlu0 %v4378, 64
  %v4384 = vpop.permute.xlu0 %4383
  %v4387 = vadd.f32 %v129, %v4382
  %v4388 = vadd.f32 %v135, %v4384
  %v4389 = vtanh.pop %v4387
  %v4390 = vtanh.pop %v4388
  %v4391 = vsub.f32 1.0, %v4355
  %v4392 = vsub.f32 1.0, %v4370
  %4395 = vrot.lane.b32.xlu0 %v4389, 96
  %v4396 = vpop.permute.xlu0 %4395
  %4397 = vrot.lane.b32.xlu0 %v4390, 96
  %v4398 = vpop.permute.xlu0 %4397
  %v4401 = vmul.f32 %v4391, %v4396
  %v4402 = vmul.f32 %v4392, %v4398
  %v4403 = vrot.slane %v4123, 7
  %v4404 = vrot.slane %v4124, 7
  %v4407 = vmul.f32 %v4355, %v4403
  %v4408 = vmul.f32 %v4370, %v4404
  %v4409 = vadd.f32 %v4401, %v4407
  %v4410 = vadd.f32 %v4402, %v4408
  %v4413 = vrot.slane %v4297, 7
  %v4414 = vrot.slane %v4323, 7
  %v4417 = vadd.f32 %v161, %v4413
  %v4418 = vadd.f32 %v167, %v4414
  %v4419 = vxor.u32 %v4417, 2147483648
  %v4420 = vxor.u32 %v4418, 2147483648
  %v4421 = vmul.f32 %v4419, 1.442695
  %v4422 = vpow.pop %v4421
  %v4423 = vmul.f32 %v4420, 1.442695
  %v4424 = vpow.pop %v4423
  %v4425 = vadd.f32 %v4422, 1.0
  %v4426 = vadd.f32 %v4424, 1.0
  %v4427 = vrcp.pop %v4425
  %v4428 = vmul.f32 %v4425, %v4427
  %v4429 = vsub.f32 1.0, %v4428
  %v4430 = vmul.f32 %v4427, %v4429
  %v4431 = vadd.f32 %v4427, %v4430
  %vm4432 = vweird.f32 %v4425
  %vm4433 = vweird.f32 %v4427
  %vm4434 = vmor %vm4432, %vm4433
  %v4435 = vsel %vm4434, %v4427, %v4431
  %v4436 = vand.u32 2147483647, %v4425
  %vm4437 = vcmp.eq.f32.partialorder %v4436, 8.507059e+37
  %v4438 = vand.u32 %v4425, 2147483648
  %v4439 = vor.u32 1.1754944e-38, %v4438
  %v4440 = vsel %vm4437, %v4439, %v4435
  %v4441 = vmul.f32 1.0, %v4440
  %v4442 = vrcp.pop %v4426
  %v4443 = vmul.f32 %v4426, %v4442
  %v4444 = vsub.f32 1.0, %v4443
  %v4445 = vmul.f32 %v4442, %v4444
  %v4446 = vadd.f32 %v4442, %v4445
  %vm4447 = vweird.f32 %v4426
  %vm4448 = vweird.f32 %v4442
  %vm4449 = vmor %vm4447, %vm4448
  %v4450 = vsel %vm4449, %v4442, %v4446
  %v4451 = vand.u32 2147483647, %v4426
  %vm4452 = vcmp.eq.f32.partialorder %v4451, 8.507059e+37
  %v4453 = vand.u32 %v4426, 2147483648
  %v4454 = vor.u32 1.1754944e-38, %v4453
  %v4455 = vsel %vm4452, %v4454, %v4450
  %v4456 = vmul.f32 1.0, %v4455
  %4457 = vrot.lane.b32.xlu0 %v4413, 64
  %v4458 = vpop.permute.xlu0 %4457
  %4459 = vrot.lane.b32.xlu0 %v4414, 64
  %v4460 = vpop.permute.xlu0 %4459
  %v4463 = vmul.f32 %v4441, %v4458
  %v4464 = vmul.f32 %v4456, %v4460
  %4467 = vrot.lane.b32.xlu0 %v4463, 64
  %v4468 = vpop.permute.xlu0 %4467
  %4469 = vrot.lane.b32.xlu0 %v4464, 64
  %v4470 = vpop.permute.xlu0 %4469
  %v4473 = vadd.f32 %v161, %v4468
  %v4474 = vadd.f32 %v167, %v4470
  %v4475 = vtanh.pop %v4473
  %v4476 = vtanh.pop %v4474
  %v4477 = vsub.f32 1.0, %v4441
  %v4478 = vsub.f32 1.0, %v4456
  %4481 = vrot.lane.b32.xlu0 %v4475, 96
  %v4482 = vpop.permute.xlu0 %4481
  %4483 = vrot.lane.b32.xlu0 %v4476, 96
  %v4484 = vpop.permute.xlu0 %4483
  %v4487 = vmul.f32 %v4477, %v4482
  %v4488 = vmul.f32 %v4478, %v4484
  %v4489 = vrot.slane %v4209, 1
  %v4490 = vrot.slane %v4210, 1
  %v4493 = vmul.f32 %v4441, %v4489
  %v4494 = vmul.f32 %v4456, %v4490
  %v4495 = vadd.f32 %v4487, %v4493
  %v4496 = vadd.f32 %v4488, %v4494
  %4499 = vrot.lane.b32.xlu0 %v4409, 96
  %v4500 = vpop.permute.xlu0 %4499
  %4501 = vrot.lane.b32.xlu0 %v4410, 96
  %v4502 = vpop.permute.xlu0 %4501
  %4505 = vst.msk [vmem:[%s11 + $0x8] sm:$0x40] %vm2233, %v4500
  %4506 = vst.msk [vmem:[%s11 + $0x18] sm:$0x40] %vm2233, %v4502
  %4507 = vst.msk [vmem:[%s11] sm:$0x2] %vm2236, %v4495
  %4508 = vst.msk [vmem:[%s11 + $0x10] sm:$0x2] %vm2236, %v4496
  %v4509 = vrot.slane %v4409, 6
  %4510 = vrot.lane.b32.xlu0 %v4509, 96
  %v4511 = vpop.permute.xlu0 %4510
  %v4512 = vsel %vm236, %v4511, 0
  %4514 = vmatpush.msra.mxu0 0.0
  %4515 = vmatpush.msra.mxu0 0.0
  %4516 = vmatpush.msra.mxu0 0.0
  %4517 = vmatpush.msra.mxu0 0.0
  %4518 = vmatpush.msra.mxu0 0.0
  %4519 = vmatpush.msra.mxu0 0.0
  %4520 = vmatpush.msra.mxu0 0.0
  %4521 = vmatpush.msra.mxu0 0.0
  %4522 = vmatpush.msra.mxu0 0.0
  %4523 = vmatpush.msra.mxu0 0.0
  %4524 = vmatpush.msra.mxu0 0.0
  %4525 = vmatpush.msra.mxu0 0.0
  %4526 = vmatpush.msra.mxu0 %v56
  %4527 = vmatpush.msra.mxu0 %v55
  %4528 = vmatpush.msra.mxu0 %v54
  %4529 = vmatpush.msra.mxu0 %v53
  %4530 = vmatmul.f32.gmra.mxu0 %v4512
  %v4531 = vpop.f32.mrf.mxu0
  %v4532 = vadd.f32 %v58, %v4531
  %4533 = vdwg.mxu0
  %v4534 = vrot.slane %v4410, 6
  %4535 = vrot.lane.b32.xlu0 %v4534, 96
  %v4536 = vpop.permute.xlu0 %4535
  %v4537 = vsel %vm236, %v4536, 0
  %4539 = vmatpush.msra.mxu0 0.0
  %4540 = vmatpush.msra.mxu0 0.0
  %4541 = vmatpush.msra.mxu0 0.0
  %4542 = vmatpush.msra.mxu0 0.0
  %4543 = vmatpush.msra.mxu0 0.0
  %4544 = vmatpush.msra.mxu0 0.0
  %4545 = vmatpush.msra.mxu0 0.0
  %4546 = vmatpush.msra.mxu0 0.0
  %4547 = vmatpush.msra.mxu0 0.0
  %4548 = vmatpush.msra.mxu0 0.0
  %4549 = vmatpush.msra.mxu0 0.0
  %4550 = vmatpush.msra.mxu0 0.0
  %4551 = vmatpush.msra.mxu0 %v56
  %4552 = vmatpush.msra.mxu0 %v55
  %4553 = vmatpush.msra.mxu0 %v54
  %4554 = vmatpush.msra.mxu0 %v53
  %4555 = vmatmul.f32.gmra.mxu0 %v4537
  %v4556 = vpop.f32.mrf.mxu0
  %v4557 = vadd.f32 %v58, %v4556
  %4558 = vdwg.mxu0
  %v4560 = vrot.slane %v4495, 1
  %4561 = vrot.lane.b32.xlu0 %v4560, 96
  %v4562 = vpop.permute.xlu0 %4561
  %v4563 = vsel %vm236, %v4562, 0
  %4565 = vmatpush.msra.mxu0 0.0
  %4566 = vmatpush.msra.mxu0 0.0
  %4567 = vmatpush.msra.mxu0 0.0
  %4568 = vmatpush.msra.mxu0 0.0
  %4569 = vmatpush.msra.mxu0 0.0
  %4570 = vmatpush.msra.mxu0 0.0
  %4571 = vmatpush.msra.mxu0 0.0
  %4572 = vmatpush.msra.mxu0 0.0
  %4573 = vmatpush.msra.mxu0 0.0
  %4574 = vmatpush.msra.mxu0 0.0
  %4575 = vmatpush.msra.mxu0 0.0
  %4576 = vmatpush.msra.mxu0 0.0
  %4577 = vmatpush.msra.mxu0 %v73
  %4578 = vmatpush.msra.mxu0 %v72
  %4579 = vmatpush.msra.mxu0 %v71
  %4580 = vmatpush.msra.mxu0 %v70
  %4581 = vmatmul.f32.gmra.mxu0 %v4563
  %v4582 = vpop.f32.mrf.mxu0
  %v4583 = vadd.f32 %v75, %v4582
  %4584 = vdwg.mxu0
  %v4586 = vrot.slane %v4496, 1
  %4587 = vrot.lane.b32.xlu0 %v4586, 96
  %v4588 = vpop.permute.xlu0 %4587
  %v4589 = vsel %vm236, %v4588, 0
  %4591 = vmatpush.msra.mxu0 0.0
  %4592 = vmatpush.msra.mxu0 0.0
  %4593 = vmatpush.msra.mxu0 0.0
  %4594 = vmatpush.msra.mxu0 0.0
  %4595 = vmatpush.msra.mxu0 0.0
  %4596 = vmatpush.msra.mxu0 0.0
  %4597 = vmatpush.msra.mxu0 0.0
  %4598 = vmatpush.msra.mxu0 0.0
  %4599 = vmatpush.msra.mxu0 0.0
  %4600 = vmatpush.msra.mxu0 0.0
  %4601 = vmatpush.msra.mxu0 0.0
  %4602 = vmatpush.msra.mxu0 0.0
  %4603 = vmatpush.msra.mxu0 %v73
  %4604 = vmatpush.msra.mxu0 %v72
  %4605 = vmatpush.msra.mxu0 %v71
  %4606 = vmatpush.msra.mxu0 %v70
  %4607 = vmatmul.f32.gmra.mxu0 %v4589
  %v4608 = vpop.f32.mrf.mxu0
  %v4609 = vadd.f32 %v75, %v4608
  %4610 = vdwg.mxu0
  %v4613 = vrot.slane %v4532, 1
  %v4614 = vrot.slane %v4557, 1
  %v4617 = vadd.f32 %v129, %v4613
  %v4618 = vadd.f32 %v135, %v4614
  %v4619 = vxor.u32 %v4617, 2147483648
  %v4620 = vxor.u32 %v4618, 2147483648
  %v4621 = vmul.f32 %v4619, 1.442695
  %v4622 = vpow.pop %v4621
  %v4623 = vmul.f32 %v4620, 1.442695
  %v4624 = vpow.pop %v4623
  %v4625 = vadd.f32 %v4622, 1.0
  %v4626 = vadd.f32 %v4624, 1.0
  %v4627 = vrcp.pop %v4625
  %v4628 = vmul.f32 %v4625, %v4627
  %v4629 = vsub.f32 1.0, %v4628
  %v4630 = vmul.f32 %v4627, %v4629
  %v4631 = vadd.f32 %v4627, %v4630
  %vm4632 = vweird.f32 %v4625
  %vm4633 = vweird.f32 %v4627
  %vm4634 = vmor %vm4632, %vm4633
  %v4635 = vsel %vm4634, %v4627, %v4631
  %v4636 = vand.u32 2147483647, %v4625
  %vm4637 = vcmp.eq.f32.partialorder %v4636, 8.507059e+37
  %v4638 = vand.u32 %v4625, 2147483648
  %v4639 = vor.u32 1.1754944e-38, %v4638
  %v4640 = vsel %vm4637, %v4639, %v4635
  %v4641 = vmul.f32 1.0, %v4640
  %v4642 = vrcp.pop %v4626
  %v4643 = vmul.f32 %v4626, %v4642
  %v4644 = vsub.f32 1.0, %v4643
  %v4645 = vmul.f32 %v4642, %v4644
  %v4646 = vadd.f32 %v4642, %v4645
  %vm4647 = vweird.f32 %v4626
  %vm4648 = vweird.f32 %v4642
  %vm4649 = vmor %vm4647, %vm4648
  %v4650 = vsel %vm4649, %v4642, %v4646
  %v4651 = vand.u32 2147483647, %v4626
  %vm4652 = vcmp.eq.f32.partialorder %v4651, 8.507059e+37
  %v4653 = vand.u32 %v4626, 2147483648
  %v4654 = vor.u32 1.1754944e-38, %v4653
  %v4655 = vsel %vm4652, %v4654, %v4650
  %v4656 = vmul.f32 1.0, %v4655
  %4657 = vrot.lane.b32.xlu0 %v4613, 64
  %v4658 = vpop.permute.xlu0 %4657
  %4659 = vrot.lane.b32.xlu0 %v4614, 64
  %v4660 = vpop.permute.xlu0 %4659
  %v4663 = vmul.f32 %v4641, %v4658
  %v4664 = vmul.f32 %v4656, %v4660
  %4667 = vrot.lane.b32.xlu0 %v4663, 64
  %v4668 = vpop.permute.xlu0 %4667
  %4669 = vrot.lane.b32.xlu0 %v4664, 64
  %v4670 = vpop.permute.xlu0 %4669
  %v4673 = vadd.f32 %v129, %v4668
  %v4674 = vadd.f32 %v135, %v4670
  %v4675 = vtanh.pop %v4673
  %v4676 = vtanh.pop %v4674
  %v4677 = vsub.f32 1.0, %v4641
  %v4678 = vsub.f32 1.0, %v4656
  %4681 = vrot.lane.b32.xlu0 %v4675, 96
  %v4682 = vpop.permute.xlu0 %4681
  %4683 = vrot.lane.b32.xlu0 %v4676, 96
  %v4684 = vpop.permute.xlu0 %4683
  %v4687 = vmul.f32 %v4677, %v4682
  %v4688 = vmul.f32 %v4678, %v4684
  %v4689 = vrot.slane %v4409, 7
  %v4690 = vrot.slane %v4410, 7
  %v4693 = vmul.f32 %v4641, %v4689
  %v4694 = vmul.f32 %v4656, %v4690
  %v4695 = vadd.f32 %v4687, %v4693
  %v4696 = vadd.f32 %v4688, %v4694
  %v4697 = vadd.f32 %v161, %v4583
  %v4698 = vadd.f32 %v167, %v4609
  %v4699 = vxor.u32 %v4697, 2147483648
  %v4700 = vxor.u32 %v4698, 2147483648
  %v4701 = vmul.f32 %v4699, 1.442695
  %v4702 = vpow.pop %v4701
  %v4703 = vmul.f32 %v4700, 1.442695
  %v4704 = vpow.pop %v4703
  %v4705 = vadd.f32 %v4702, 1.0
  %v4706 = vadd.f32 %v4704, 1.0
  %v4707 = vrcp.pop %v4705
  %v4708 = vmul.f32 %v4705, %v4707
  %v4709 = vsub.f32 1.0, %v4708
  %v4710 = vmul.f32 %v4707, %v4709
  %v4711 = vadd.f32 %v4707, %v4710
  %vm4712 = vweird.f32 %v4705
  %vm4713 = vweird.f32 %v4707
  %vm4714 = vmor %vm4712, %vm4713
  %v4715 = vsel %vm4714, %v4707, %v4711
  %v4716 = vand.u32 2147483647, %v4705
  %vm4717 = vcmp.eq.f32.partialorder %v4716, 8.507059e+37
  %v4718 = vand.u32 %v4705, 2147483648
  %v4719 = vor.u32 1.1754944e-38, %v4718
  %v4720 = vsel %vm4717, %v4719, %v4715
  %v4721 = vmul.f32 1.0, %v4720
  %v4722 = vrcp.pop %v4706
  %v4723 = vmul.f32 %v4706, %v4722
  %v4724 = vsub.f32 1.0, %v4723
  %v4725 = vmul.f32 %v4722, %v4724
  %v4726 = vadd.f32 %v4722, %v4725
  %vm4727 = vweird.f32 %v4706
  %vm4728 = vweird.f32 %v4722
  %vm4729 = vmor %vm4727, %vm4728
  %v4730 = vsel %vm4729, %v4722, %v4726
  %v4731 = vand.u32 2147483647, %v4706
  %vm4732 = vcmp.eq.f32.partialorder %v4731, 8.507059e+37
  %v4733 = vand.u32 %v4706, 2147483648
  %v4734 = vor.u32 1.1754944e-38, %v4733
  %v4735 = vsel %vm4732, %v4734, %v4730
  %v4736 = vmul.f32 1.0, %v4735
  %4739 = vrot.lane.b32.xlu0 %v4583, 64
  %v4740 = vpop.permute.xlu0 %4739
  %4741 = vrot.lane.b32.xlu0 %v4609, 64
  %v4742 = vpop.permute.xlu0 %4741
  %v4745 = vmul.f32 %v4721, %v4740
  %v4746 = vmul.f32 %v4736, %v4742
  %4749 = vrot.lane.b32.xlu0 %v4745, 64
  %v4750 = vpop.permute.xlu0 %4749
  %4751 = vrot.lane.b32.xlu0 %v4746, 64
  %v4752 = vpop.permute.xlu0 %4751
  %v4755 = vadd.f32 %v161, %v4750
  %v4756 = vadd.f32 %v167, %v4752
  %v4757 = vtanh.pop %v4755
  %v4758 = vtanh.pop %v4756
  %v4759 = vsub.f32 1.0, %v4721
  %v4760 = vsub.f32 1.0, %v4736
  %4763 = vrot.lane.b32.xlu0 %v4757, 96
  %v4764 = vpop.permute.xlu0 %4763
  %4765 = vrot.lane.b32.xlu0 %v4758, 96
  %v4766 = vpop.permute.xlu0 %4765
  %v4769 = vmul.f32 %v4759, %v4764
  %v4770 = vmul.f32 %v4760, %v4766
  %v4773 = vmul.f32 %v4721, %v4560
  %v4774 = vmul.f32 %v4736, %v4586
  %v4775 = vadd.f32 %v4769, %v4773
  %v4776 = vadd.f32 %v4770, %v4774
  %4779 = vrot.lane.b32.xlu0 %v4695, 96
  %v4780 = vpop.permute.xlu0 %4779
  %4781 = vrot.lane.b32.xlu0 %v4696, 96
  %v4782 = vpop.permute.xlu0 %4781
  %4785 = vst.msk [vmem:[%s11 + $0x8] sm:$0x80] %vm2515, %v4780
  %4786 = vst.msk [vmem:[%s11 + $0x18] sm:$0x80] %vm2515, %v4782
  %4787 = vst.msk [vmem:[%s11] sm:$0x1] %vm2518, %v4775
  %4788 = vst.msk [vmem:[%s11 + $0x10] sm:$0x1] %vm2518, %v4776
  // Predicated region
  $region46: #{rnn_doc_reader_forward.4} parent=0 // pred_check
    _
  $region47: #{rnn_doc_reader_forward.4} parent=0 // pred_check_branch
    %4790 = sbr.rel (0) target = $region49
  $region48: #{rnn_doc_reader_forward.4} parent=0 // pred_region
    _
  $region49: #{rnn_doc_reader_forward.4} parent=0 // pred_fallthru
    _
  // Predicated region
  $region50: #{rnn_doc_reader_forward.4} parent=0 // pred_check
    _
  $region51: #{rnn_doc_reader_forward.4} parent=0 // pred_check_branch
    %4792 = sbr.rel (0) target = $region53
  $region52: #{rnn_doc_reader_forward.4} parent=0 // pred_region
    _
  $region53: #{rnn_doc_reader_forward.4} parent=0 // pred_fallthru
    _

</llo_original>
